<compile_context>
chip_gen: v6e
topology: v6e:2x2x1
jax: 0.10.0
libtpu: 0.0.40
codegen_flags: <defaults>
</compile_context>

<pallas_src>
import jax
import jax.numpy as jnp
from jax.experimental import pallas as pl
from jax.experimental.pallas import tpu as pltpu

LEAKY_SLOPE = 0.01   # nn.LeakyReLU default negative_slope
BN_EPS = 1e-5


# --------------------------------------------------------------------------
# Fused kernel: conv1(1x1)+BN1 -> conv2(3x3,p=1)+BN2 -> CBAM channel attn ->
# CBAM spatial attn -> (optional 1x1 residual projection) + add + LeakyReLU.
# One grid step = one batch element; all intermediates stay in VMEM/vregs.
# --------------------------------------------------------------------------
def _make_res_cbam_kernel(H, W, project):
    def kernel(x_ref, w1_ref, b1_ref, w2_ref, b2_ref, caw1_ref, caw2_ref,
               band_ref, *rest):
        if project:
            wres_ref, bres_ref, o_ref, pad1, ap, mp = rest
        else:
            o_ref, pad1, ap, mp = rest

        x_flat = x_ref[0]                                    # (H*W, Cin)
        Cout = o_ref.shape[1]

        # ---- conv1 (1x1) + BN1 (BN folded into w1/b1 in the wrapper) ----
        y1 = jnp.dot(x_flat, w1_ref[...],
                     preferred_element_type=jnp.float32) + b1_ref[...]   # (H*W, Cout)

        # ---- conv2 (3x3, padding=1) + BN2: in-VMEM zero padding, 9 whole-image matmuls ----
        zrow = jnp.zeros((1, W + 2, Cout), jnp.float32)
        zcol = jnp.zeros((H + 2, 1, Cout), jnp.float32)
        pad1[0:1, :, :] = zrow                               # border-only zeroing
        pad1[H + 1:H + 2, :, :] = zrow
        pad1[:, 0:1, :] = zcol
        pad1[:, W + 1:W + 2, :] = zcol
        pad1[1:H + 1, 1:W + 1, :] = y1.reshape(H, W, Cout)

        acc = jnp.zeros((H * W, Cout), jnp.float32)
        for ky in range(3):
            for kx in range(3):
                tap = pad1[ky:ky + H, kx:kx + W, :].reshape(H * W, Cout)
                acc = acc + jnp.dot(tap, w2_ref[ky, kx],
                                    preferred_element_type=jnp.float32)
        y2 = acc + b2_ref[...]                               # (H*W, Cout)

        # ---- CBAM channel attention: global avg/max pool + shared MLP + sigmoid ----
        avg_c = jnp.mean(y2, axis=0, keepdims=True)          # (1, Cout)
        max_c = jnp.max(y2, axis=0, keepdims=True)           # (1, Cout)

        def mlp(v):
            h = jnp.dot(v, caw1_ref[...], preferred_element_type=jnp.float32)
            h = jnp.maximum(h, 0.0)
            return jnp.dot(h, caw2_ref[...], preferred_element_type=jnp.float32)

        ca = jax.nn.sigmoid(mlp(avg_c) + mlp(max_c))         # (1, Cout)
        xc = y2 * ca                                         # (H*W, Cout)

        # ---- CBAM spatial attention: channel mean/max maps -> 7x7 conv via 14 banded
        #      MXU matmuls -> sigmoid. Concat channel order is [avg, max].
        # TODO(synk): some CBAM variants concatenate [max, avg]; match when loading real weights.
        xc3 = xc.reshape(H, W, Cout)
        avg_s = jnp.mean(xc3, axis=-1)                       # (H, W)
        max_s = jnp.max(xc3, axis=-1)                        # (H, W)

        zr3 = jnp.zeros((3, W + 6), jnp.float32)
        zc3 = jnp.zeros((H + 6, 3), jnp.float32)
        ap[0:3, :] = zr3
        ap[H + 3:H + 6, :] = zr3
        ap[:, 0:3] = zc3
        ap[:, W + 3:W + 6] = zc3
        ap[3:H + 3, 3:W + 3] = avg_s
        mp[0:3, :] = zr3
        mp[H + 3:H + 6, :] = zr3
        mp[:, 0:3] = zc3
        mp[:, W + 3:W + 6] = zc3
        mp[3:H + 3, 3:W + 3] = max_s

        att = jnp.zeros((H, W), jnp.float32)
        for ky in range(7):
            att = att + jnp.dot(ap[ky:ky + H, :], band_ref[ky, 0],
                                preferred_element_type=jnp.float32)
            att = att + jnp.dot(mp[ky:ky + H, :], band_ref[ky, 1],
                                preferred_element_type=jnp.float32)
        sa = jax.nn.sigmoid(att)                             # (H, W)
        xs = (xc3 * sa[:, :, None]).reshape(H * W, Cout)

        # ---- residual (optional 1x1 projection, conv+bias only, as in the spec) + LeakyReLU ----
        if project:
            res = jnp.dot(x_flat, wres_ref[...],
                          preferred_element_type=jnp.float32) + bres_ref[...]
        else:
            res = x_flat                                     # Cin == Cout
        z = xs + res
        z = jnp.where(z >= 0, z, LEAKY_SLOPE * z)

        # lane-dense channel-major store: (Cout, H*W), minor dim = H*W.
        o_ref[0] = z.T

    return kernel


# --------------------------------------------------------------------------
# Banded-matrix form of the 7x7 two-channel spatial conv:
#   band[ky, c, w + kx, w] = sa_w[ky, kx, c]
# so   att = sum_ky  pad_avg[ky:ky+H, :] @ band[ky,0] + pad_max[ky:ky+H, :] @ band[ky,1]
# --------------------------------------------------------------------------
def _build_spatial_band(sa_w, W):
    j = jnp.arange(W + 6)[:, None]           # padded column index
    w = jnp.arange(W)[None, :]               # output column index
    kx = j - w                               # tap offset, valid in [0, 7)
    valid = (kx >= 0) & (kx < 7)
    g = sa_w[:, jnp.clip(kx, 0, 6), :]       # (7, W+6, W, 2)
    band = jnp.where(valid[None, :, :, None], g, 0.0)
    return jnp.transpose(band, (0, 3, 1, 2)) # (7, 2, W+6, W)


def fold_bn(gamma, beta, mean, var, eps=BN_EPS):
    scale = gamma / jnp.sqrt(var + eps)
    shift = beta - mean * scale
    return scale, shift


# --------------------------------------------------------------------------
# Parameters (deterministic kaiming_normal_(a=1) -> std = 1/sqrt(fan_in),
# conv biases zero, BN gamma=1 / beta=0 / running stats = (0, 1)).
# --------------------------------------------------------------------------
def make_params(key, cin, cout, ratio):
    hidden = max(cout // ratio, 1)
    ks = jax.random.split(key, 6)

    def kaiming(k, shape, fan_in):
        return jax.random.normal(k, shape, jnp.float32) / jnp.sqrt(float(fan_in))

    p = {
        "conv1_w": kaiming(ks[0], (cin, cout), cin),               # 1x1 conv (Cin, Cout)
        "conv1_b": jnp.zeros((cout,), jnp.float32),
        "conv2_w": kaiming(ks[1], (3, 3, cout, cout), cout * 9),   # 3x3 conv (HWIO)
        "conv2_b": jnp.zeros((cout,), jnp.float32),
        "ca_w1": kaiming(ks[2], (cout, hidden), cout),             # channel-attn fc1
        "ca_w2": kaiming(ks[3], (hidden, cout), hidden),           # channel-attn fc2
        "sa_w": kaiming(ks[4], (7, 7, 2), 2 * 49),                 # spatial 7x7, ch0=avg ch1=max
        "conv1x1_w": kaiming(ks[5], (cin, cout), cin),             # residual projection
        "conv1x1_b": jnp.zeros((cout,), jnp.float32),
    }
    for name in ("bn1", "bn2"):
        p[name] = dict(gamma=jnp.ones((cout,), jnp.float32),
                       beta=jnp.zeros((cout,), jnp.float32),
                       mean=jnp.zeros((cout,), jnp.float32),
                       var=jnp.ones((cout,), jnp.float32))
    return p


# --------------------------------------------------------------------------
# Forward (NCHW in / NCHW out, matching the PyTorch module).
# --------------------------------------------------------------------------
def res_cbam_forward(x_nchw, params, in_channels, out_channels):
    N, Cin, H, W = x_nchw.shape
    Cout = out_channels
    hidden = params["ca_w1"].shape[1]
    project = in_channels != out_channels

    # NCHW -> flat (n, h*W + w, c) rows for the 1x1 matmuls (small, one-time layout op).
    x_flat = jnp.transpose(x_nchw, (0, 2, 3, 1)).astype(jnp.float32).reshape(N, H * W, Cin)

    # Fold eval-mode BatchNorm into the conv weights / biases.
    s1, sh1 = fold_bn(**params["bn1"])
    s2, sh2 = fold_bn(**params["bn2"])
    w1 = params["conv1_w"] * s1[None, :]
    b1 = (params["conv1_b"] * s1 + sh1).reshape(1, Cout)
    w2 = params["conv2_w"] * s2[None, None, None, :]
    b2 = (params["conv2_b"] * s2 + sh2).reshape(1, Cout)
    band = _build_spatial_band(params["sa_w"], W)

    inputs = [x_flat, w1, b1, w2, b2, params["ca_w1"], params["ca_w2"], band]
    in_specs = [
        pl.BlockSpec((1, H * W, Cin), lambda n: (n, 0, 0)),
        pl.BlockSpec((Cin, Cout), lambda n: (0, 0)),
        pl.BlockSpec((1, Cout), lambda n: (0, 0)),
        pl.BlockSpec((3, 3, Cout, Cout), lambda n: (0, 0, 0, 0)),
        pl.BlockSpec((1, Cout), lambda n: (0, 0)),
        pl.BlockSpec((Cout, hidden), lambda n: (0, 0)),
        pl.BlockSpec((hidden, Cout), lambda n: (0, 0)),
        pl.BlockSpec((7, 2, W + 6, W), lambda n: (0, 0, 0, 0)),
    ]
    if project:
        inputs += [params["conv1x1_w"], params["conv1x1_b"].reshape(1, Cout)]
        in_specs += [pl.BlockSpec((Cin, Cout), lambda n: (0, 0)),
                     pl.BlockSpec((1, Cout), lambda n: (0, 0))]

    kernel = _make_res_cbam_kernel(H, W, project)
    out = pl.pallas_call(
        kernel,
        out_shape=jax.ShapeDtypeStruct((N, Cout, H * W), jnp.float32),
        grid=(N,),
        in_specs=in_specs,
        out_specs=pl.BlockSpec((1, Cout, H * W), lambda n: (n, 0, 0)),
        scratch_shapes=[pltpu.VMEM((H + 2, W + 2, Cout), jnp.float32),   # conv3x3 zero-pad
                        pltpu.VMEM((H + 6, W + 6), jnp.float32),         # avg map, 3-pad
                        pltpu.VMEM((H + 6, W + 6), jnp.float32)],        # max map, 3-pad
        compiler_params=pltpu.CompilerParams(
            dimension_semantics=("parallel",),
            vmem_limit_bytes=32 * 1024 * 1024),
    )(*inputs)

    # Channel-major flat output -> NCHW is a free metadata reshape (no transpose pass).
    return out.reshape(N, Cout, H, W)


if __name__ == "__main__":
    key = jax.random.PRNGKey(0)
    k_x, k_p, k_x2, k_p2 = jax.random.split(key, 4)

    # ResCBAM(in_channels=4, out_channels=16, ratio=4) on a (2, 4, 16, 16) input.
    N, Cin, H, W = 2, 4, 16, 16
    Cout, ratio = 16, 4

    x = jax.random.normal(k_x, (N, Cin, H, W), jnp.float32)
    params = make_params(k_p, Cin, Cout, ratio)
    out = jax.block_until_ready(res_cbam_forward(x, params, Cin, Cout))
    assert out.shape == (N, Cout, H, W), out.shape
    assert bool(jnp.all(jnp.isfinite(out)))

    # Identity-shortcut branch (in_channels == out_channels, no 1x1 projection).
    x2 = jax.random.normal(k_x2, (N, Cout, H, W), jnp.float32)
    params2 = make_params(k_p2, Cout, Cout, ratio)
    out2 = jax.block_until_ready(res_cbam_forward(x2, params2, Cout, Cout))
    assert out2.shape == (N, Cout, H, W), out2.shape
    assert bool(jnp.all(jnp.isfinite(out2)))

    print("KERNEL_OK")
</pallas_src>

<mosaic_0001>
module attributes {stable_mosaic.version = 11 : i64} {
  func.func @kernel(%arg0: i32, %arg1: memref<1x256x4xf32, #tpu.memory_space<vmem>>, %arg2: memref<4x16xf32, #tpu.memory_space<vmem>>, %arg3: memref<1x16xf32, #tpu.memory_space<vmem>>, %arg4: memref<3x3x16x16xf32, #tpu.memory_space<vmem>>, %arg5: memref<1x16xf32, #tpu.memory_space<vmem>>, %arg6: memref<16x4xf32, #tpu.memory_space<vmem>>, %arg7: memref<4x16xf32, #tpu.memory_space<vmem>>, %arg8: memref<7x2x22x16xf32, #tpu.memory_space<vmem>>, %arg9: memref<4x16xf32, #tpu.memory_space<vmem>>, %arg10: memref<1x16xf32, #tpu.memory_space<vmem>>, %arg11: memref<1x16x256xf32, #tpu.memory_space<vmem>>, %arg12: memref<18x18x16xf32, #tpu.memory_space<vmem>>, %arg13: memref<22x22xf32, #tpu.memory_space<vmem>>, %arg14: memref<22x22xf32, #tpu.memory_space<vmem>>) attributes {dimension_semantics = [#tpu.dimension_semantics<parallel>], iteration_bounds = array<i64: 2>, scalar_prefetch = 0 : i64, scratch_operands = 3 : i64, tpu.core_type = #tpu.core_type<tc>, window_params = [{transform_indices = @transform_0, window_bounds = array<i64: 1, 256, 4>}, {pipeline_mode = #tpu.pipeline_mode<synchronous>, transform_indices = @transform_1, window_bounds = array<i64: 4, 16>}, {pipeline_mode = #tpu.pipeline_mode<synchronous>, transform_indices = @transform_2, window_bounds = array<i64: 1, 16>}, {pipeline_mode = #tpu.pipeline_mode<synchronous>, transform_indices = @transform_3, window_bounds = array<i64: 3, 3, 16, 16>}, {pipeline_mode = #tpu.pipeline_mode<synchronous>, transform_indices = @transform_4, window_bounds = array<i64: 1, 16>}, {pipeline_mode = #tpu.pipeline_mode<synchronous>, transform_indices = @transform_5, window_bounds = array<i64: 16, 4>}, {pipeline_mode = #tpu.pipeline_mode<synchronous>, transform_indices = @transform_6, window_bounds = array<i64: 4, 16>}, {pipeline_mode = #tpu.pipeline_mode<synchronous>, transform_indices = @transform_7, window_bounds = array<i64: 7, 2, 22, 16>}, {pipeline_mode = #tpu.pipeline_mode<synchronous>, transform_indices = @transform_8, window_bounds = array<i64: 4, 16>}, {pipeline_mode = #tpu.pipeline_mode<synchronous>, transform_indices = @transform_9, window_bounds = array<i64: 1, 16>}, {transform_indices = @transform_10, window_bounds = array<i64: 1, 16, 256>}]} {
    %c0 = arith.constant 0 : index
    %c0_0 = arith.constant 0 : index
    %c0_1 = arith.constant 0 : index
    %0 = vector.load %arg1[%c0, %c0_0, %c0_1] : memref<1x256x4xf32, #tpu.memory_space<vmem>>, vector<1x256x4xf32>
    %1 = vector.shape_cast %0 : vector<1x256x4xf32> to vector<256x4xf32>
    %c0_2 = arith.constant 0 : index
    %c0_3 = arith.constant 0 : index
    %2 = vector.load %arg2[%c0_2, %c0_3] : memref<4x16xf32, #tpu.memory_space<vmem>>, vector<4x16xf32>
    %cst = arith.constant dense<0.000000e+00> : vector<256x16xf32>
    %3 = tpu.matmul %1, %2, %cst {dimension_numbers = #tpu.dot_dimension_numbers<[1], [0], [0], [1], [0, 0, 1, 1], [], []>} : vector<256x4xf32>, vector<4x16xf32>, vector<256x16xf32> -> vector<256x16xf32>
    %c0_4 = arith.constant 0 : index
    %c0_5 = arith.constant 0 : index
    %4 = vector.load %arg3[%c0_4, %c0_5] : memref<1x16xf32, #tpu.memory_space<vmem>>, vector<1x16xf32>
    %5 = vector.broadcast %4 : vector<1x16xf32> to vector<256x16xf32>
    %6 = arith.addf %3, %5 : vector<256x16xf32>
    %cst_6 = arith.constant 0.000000e+00 : f32
    %7 = vector.broadcast %cst_6 : f32 to vector<1x18x16xf32>
    %cst_7 = arith.constant 0.000000e+00 : f32
    %8 = vector.broadcast %cst_7 : f32 to vector<18x1x16xf32>
    %c0_8 = arith.constant 0 : index
    %c0_9 = arith.constant 0 : index
    %c0_10 = arith.constant 0 : index
    %9 = vector.load %arg12[%c0_8, %c0_9, %c0_10] : memref<18x18x16xf32, #tpu.memory_space<vmem>>, vector<1x18x16xf32>
    tpu.vector_store %arg12[%c0_8, %c0_9, %c0_10], %7 {strides = array<i32>} : memref<18x18x16xf32, #tpu.memory_space<vmem>>, vector<1x18x16xf32>,
    %c17 = arith.constant 17 : index
    %c0_11 = arith.constant 0 : index
    %c0_12 = arith.constant 0 : index
    %10 = vector.load %arg12[%c17, %c0_11, %c0_12] : memref<18x18x16xf32, #tpu.memory_space<vmem>>, vector<1x18x16xf32>
    tpu.vector_store %arg12[%c17, %c0_11, %c0_12], %7 {strides = array<i32>} : memref<18x18x16xf32, #tpu.memory_space<vmem>>, vector<1x18x16xf32>,
    %c0_13 = arith.constant 0 : index
    %c0_14 = arith.constant 0 : index
    %c0_15 = arith.constant 0 : index
    %11 = vector.load %arg12[%c0_13, %c0_14, %c0_15] : memref<18x18x16xf32, #tpu.memory_space<vmem>>, vector<18x1x16xf32>
    tpu.vector_store %arg12[%c0_13, %c0_14, %c0_15], %8 {strides = array<i32>} : memref<18x18x16xf32, #tpu.memory_space<vmem>>, vector<18x1x16xf32>,
    %c0_16 = arith.constant 0 : index
    %c17_17 = arith.constant 17 : index
    %c0_18 = arith.constant 0 : index
    %12 = vector.load %arg12[%c0_16, %c17_17, %c0_18] : memref<18x18x16xf32, #tpu.memory_space<vmem>>, vector<18x1x16xf32>
    tpu.vector_store %arg12[%c0_16, %c17_17, %c0_18], %8 {strides = array<i32>} : memref<18x18x16xf32, #tpu.memory_space<vmem>>, vector<18x1x16xf32>,
    %13 = vector.shape_cast %6 : vector<256x16xf32> to vector<16x16x16xf32>
    %c1 = arith.constant 1 : index
    %c1_19 = arith.constant 1 : index
    %c0_20 = arith.constant 0 : index
    %14 = vector.load %arg12[%c1, %c1_19, %c0_20] : memref<18x18x16xf32, #tpu.memory_space<vmem>>, vector<16x16x16xf32>
    tpu.vector_store %arg12[%c1, %c1_19, %c0_20], %13 {strides = array<i32>} : memref<18x18x16xf32, #tpu.memory_space<vmem>>, vector<16x16x16xf32>,
    %cst_21 = arith.constant 0.000000e+00 : f32
    %15 = vector.broadcast %cst_21 : f32 to vector<256x16xf32>
    %c0_22 = arith.constant 0 : index
    %c0_23 = arith.constant 0 : index
    %c0_24 = arith.constant 0 : index
    %16 = vector.load %arg12[%c0_22, %c0_23, %c0_24] : memref<18x18x16xf32, #tpu.memory_space<vmem>>, vector<16x16x16xf32>
    %17 = vector.shape_cast %16 : vector<16x16x16xf32> to vector<256x16xf32>
    %c0_25 = arith.constant 0 : index
    %c0_26 = arith.constant 0 : index
    %c0_27 = arith.constant 0 : index
    %c0_28 = arith.constant 0 : index
    %18 = vector.load %arg4[%c0_25, %c0_26, %c0_27, %c0_28] : memref<3x3x16x16xf32, #tpu.memory_space<vmem>>, vector<1x1x16x16xf32>
    %19 = vector.shape_cast %18 : vector<1x1x16x16xf32> to vector<16x16xf32>
    %cst_29 = arith.constant dense<0.000000e+00> : vector<256x16xf32>
    %20 = tpu.matmul %17, %19, %cst_29 {dimension_numbers = #tpu.dot_dimension_numbers<[1], [0], [0], [1], [0, 0, 1, 1], [], []>} : vector<256x16xf32>, vector<16x16xf32>, vector<256x16xf32> -> vector<256x16xf32>
    %21 = arith.addf %15, %20 : vector<256x16xf32>
    %c0_30 = arith.constant 0 : index
    %c1_31 = arith.constant 1 : index
    %c0_32 = arith.constant 0 : index
    %22 = vector.load %arg12[%c0_30, %c1_31, %c0_32] : memref<18x18x16xf32, #tpu.memory_space<vmem>>, vector<16x16x16xf32>
    %23 = vector.shape_cast %22 : vector<16x16x16xf32> to vector<256x16xf32>
    %c0_33 = arith.constant 0 : index
    %c1_34 = arith.constant 1 : index
    %c0_35 = arith.constant 0 : index
    %c0_36 = arith.constant 0 : index
    %24 = vector.load %arg4[%c0_33, %c1_34, %c0_35, %c0_36] : memref<3x3x16x16xf32, #tpu.memory_space<vmem>>, vector<1x1x16x16xf32>
    %25 = vector.shape_cast %24 : vector<1x1x16x16xf32> to vector<16x16xf32>
    %cst_37 = arith.constant dense<0.000000e+00> : vector<256x16xf32>
    %26 = tpu.matmul %23, %25, %cst_37 {dimension_numbers = #tpu.dot_dimension_numbers<[1], [0], [0], [1], [0, 0, 1, 1], [], []>} : vector<256x16xf32>, vector<16x16xf32>, vector<256x16xf32> -> vector<256x16xf32>
    %27 = arith.addf %21, %26 : vector<256x16xf32>
    %c0_38 = arith.constant 0 : index
    %c2 = arith.constant 2 : index
    %c0_39 = arith.constant 0 : index
    %28 = vector.load %arg12[%c0_38, %c2, %c0_39] : memref<18x18x16xf32, #tpu.memory_space<vmem>>, vector<16x16x16xf32>
    %29 = vector.shape_cast %28 : vector<16x16x16xf32> to vector<256x16xf32>
    %c0_40 = arith.constant 0 : index
    %c2_41 = arith.constant 2 : index
    %c0_42 = arith.constant 0 : index
    %c0_43 = arith.constant 0 : index
    %30 = vector.load %arg4[%c0_40, %c2_41, %c0_42, %c0_43] : memref<3x3x16x16xf32, #tpu.memory_space<vmem>>, vector<1x1x16x16xf32>
    %31 = vector.shape_cast %30 : vector<1x1x16x16xf32> to vector<16x16xf32>
    %cst_44 = arith.constant dense<0.000000e+00> : vector<256x16xf32>
    %32 = tpu.matmul %29, %31, %cst_44 {dimension_numbers = #tpu.dot_dimension_numbers<[1], [0], [0], [1], [0, 0, 1, 1], [], []>} : vector<256x16xf32>, vector<16x16xf32>, vector<256x16xf32> -> vector<256x16xf32>
    %33 = arith.addf %27, %32 : vector<256x16xf32>
    %c1_45 = arith.constant 1 : index
    %c0_46 = arith.constant 0 : index
    %c0_47 = arith.constant 0 : index
    %34 = vector.load %arg12[%c1_45, %c0_46, %c0_47] : memref<18x18x16xf32, #tpu.memory_space<vmem>>, vector<16x16x16xf32>
    %35 = vector.shape_cast %34 : vector<16x16x16xf32> to vector<256x16xf32>
    %c1_48 = arith.constant 1 : index
    %c0_49 = arith.constant 0 : index
    %c0_50 = arith.constant 0 : index
    %c0_51 = arith.constant 0 : index
    %36 = vector.load %arg4[%c1_48, %c0_49, %c0_50, %c0_51] : memref<3x3x16x16xf32, #tpu.memory_space<vmem>>, vector<1x1x16x16xf32>
    %37 = vector.shape_cast %36 : vector<1x1x16x16xf32> to vector<16x16xf32>
    %cst_52 = arith.constant dense<0.000000e+00> : vector<256x16xf32>
    %38 = tpu.matmul %35, %37, %cst_52 {dimension_numbers = #tpu.dot_dimension_numbers<[1], [0], [0], [1], [0, 0, 1, 1], [], []>} : vector<256x16xf32>, vector<16x16xf32>, vector<256x16xf32> -> vector<256x16xf32>
    %39 = arith.addf %33, %38 : vector<256x16xf32>
    %c1_53 = arith.constant 1 : index
    %c1_54 = arith.constant 1 : index
    %c0_55 = arith.constant 0 : index
    %40 = vector.load %arg12[%c1_53, %c1_54, %c0_55] : memref<18x18x16xf32, #tpu.memory_space<vmem>>, vector<16x16x16xf32>
    %41 = vector.shape_cast %40 : vector<16x16x16xf32> to vector<256x16xf32>
    %c1_56 = arith.constant 1 : index
    %c1_57 = arith.constant 1 : index
    %c0_58 = arith.constant 0 : index
    %c0_59 = arith.constant 0 : index
    %42 = vector.load %arg4[%c1_56, %c1_57, %c0_58, %c0_59] : memref<3x3x16x16xf32, #tpu.memory_space<vmem>>, vector<1x1x16x16xf32>
    %43 = vector.shape_cast %42 : vector<1x1x16x16xf32> to vector<16x16xf32>
    %cst_60 = arith.constant dense<0.000000e+00> : vector<256x16xf32>
    %44 = tpu.matmul %41, %43, %cst_60 {dimension_numbers = #tpu.dot_dimension_numbers<[1], [0], [0], [1], [0, 0, 1, 1], [], []>} : vector<256x16xf32>, vector<16x16xf32>, vector<256x16xf32> -> vector<256x16xf32>
    %45 = arith.addf %39, %44 : vector<256x16xf32>
    %c1_61 = arith.constant 1 : index
    %c2_62 = arith.constant 2 : index
    %c0_63 = arith.constant 0 : index
    %46 = vector.load %arg12[%c1_61, %c2_62, %c0_63] : memref<18x18x16xf32, #tpu.memory_space<vmem>>, vector<16x16x16xf32>
    %47 = vector.shape_cast %46 : vector<16x16x16xf32> to vector<256x16xf32>
    %c1_64 = arith.constant 1 : index
    %c2_65 = arith.constant 2 : index
    %c0_66 = arith.constant 0 : index
    %c0_67 = arith.constant 0 : index
    %48 = vector.load %arg4[%c1_64, %c2_65, %c0_66, %c0_67] : memref<3x3x16x16xf32, #tpu.memory_space<vmem>>, vector<1x1x16x16xf32>
    %49 = vector.shape_cast %48 : vector<1x1x16x16xf32> to vector<16x16xf32>
    %cst_68 = arith.constant dense<0.000000e+00> : vector<256x16xf32>
    %50 = tpu.matmul %47, %49, %cst_68 {dimension_numbers = #tpu.dot_dimension_numbers<[1], [0], [0], [1], [0, 0, 1, 1], [], []>} : vector<256x16xf32>, vector<16x16xf32>, vector<256x16xf32> -> vector<256x16xf32>
    %51 = arith.addf %45, %50 : vector<256x16xf32>
    %c2_69 = arith.constant 2 : index
    %c0_70 = arith.constant 0 : index
    %c0_71 = arith.constant 0 : index
    %52 = vector.load %arg12[%c2_69, %c0_70, %c0_71] : memref<18x18x16xf32, #tpu.memory_space<vmem>>, vector<16x16x16xf32>
    %53 = vector.shape_cast %52 : vector<16x16x16xf32> to vector<256x16xf32>
    %c2_72 = arith.constant 2 : index
    %c0_73 = arith.constant 0 : index
    %c0_74 = arith.constant 0 : index
    %c0_75 = arith.constant 0 : index
    %54 = vector.load %arg4[%c2_72, %c0_73, %c0_74, %c0_75] : memref<3x3x16x16xf32, #tpu.memory_space<vmem>>, vector<1x1x16x16xf32>
    %55 = vector.shape_cast %54 : vector<1x1x16x16xf32> to vector<16x16xf32>
    %cst_76 = arith.constant dense<0.000000e+00> : vector<256x16xf32>
    %56 = tpu.matmul %53, %55, %cst_76 {dimension_numbers = #tpu.dot_dimension_numbers<[1], [0], [0], [1], [0, 0, 1, 1], [], []>} : vector<256x16xf32>, vector<16x16xf32>, vector<256x16xf32> -> vector<256x16xf32>
    %57 = arith.addf %51, %56 : vector<256x16xf32>
    %c2_77 = arith.constant 2 : index
    %c1_78 = arith.constant 1 : index
    %c0_79 = arith.constant 0 : index
    %58 = vector.load %arg12[%c2_77, %c1_78, %c0_79] : memref<18x18x16xf32, #tpu.memory_space<vmem>>, vector<16x16x16xf32>
    %59 = vector.shape_cast %58 : vector<16x16x16xf32> to vector<256x16xf32>
    %c2_80 = arith.constant 2 : index
    %c1_81 = arith.constant 1 : index
    %c0_82 = arith.constant 0 : index
    %c0_83 = arith.constant 0 : index
    %60 = vector.load %arg4[%c2_80, %c1_81, %c0_82, %c0_83] : memref<3x3x16x16xf32, #tpu.memory_space<vmem>>, vector<1x1x16x16xf32>
    %61 = vector.shape_cast %60 : vector<1x1x16x16xf32> to vector<16x16xf32>
    %cst_84 = arith.constant dense<0.000000e+00> : vector<256x16xf32>
    %62 = tpu.matmul %59, %61, %cst_84 {dimension_numbers = #tpu.dot_dimension_numbers<[1], [0], [0], [1], [0, 0, 1, 1], [], []>} : vector<256x16xf32>, vector<16x16xf32>, vector<256x16xf32> -> vector<256x16xf32>
    %63 = arith.addf %57, %62 : vector<256x16xf32>
    %c2_85 = arith.constant 2 : index
    %c2_86 = arith.constant 2 : index
    %c0_87 = arith.constant 0 : index
    %64 = vector.load %arg12[%c2_85, %c2_86, %c0_87] : memref<18x18x16xf32, #tpu.memory_space<vmem>>, vector<16x16x16xf32>
    %65 = vector.shape_cast %64 : vector<16x16x16xf32> to vector<256x16xf32>
    %c2_88 = arith.constant 2 : index
    %c2_89 = arith.constant 2 : index
    %c0_90 = arith.constant 0 : index
    %c0_91 = arith.constant 0 : index
    %66 = vector.load %arg4[%c2_88, %c2_89, %c0_90, %c0_91] : memref<3x3x16x16xf32, #tpu.memory_space<vmem>>, vector<1x1x16x16xf32>
    %67 = vector.shape_cast %66 : vector<1x1x16x16xf32> to vector<16x16xf32>
    %cst_92 = arith.constant dense<0.000000e+00> : vector<256x16xf32>
    %68 = tpu.matmul %65, %67, %cst_92 {dimension_numbers = #tpu.dot_dimension_numbers<[1], [0], [0], [1], [0, 0, 1, 1], [], []>} : vector<256x16xf32>, vector<16x16xf32>, vector<256x16xf32> -> vector<256x16xf32>
    %69 = arith.addf %63, %68 : vector<256x16xf32>
    %c0_93 = arith.constant 0 : index
    %c0_94 = arith.constant 0 : index
    %70 = vector.load %arg5[%c0_93, %c0_94] : memref<1x16xf32, #tpu.memory_space<vmem>>, vector<1x16xf32>
    %71 = vector.broadcast %70 : vector<1x16xf32> to vector<256x16xf32>
    %72 = arith.addf %69, %71 : vector<256x16xf32>
    %cst_95 = arith.constant dense<0.000000e+00> : vector<16xf32>
    %73 = vector.multi_reduction <add>, %72, %cst_95 [0] : vector<256x16xf32> to vector<16xf32>
    %74 = vector.shape_cast %73 : vector<16xf32> to vector<1x16xf32>
    %cst_96 = arith.constant 2.560000e+02 : f32
    %75 = vector.broadcast %cst_96 : f32 to vector<1x16xf32>
    %76 = arith.divf %74, %75 : vector<1x16xf32>
    %cst_97 = arith.constant dense<0xFF800000> : vector<16xf32>
    %77 = vector.multi_reduction <maximumf>, %72, %cst_97 [0] : vector<256x16xf32> to vector<16xf32>
    %78 = vector.shape_cast %77 : vector<16xf32> to vector<1x16xf32>
    %c0_98 = arith.constant 0 : index
    %c0_99 = arith.constant 0 : index
    %79 = vector.load %arg6[%c0_98, %c0_99] : memref<16x4xf32, #tpu.memory_space<vmem>>, vector<16x4xf32>
    %cst_100 = arith.constant dense<0.000000e+00> : vector<1x4xf32>
    %80 = tpu.matmul %76, %79, %cst_100 {dimension_numbers = #tpu.dot_dimension_numbers<[1], [0], [0], [1], [0, 0, 1, 1], [], []>} : vector<1x16xf32>, vector<16x4xf32>, vector<1x4xf32> -> vector<1x4xf32>
    %cst_101 = arith.constant 0.000000e+00 : f32
    %81 = vector.broadcast %cst_101 : f32 to vector<1x4xf32>
    %82 = arith.maximumf %80, %81 : vector<1x4xf32>
    %c0_102 = arith.constant 0 : index
    %c0_103 = arith.constant 0 : index
    %83 = vector.load %arg7[%c0_102, %c0_103] : memref<4x16xf32, #tpu.memory_space<vmem>>, vector<4x16xf32>
    %cst_104 = arith.constant dense<0.000000e+00> : vector<1x16xf32>
    %84 = tpu.matmul %82, %83, %cst_104 {dimension_numbers = #tpu.dot_dimension_numbers<[1], [0], [0], [1], [0, 0, 1, 1], [], []>} : vector<1x4xf32>, vector<4x16xf32>, vector<1x16xf32> -> vector<1x16xf32>
    %c0_105 = arith.constant 0 : index
    %c0_106 = arith.constant 0 : index
    %85 = vector.load %arg6[%c0_105, %c0_106] : memref<16x4xf32, #tpu.memory_space<vmem>>, vector<16x4xf32>
    %cst_107 = arith.constant dense<0.000000e+00> : vector<1x4xf32>
    %86 = tpu.matmul %78, %85, %cst_107 {dimension_numbers = #tpu.dot_dimension_numbers<[1], [0], [0], [1], [0, 0, 1, 1], [], []>} : vector<1x16xf32>, vector<16x4xf32>, vector<1x4xf32> -> vector<1x4xf32>
    %cst_108 = arith.constant 0.000000e+00 : f32
    %87 = vector.broadcast %cst_108 : f32 to vector<1x4xf32>
    %88 = arith.maximumf %86, %87 : vector<1x4xf32>
    %c0_109 = arith.constant 0 : index
    %c0_110 = arith.constant 0 : index
    %89 = vector.load %arg7[%c0_109, %c0_110] : memref<4x16xf32, #tpu.memory_space<vmem>>, vector<4x16xf32>
    %cst_111 = arith.constant dense<0.000000e+00> : vector<1x16xf32>
    %90 = tpu.matmul %88, %89, %cst_111 {dimension_numbers = #tpu.dot_dimension_numbers<[1], [0], [0], [1], [0, 0, 1, 1], [], []>} : vector<1x4xf32>, vector<4x16xf32>, vector<1x16xf32> -> vector<1x16xf32>
    %91 = arith.addf %84, %90 : vector<1x16xf32>
    %92 = arith.negf %91 : vector<1x16xf32>
    %93 = math.exp %92 : vector<1x16xf32>
    %cst_112 = arith.constant 1.000000e+00 : f32
    %94 = vector.broadcast %cst_112 : f32 to vector<1x16xf32>
    %95 = arith.addf %94, %93 : vector<1x16xf32>
    %96 = arith.divf %94, %95 : vector<1x16xf32>
    %97 = vector.broadcast %96 : vector<1x16xf32> to vector<256x16xf32>
    %98 = arith.mulf %72, %97 : vector<256x16xf32>
    %99 = vector.shape_cast %98 : vector<256x16xf32> to vector<16x16x16xf32>
    %cst_113 = arith.constant dense<0.000000e+00> : vector<16x16xf32>
    %100 = vector.multi_reduction <add>, %99, %cst_113 [2] : vector<16x16x16xf32> to vector<16x16xf32>
    %cst_114 = arith.constant 1.600000e+01 : f32
    %101 = vector.broadcast %cst_114 : f32 to vector<16x16xf32>
    %102 = arith.divf %100, %101 : vector<16x16xf32>
    %cst_115 = arith.constant dense<0xFF800000> : vector<16x16xf32>
    %103 = vector.multi_reduction <maximumf>, %99, %cst_115 [2] : vector<16x16x16xf32> to vector<16x16xf32>
    %cst_116 = arith.constant 0.000000e+00 : f32
    %104 = vector.broadcast %cst_116 : f32 to vector<3x22xf32>
    %cst_117 = arith.constant 0.000000e+00 : f32
    %105 = vector.broadcast %cst_117 : f32 to vector<22x3xf32>
    %c0_118 = arith.constant 0 : index
    %c0_119 = arith.constant 0 : index
    %106 = vector.load %arg13[%c0_118, %c0_119] : memref<22x22xf32, #tpu.memory_space<vmem>>, vector<3x22xf32>
    tpu.vector_store %arg13[%c0_118, %c0_119], %104 {strides = array<i32>} : memref<22x22xf32, #tpu.memory_space<vmem>>, vector<3x22xf32>,
    %c19 = arith.constant 19 : index
    %c0_120 = arith.constant 0 : index
    %107 = vector.load %arg13[%c19, %c0_120] : memref<22x22xf32, #tpu.memory_space<vmem>>, vector<3x22xf32>
    tpu.vector_store %arg13[%c19, %c0_120], %104 {strides = array<i32>} : memref<22x22xf32, #tpu.memory_space<vmem>>, vector<3x22xf32>,
    %c0_121 = arith.constant 0 : index
    %c0_122 = arith.constant 0 : index
    %108 = vector.load %arg13[%c0_121, %c0_122] : memref<22x22xf32, #tpu.memory_space<vmem>>, vector<22x3xf32>
    tpu.vector_store %arg13[%c0_121, %c0_122], %105 {strides = array<i32>} : memref<22x22xf32, #tpu.memory_space<vmem>>, vector<22x3xf32>,
    %c0_123 = arith.constant 0 : index
    %c19_124 = arith.constant 19 : index
    %109 = vector.load %arg13[%c0_123, %c19_124] : memref<22x22xf32, #tpu.memory_space<vmem>>, vector<22x3xf32>
    tpu.vector_store %arg13[%c0_123, %c19_124], %105 {strides = array<i32>} : memref<22x22xf32, #tpu.memory_space<vmem>>, vector<22x3xf32>,
    %c3 = arith.constant 3 : index
    %c3_125 = arith.constant 3 : index
    %110 = vector.load %arg13[%c3, %c3_125] : memref<22x22xf32, #tpu.memory_space<vmem>>, vector<16x16xf32>
    tpu.vector_store %arg13[%c3, %c3_125], %102 {strides = array<i32>} : memref<22x22xf32, #tpu.memory_space<vmem>>, vector<16x16xf32>,
    %c0_126 = arith.constant 0 : index
    %c0_127 = arith.constant 0 : index
    %111 = vector.load %arg14[%c0_126, %c0_127] : memref<22x22xf32, #tpu.memory_space<vmem>>, vector<3x22xf32>
    tpu.vector_store %arg14[%c0_126, %c0_127], %104 {strides = array<i32>} : memref<22x22xf32, #tpu.memory_space<vmem>>, vector<3x22xf32>,
    %c19_128 = arith.constant 19 : index
    %c0_129 = arith.constant 0 : index
    %112 = vector.load %arg14[%c19_128, %c0_129] : memref<22x22xf32, #tpu.memory_space<vmem>>, vector<3x22xf32>
    tpu.vector_store %arg14[%c19_128, %c0_129], %104 {strides = array<i32>} : memref<22x22xf32, #tpu.memory_space<vmem>>, vector<3x22xf32>,
    %c0_130 = arith.constant 0 : index
    %c0_131 = arith.constant 0 : index
    %113 = vector.load %arg14[%c0_130, %c0_131] : memref<22x22xf32, #tpu.memory_space<vmem>>, vector<22x3xf32>
    tpu.vector_store %arg14[%c0_130, %c0_131], %105 {strides = array<i32>} : memref<22x22xf32, #tpu.memory_space<vmem>>, vector<22x3xf32>,
    %c0_132 = arith.constant 0 : index
    %c19_133 = arith.constant 19 : index
    %114 = vector.load %arg14[%c0_132, %c19_133] : memref<22x22xf32, #tpu.memory_space<vmem>>, vector<22x3xf32>
    tpu.vector_store %arg14[%c0_132, %c19_133], %105 {strides = array<i32>} : memref<22x22xf32, #tpu.memory_space<vmem>>, vector<22x3xf32>,
    %c3_134 = arith.constant 3 : index
    %c3_135 = arith.constant 3 : index
    %115 = vector.load %arg14[%c3_134, %c3_135] : memref<22x22xf32, #tpu.memory_space<vmem>>, vector<16x16xf32>
    tpu.vector_store %arg14[%c3_134, %c3_135], %103 {strides = array<i32>} : memref<22x22xf32, #tpu.memory_space<vmem>>, vector<16x16xf32>,
    %cst_136 = arith.constant 0.000000e+00 : f32
    %116 = vector.broadcast %cst_136 : f32 to vector<16x16xf32>
    %c0_137 = arith.constant 0 : index
    %c0_138 = arith.constant 0 : index
    %117 = vector.load %arg13[%c0_137, %c0_138] : memref<22x22xf32, #tpu.memory_space<vmem>>, vector<16x22xf32>
    %c0_139 = arith.constant 0 : index
    %c0_140 = arith.constant 0 : index
    %c0_141 = arith.constant 0 : index
    %c0_142 = arith.constant 0 : index
    %118 = vector.load %arg8[%c0_139, %c0_140, %c0_141, %c0_142] : memref<7x2x22x16xf32, #tpu.memory_space<vmem>>, vector<1x1x22x16xf32>
    %119 = vector.shape_cast %118 : vector<1x1x22x16xf32> to vector<22x16xf32>
    %cst_143 = arith.constant dense<0.000000e+00> : vector<16x16xf32>
    %120 = tpu.matmul %117, %119, %cst_143 {dimension_numbers = #tpu.dot_dimension_numbers<[1], [0], [0], [1], [0, 0, 1, 1], [], []>} : vector<16x22xf32>, vector<22x16xf32>, vector<16x16xf32> -> vector<16x16xf32>
    %121 = arith.addf %116, %120 : vector<16x16xf32>
    %c0_144 = arith.constant 0 : index
    %c0_145 = arith.constant 0 : index
    %122 = vector.load %arg14[%c0_144, %c0_145] : memref<22x22xf32, #tpu.memory_space<vmem>>, vector<16x22xf32>
    %c0_146 = arith.constant 0 : index
    %c1_147 = arith.constant 1 : index
    %c0_148 = arith.constant 0 : index
    %c0_149 = arith.constant 0 : index
    %123 = vector.load %arg8[%c0_146, %c1_147, %c0_148, %c0_149] : memref<7x2x22x16xf32, #tpu.memory_space<vmem>>, vector<1x1x22x16xf32>
    %124 = vector.shape_cast %123 : vector<1x1x22x16xf32> to vector<22x16xf32>
    %cst_150 = arith.constant dense<0.000000e+00> : vector<16x16xf32>
    %125 = tpu.matmul %122, %124, %cst_150 {dimension_numbers = #tpu.dot_dimension_numbers<[1], [0], [0], [1], [0, 0, 1, 1], [], []>} : vector<16x22xf32>, vector<22x16xf32>, vector<16x16xf32> -> vector<16x16xf32>
    %126 = arith.addf %121, %125 : vector<16x16xf32>
    %c1_151 = arith.constant 1 : index
    %c0_152 = arith.constant 0 : index
    %127 = vector.load %arg13[%c1_151, %c0_152] : memref<22x22xf32, #tpu.memory_space<vmem>>, vector<16x22xf32>
    %c1_153 = arith.constant 1 : index
    %c0_154 = arith.constant 0 : index
    %c0_155 = arith.constant 0 : index
    %c0_156 = arith.constant 0 : index
    %128 = vector.load %arg8[%c1_153, %c0_154, %c0_155, %c0_156] : memref<7x2x22x16xf32, #tpu.memory_space<vmem>>, vector<1x1x22x16xf32>
    %129 = vector.shape_cast %128 : vector<1x1x22x16xf32> to vector<22x16xf32>
    %cst_157 = arith.constant dense<0.000000e+00> : vector<16x16xf32>
    %130 = tpu.matmul %127, %129, %cst_157 {dimension_numbers = #tpu.dot_dimension_numbers<[1], [0], [0], [1], [0, 0, 1, 1], [], []>} : vector<16x22xf32>, vector<22x16xf32>, vector<16x16xf32> -> vector<16x16xf32>
    %131 = arith.addf %126, %130 : vector<16x16xf32>
    %c1_158 = arith.constant 1 : index
    %c0_159 = arith.constant 0 : index
    %132 = vector.load %arg14[%c1_158, %c0_159] : memref<22x22xf32, #tpu.memory_space<vmem>>, vector<16x22xf32>
    %c1_160 = arith.constant 1 : index
    %c1_161 = arith.constant 1 : index
    %c0_162 = arith.constant 0 : index
    %c0_163 = arith.constant 0 : index
    %133 = vector.load %arg8[%c1_160, %c1_161, %c0_162, %c0_163] : memref<7x2x22x16xf32, #tpu.memory_space<vmem>>, vector<1x1x22x16xf32>
    %134 = vector.shape_cast %133 : vector<1x1x22x16xf32> to vector<22x16xf32>
    %cst_164 = arith.constant dense<0.000000e+00> : vector<16x16xf32>
    %135 = tpu.matmul %132, %134, %cst_164 {dimension_numbers = #tpu.dot_dimension_numbers<[1], [0], [0], [1], [0, 0, 1, 1], [], []>} : vector<16x22xf32>, vector<22x16xf32>, vector<16x16xf32> -> vector<16x16xf32>
    %136 = arith.addf %131, %135 : vector<16x16xf32>
    %c2_165 = arith.constant 2 : index
    %c0_166 = arith.constant 0 : index
    %137 = vector.load %arg13[%c2_165, %c0_166] : memref<22x22xf32, #tpu.memory_space<vmem>>, vector<16x22xf32>
    %c2_167 = arith.constant 2 : index
    %c0_168 = arith.constant 0 : index
    %c0_169 = arith.constant 0 : index
    %c0_170 = arith.constant 0 : index
    %138 = vector.load %arg8[%c2_167, %c0_168, %c0_169, %c0_170] : memref<7x2x22x16xf32, #tpu.memory_space<vmem>>, vector<1x1x22x16xf32>
    %139 = vector.shape_cast %138 : vector<1x1x22x16xf32> to vector<22x16xf32>
    %cst_171 = arith.constant dense<0.000000e+00> : vector<16x16xf32>
    %140 = tpu.matmul %137, %139, %cst_171 {dimension_numbers = #tpu.dot_dimension_numbers<[1], [0], [0], [1], [0, 0, 1, 1], [], []>} : vector<16x22xf32>, vector<22x16xf32>, vector<16x16xf32> -> vector<16x16xf32>
    %141 = arith.addf %136, %140 : vector<16x16xf32>
    %c2_172 = arith.constant 2 : index
    %c0_173 = arith.constant 0 : index
    %142 = vector.load %arg14[%c2_172, %c0_173] : memref<22x22xf32, #tpu.memory_space<vmem>>, vector<16x22xf32>
    %c2_174 = arith.constant 2 : index
    %c1_175 = arith.constant 1 : index
    %c0_176 = arith.constant 0 : index
    %c0_177 = arith.constant 0 : index
    %143 = vector.load %arg8[%c2_174, %c1_175, %c0_176, %c0_177] : memref<7x2x22x16xf32, #tpu.memory_space<vmem>>, vector<1x1x22x16xf32>
    %144 = vector.shape_cast %143 : vector<1x1x22x16xf32> to vector<22x16xf32>
    %cst_178 = arith.constant dense<0.000000e+00> : vector<16x16xf32>
    %145 = tpu.matmul %142, %144, %cst_178 {dimension_numbers = #tpu.dot_dimension_numbers<[1], [0], [0], [1], [0, 0, 1, 1], [], []>} : vector<16x22xf32>, vector<22x16xf32>, vector<16x16xf32> -> vector<16x16xf32>
    %146 = arith.addf %141, %145 : vector<16x16xf32>
    %c3_179 = arith.constant 3 : index
    %c0_180 = arith.constant 0 : index
    %147 = vector.load %arg13[%c3_179, %c0_180] : memref<22x22xf32, #tpu.memory_space<vmem>>, vector<16x22xf32>
    %c3_181 = arith.constant 3 : index
    %c0_182 = arith.constant 0 : index
    %c0_183 = arith.constant 0 : index
    %c0_184 = arith.constant 0 : index
    %148 = vector.load %arg8[%c3_181, %c0_182, %c0_183, %c0_184] : memref<7x2x22x16xf32, #tpu.memory_space<vmem>>, vector<1x1x22x16xf32>
    %149 = vector.shape_cast %148 : vector<1x1x22x16xf32> to vector<22x16xf32>
    %cst_185 = arith.constant dense<0.000000e+00> : vector<16x16xf32>
    %150 = tpu.matmul %147, %149, %cst_185 {dimension_numbers = #tpu.dot_dimension_numbers<[1], [0], [0], [1], [0, 0, 1, 1], [], []>} : vector<16x22xf32>, vector<22x16xf32>, vector<16x16xf32> -> vector<16x16xf32>
    %151 = arith.addf %146, %150 : vector<16x16xf32>
    %c3_186 = arith.constant 3 : index
    %c0_187 = arith.constant 0 : index
    %152 = vector.load %arg14[%c3_186, %c0_187] : memref<22x22xf32, #tpu.memory_space<vmem>>, vector<16x22xf32>
    %c3_188 = arith.constant 3 : index
    %c1_189 = arith.constant 1 : index
    %c0_190 = arith.constant 0 : index
    %c0_191 = arith.constant 0 : index
    %153 = vector.load %arg8[%c3_188, %c1_189, %c0_190, %c0_191] : memref<7x2x22x16xf32, #tpu.memory_space<vmem>>, vector<1x1x22x16xf32>
    %154 = vector.shape_cast %153 : vector<1x1x22x16xf32> to vector<22x16xf32>
    %cst_192 = arith.constant dense<0.000000e+00> : vector<16x16xf32>
    %155 = tpu.matmul %152, %154, %cst_192 {dimension_numbers = #tpu.dot_dimension_numbers<[1], [0], [0], [1], [0, 0, 1, 1], [], []>} : vector<16x22xf32>, vector<22x16xf32>, vector<16x16xf32> -> vector<16x16xf32>
    %156 = arith.addf %151, %155 : vector<16x16xf32>
    %c4 = arith.constant 4 : index
    %c0_193 = arith.constant 0 : index
    %157 = vector.load %arg13[%c4, %c0_193] : memref<22x22xf32, #tpu.memory_space<vmem>>, vector<16x22xf32>
    %c4_194 = arith.constant 4 : index
    %c0_195 = arith.constant 0 : index
    %c0_196 = arith.constant 0 : index
    %c0_197 = arith.constant 0 : index
    %158 = vector.load %arg8[%c4_194, %c0_195, %c0_196, %c0_197] : memref<7x2x22x16xf32, #tpu.memory_space<vmem>>, vector<1x1x22x16xf32>
    %159 = vector.shape_cast %158 : vector<1x1x22x16xf32> to vector<22x16xf32>
    %cst_198 = arith.constant dense<0.000000e+00> : vector<16x16xf32>
    %160 = tpu.matmul %157, %159, %cst_198 {dimension_numbers = #tpu.dot_dimension_numbers<[1], [0], [0], [1], [0, 0, 1, 1], [], []>} : vector<16x22xf32>, vector<22x16xf32>, vector<16x16xf32> -> vector<16x16xf32>
    %161 = arith.addf %156, %160 : vector<16x16xf32>
    %c4_199 = arith.constant 4 : index
    %c0_200 = arith.constant 0 : index
    %162 = vector.load %arg14[%c4_199, %c0_200] : memref<22x22xf32, #tpu.memory_space<vmem>>, vector<16x22xf32>
    %c4_201 = arith.constant 4 : index
    %c1_202 = arith.constant 1 : index
    %c0_203 = arith.constant 0 : index
    %c0_204 = arith.constant 0 : index
    %163 = vector.load %arg8[%c4_201, %c1_202, %c0_203, %c0_204] : memref<7x2x22x16xf32, #tpu.memory_space<vmem>>, vector<1x1x22x16xf32>
    %164 = vector.shape_cast %163 : vector<1x1x22x16xf32> to vector<22x16xf32>
    %cst_205 = arith.constant dense<0.000000e+00> : vector<16x16xf32>
    %165 = tpu.matmul %162, %164, %cst_205 {dimension_numbers = #tpu.dot_dimension_numbers<[1], [0], [0], [1], [0, 0, 1, 1], [], []>} : vector<16x22xf32>, vector<22x16xf32>, vector<16x16xf32> -> vector<16x16xf32>
    %166 = arith.addf %161, %165 : vector<16x16xf32>
    %c5 = arith.constant 5 : index
    %c0_206 = arith.constant 0 : index
    %167 = vector.load %arg13[%c5, %c0_206] : memref<22x22xf32, #tpu.memory_space<vmem>>, vector<16x22xf32>
    %c5_207 = arith.constant 5 : index
    %c0_208 = arith.constant 0 : index
    %c0_209 = arith.constant 0 : index
    %c0_210 = arith.constant 0 : index
    %168 = vector.load %arg8[%c5_207, %c0_208, %c0_209, %c0_210] : memref<7x2x22x16xf32, #tpu.memory_space<vmem>>, vector<1x1x22x16xf32>
    %169 = vector.shape_cast %168 : vector<1x1x22x16xf32> to vector<22x16xf32>
    %cst_211 = arith.constant dense<0.000000e+00> : vector<16x16xf32>
    %170 = tpu.matmul %167, %169, %cst_211 {dimension_numbers = #tpu.dot_dimension_numbers<[1], [0], [0], [1], [0, 0, 1, 1], [], []>} : vector<16x22xf32>, vector<22x16xf32>, vector<16x16xf32> -> vector<16x16xf32>
    %171 = arith.addf %166, %170 : vector<16x16xf32>
    %c5_212 = arith.constant 5 : index
    %c0_213 = arith.constant 0 : index
    %172 = vector.load %arg14[%c5_212, %c0_213] : memref<22x22xf32, #tpu.memory_space<vmem>>, vector<16x22xf32>
    %c5_214 = arith.constant 5 : index
    %c1_215 = arith.constant 1 : index
    %c0_216 = arith.constant 0 : index
    %c0_217 = arith.constant 0 : index
    %173 = vector.load %arg8[%c5_214, %c1_215, %c0_216, %c0_217] : memref<7x2x22x16xf32, #tpu.memory_space<vmem>>, vector<1x1x22x16xf32>
    %174 = vector.shape_cast %173 : vector<1x1x22x16xf32> to vector<22x16xf32>
    %cst_218 = arith.constant dense<0.000000e+00> : vector<16x16xf32>
    %175 = tpu.matmul %172, %174, %cst_218 {dimension_numbers = #tpu.dot_dimension_numbers<[1], [0], [0], [1], [0, 0, 1, 1], [], []>} : vector<16x22xf32>, vector<22x16xf32>, vector<16x16xf32> -> vector<16x16xf32>
    %176 = arith.addf %171, %175 : vector<16x16xf32>
    %c6 = arith.constant 6 : index
    %c0_219 = arith.constant 0 : index
    %177 = vector.load %arg13[%c6, %c0_219] : memref<22x22xf32, #tpu.memory_space<vmem>>, vector<16x22xf32>
    %c6_220 = arith.constant 6 : index
    %c0_221 = arith.constant 0 : index
    %c0_222 = arith.constant 0 : index
    %c0_223 = arith.constant 0 : index
    %178 = vector.load %arg8[%c6_220, %c0_221, %c0_222, %c0_223] : memref<7x2x22x16xf32, #tpu.memory_space<vmem>>, vector<1x1x22x16xf32>
    %179 = vector.shape_cast %178 : vector<1x1x22x16xf32> to vector<22x16xf32>
    %cst_224 = arith.constant dense<0.000000e+00> : vector<16x16xf32>
    %180 = tpu.matmul %177, %179, %cst_224 {dimension_numbers = #tpu.dot_dimension_numbers<[1], [0], [0], [1], [0, 0, 1, 1], [], []>} : vector<16x22xf32>, vector<22x16xf32>, vector<16x16xf32> -> vector<16x16xf32>
    %181 = arith.addf %176, %180 : vector<16x16xf32>
    %c6_225 = arith.constant 6 : index
    %c0_226 = arith.constant 0 : index
    %182 = vector.load %arg14[%c6_225, %c0_226] : memref<22x22xf32, #tpu.memory_space<vmem>>, vector<16x22xf32>
    %c6_227 = arith.constant 6 : index
    %c1_228 = arith.constant 1 : index
    %c0_229 = arith.constant 0 : index
    %c0_230 = arith.constant 0 : index
    %183 = vector.load %arg8[%c6_227, %c1_228, %c0_229, %c0_230] : memref<7x2x22x16xf32, #tpu.memory_space<vmem>>, vector<1x1x22x16xf32>
    %184 = vector.shape_cast %183 : vector<1x1x22x16xf32> to vector<22x16xf32>
    %cst_231 = arith.constant dense<0.000000e+00> : vector<16x16xf32>
    %185 = tpu.matmul %182, %184, %cst_231 {dimension_numbers = #tpu.dot_dimension_numbers<[1], [0], [0], [1], [0, 0, 1, 1], [], []>} : vector<16x22xf32>, vector<22x16xf32>, vector<16x16xf32> -> vector<16x16xf32>
    %186 = arith.addf %181, %185 : vector<16x16xf32>
    %187 = arith.negf %186 : vector<16x16xf32>
    %188 = math.exp %187 : vector<16x16xf32>
    %cst_232 = arith.constant 1.000000e+00 : f32
    %189 = vector.broadcast %cst_232 : f32 to vector<16x16xf32>
    %190 = arith.addf %189, %188 : vector<16x16xf32>
    %191 = arith.divf %189, %190 : vector<16x16xf32>
    %192 = vector.shape_cast %191 : vector<16x16xf32> to vector<16x16x1xf32>
    %193 = vector.broadcast %192 : vector<16x16x1xf32> to vector<16x16x16xf32>
    %194 = arith.mulf %99, %193 : vector<16x16x16xf32>
    %195 = vector.shape_cast %194 : vector<16x16x16xf32> to vector<256x16xf32>
    %c0_233 = arith.constant 0 : index
    %c0_234 = arith.constant 0 : index
    %196 = vector.load %arg9[%c0_233, %c0_234] : memref<4x16xf32, #tpu.memory_space<vmem>>, vector<4x16xf32>
    %cst_235 = arith.constant dense<0.000000e+00> : vector<256x16xf32>
    %197 = tpu.matmul %1, %196, %cst_235 {dimension_numbers = #tpu.dot_dimension_numbers<[1], [0], [0], [1], [0, 0, 1, 1], [], []>} : vector<256x4xf32>, vector<4x16xf32>, vector<256x16xf32> -> vector<256x16xf32>
    %c0_236 = arith.constant 0 : index
    %c0_237 = arith.constant 0 : index
    %198 = vector.load %arg10[%c0_236, %c0_237] : memref<1x16xf32, #tpu.memory_space<vmem>>, vector<1x16xf32>
    %199 = vector.broadcast %198 : vector<1x16xf32> to vector<256x16xf32>
    %200 = arith.addf %197, %199 : vector<256x16xf32>
    %201 = arith.addf %195, %200 : vector<256x16xf32>
    %cst_238 = arith.constant 0.000000e+00 : f32
    %202 = vector.broadcast %cst_238 : f32 to vector<256x16xf32>
    %203 = arith.cmpf oge, %201, %202 : vector<256x16xf32>
    %cst_239 = arith.constant 0.00999999977 : f32
    %204 = vector.broadcast %cst_239 : f32 to vector<256x16xf32>
    %205 = arith.mulf %204, %201 : vector<256x16xf32>
    %206 = arith.select %203, %201, %205 : vector<256x16xi1>, vector<256x16xf32>
    %207 = tpu.transpose %206, [1, 0] : vector<256x16xf32> -> vector<16x256xf32>
    %c0_240 = arith.constant 0 : index
    %c0_241 = arith.constant 0 : index
    %c0_242 = arith.constant 0 : index
    %208 = vector.load %arg11[%c0_240, %c0_241, %c0_242] : memref<1x16x256xf32, #tpu.memory_space<vmem>>, vector<1x16x256xf32>
    %209 = vector.shape_cast %208 : vector<1x16x256xf32> to vector<16x256xf32>
    %210 = vector.shape_cast %207 : vector<16x256xf32> to vector<1x16x256xf32>
    tpu.vector_store %arg11[%c0_240, %c0_241, %c0_242], %210 {strides = array<i32>} : memref<1x16x256xf32, #tpu.memory_space<vmem>>, vector<1x16x256xf32>,
    return
  }
  func.func @transform_0(%arg0: i32) -> (i32, i32, i32) {
    %c0_i32 = arith.constant 0 : i32
    %c0_i32_0 = arith.constant 0 : i32
    %c0_i32_1 = arith.constant 0 : i32
    return %arg0, %c0_i32, %c0_i32_0 : i32, i32, i32
  }
  func.func @transform_1(%arg0: i32) -> (i32, i32) {
    %c0_i32 = arith.constant 0 : i32
    %c0_i32_0 = arith.constant 0 : i32
    %c0_i32_1 = arith.constant 0 : i32
    return %c0_i32, %c0_i32_0 : i32, i32
  }
  func.func @transform_2(%arg0: i32) -> (i32, i32) {
    %c0_i32 = arith.constant 0 : i32
    %c0_i32_0 = arith.constant 0 : i32
    %c0_i32_1 = arith.constant 0 : i32
    return %c0_i32, %c0_i32_0 : i32, i32
  }
  func.func @transform_3(%arg0: i32) -> (i32, i32, i32, i32) {
    %c0_i32 = arith.constant 0 : i32
    %c0_i32_0 = arith.constant 0 : i32
    %c0_i32_1 = arith.constant 0 : i32
    %c0_i32_2 = arith.constant 0 : i32
    %c0_i32_3 = arith.constant 0 : i32
    return %c0_i32, %c0_i32_0, %c0_i32_1, %c0_i32_2 : i32, i32, i32, i32
  }
  func.func @transform_4(%arg0: i32) -> (i32, i32) {
    %c0_i32 = arith.constant 0 : i32
    %c0_i32_0 = arith.constant 0 : i32
    %c0_i32_1 = arith.constant 0 : i32
    return %c0_i32, %c0_i32_0 : i32, i32
  }
  func.func @transform_5(%arg0: i32) -> (i32, i32) {
    %c0_i32 = arith.constant 0 : i32
    %c0_i32_0 = arith.constant 0 : i32
    %c0_i32_1 = arith.constant 0 : i32
    return %c0_i32, %c0_i32_0 : i32, i32
  }
  func.func @transform_6(%arg0: i32) -> (i32, i32) {
    %c0_i32 = arith.constant 0 : i32
    %c0_i32_0 = arith.constant 0 : i32
    %c0_i32_1 = arith.constant 0 : i32
    return %c0_i32, %c0_i32_0 : i32, i32
  }
  func.func @transform_7(%arg0: i32) -> (i32, i32, i32, i32) {
    %c0_i32 = arith.constant 0 : i32
    %c0_i32_0 = arith.constant 0 : i32
    %c0_i32_1 = arith.constant 0 : i32
    %c0_i32_2 = arith.constant 0 : i32
    %c0_i32_3 = arith.constant 0 : i32
    return %c0_i32, %c0_i32_0, %c0_i32_1, %c0_i32_2 : i32, i32, i32, i32
  }
  func.func @transform_8(%arg0: i32) -> (i32, i32) {
    %c0_i32 = arith.constant 0 : i32
    %c0_i32_0 = arith.constant 0 : i32
    %c0_i32_1 = arith.constant 0 : i32
    return %c0_i32, %c0_i32_0 : i32, i32
  }
  func.func @transform_9(%arg0: i32) -> (i32, i32) {
    %c0_i32 = arith.constant 0 : i32
    %c0_i32_0 = arith.constant 0 : i32
    %c0_i32_1 = arith.constant 0 : i32
    return %c0_i32, %c0_i32_0 : i32, i32
  }
  func.func @transform_10(%arg0: i32) -> (i32, i32, i32) {
    %c0_i32 = arith.constant 0 : i32
    %c0_i32_0 = arith.constant 0 : i32
    %c0_i32_1 = arith.constant 0 : i32
    return %arg0, %c0_i32, %c0_i32_0 : i32, i32, i32
  }
}

</mosaic_0001>

<llo_original>
// kernel: tpu_custom_call.1
$region0: #{tpu_custom_call.1}
  #allocation0 [shape = 'u32[]', space=smem, size = 0x4, offset = 0x4, fixed_abs, tag = 'smem constant byte address 0x4 - core index']
  #allocation1 [shape = 'u32[144,128]{1,0:T(1,128)}', space=vmem, size = 0x12000, scoped, tag = 'internal scratch']
  #allocation2 [shape = 'f32[18,18,16]{2,1,0:T(8,128)}', space=vmem, size = 0x36000, scoped, tag = 'scratch operand']
  #allocation3 [shape = 'f32[22,22]{1,0:T(8,128)}', space=vmem, size = 0x3000, scoped, tag = 'scratch operand']
  #allocation4 [shape = 'f32[22,22]{1,0:T(8,128)}', space=vmem, size = 0x3000, scoped, tag = 'scratch operand']
  %s0 = inlined_call_operand.vmem [shape: f32[2,256,4], index: 0, kind: input, shape index: {}]
  %s1 = inlined_call_operand.vmem [shape: f32[4,16], index: 1, kind: input, shape index: {}]
  %s2 = inlined_call_operand.vmem [shape: f32[1,16], index: 2, kind: input, shape index: {}]
  %s3 = inlined_call_operand.vmem [shape: f32[3,3,16,16], index: 3, kind: input, shape index: {}]
  %s4 = inlined_call_operand.vmem [shape: f32[1,16], index: 4, kind: input, shape index: {}]
  %s5 = inlined_call_operand.vmem [shape: f32[16,4], index: 5, kind: input, shape index: {}]
  %s6 = inlined_call_operand.vmem [shape: f32[4,16], index: 6, kind: input, shape index: {}]
  %s7 = inlined_call_operand.vmem [shape: f32[7,2,22,16], index: 7, kind: input, shape index: {}]
  %s8 = inlined_call_operand.vmem [shape: f32[4,16], index: 8, kind: input, shape index: {}]
  %s9 = inlined_call_operand.vmem [shape: f32[1,16], index: 9, kind: input, shape index: {}]
  %s10 = inlined_call_operand.hbm [shape: f32[2,16,256], index: 10, kind: output, shape index: {}]
  %s11 = sld [smem:[#allocation0]]
  $region73: #{tpu_custom_call.1} parent=0
    _
  %s13 = ssub.s32 1, %s11
  %s14 = scalar_select 0, %s13, %s11
  $region1: #{tpu_custom_call.1} parent=0
    #allocation5 [shape = 'u8[32768]{0}', space=vmem, size = 0x8000, scoped, tag = 'output window, operand 0']
    #allocation6 [shape = 's32[2]{0}', space=sflag, size = 0x8, scoped, tag = 'scoped memory for tpu_custom_call.1']
    %15 = vsyncpa [#allocation6], 0
    %s16 = scalar_lea.sflag [#allocation6], 1
    %17 = vsyncpa %s16, 0
    loop: start=0, step=1, limit=4
    $region2: #{tpu_custom_call.1} parent=1 // loop_pre_header
      _
    $region3: #{tpu_custom_call.1} parent=1 // loop_header
      %s19 = sphi 0, %s23
      %p20 = scmp.ge.s32.totalorder %s19, 4
      %s29 = sphi 0, %s31
      %s32 = sphi 0, %s29
      %s33 = sphi 0, %s32
      %s49 = sphi 0, %s33
      %s53 = sphi 0, %s53
      %s55 = sphi 0, %s53
      %s56 = sphi 0, %s55
      %s70 = sphi 0, %s56
      %s74 = sphi 0, %s74
      %s76 = sphi 0, %s74
      %s77 = sphi 0, %s76
      %s91 = sphi 0, %s77
      %s95 = sphi 0, %s95
      %s97 = sphi 0, %s95
      %s98 = sphi 0, %s97
      %s112 = sphi 0, %s98
      %s116 = sphi 0, %s116
      %s118 = sphi 0, %s116
      %s119 = sphi 0, %s118
      %s133 = sphi 0, %s119
      %s137 = sphi 0, %s137
      %s139 = sphi 0, %s137
      %s140 = sphi 0, %s139
      %s154 = sphi 0, %s140
      %s158 = sphi 0, %s158
      %s160 = sphi 0, %s158
      %s161 = sphi 0, %s160
      %s175 = sphi 0, %s161
      %s179 = sphi 0, %s179
      %s181 = sphi 0, %s179
      %s182 = sphi 0, %s181
      %s196 = sphi 0, %s182
      %s200 = sphi 0, %s200
      %s202 = sphi 0, %s200
      %s203 = sphi 0, %s202
      %s217 = sphi 0, %s203
      %s221 = sphi 0, %s221
      %s223 = sphi 0, %s221
      %s224 = sphi 0, %s223
      %s238 = sphi 0, %s224
      %s244 = sphi 0, %s246
      %s247 = sphi 0, %s244
      %s248 = sphi 0, %s247
      %s264 = sphi 0, %s248
    $region4: #{tpu_custom_call.1} parent=1 // loop_header_branch
      %22 = sbr.rel (%p20) target = $region8
    $region5: #{tpu_custom_call.1} parent=1 // loop_body
      %s24 = ssub.s32 %s19, 1
      %s25 = ssub.s32 %s19, 2
      %s26 = sadd.s32 %s19, 1
      %s27 = ssub.s32 %s19, %s26
      %p28 = scmp.eq.s32.totalorder %s27, 0
      %s30 = sadd.s32 %s29, 1
      %s31 = scalar_select %p28, %s29, %s30
      %p34 = pneg %p28
      %p35 = scmp.eq.s32.totalorder %s19, 1
      %p36 = por %p34, %p35
      %p37 = scmp.ne.s32.totalorder %s29, %s32
      %p38 = scmp.eq.s32.totalorder %s19, 0
      %p39 = por %p37, %p38
      %p40 = scmp.ne.s32.totalorder %s29, %s32
      %p41 = scmp.eq.s32.totalorder %s24, 1
      %p42 = por %p40, %p41
      %p43 = scmp.ne.s32.totalorder %s32, %s33
      %p44 = scmp.eq.s32.totalorder %s24, 0
      %p45 = por %p43, %p44
      %p46 = scmp.ne.s32.totalorder %s32, %s33
      %p47 = scmp.eq.s32.totalorder %s25, 1
      %p48 = por %p46, %p47
      %p50 = scmp.ne.s32.totalorder %s33, %s49
      %p51 = scmp.eq.s32.totalorder %s25, 0
      %p52 = por %p50, %p51
      %s54 = sadd.s32 %s53, 1
      %p57 = scmp.eq.s32.totalorder %s19, 1
      %p58 = scmp.ne.s32.totalorder %s53, %s55
      %p59 = scmp.eq.s32.totalorder %s19, 0
      %p60 = por %p58, %p59
      %p61 = scmp.ne.s32.totalorder %s53, %s55
      %p62 = scmp.eq.s32.totalorder %s24, 1
      %p63 = por %p61, %p62
      %p64 = scmp.ne.s32.totalorder %s55, %s56
      %p65 = scmp.eq.s32.totalorder %s24, 0
      %p66 = por %p64, %p65
      %p67 = scmp.ne.s32.totalorder %s55, %s56
      %p68 = scmp.eq.s32.totalorder %s25, 1
      %p69 = por %p67, %p68
      %p71 = scmp.ne.s32.totalorder %s56, %s70
      %p72 = scmp.eq.s32.totalorder %s25, 0
      %p73 = por %p71, %p72
      %s75 = sadd.s32 %s74, 1
      %p78 = scmp.eq.s32.totalorder %s19, 1
      %p79 = scmp.ne.s32.totalorder %s74, %s76
      %p80 = scmp.eq.s32.totalorder %s19, 0
      %p81 = por %p79, %p80
      %p82 = scmp.ne.s32.totalorder %s74, %s76
      %p83 = scmp.eq.s32.totalorder %s24, 1
      %p84 = por %p82, %p83
      %p85 = scmp.ne.s32.totalorder %s76, %s77
      %p86 = scmp.eq.s32.totalorder %s24, 0
      %p87 = por %p85, %p86
      %p88 = scmp.ne.s32.totalorder %s76, %s77
      %p89 = scmp.eq.s32.totalorder %s25, 1
      %p90 = por %p88, %p89
      %p92 = scmp.ne.s32.totalorder %s77, %s91
      %p93 = scmp.eq.s32.totalorder %s25, 0
      %p94 = por %p92, %p93
      %s96 = sadd.s32 %s95, 1
      %p99 = scmp.eq.s32.totalorder %s19, 1
      %p100 = scmp.ne.s32.totalorder %s95, %s97
      %p101 = scmp.eq.s32.totalorder %s19, 0
      %p102 = por %p100, %p101
      %p103 = scmp.ne.s32.totalorder %s95, %s97
      %p104 = scmp.eq.s32.totalorder %s24, 1
      %p105 = por %p103, %p104
      %p106 = scmp.ne.s32.totalorder %s97, %s98
      %p107 = scmp.eq.s32.totalorder %s24, 0
      %p108 = por %p106, %p107
      %p109 = scmp.ne.s32.totalorder %s97, %s98
      %p110 = scmp.eq.s32.totalorder %s25, 1
      %p111 = por %p109, %p110
      %p113 = scmp.ne.s32.totalorder %s98, %s112
      %p114 = scmp.eq.s32.totalorder %s25, 0
      %p115 = por %p113, %p114
      %s117 = sadd.s32 %s116, 1
      %p120 = scmp.eq.s32.totalorder %s19, 1
      %p121 = scmp.ne.s32.totalorder %s116, %s118
      %p122 = scmp.eq.s32.totalorder %s19, 0
      %p123 = por %p121, %p122
      %p124 = scmp.ne.s32.totalorder %s116, %s118
      %p125 = scmp.eq.s32.totalorder %s24, 1
      %p126 = por %p124, %p125
      %p127 = scmp.ne.s32.totalorder %s118, %s119
      %p128 = scmp.eq.s32.totalorder %s24, 0
      %p129 = por %p127, %p128
      %p130 = scmp.ne.s32.totalorder %s118, %s119
      %p131 = scmp.eq.s32.totalorder %s25, 1
      %p132 = por %p130, %p131
      %p134 = scmp.ne.s32.totalorder %s119, %s133
      %p135 = scmp.eq.s32.totalorder %s25, 0
      %p136 = por %p134, %p135
      %s138 = sadd.s32 %s137, 1
      %p141 = scmp.eq.s32.totalorder %s19, 1
      %p142 = scmp.ne.s32.totalorder %s137, %s139
      %p143 = scmp.eq.s32.totalorder %s19, 0
      %p144 = por %p142, %p143
      %p145 = scmp.ne.s32.totalorder %s137, %s139
      %p146 = scmp.eq.s32.totalorder %s24, 1
      %p147 = por %p145, %p146
      %p148 = scmp.ne.s32.totalorder %s139, %s140
      %p149 = scmp.eq.s32.totalorder %s24, 0
      %p150 = por %p148, %p149
      %p151 = scmp.ne.s32.totalorder %s139, %s140
      %p152 = scmp.eq.s32.totalorder %s25, 1
      %p153 = por %p151, %p152
      %p155 = scmp.ne.s32.totalorder %s140, %s154
      %p156 = scmp.eq.s32.totalorder %s25, 0
      %p157 = por %p155, %p156
      %s159 = sadd.s32 %s158, 1
      %p162 = scmp.eq.s32.totalorder %s19, 1
      %p163 = scmp.ne.s32.totalorder %s158, %s160
      %p164 = scmp.eq.s32.totalorder %s19, 0
      %p165 = por %p163, %p164
      %p166 = scmp.ne.s32.totalorder %s158, %s160
      %p167 = scmp.eq.s32.totalorder %s24, 1
      %p168 = por %p166, %p167
      %p169 = scmp.ne.s32.totalorder %s160, %s161
      %p170 = scmp.eq.s32.totalorder %s24, 0
      %p171 = por %p169, %p170
      %p172 = scmp.ne.s32.totalorder %s160, %s161
      %p173 = scmp.eq.s32.totalorder %s25, 1
      %p174 = por %p172, %p173
      %p176 = scmp.ne.s32.totalorder %s161, %s175
      %p177 = scmp.eq.s32.totalorder %s25, 0
      %p178 = por %p176, %p177
      %s180 = sadd.s32 %s179, 1
      %p183 = scmp.eq.s32.totalorder %s19, 1
      %p184 = scmp.ne.s32.totalorder %s179, %s181
      %p185 = scmp.eq.s32.totalorder %s19, 0
      %p186 = por %p184, %p185
      %p187 = scmp.ne.s32.totalorder %s179, %s181
      %p188 = scmp.eq.s32.totalorder %s24, 1
      %p189 = por %p187, %p188
      %p190 = scmp.ne.s32.totalorder %s181, %s182
      %p191 = scmp.eq.s32.totalorder %s24, 0
      %p192 = por %p190, %p191
      %p193 = scmp.ne.s32.totalorder %s181, %s182
      %p194 = scmp.eq.s32.totalorder %s25, 1
      %p195 = por %p193, %p194
      %p197 = scmp.ne.s32.totalorder %s182, %s196
      %p198 = scmp.eq.s32.totalorder %s25, 0
      %p199 = por %p197, %p198
      %s201 = sadd.s32 %s200, 1
      %p204 = scmp.eq.s32.totalorder %s19, 1
      %p205 = scmp.ne.s32.totalorder %s200, %s202
      %p206 = scmp.eq.s32.totalorder %s19, 0
      %p207 = por %p205, %p206
      %p208 = scmp.ne.s32.totalorder %s200, %s202
      %p209 = scmp.eq.s32.totalorder %s24, 1
      %p210 = por %p208, %p209
      %p211 = scmp.ne.s32.totalorder %s202, %s203
      %p212 = scmp.eq.s32.totalorder %s24, 0
      %p213 = por %p211, %p212
      %p214 = scmp.ne.s32.totalorder %s202, %s203
      %p215 = scmp.eq.s32.totalorder %s25, 1
      %p216 = por %p214, %p215
      %p218 = scmp.ne.s32.totalorder %s203, %s217
      %p219 = scmp.eq.s32.totalorder %s25, 0
      %p220 = por %p218, %p219
      %s222 = sadd.s32 %s221, 1
      %p225 = scmp.eq.s32.totalorder %s19, 1
      %p226 = scmp.ne.s32.totalorder %s221, %s223
      %p227 = scmp.eq.s32.totalorder %s19, 0
      %p228 = por %p226, %p227
      %p229 = scmp.ne.s32.totalorder %s221, %s223
      %p230 = scmp.eq.s32.totalorder %s24, 1
      %p231 = por %p229, %p230
      %p232 = scmp.ne.s32.totalorder %s223, %s224
      %p233 = scmp.eq.s32.totalorder %s24, 0
      %p234 = por %p232, %p233
      %p235 = scmp.ne.s32.totalorder %s223, %s224
      %p236 = scmp.eq.s32.totalorder %s25, 1
      %p237 = por %p235, %p236
      %p239 = scmp.ne.s32.totalorder %s224, %s238
      %p240 = scmp.eq.s32.totalorder %s25, 0
      %p241 = por %p239, %p240
      %s242 = ssub.s32 %s19, %s26
      %p243 = scmp.eq.s32.totalorder %s242, 0
      %s245 = sadd.s32 %s244, 1
      %s246 = scalar_select %p243, %s244, %s245
      %p249 = pneg %p243
      %p250 = scmp.eq.s32.totalorder %s19, 1
      %p251 = por %p249, %p250
      %p252 = scmp.ne.s32.totalorder %s244, %s247
      %p253 = scmp.eq.s32.totalorder %s19, 0
      %p254 = por %p252, %p253
      %p255 = scmp.ne.s32.totalorder %s244, %s247
      %p256 = scmp.eq.s32.totalorder %s24, 1
      %p257 = por %p255, %p256
      %p258 = scmp.ne.s32.totalorder %s247, %s248
      %p259 = scmp.eq.s32.totalorder %s24, 0
      %p260 = por %p258, %p259
      %p261 = scmp.ne.s32.totalorder %s247, %s248
      %p262 = scmp.eq.s32.totalorder %s25, 1
      %p263 = por %p261, %p262
      %p265 = scmp.ne.s32.totalorder %s248, %s264
      %p266 = scmp.eq.s32.totalorder %s25, 0
      %p267 = por %p265, %p266
      %p268 = scmp.le.s32.totalorder 1, %s19
      %p269 = scmp.lt.s32.totalorder %s19, 3
      %p270 = pnand %p268, %p269
      %p271 = pneg %p270
      // Predicated region
      $region9: #{tpu_custom_call.1} parent=5 // pred_check
        _
      $region10: #{tpu_custom_call.1} parent=5 // pred_check_branch
        %273 = sbr.rel (%p270) target = $region12
      $region11: #{tpu_custom_call.1} parent=5 // pred_region
        %s274 = ssub.s32 %s19, 1
        // Predicated region
        $region13: #{tpu_custom_call.1} parent=11 // pred_check
          %p275 = pneg %p66
        $region14: #{tpu_custom_call.1} parent=11 // pred_check_branch
          %277 = sbr.rel (%p275) target = $region16
        $region15: #{tpu_custom_call.1} parent=11 // pred_region
          _
        $region16: #{tpu_custom_call.1} parent=11 // pred_fallthru
          _
        // Predicated region
        $region17: #{tpu_custom_call.1} parent=11 // pred_check
          %p278 = pneg %p87
        $region18: #{tpu_custom_call.1} parent=11 // pred_check_branch
          %280 = sbr.rel (%p278) target = $region20
        $region19: #{tpu_custom_call.1} parent=11 // pred_region
          _
        $region20: #{tpu_custom_call.1} parent=11 // pred_fallthru
          _
        // Predicated region
        $region21: #{tpu_custom_call.1} parent=11 // pred_check
          %p281 = pneg %p108
        $region22: #{tpu_custom_call.1} parent=11 // pred_check_branch
          %283 = sbr.rel (%p281) target = $region24
        $region23: #{tpu_custom_call.1} parent=11 // pred_region
          _
        $region24: #{tpu_custom_call.1} parent=11 // pred_fallthru
          _
        // Predicated region
        $region25: #{tpu_custom_call.1} parent=11 // pred_check
          %p284 = pneg %p129
        $region26: #{tpu_custom_call.1} parent=11 // pred_check_branch
          %286 = sbr.rel (%p284) target = $region28
        $region27: #{tpu_custom_call.1} parent=11 // pred_region
          _
        $region28: #{tpu_custom_call.1} parent=11 // pred_fallthru
          _
        // Predicated region
        $region29: #{tpu_custom_call.1} parent=11 // pred_check
          %p287 = pneg %p150
        $region30: #{tpu_custom_call.1} parent=11 // pred_check_branch
          %289 = sbr.rel (%p287) target = $region32
        $region31: #{tpu_custom_call.1} parent=11 // pred_region
          _
        $region32: #{tpu_custom_call.1} parent=11 // pred_fallthru
          _
        // Predicated region
        $region33: #{tpu_custom_call.1} parent=11 // pred_check
          %p290 = pneg %p171
        $region34: #{tpu_custom_call.1} parent=11 // pred_check_branch
          %292 = sbr.rel (%p290) target = $region36
        $region35: #{tpu_custom_call.1} parent=11 // pred_region
          _
        $region36: #{tpu_custom_call.1} parent=11 // pred_fallthru
          _
        // Predicated region
        $region37: #{tpu_custom_call.1} parent=11 // pred_check
          %p293 = pneg %p192
        $region38: #{tpu_custom_call.1} parent=11 // pred_check_branch
          %295 = sbr.rel (%p293) target = $region40
        $region39: #{tpu_custom_call.1} parent=11 // pred_region
          _
        $region40: #{tpu_custom_call.1} parent=11 // pred_fallthru
          _
        // Predicated region
        $region41: #{tpu_custom_call.1} parent=11 // pred_check
          %p296 = pneg %p213
        $region42: #{tpu_custom_call.1} parent=11 // pred_check_branch
          %298 = sbr.rel (%p296) target = $region44
        $region43: #{tpu_custom_call.1} parent=11 // pred_region
          _
        $region44: #{tpu_custom_call.1} parent=11 // pred_fallthru
          _
        // Predicated region
        $region45: #{tpu_custom_call.1} parent=11 // pred_check
          %p299 = pneg %p234
        $region46: #{tpu_custom_call.1} parent=11 // pred_check_branch
          %301 = sbr.rel (%p299) target = $region48
        $region47: #{tpu_custom_call.1} parent=11 // pred_region
          _
        $region48: #{tpu_custom_call.1} parent=11 // pred_fallthru
          _
      $region12: #{tpu_custom_call.1} parent=5 // pred_fallthru
        _
      %p302 = scmp.lt.s32.totalorder %s19, 2
      // Predicated region
      $region49: #{tpu_custom_call.1} parent=5 // pred_check
        %p303 = pneg %p302
      $region50: #{tpu_custom_call.1} parent=5 // pred_check_branch
        %305 = sbr.rel (%p303) target = $region52
      $region51: #{tpu_custom_call.1} parent=5 // pred_region
        // Predicated region
        $region53: #{tpu_custom_call.1} parent=51 // pred_check
          %p306 = pneg %p39
        $region54: #{tpu_custom_call.1} parent=51 // pred_check_branch
          %308 = sbr.rel (%p306) target = $region56
        $region55: #{tpu_custom_call.1} parent=51 // pred_region
          %p309 = scmp.lt.s32.totalorder %s19, 1
          %s310 = scalar_select %p309, %s19, 1
          %s311 = smul.addr %s310, 32
          %s312 = smul.addr %s311, 8
          %s313 = scalar_lea.vmem %s0, %s312
        $region56: #{tpu_custom_call.1} parent=51 // pred_fallthru
          _
      $region52: #{tpu_custom_call.1} parent=5 // pred_fallthru
        _
      %p314 = scmp.le.s32.totalorder 1, %s19
      %p315 = scmp.lt.s32.totalorder %s19, 3
      %p316 = pnand %p314, %p315
      %p317 = pneg %p316
      // Predicated region
      $region57: #{tpu_custom_call.1} parent=5 // pred_check
        _
      $region58: #{tpu_custom_call.1} parent=5 // pred_check_branch
        %319 = sbr.rel (%p316) target = $region60
      $region59: #{tpu_custom_call.1} parent=5 // pred_region
        %s320 = ssub.s32 %s19, 1
        %p321 = scmp.lt.s32.totalorder %s24, 1
        %s322 = scalar_select %p321, %s24, 1
        %s323 = smul.addr %s322, 32
        %s324 = smul.addr %s323, 8
        %s325 = scalar_lea.vmem %s0, %s324
        %p326 = pneg %p45
        %p327 = pneg %p42
        %p328 = pneg %p66
        %p329 = pneg %p63
        %p330 = pneg %p87
        %p331 = pneg %p84
        %p332 = pneg %p108
        %p333 = pneg %p105
        %p334 = pneg %p129
        %p335 = pneg %p126
        %p336 = pneg %p150
        %p337 = pneg %p147
        %p338 = pneg %p171
        %p339 = pneg %p168
        %p340 = pneg %p192
        %p341 = pneg %p189
        %p342 = pneg %p213
        %p343 = pneg %p210
        %p344 = pneg %p234
        %p345 = pneg %p231
        %p346 = pneg %p260
        %p347 = pneg %p257
        %s348 = sand.u32 %s247, 1
        %s349 = scalar_lea.sflag [#allocation6], %s348
        %s350 = sand.u32 %s247, 1
        %s351 = smul.addr %s350, 32
        %s352 = scalar_lea.vmem [#allocation5], %s351
        %p353 = scmp.lt.s32.totalorder %s24, 1
        %s354 = scalar_select %p353, %s24, 1
        %s355 = smul.addr %s354, 32
        %s356 = smul.addr %s355, 8
        %s357 = scalar_lea.vmem %s0, %s356
        %v358 = vld [vmem:[%s357] sm:$0xff]
        %v359 = vld [vmem:[%s357 + $0x8] sm:$0xff]
        %v360 = vld [vmem:[%s357 + $0x10] sm:$0xff]
        %v361 = vld [vmem:[%s357 + $0x18] sm:$0xff]
        %v362 = vld [vmem:[%s357 + $0x20] sm:$0xff]
        %v363 = vld [vmem:[%s357 + $0x28] sm:$0xff]
        %v364 = vld [vmem:[%s357 + $0x30] sm:$0xff]
        %v365 = vld [vmem:[%s357 + $0x38] sm:$0xff]
        %v366 = vld [vmem:[%s357 + $0x40] sm:$0xff]
        %v367 = vld [vmem:[%s357 + $0x48] sm:$0xff]
        %v368 = vld [vmem:[%s357 + $0x50] sm:$0xff]
        %v369 = vld [vmem:[%s357 + $0x58] sm:$0xff]
        %v370 = vld [vmem:[%s357 + $0x60] sm:$0xff]
        %v371 = vld [vmem:[%s357 + $0x68] sm:$0xff]
        %v372 = vld [vmem:[%s357 + $0x70] sm:$0xff]
        %v373 = vld [vmem:[%s357 + $0x78] sm:$0xff]
        %v374 = vld [vmem:[%s357 + $0x80] sm:$0xff]
        %v375 = vld [vmem:[%s357 + $0x88] sm:$0xff]
        %v376 = vld [vmem:[%s357 + $0x90] sm:$0xff]
        %v377 = vld [vmem:[%s357 + $0x98] sm:$0xff]
        %v378 = vld [vmem:[%s357 + $0xa0] sm:$0xff]
        %v379 = vld [vmem:[%s357 + $0xa8] sm:$0xff]
        %v380 = vld [vmem:[%s357 + $0xb0] sm:$0xff]
        %v381 = vld [vmem:[%s357 + $0xb8] sm:$0xff]
        %v382 = vld [vmem:[%s357 + $0xc0] sm:$0xff]
        %v383 = vld [vmem:[%s357 + $0xc8] sm:$0xff]
        %v384 = vld [vmem:[%s357 + $0xd0] sm:$0xff]
        %v385 = vld [vmem:[%s357 + $0xd8] sm:$0xff]
        %v386 = vld [vmem:[%s357 + $0xe0] sm:$0xff]
        %v387 = vld [vmem:[%s357 + $0xe8] sm:$0xff]
        %v388 = vld [vmem:[%s357 + $0xf0] sm:$0xff]
        %v389 = vld [vmem:[%s357 + $0xf8] sm:$0xff]
        %v390 = vld [vmem:[%s1] sm:$0xf]
        %v391 = vld [vmem:[%s2] sm:$0x1]
        %v393 = vlaneseq
        %v394 = vshrl.u32 %v393, 7
        %v395 = vsub.s32 0, %v394
        %v396 = vrot.slane %v391, %v395
        %vm398 = vcmask 31744
        %v400 = vsel %vm398, %v358, 0
        %v403 = vsel %vm398, %v359, 0
        %v406 = vsel %vm398, %v360, 0
        %v409 = vsel %vm398, %v361, 0
        %v412 = vsel %vm398, %v362, 0
        %v415 = vsel %vm398, %v363, 0
        %v418 = vsel %vm398, %v364, 0
        %v421 = vsel %vm398, %v365, 0
        %v424 = vsel %vm398, %v366, 0
        %v427 = vsel %vm398, %v367, 0
        %v430 = vsel %vm398, %v368, 0
        %v433 = vsel %vm398, %v369, 0
        %v436 = vsel %vm398, %v370, 0
        %v439 = vsel %vm398, %v371, 0
        %v442 = vsel %vm398, %v372, 0
        %v445 = vsel %vm398, %v373, 0
        %v448 = vsel %vm398, %v374, 0
        %v451 = vsel %vm398, %v375, 0
        %v454 = vsel %vm398, %v376, 0
        %v457 = vsel %vm398, %v377, 0
        %v460 = vsel %vm398, %v378, 0
        %v463 = vsel %vm398, %v379, 0
        %v466 = vsel %vm398, %v380, 0
        %v469 = vsel %vm398, %v381, 0
        %v472 = vsel %vm398, %v382, 0
        %v475 = vsel %vm398, %v383, 0
        %v478 = vsel %vm398, %v384, 0
        %v481 = vsel %vm398, %v385, 0
        %v484 = vsel %vm398, %v386, 0
        %v487 = vsel %vm398, %v387, 0
        %v490 = vsel %vm398, %v388, 0
        %v493 = vsel %vm398, %v389, 0
        %vm495 = vcmask 1043456
        %v497 = vsel %vm495, %v390, 0
        %499 = vmatprep.subr.mxu0 0.0
        %500 = vmatpush1.msra.mxu0 0.0
        %501 = vmatprep.subr.mxu0 0.0
        %502 = vmatpush1.msra.mxu0 0.0
        %503 = vmatprep.subr.mxu0 0.0
        %504 = vmatpush1.msra.mxu0 0.0
        %505 = vmatprep.subr.mxu0 0.0
        %506 = vmatpush1.msra.mxu0 0.0
        %507 = vmatprep.subr.mxu0 0.0
        %508 = vmatpush1.msra.mxu0 0.0
        %509 = vmatprep.subr.mxu0 0.0
        %510 = vmatpush1.msra.mxu0 0.0
        %511 = vmatprep.subr.mxu0 0.0
        %512 = vmatpush1.msra.mxu0 0.0
        %513 = vmatprep.subr.mxu0 0.0
        %514 = vmatpush1.msra.mxu0 0.0
        %515 = vmatprep.subr.mxu0 0.0
        %516 = vmatpush1.msra.mxu0 0.0
        %517 = vmatprep.subr.mxu0 0.0
        %518 = vmatpush1.msra.mxu0 0.0
        %519 = vmatprep.subr.mxu0 0.0
        %520 = vmatpush1.msra.mxu0 0.0
        %521 = vmatprep.subr.mxu0 0.0
        %522 = vmatpush1.msra.mxu0 0.0
        %523 = vmatprep.subr.mxu0 0.0
        %524 = vmatpush1.msra.mxu0 0.0
        %525 = vmatprep.subr.mxu0 0.0
        %526 = vmatpush1.msra.mxu0 0.0
        %527 = vmatprep.subr.mxu0 0.0
        %528 = vmatpush1.msra.mxu0 0.0
        %529 = vmatprep.subr.mxu0 0.0
        %530 = vmatpush1.msra.mxu0 %v497
        %531 = vmatprep.subr.mxu0 0.0
        %532 = vmatpush2.msra.mxu0 0.0
        %533 = vmatprep.subr.mxu0 0.0
        %534 = vmatpush2.msra.mxu0 0.0
        %535 = vmatprep.subr.mxu0 0.0
        %536 = vmatpush2.msra.mxu0 0.0
        %537 = vmatprep.subr.mxu0 0.0
        %538 = vmatpush2.msra.mxu0 0.0
        %539 = vmatprep.subr.mxu0 0.0
        %540 = vmatpush2.msra.mxu0 0.0
        %541 = vmatprep.subr.mxu0 0.0
        %542 = vmatpush2.msra.mxu0 0.0
        %543 = vmatprep.subr.mxu0 0.0
        %544 = vmatpush2.msra.mxu0 0.0
        %545 = vmatprep.subr.mxu0 0.0
        %546 = vmatpush2.msra.mxu0 0.0
        %547 = vmatprep.subr.mxu0 0.0
        %548 = vmatpush2.msra.mxu0 0.0
        %549 = vmatprep.subr.mxu0 0.0
        %550 = vmatpush2.msra.mxu0 0.0
        %551 = vmatprep.subr.mxu0 0.0
        %552 = vmatpush2.msra.mxu0 0.0
        %553 = vmatprep.subr.mxu0 0.0
        %554 = vmatpush2.msra.mxu0 0.0
        %555 = vmatprep.subr.mxu0 0.0
        %556 = vmatpush2.msra.mxu0 0.0
        %557 = vmatprep.subr.mxu0 0.0
        %558 = vmatpush2.msra.mxu0 0.0
        %559 = vmatprep.subr.mxu0 0.0
        %560 = vmatpush2.msra.mxu0 0.0
        %561 = vmatprep.subr.mxu0 0.0
        %562 = vmatpush2.msra.mxu0 0.0
        %563 = vmatprep.mubr.f32.mxu0 0.0
        %564 = vmatmul.mubr.f32.gmra.mxu0 %v400
        %v565 = vpop.f32.mrf.mxu0
        %v566 = vadd.f32 %v396, %v565
        %v567 = vpop.f32.mrf.mxu0
        %568 = vmatprep.mubr.f32.mxu0 0.0
        %569 = vmatmul.mubr.f32.gmra.mxu0 %v403
        %v570 = vpop.f32.mrf.mxu0
        %v571 = vadd.f32 %v396, %v570
        %v572 = vpop.f32.mrf.mxu0
        %573 = vmatprep.mubr.f32.mxu0 0.0
        %574 = vmatmul.mubr.f32.gmra.mxu0 %v406
        %v575 = vpop.f32.mrf.mxu0
        %v576 = vadd.f32 %v396, %v575
        %v577 = vpop.f32.mrf.mxu0
        %578 = vmatprep.mubr.f32.mxu0 0.0
        %579 = vmatmul.mubr.f32.gmra.mxu0 %v409
        %v580 = vpop.f32.mrf.mxu0
        %v581 = vadd.f32 %v396, %v580
        %v582 = vpop.f32.mrf.mxu0
        %583 = vmatprep.mubr.f32.mxu0 0.0
        %584 = vmatmul.mubr.f32.gmra.mxu0 %v412
        %v585 = vpop.f32.mrf.mxu0
        %v586 = vadd.f32 %v396, %v585
        %v587 = vpop.f32.mrf.mxu0
        %588 = vmatprep.mubr.f32.mxu0 0.0
        %589 = vmatmul.mubr.f32.gmra.mxu0 %v415
        %v590 = vpop.f32.mrf.mxu0
        %v591 = vadd.f32 %v396, %v590
        %v592 = vpop.f32.mrf.mxu0
        %593 = vmatprep.mubr.f32.mxu0 0.0
        %594 = vmatmul.mubr.f32.gmra.mxu0 %v418
        %v595 = vpop.f32.mrf.mxu0
        %v596 = vadd.f32 %v396, %v595
        %v597 = vpop.f32.mrf.mxu0
        %598 = vmatprep.mubr.f32.mxu0 0.0
        %599 = vmatmul.mubr.f32.gmra.mxu0 %v421
        %v600 = vpop.f32.mrf.mxu0
        %v601 = vadd.f32 %v396, %v600
        %v602 = vpop.f32.mrf.mxu0
        %603 = vmatprep.mubr.f32.mxu0 0.0
        %604 = vmatmul.mubr.f32.gmra.mxu0 %v424
        %v605 = vpop.f32.mrf.mxu0
        %v606 = vadd.f32 %v396, %v605
        %v607 = vpop.f32.mrf.mxu0
        %608 = vmatprep.mubr.f32.mxu0 0.0
        %609 = vmatmul.mubr.f32.gmra.mxu0 %v427
        %v610 = vpop.f32.mrf.mxu0
        %v611 = vadd.f32 %v396, %v610
        %v612 = vpop.f32.mrf.mxu0
        %613 = vmatprep.mubr.f32.mxu0 0.0
        %614 = vmatmul.mubr.f32.gmra.mxu0 %v430
        %v615 = vpop.f32.mrf.mxu0
        %v616 = vadd.f32 %v396, %v615
        %v617 = vpop.f32.mrf.mxu0
        %618 = vmatprep.mubr.f32.mxu0 0.0
        %619 = vmatmul.mubr.f32.gmra.mxu0 %v433
        %v620 = vpop.f32.mrf.mxu0
        %v621 = vadd.f32 %v396, %v620
        %v622 = vpop.f32.mrf.mxu0
        %623 = vmatprep.mubr.f32.mxu0 0.0
        %624 = vmatmul.mubr.f32.gmra.mxu0 %v436
        %v625 = vpop.f32.mrf.mxu0
        %v626 = vadd.f32 %v396, %v625
        %v627 = vpop.f32.mrf.mxu0
        %628 = vmatprep.mubr.f32.mxu0 0.0
        %629 = vmatmul.mubr.f32.gmra.mxu0 %v439
        %v630 = vpop.f32.mrf.mxu0
        %v631 = vadd.f32 %v396, %v630
        %v632 = vpop.f32.mrf.mxu0
        %633 = vmatprep.mubr.f32.mxu0 0.0
        %634 = vmatmul.mubr.f32.gmra.mxu0 %v442
        %v635 = vpop.f32.mrf.mxu0
        %v636 = vadd.f32 %v396, %v635
        %v637 = vpop.f32.mrf.mxu0
        %638 = vmatprep.mubr.f32.mxu0 0.0
        %639 = vmatmul.mubr.f32.gmra.mxu0 %v445
        %v640 = vpop.f32.mrf.mxu0
        %v641 = vadd.f32 %v396, %v640
        %v642 = vpop.f32.mrf.mxu0
        %643 = vmatprep.mubr.f32.mxu0 0.0
        %644 = vmatmul.mubr.f32.gmra.mxu0 %v448
        %v645 = vpop.f32.mrf.mxu0
        %v646 = vadd.f32 %v396, %v645
        %v647 = vpop.f32.mrf.mxu0
        %648 = vmatprep.mubr.f32.mxu0 0.0
        %649 = vmatmul.mubr.f32.gmra.mxu0 %v451
        %v650 = vpop.f32.mrf.mxu0
        %v651 = vadd.f32 %v396, %v650
        %v652 = vpop.f32.mrf.mxu0
        %653 = vmatprep.mubr.f32.mxu0 0.0
        %654 = vmatmul.mubr.f32.gmra.mxu0 %v454
        %v655 = vpop.f32.mrf.mxu0
        %v656 = vadd.f32 %v396, %v655
        %v657 = vpop.f32.mrf.mxu0
        %658 = vmatprep.mubr.f32.mxu0 0.0
        %659 = vmatmul.mubr.f32.gmra.mxu0 %v457
        %v660 = vpop.f32.mrf.mxu0
        %v661 = vadd.f32 %v396, %v660
        %v662 = vpop.f32.mrf.mxu0
        %663 = vmatprep.mubr.f32.mxu0 0.0
        %664 = vmatmul.mubr.f32.gmra.mxu0 %v460
        %v665 = vpop.f32.mrf.mxu0
        %v666 = vadd.f32 %v396, %v665
        %v667 = vpop.f32.mrf.mxu0
        %668 = vmatprep.mubr.f32.mxu0 0.0
        %669 = vmatmul.mubr.f32.gmra.mxu0 %v463
        %v670 = vpop.f32.mrf.mxu0
        %v671 = vadd.f32 %v396, %v670
        %v672 = vpop.f32.mrf.mxu0
        %673 = vmatprep.mubr.f32.mxu0 0.0
        %674 = vmatmul.mubr.f32.gmra.mxu0 %v466
        %v675 = vpop.f32.mrf.mxu0
        %v676 = vadd.f32 %v396, %v675
        %v677 = vpop.f32.mrf.mxu0
        %678 = vmatprep.mubr.f32.mxu0 0.0
        %679 = vmatmul.mubr.f32.gmra.mxu0 %v469
        %v680 = vpop.f32.mrf.mxu0
        %v681 = vadd.f32 %v396, %v680
        %v682 = vpop.f32.mrf.mxu0
        %683 = vmatprep.mubr.f32.mxu0 0.0
        %684 = vmatmul.mubr.f32.gmra.mxu0 %v472
        %v685 = vpop.f32.mrf.mxu0
        %v686 = vadd.f32 %v396, %v685
        %v687 = vpop.f32.mrf.mxu0
        %688 = vmatprep.mubr.f32.mxu0 0.0
        %689 = vmatmul.mubr.f32.gmra.mxu0 %v475
        %v690 = vpop.f32.mrf.mxu0
        %v691 = vadd.f32 %v396, %v690
        %v692 = vpop.f32.mrf.mxu0
        %693 = vmatprep.mubr.f32.mxu0 0.0
        %694 = vmatmul.mubr.f32.gmra.mxu0 %v478
        %v695 = vpop.f32.mrf.mxu0
        %v696 = vadd.f32 %v396, %v695
        %v697 = vpop.f32.mrf.mxu0
        %698 = vmatprep.mubr.f32.mxu0 0.0
        %699 = vmatmul.mubr.f32.gmra.mxu0 %v481
        %v700 = vpop.f32.mrf.mxu0
        %v701 = vadd.f32 %v396, %v700
        %v702 = vpop.f32.mrf.mxu0
        %703 = vmatprep.mubr.f32.mxu0 0.0
        %704 = vmatmul.mubr.f32.gmra.mxu0 %v484
        %v705 = vpop.f32.mrf.mxu0
        %v706 = vadd.f32 %v396, %v705
        %v707 = vpop.f32.mrf.mxu0
        %708 = vmatprep.mubr.f32.mxu0 0.0
        %709 = vmatmul.mubr.f32.gmra.mxu0 %v487
        %v710 = vpop.f32.mrf.mxu0
        %v711 = vadd.f32 %v396, %v710
        %v712 = vpop.f32.mrf.mxu0
        %713 = vmatprep.mubr.f32.mxu0 0.0
        %714 = vmatmul.mubr.f32.gmra.mxu0 %v490
        %v715 = vpop.f32.mrf.mxu0
        %v716 = vadd.f32 %v396, %v715
        %v717 = vpop.f32.mrf.mxu0
        %718 = vmatprep.mubr.f32.mxu0 0.0
        %719 = vmatmul.mubr.f32.gmra.mxu0 %v493
        %v720 = vpop.f32.mrf.mxu0
        %v721 = vadd.f32 %v396, %v720
        %v722 = vpop.f32.mrf.mxu0
        %723 = vdwg.mxu0
        %vm724 = vcmask 130048
        %725 = vst.msk [vmem:[#allocation2] sm:$0xff] %vm724, 0.0
        %726 = vst.msk [vmem:[#allocation2 + $0x8] sm:$0xff] %vm724, 0.0
        %vm727 = vcmask 123904
        %728 = vst.msk [vmem:[#allocation2 + $0x10] sm:$0x3] %vm727, 0.0
        %s729 = scalar_lea.vmem [#allocation2], 408
        %730 = vst.msk [vmem:[%s729] sm:$0xff] %vm724, 0.0
        %731 = vst.msk [vmem:[%s729 + $0x8] sm:$0xff] %vm724, 0.0
        %732 = vst.msk [vmem:[%s729 + $0x10] sm:$0x3] %vm727, 0.0
        %vm733 = vcmask 122880
        %734 = vst.msk [vmem:[#allocation2] sm:$0x1] %vm733, 0.0
        %735 = vst.msk [vmem:[#allocation2 + $0x18] sm:$0x1] %vm733, 0.0
        %736 = vst.msk [vmem:[#allocation2 + $0x30] sm:$0x1] %vm733, 0.0
        %737 = vst.msk [vmem:[#allocation2 + $0x48] sm:$0x1] %vm733, 0.0
        %738 = vst.msk [vmem:[#allocation2 + $0x60] sm:$0x1] %vm733, 0.0
        %739 = vst.msk [vmem:[#allocation2 + $0x78] sm:$0x1] %vm733, 0.0
        %740 = vst.msk [vmem:[#allocation2 + $0x90] sm:$0x1] %vm733, 0.0
        %741 = vst.msk [vmem:[#allocation2 + $0xa8] sm:$0x1] %vm733, 0.0
        %742 = vst.msk [vmem:[#allocation2 + $0xc0] sm:$0x1] %vm733, 0.0
        %743 = vst.msk [vmem:[#allocation2 + $0xd8] sm:$0x1] %vm733, 0.0
        %744 = vst.msk [vmem:[#allocation2 + $0xf0] sm:$0x1] %vm733, 0.0
        %745 = vst.msk [vmem:[#allocation2 + $0x108] sm:$0x1] %vm733, 0.0
        %746 = vst.msk [vmem:[#allocation2 + $0x120] sm:$0x1] %vm733, 0.0
        %747 = vst.msk [vmem:[#allocation2 + $0x138] sm:$0x1] %vm733, 0.0
        %748 = vst.msk [vmem:[#allocation2 + $0x150] sm:$0x1] %vm733, 0.0
        %749 = vst.msk [vmem:[#allocation2 + $0x168] sm:$0x1] %vm733, 0.0
        %750 = vst.msk [vmem:[#allocation2 + $0x180] sm:$0x1] %vm733, 0.0
        %751 = vst.msk [vmem:[#allocation2 + $0x198] sm:$0x1] %vm733, 0.0
        %752 = vst.msk [vmem:[#allocation2 + $0x11] sm:$0x1] %vm733, 0.0
        %753 = vst.msk [vmem:[#allocation2 + $0x29] sm:$0x1] %vm733, 0.0
        %754 = vst.msk [vmem:[#allocation2 + $0x41] sm:$0x1] %vm733, 0.0
        %755 = vst.msk [vmem:[#allocation2 + $0x59] sm:$0x1] %vm733, 0.0
        %756 = vst.msk [vmem:[#allocation2 + $0x71] sm:$0x1] %vm733, 0.0
        %757 = vst.msk [vmem:[#allocation2 + $0x89] sm:$0x1] %vm733, 0.0
        %758 = vst.msk [vmem:[#allocation2 + $0xa1] sm:$0x1] %vm733, 0.0
        %759 = vst.msk [vmem:[#allocation2 + $0xb9] sm:$0x1] %vm733, 0.0
        %760 = vst.msk [vmem:[#allocation2 + $0xd1] sm:$0x1] %vm733, 0.0
        %761 = vst.msk [vmem:[#allocation2 + $0xe9] sm:$0x1] %vm733, 0.0
        %762 = vst.msk [vmem:[#allocation2 + $0x101] sm:$0x1] %vm733, 0.0
        %763 = vst.msk [vmem:[#allocation2 + $0x119] sm:$0x1] %vm733, 0.0
        %764 = vst.msk [vmem:[#allocation2 + $0x131] sm:$0x1] %vm733, 0.0
        %765 = vst.msk [vmem:[#allocation2 + $0x149] sm:$0x1] %vm733, 0.0
        %766 = vst.msk [vmem:[#allocation2 + $0x161] sm:$0x1] %vm733, 0.0
        %767 = vst.msk [vmem:[#allocation2 + $0x179] sm:$0x1] %vm733, 0.0
        %768 = vst.msk [vmem:[#allocation2 + $0x191] sm:$0x1] %vm733, 0.0
        %769 = vst.msk [vmem:[#allocation2 + $0x1a9] sm:$0x1] %vm733, 0.0
        %s770 = scalar_lea.vmem [#allocation2], 24
        %771 = vst.msk [vmem:[%s770 + $0x1] sm:$0xff] %vm724, %v566
        %772 = vst.msk [vmem:[%s770 + $0x9] sm:$0xff] %vm724, %v571
        %773 = vst.msk [vmem:[%s770 + $0x19] sm:$0xff] %vm724, %v576
        %774 = vst.msk [vmem:[%s770 + $0x21] sm:$0xff] %vm724, %v581
        %775 = vst.msk [vmem:[%s770 + $0x31] sm:$0xff] %vm724, %v586
        %776 = vst.msk [vmem:[%s770 + $0x39] sm:$0xff] %vm724, %v591
        %777 = vst.msk [vmem:[%s770 + $0x49] sm:$0xff] %vm724, %v596
        %778 = vst.msk [vmem:[%s770 + $0x51] sm:$0xff] %vm724, %v601
        %779 = vst.msk [vmem:[%s770 + $0x61] sm:$0xff] %vm724, %v606
        %780 = vst.msk [vmem:[%s770 + $0x69] sm:$0xff] %vm724, %v611
        %781 = vst.msk [vmem:[%s770 + $0x79] sm:$0xff] %vm724, %v616
        %782 = vst.msk [vmem:[%s770 + $0x81] sm:$0xff] %vm724, %v621
        %783 = vst.msk [vmem:[%s770 + $0x91] sm:$0xff] %vm724, %v626
        %784 = vst.msk [vmem:[%s770 + $0x99] sm:$0xff] %vm724, %v631
        %785 = vst.msk [vmem:[%s770 + $0xa9] sm:$0xff] %vm724, %v636
        %786 = vst.msk [vmem:[%s770 + $0xb1] sm:$0xff] %vm724, %v641
        %787 = vst.msk [vmem:[%s770 + $0xc1] sm:$0xff] %vm724, %v646
        %788 = vst.msk [vmem:[%s770 + $0xc9] sm:$0xff] %vm724, %v651
        %789 = vst.msk [vmem:[%s770 + $0xd9] sm:$0xff] %vm724, %v656
        %790 = vst.msk [vmem:[%s770 + $0xe1] sm:$0xff] %vm724, %v661
        %791 = vst.msk [vmem:[%s770 + $0xf1] sm:$0xff] %vm724, %v666
        %792 = vst.msk [vmem:[%s770 + $0xf9] sm:$0xff] %vm724, %v671
        %793 = vst.msk [vmem:[%s770 + $0x109] sm:$0xff] %vm724, %v676
        %794 = vst.msk [vmem:[%s770 + $0x111] sm:$0xff] %vm724, %v681
        %795 = vst.msk [vmem:[%s770 + $0x121] sm:$0xff] %vm724, %v686
        %796 = vst.msk [vmem:[%s770 + $0x129] sm:$0xff] %vm724, %v691
        %797 = vst.msk [vmem:[%s770 + $0x139] sm:$0xff] %vm724, %v696
        %798 = vst.msk [vmem:[%s770 + $0x141] sm:$0xff] %vm724, %v701
        %799 = vst.msk [vmem:[%s770 + $0x151] sm:$0xff] %vm724, %v706
        %800 = vst.msk [vmem:[%s770 + $0x159] sm:$0xff] %vm724, %v711
        %801 = vst.msk [vmem:[%s770 + $0x169] sm:$0xff] %vm724, %v716
        %802 = vst.msk [vmem:[%s770 + $0x171] sm:$0xff] %vm724, %v721
        %v803 = vld [vmem:[#allocation2] sm:$0xff]
        %v804 = vld [vmem:[#allocation2 + $0x8] sm:$0xff]
        %v805 = vld [vmem:[#allocation2 + $0x18] sm:$0xff]
        %v806 = vld [vmem:[#allocation2 + $0x20] sm:$0xff]
        %v807 = vld [vmem:[#allocation2 + $0x30] sm:$0xff]
        %v808 = vld [vmem:[#allocation2 + $0x38] sm:$0xff]
        %v809 = vld [vmem:[#allocation2 + $0x48] sm:$0xff]
        %v810 = vld [vmem:[#allocation2 + $0x50] sm:$0xff]
        %v811 = vld [vmem:[#allocation2 + $0x60] sm:$0xff]
        %v812 = vld [vmem:[#allocation2 + $0x68] sm:$0xff]
        %v813 = vld [vmem:[#allocation2 + $0x78] sm:$0xff]
        %v814 = vld [vmem:[#allocation2 + $0x80] sm:$0xff]
        %v815 = vld [vmem:[#allocation2 + $0x90] sm:$0xff]
        %v816 = vld [vmem:[#allocation2 + $0x98] sm:$0xff]
        %v817 = vld [vmem:[#allocation2 + $0xa8] sm:$0xff]
        %v818 = vld [vmem:[#allocation2 + $0xb0] sm:$0xff]
        %v819 = vld [vmem:[#allocation2 + $0xc0] sm:$0xff]
        %v820 = vld [vmem:[#allocation2 + $0xc8] sm:$0xff]
        %v821 = vld [vmem:[#allocation2 + $0xd8] sm:$0xff]
        %v822 = vld [vmem:[#allocation2 + $0xe0] sm:$0xff]
        %v823 = vld [vmem:[#allocation2 + $0xf0] sm:$0xff]
        %v824 = vld [vmem:[#allocation2 + $0xf8] sm:$0xff]
        %v825 = vld [vmem:[#allocation2 + $0x108] sm:$0xff]
        %v826 = vld [vmem:[#allocation2 + $0x110] sm:$0xff]
        %v827 = vld [vmem:[#allocation2 + $0x120] sm:$0xff]
        %v828 = vld [vmem:[#allocation2 + $0x128] sm:$0xff]
        %v829 = vld [vmem:[#allocation2 + $0x138] sm:$0xff]
        %v830 = vld [vmem:[#allocation2 + $0x140] sm:$0xff]
        %v831 = vld [vmem:[#allocation2 + $0x150] sm:$0xff]
        %v832 = vld [vmem:[#allocation2 + $0x158] sm:$0xff]
        %v833 = vld [vmem:[#allocation2 + $0x168] sm:$0xff]
        %v834 = vld [vmem:[#allocation2 + $0x170] sm:$0xff]
        %v835 = vld [vmem:[%s3] sm:$0xff]
        %v836 = vld [vmem:[%s3 + $0x8] sm:$0xff]
        %v837 = vld [vmem:[#allocation2 + $0x1] sm:$0xff]
        %v838 = vld [vmem:[#allocation2 + $0x9] sm:$0xff]
        %v839 = vld [vmem:[#allocation2 + $0x19] sm:$0xff]
        %v840 = vld [vmem:[#allocation2 + $0x21] sm:$0xff]
        %v841 = vld [vmem:[#allocation2 + $0x31] sm:$0xff]
        %v842 = vld [vmem:[#allocation2 + $0x39] sm:$0xff]
        %v843 = vld [vmem:[#allocation2 + $0x49] sm:$0xff]
        %v844 = vld [vmem:[#allocation2 + $0x51] sm:$0xff]
        %v845 = vld [vmem:[#allocation2 + $0x61] sm:$0xff]
        %v846 = vld [vmem:[#allocation2 + $0x69] sm:$0xff]
        %v847 = vld [vmem:[#allocation2 + $0x79] sm:$0xff]
        %v848 = vld [vmem:[#allocation2 + $0x81] sm:$0xff]
        %v849 = vld [vmem:[#allocation2 + $0x91] sm:$0xff]
        %v850 = vld [vmem:[#allocation2 + $0x99] sm:$0xff]
        %v851 = vld [vmem:[#allocation2 + $0xa9] sm:$0xff]
        %v852 = vld [vmem:[#allocation2 + $0xb1] sm:$0xff]
        %v853 = vld [vmem:[#allocation2 + $0xc1] sm:$0xff]
        %v854 = vld [vmem:[#allocation2 + $0xc9] sm:$0xff]
        %v855 = vld [vmem:[#allocation2 + $0xd9] sm:$0xff]
        %v856 = vld [vmem:[#allocation2 + $0xe1] sm:$0xff]
        %v857 = vld [vmem:[#allocation2 + $0xf1] sm:$0xff]
        %v858 = vld [vmem:[#allocation2 + $0xf9] sm:$0xff]
        %v859 = vld [vmem:[#allocation2 + $0x109] sm:$0xff]
        %v860 = vld [vmem:[#allocation2 + $0x111] sm:$0xff]
        %v861 = vld [vmem:[#allocation2 + $0x121] sm:$0xff]
        %v862 = vld [vmem:[#allocation2 + $0x129] sm:$0xff]
        %v863 = vld [vmem:[#allocation2 + $0x139] sm:$0xff]
        %v864 = vld [vmem:[#allocation2 + $0x141] sm:$0xff]
        %v865 = vld [vmem:[#allocation2 + $0x151] sm:$0xff]
        %v866 = vld [vmem:[#allocation2 + $0x159] sm:$0xff]
        %v867 = vld [vmem:[#allocation2 + $0x169] sm:$0xff]
        %v868 = vld [vmem:[#allocation2 + $0x171] sm:$0xff]
        %s869 = scalar_lea.vmem %s3, 16
        %v870 = vld [vmem:[%s869] sm:$0xff]
        %v871 = vld [vmem:[%s869 + $0x8] sm:$0xff]
        %v873 = vsel %vm724, %v837, 0
        %v876 = vsel %vm724, %v838, 0
        %v879 = vsel %vm724, %v839, 0
        %v882 = vsel %vm724, %v840, 0
        %v885 = vsel %vm724, %v841, 0
        %v888 = vsel %vm724, %v842, 0
        %v891 = vsel %vm724, %v843, 0
        %v894 = vsel %vm724, %v844, 0
        %v897 = vsel %vm724, %v845, 0
        %v900 = vsel %vm724, %v846, 0
        %v903 = vsel %vm724, %v847, 0
        %v906 = vsel %vm724, %v848, 0
        %v909 = vsel %vm724, %v849, 0
        %v912 = vsel %vm724, %v850, 0
        %v915 = vsel %vm724, %v851, 0
        %v918 = vsel %vm724, %v852, 0
        %v921 = vsel %vm724, %v853, 0
        %v924 = vsel %vm724, %v854, 0
        %v927 = vsel %vm724, %v855, 0
        %v930 = vsel %vm724, %v856, 0
        %v933 = vsel %vm724, %v857, 0
        %v936 = vsel %vm724, %v858, 0
        %v939 = vsel %vm724, %v859, 0
        %v942 = vsel %vm724, %v860, 0
        %v945 = vsel %vm724, %v861, 0
        %v948 = vsel %vm724, %v862, 0
        %v951 = vsel %vm724, %v863, 0
        %v954 = vsel %vm724, %v864, 0
        %v957 = vsel %vm724, %v865, 0
        %v960 = vsel %vm724, %v866, 0
        %v963 = vsel %vm724, %v867, 0
        %v966 = vsel %vm724, %v868, 0
        %968 = vmatprep.subr.mxu0 0.0
        %969 = vmatpush1.msra.mxu0 0.0
        %970 = vmatprep.subr.mxu0 0.0
        %971 = vmatpush1.msra.mxu0 0.0
        %972 = vmatprep.subr.mxu0 0.0
        %973 = vmatpush1.msra.mxu0 0.0
        %974 = vmatprep.subr.mxu0 0.0
        %975 = vmatpush1.msra.mxu0 0.0
        %976 = vmatprep.subr.mxu0 0.0
        %977 = vmatpush1.msra.mxu0 0.0
        %978 = vmatprep.subr.mxu0 0.0
        %979 = vmatpush1.msra.mxu0 0.0
        %980 = vmatprep.subr.mxu0 0.0
        %981 = vmatpush1.msra.mxu0 0.0
        %982 = vmatprep.subr.mxu0 0.0
        %983 = vmatpush1.msra.mxu0 0.0
        %984 = vmatprep.subr.mxu0 0.0
        %985 = vmatpush1.msra.mxu0 0.0
        %986 = vmatprep.subr.mxu0 0.0
        %987 = vmatpush1.msra.mxu0 0.0
        %988 = vmatprep.subr.mxu0 0.0
        %989 = vmatpush1.msra.mxu0 0.0
        %990 = vmatprep.subr.mxu0 0.0
        %991 = vmatpush1.msra.mxu0 0.0
        %992 = vmatprep.subr.mxu0 0.0
        %993 = vmatpush1.msra.mxu0 0.0
        %994 = vmatprep.subr.mxu0 0.0
        %995 = vmatpush1.msra.mxu0 0.0
        %996 = vmatprep.subr.mxu0 0.0
        %997 = vmatpush1.msra.mxu0 %v871
        %998 = vmatprep.subr.mxu0 0.0
        %999 = vmatpush1.msra.mxu0 %v870
        %1000 = vmatprep.subr.mxu0 0.0
        %1001 = vmatpush2.msra.mxu0 0.0
        %1002 = vmatprep.subr.mxu0 0.0
        %1003 = vmatpush2.msra.mxu0 0.0
        %1004 = vmatprep.subr.mxu0 0.0
        %1005 = vmatpush2.msra.mxu0 0.0
        %1006 = vmatprep.subr.mxu0 0.0
        %1007 = vmatpush2.msra.mxu0 0.0
        %1008 = vmatprep.subr.mxu0 0.0
        %1009 = vmatpush2.msra.mxu0 0.0
        %1010 = vmatprep.subr.mxu0 0.0
        %1011 = vmatpush2.msra.mxu0 0.0
        %1012 = vmatprep.subr.mxu0 0.0
        %1013 = vmatpush2.msra.mxu0 0.0
        %1014 = vmatprep.subr.mxu0 0.0
        %1015 = vmatpush2.msra.mxu0 0.0
        %1016 = vmatprep.subr.mxu0 0.0
        %1017 = vmatpush2.msra.mxu0 0.0
        %1018 = vmatprep.subr.mxu0 0.0
        %1019 = vmatpush2.msra.mxu0 0.0
        %1020 = vmatprep.subr.mxu0 0.0
        %1021 = vmatpush2.msra.mxu0 0.0
        %1022 = vmatprep.subr.mxu0 0.0
        %1023 = vmatpush2.msra.mxu0 0.0
        %1024 = vmatprep.subr.mxu0 0.0
        %1025 = vmatpush2.msra.mxu0 0.0
        %1026 = vmatprep.subr.mxu0 0.0
        %1027 = vmatpush2.msra.mxu0 0.0
        %1028 = vmatprep.subr.mxu0 0.0
        %1029 = vmatpush2.msra.mxu0 0.0
        %1030 = vmatprep.subr.mxu0 0.0
        %1031 = vmatpush2.msra.mxu0 0.0
        %1032 = vmatprep.mubr.f32.mxu0 0.0
        %1033 = vmatmul.mubr.f32.gmra.mxu0 %v873
        %v1034 = vpop.f32.mrf.mxu0
        %v1035 = vadd.f32 0.0, %v1034
        %v1036 = vpop.f32.mrf.mxu0
        %1037 = vmatprep.mubr.f32.mxu0 0.0
        %1038 = vmatmul.mubr.f32.gmra.mxu0 %v876
        %v1039 = vpop.f32.mrf.mxu0
        %v1040 = vadd.f32 0.0, %v1039
        %v1041 = vpop.f32.mrf.mxu0
        %1042 = vmatprep.mubr.f32.mxu0 0.0
        %1043 = vmatmul.mubr.f32.gmra.mxu0 %v879
        %v1044 = vpop.f32.mrf.mxu0
        %v1045 = vadd.f32 0.0, %v1044
        %v1046 = vpop.f32.mrf.mxu0
        %1047 = vmatprep.mubr.f32.mxu0 0.0
        %1048 = vmatmul.mubr.f32.gmra.mxu0 %v882
        %v1049 = vpop.f32.mrf.mxu0
        %v1050 = vadd.f32 0.0, %v1049
        %v1051 = vpop.f32.mrf.mxu0
        %1052 = vmatprep.mubr.f32.mxu0 0.0
        %1053 = vmatmul.mubr.f32.gmra.mxu0 %v885
        %v1054 = vpop.f32.mrf.mxu0
        %v1055 = vadd.f32 0.0, %v1054
        %v1056 = vpop.f32.mrf.mxu0
        %1057 = vmatprep.mubr.f32.mxu0 0.0
        %1058 = vmatmul.mubr.f32.gmra.mxu0 %v888
        %v1059 = vpop.f32.mrf.mxu0
        %v1060 = vadd.f32 0.0, %v1059
        %v1061 = vpop.f32.mrf.mxu0
        %1062 = vmatprep.mubr.f32.mxu0 0.0
        %1063 = vmatmul.mubr.f32.gmra.mxu0 %v891
        %v1064 = vpop.f32.mrf.mxu0
        %v1065 = vadd.f32 0.0, %v1064
        %v1066 = vpop.f32.mrf.mxu0
        %1067 = vmatprep.mubr.f32.mxu0 0.0
        %1068 = vmatmul.mubr.f32.gmra.mxu0 %v894
        %v1069 = vpop.f32.mrf.mxu0
        %v1070 = vadd.f32 0.0, %v1069
        %v1071 = vpop.f32.mrf.mxu0
        %1072 = vmatprep.mubr.f32.mxu0 0.0
        %1073 = vmatmul.mubr.f32.gmra.mxu0 %v897
        %v1074 = vpop.f32.mrf.mxu0
        %v1075 = vadd.f32 0.0, %v1074
        %v1076 = vpop.f32.mrf.mxu0
        %1077 = vmatprep.mubr.f32.mxu0 0.0
        %1078 = vmatmul.mubr.f32.gmra.mxu0 %v900
        %v1079 = vpop.f32.mrf.mxu0
        %v1080 = vadd.f32 0.0, %v1079
        %v1081 = vpop.f32.mrf.mxu0
        %1082 = vmatprep.mubr.f32.mxu0 0.0
        %1083 = vmatmul.mubr.f32.gmra.mxu0 %v903
        %v1084 = vpop.f32.mrf.mxu0
        %v1085 = vadd.f32 0.0, %v1084
        %v1086 = vpop.f32.mrf.mxu0
        %1087 = vmatprep.mubr.f32.mxu0 0.0
        %1088 = vmatmul.mubr.f32.gmra.mxu0 %v906
        %v1089 = vpop.f32.mrf.mxu0
        %v1090 = vadd.f32 0.0, %v1089
        %v1091 = vpop.f32.mrf.mxu0
        %1092 = vmatprep.mubr.f32.mxu0 0.0
        %1093 = vmatmul.mubr.f32.gmra.mxu0 %v909
        %v1094 = vpop.f32.mrf.mxu0
        %v1095 = vadd.f32 0.0, %v1094
        %v1096 = vpop.f32.mrf.mxu0
        %1097 = vmatprep.mubr.f32.mxu0 0.0
        %1098 = vmatmul.mubr.f32.gmra.mxu0 %v912
        %v1099 = vpop.f32.mrf.mxu0
        %v1100 = vadd.f32 0.0, %v1099
        %v1101 = vpop.f32.mrf.mxu0
        %1102 = vmatprep.mubr.f32.mxu0 0.0
        %1103 = vmatmul.mubr.f32.gmra.mxu0 %v915
        %v1104 = vpop.f32.mrf.mxu0
        %v1105 = vadd.f32 0.0, %v1104
        %v1106 = vpop.f32.mrf.mxu0
        %1107 = vmatprep.mubr.f32.mxu0 0.0
        %1108 = vmatmul.mubr.f32.gmra.mxu0 %v918
        %v1109 = vpop.f32.mrf.mxu0
        %v1110 = vadd.f32 0.0, %v1109
        %v1111 = vpop.f32.mrf.mxu0
        %1112 = vmatprep.mubr.f32.mxu0 0.0
        %1113 = vmatmul.mubr.f32.gmra.mxu0 %v921
        %v1114 = vpop.f32.mrf.mxu0
        %v1115 = vadd.f32 0.0, %v1114
        %v1116 = vpop.f32.mrf.mxu0
        %1117 = vmatprep.mubr.f32.mxu0 0.0
        %1118 = vmatmul.mubr.f32.gmra.mxu0 %v924
        %v1119 = vpop.f32.mrf.mxu0
        %v1120 = vadd.f32 0.0, %v1119
        %v1121 = vpop.f32.mrf.mxu0
        %1122 = vmatprep.mubr.f32.mxu0 0.0
        %1123 = vmatmul.mubr.f32.gmra.mxu0 %v927
        %v1124 = vpop.f32.mrf.mxu0
        %v1125 = vadd.f32 0.0, %v1124
        %v1126 = vpop.f32.mrf.mxu0
        %1127 = vmatprep.mubr.f32.mxu0 0.0
        %1128 = vmatmul.mubr.f32.gmra.mxu0 %v930
        %v1129 = vpop.f32.mrf.mxu0
        %v1130 = vadd.f32 0.0, %v1129
        %v1131 = vpop.f32.mrf.mxu0
        %1132 = vmatprep.mubr.f32.mxu0 0.0
        %1133 = vmatmul.mubr.f32.gmra.mxu0 %v933
        %v1134 = vpop.f32.mrf.mxu0
        %v1135 = vadd.f32 0.0, %v1134
        %v1136 = vpop.f32.mrf.mxu0
        %1137 = vmatprep.mubr.f32.mxu0 0.0
        %1138 = vmatmul.mubr.f32.gmra.mxu0 %v936
        %v1139 = vpop.f32.mrf.mxu0
        %v1140 = vadd.f32 0.0, %v1139
        %v1141 = vpop.f32.mrf.mxu0
        %1142 = vmatprep.mubr.f32.mxu0 0.0
        %1143 = vmatmul.mubr.f32.gmra.mxu0 %v939
        %v1144 = vpop.f32.mrf.mxu0
        %v1145 = vadd.f32 0.0, %v1144
        %v1146 = vpop.f32.mrf.mxu0
        %1147 = vmatprep.mubr.f32.mxu0 0.0
        %1148 = vmatmul.mubr.f32.gmra.mxu0 %v942
        %v1149 = vpop.f32.mrf.mxu0
        %v1150 = vadd.f32 0.0, %v1149
        %v1151 = vpop.f32.mrf.mxu0
        %1152 = vmatprep.mubr.f32.mxu0 0.0
        %1153 = vmatmul.mubr.f32.gmra.mxu0 %v945
        %v1154 = vpop.f32.mrf.mxu0
        %v1155 = vadd.f32 0.0, %v1154
        %v1156 = vpop.f32.mrf.mxu0
        %1157 = vmatprep.mubr.f32.mxu0 0.0
        %1158 = vmatmul.mubr.f32.gmra.mxu0 %v948
        %v1159 = vpop.f32.mrf.mxu0
        %v1160 = vadd.f32 0.0, %v1159
        %v1161 = vpop.f32.mrf.mxu0
        %1162 = vmatprep.mubr.f32.mxu0 0.0
        %1163 = vmatmul.mubr.f32.gmra.mxu0 %v951
        %v1164 = vpop.f32.mrf.mxu0
        %v1165 = vadd.f32 0.0, %v1164
        %v1166 = vpop.f32.mrf.mxu0
        %1167 = vmatprep.mubr.f32.mxu0 0.0
        %1168 = vmatmul.mubr.f32.gmra.mxu0 %v954
        %v1169 = vpop.f32.mrf.mxu0
        %v1170 = vadd.f32 0.0, %v1169
        %v1171 = vpop.f32.mrf.mxu0
        %1172 = vmatprep.mubr.f32.mxu0 0.0
        %1173 = vmatmul.mubr.f32.gmra.mxu0 %v957
        %v1174 = vpop.f32.mrf.mxu0
        %v1175 = vadd.f32 0.0, %v1174
        %v1176 = vpop.f32.mrf.mxu0
        %1177 = vmatprep.mubr.f32.mxu0 0.0
        %1178 = vmatmul.mubr.f32.gmra.mxu0 %v960
        %v1179 = vpop.f32.mrf.mxu0
        %v1180 = vadd.f32 0.0, %v1179
        %v1181 = vpop.f32.mrf.mxu0
        %1182 = vmatprep.mubr.f32.mxu0 0.0
        %1183 = vmatmul.mubr.f32.gmra.mxu0 %v963
        %v1184 = vpop.f32.mrf.mxu0
        %v1185 = vadd.f32 0.0, %v1184
        %v1186 = vpop.f32.mrf.mxu0
        %1187 = vmatprep.mubr.f32.mxu0 0.0
        %1188 = vmatmul.mubr.f32.gmra.mxu0 %v966
        %v1189 = vpop.f32.mrf.mxu0
        %v1190 = vadd.f32 0.0, %v1189
        %v1191 = vpop.f32.mrf.mxu0
        %1192 = vdwg.mxu0
        %v1194 = vsel %vm724, %v803, 0
        %v1197 = vsel %vm724, %v804, 0
        %v1200 = vsel %vm724, %v805, 0
        %v1203 = vsel %vm724, %v806, 0
        %v1206 = vsel %vm724, %v807, 0
        %v1209 = vsel %vm724, %v808, 0
        %v1212 = vsel %vm724, %v809, 0
        %v1215 = vsel %vm724, %v810, 0
        %v1218 = vsel %vm724, %v811, 0
        %v1221 = vsel %vm724, %v812, 0
        %v1224 = vsel %vm724, %v813, 0
        %v1227 = vsel %vm724, %v814, 0
        %v1230 = vsel %vm724, %v815, 0
        %v1233 = vsel %vm724, %v816, 0
        %v1236 = vsel %vm724, %v817, 0
        %v1239 = vsel %vm724, %v818, 0
        %v1242 = vsel %vm724, %v819, 0
        %v1245 = vsel %vm724, %v820, 0
        %v1248 = vsel %vm724, %v821, 0
        %v1251 = vsel %vm724, %v822, 0
        %v1254 = vsel %vm724, %v823, 0
        %v1257 = vsel %vm724, %v824, 0
        %v1260 = vsel %vm724, %v825, 0
        %v1263 = vsel %vm724, %v826, 0
        %v1266 = vsel %vm724, %v827, 0
        %v1269 = vsel %vm724, %v828, 0
        %v1272 = vsel %vm724, %v829, 0
        %v1275 = vsel %vm724, %v830, 0
        %v1278 = vsel %vm724, %v831, 0
        %v1281 = vsel %vm724, %v832, 0
        %v1284 = vsel %vm724, %v833, 0
        %v1287 = vsel %vm724, %v834, 0
        %1289 = vmatprep.subr.mxu0 0.0
        %1290 = vmatpush1.msra.mxu0 0.0
        %1291 = vmatprep.subr.mxu0 0.0
        %1292 = vmatpush1.msra.mxu0 0.0
        %1293 = vmatprep.subr.mxu0 0.0
        %1294 = vmatpush1.msra.mxu0 0.0
        %1295 = vmatprep.subr.mxu0 0.0
        %1296 = vmatpush1.msra.mxu0 0.0
        %1297 = vmatprep.subr.mxu0 0.0
        %1298 = vmatpush1.msra.mxu0 0.0
        %1299 = vmatprep.subr.mxu0 0.0
        %1300 = vmatpush1.msra.mxu0 0.0
        %1301 = vmatprep.subr.mxu0 0.0
        %1302 = vmatpush1.msra.mxu0 0.0
        %1303 = vmatprep.subr.mxu0 0.0
        %1304 = vmatpush1.msra.mxu0 0.0
        %1305 = vmatprep.subr.mxu0 0.0
        %1306 = vmatpush1.msra.mxu0 0.0
        %1307 = vmatprep.subr.mxu0 0.0
        %1308 = vmatpush1.msra.mxu0 0.0
        %1309 = vmatprep.subr.mxu0 0.0
        %1310 = vmatpush1.msra.mxu0 0.0
        %1311 = vmatprep.subr.mxu0 0.0
        %1312 = vmatpush1.msra.mxu0 0.0
        %1313 = vmatprep.subr.mxu0 0.0
        %1314 = vmatpush1.msra.mxu0 0.0
        %1315 = vmatprep.subr.mxu0 0.0
        %1316 = vmatpush1.msra.mxu0 0.0
        %1317 = vmatprep.subr.mxu0 0.0
        %1318 = vmatpush1.msra.mxu0 %v836
        %1319 = vmatprep.subr.mxu0 0.0
        %1320 = vmatpush1.msra.mxu0 %v835
        %1321 = vmatprep.subr.mxu0 0.0
        %1322 = vmatpush2.msra.mxu0 0.0
        %1323 = vmatprep.subr.mxu0 0.0
        %1324 = vmatpush2.msra.mxu0 0.0
        %1325 = vmatprep.subr.mxu0 0.0
        %1326 = vmatpush2.msra.mxu0 0.0
        %1327 = vmatprep.subr.mxu0 0.0
        %1328 = vmatpush2.msra.mxu0 0.0
        %1329 = vmatprep.subr.mxu0 0.0
        %1330 = vmatpush2.msra.mxu0 0.0
        %1331 = vmatprep.subr.mxu0 0.0
        %1332 = vmatpush2.msra.mxu0 0.0
        %1333 = vmatprep.subr.mxu0 0.0
        %1334 = vmatpush2.msra.mxu0 0.0
        %1335 = vmatprep.subr.mxu0 0.0
        %1336 = vmatpush2.msra.mxu0 0.0
        %1337 = vmatprep.subr.mxu0 0.0
        %1338 = vmatpush2.msra.mxu0 0.0
        %1339 = vmatprep.subr.mxu0 0.0
        %1340 = vmatpush2.msra.mxu0 0.0
        %1341 = vmatprep.subr.mxu0 0.0
        %1342 = vmatpush2.msra.mxu0 0.0
        %1343 = vmatprep.subr.mxu0 0.0
        %1344 = vmatpush2.msra.mxu0 0.0
        %1345 = vmatprep.subr.mxu0 0.0
        %1346 = vmatpush2.msra.mxu0 0.0
        %1347 = vmatprep.subr.mxu0 0.0
        %1348 = vmatpush2.msra.mxu0 0.0
        %1349 = vmatprep.subr.mxu0 0.0
        %1350 = vmatpush2.msra.mxu0 0.0
        %1351 = vmatprep.subr.mxu0 0.0
        %1352 = vmatpush2.msra.mxu0 0.0
        %1353 = vmatprep.mubr.f32.mxu0 0.0
        %1354 = vmatmul.mubr.f32.gmra.mxu0 %v1194
        %v1355 = vpop.f32.mrf.mxu0
        %v1356 = vadd.f32 %v1035, %v1355
        %v1357 = vpop.f32.mrf.mxu0
        %1358 = vmatprep.mubr.f32.mxu0 0.0
        %1359 = vmatmul.mubr.f32.gmra.mxu0 %v1197
        %v1360 = vpop.f32.mrf.mxu0
        %v1361 = vadd.f32 %v1040, %v1360
        %v1362 = vpop.f32.mrf.mxu0
        %1363 = vmatprep.mubr.f32.mxu0 0.0
        %1364 = vmatmul.mubr.f32.gmra.mxu0 %v1200
        %v1365 = vpop.f32.mrf.mxu0
        %v1366 = vadd.f32 %v1045, %v1365
        %v1367 = vpop.f32.mrf.mxu0
        %1368 = vmatprep.mubr.f32.mxu0 0.0
        %1369 = vmatmul.mubr.f32.gmra.mxu0 %v1203
        %v1370 = vpop.f32.mrf.mxu0
        %v1371 = vadd.f32 %v1050, %v1370
        %v1372 = vpop.f32.mrf.mxu0
        %1373 = vmatprep.mubr.f32.mxu0 0.0
        %1374 = vmatmul.mubr.f32.gmra.mxu0 %v1206
        %v1375 = vpop.f32.mrf.mxu0
        %v1376 = vadd.f32 %v1055, %v1375
        %v1377 = vpop.f32.mrf.mxu0
        %1378 = vmatprep.mubr.f32.mxu0 0.0
        %1379 = vmatmul.mubr.f32.gmra.mxu0 %v1209
        %v1380 = vpop.f32.mrf.mxu0
        %v1381 = vadd.f32 %v1060, %v1380
        %v1382 = vpop.f32.mrf.mxu0
        %1383 = vmatprep.mubr.f32.mxu0 0.0
        %1384 = vmatmul.mubr.f32.gmra.mxu0 %v1212
        %v1385 = vpop.f32.mrf.mxu0
        %v1386 = vadd.f32 %v1065, %v1385
        %v1387 = vpop.f32.mrf.mxu0
        %1388 = vmatprep.mubr.f32.mxu0 0.0
        %1389 = vmatmul.mubr.f32.gmra.mxu0 %v1215
        %v1390 = vpop.f32.mrf.mxu0
        %v1391 = vadd.f32 %v1070, %v1390
        %v1392 = vpop.f32.mrf.mxu0
        %1393 = vmatprep.mubr.f32.mxu0 0.0
        %1394 = vmatmul.mubr.f32.gmra.mxu0 %v1218
        %v1395 = vpop.f32.mrf.mxu0
        %v1396 = vadd.f32 %v1075, %v1395
        %v1397 = vpop.f32.mrf.mxu0
        %1398 = vmatprep.mubr.f32.mxu0 0.0
        %1399 = vmatmul.mubr.f32.gmra.mxu0 %v1221
        %v1400 = vpop.f32.mrf.mxu0
        %v1401 = vadd.f32 %v1080, %v1400
        %v1402 = vpop.f32.mrf.mxu0
        %1403 = vmatprep.mubr.f32.mxu0 0.0
        %1404 = vmatmul.mubr.f32.gmra.mxu0 %v1224
        %v1405 = vpop.f32.mrf.mxu0
        %v1406 = vadd.f32 %v1085, %v1405
        %v1407 = vpop.f32.mrf.mxu0
        %1408 = vmatprep.mubr.f32.mxu0 0.0
        %1409 = vmatmul.mubr.f32.gmra.mxu0 %v1227
        %v1410 = vpop.f32.mrf.mxu0
        %v1411 = vadd.f32 %v1090, %v1410
        %v1412 = vpop.f32.mrf.mxu0
        %1413 = vmatprep.mubr.f32.mxu0 0.0
        %1414 = vmatmul.mubr.f32.gmra.mxu0 %v1230
        %v1415 = vpop.f32.mrf.mxu0
        %v1416 = vadd.f32 %v1095, %v1415
        %v1417 = vpop.f32.mrf.mxu0
        %1418 = vmatprep.mubr.f32.mxu0 0.0
        %1419 = vmatmul.mubr.f32.gmra.mxu0 %v1233
        %v1420 = vpop.f32.mrf.mxu0
        %v1421 = vadd.f32 %v1100, %v1420
        %v1422 = vpop.f32.mrf.mxu0
        %1423 = vmatprep.mubr.f32.mxu0 0.0
        %1424 = vmatmul.mubr.f32.gmra.mxu0 %v1236
        %v1425 = vpop.f32.mrf.mxu0
        %v1426 = vadd.f32 %v1105, %v1425
        %v1427 = vpop.f32.mrf.mxu0
        %1428 = vmatprep.mubr.f32.mxu0 0.0
        %1429 = vmatmul.mubr.f32.gmra.mxu0 %v1239
        %v1430 = vpop.f32.mrf.mxu0
        %v1431 = vadd.f32 %v1110, %v1430
        %v1432 = vpop.f32.mrf.mxu0
        %1433 = vmatprep.mubr.f32.mxu0 0.0
        %1434 = vmatmul.mubr.f32.gmra.mxu0 %v1242
        %v1435 = vpop.f32.mrf.mxu0
        %v1436 = vadd.f32 %v1115, %v1435
        %v1437 = vpop.f32.mrf.mxu0
        %1438 = vmatprep.mubr.f32.mxu0 0.0
        %1439 = vmatmul.mubr.f32.gmra.mxu0 %v1245
        %v1440 = vpop.f32.mrf.mxu0
        %v1441 = vadd.f32 %v1120, %v1440
        %v1442 = vpop.f32.mrf.mxu0
        %1443 = vmatprep.mubr.f32.mxu0 0.0
        %1444 = vmatmul.mubr.f32.gmra.mxu0 %v1248
        %v1445 = vpop.f32.mrf.mxu0
        %v1446 = vadd.f32 %v1125, %v1445
        %v1447 = vpop.f32.mrf.mxu0
        %1448 = vmatprep.mubr.f32.mxu0 0.0
        %1449 = vmatmul.mubr.f32.gmra.mxu0 %v1251
        %v1450 = vpop.f32.mrf.mxu0
        %v1451 = vadd.f32 %v1130, %v1450
        %v1452 = vpop.f32.mrf.mxu0
        %1453 = vmatprep.mubr.f32.mxu0 0.0
        %1454 = vmatmul.mubr.f32.gmra.mxu0 %v1254
        %v1455 = vpop.f32.mrf.mxu0
        %v1456 = vadd.f32 %v1135, %v1455
        %v1457 = vpop.f32.mrf.mxu0
        %1458 = vmatprep.mubr.f32.mxu0 0.0
        %1459 = vmatmul.mubr.f32.gmra.mxu0 %v1257
        %v1460 = vpop.f32.mrf.mxu0
        %v1461 = vadd.f32 %v1140, %v1460
        %v1462 = vpop.f32.mrf.mxu0
        %1463 = vmatprep.mubr.f32.mxu0 0.0
        %1464 = vmatmul.mubr.f32.gmra.mxu0 %v1260
        %v1465 = vpop.f32.mrf.mxu0
        %v1466 = vadd.f32 %v1145, %v1465
        %v1467 = vpop.f32.mrf.mxu0
        %1468 = vmatprep.mubr.f32.mxu0 0.0
        %1469 = vmatmul.mubr.f32.gmra.mxu0 %v1263
        %v1470 = vpop.f32.mrf.mxu0
        %v1471 = vadd.f32 %v1150, %v1470
        %v1472 = vpop.f32.mrf.mxu0
        %1473 = vmatprep.mubr.f32.mxu0 0.0
        %1474 = vmatmul.mubr.f32.gmra.mxu0 %v1266
        %v1475 = vpop.f32.mrf.mxu0
        %v1476 = vadd.f32 %v1155, %v1475
        %v1477 = vpop.f32.mrf.mxu0
        %1478 = vmatprep.mubr.f32.mxu0 0.0
        %1479 = vmatmul.mubr.f32.gmra.mxu0 %v1269
        %v1480 = vpop.f32.mrf.mxu0
        %v1481 = vadd.f32 %v1160, %v1480
        %v1482 = vpop.f32.mrf.mxu0
        %1483 = vmatprep.mubr.f32.mxu0 0.0
        %1484 = vmatmul.mubr.f32.gmra.mxu0 %v1272
        %v1485 = vpop.f32.mrf.mxu0
        %v1486 = vadd.f32 %v1165, %v1485
        %v1487 = vpop.f32.mrf.mxu0
        %1488 = vmatprep.mubr.f32.mxu0 0.0
        %1489 = vmatmul.mubr.f32.gmra.mxu0 %v1275
        %v1490 = vpop.f32.mrf.mxu0
        %v1491 = vadd.f32 %v1170, %v1490
        %v1492 = vpop.f32.mrf.mxu0
        %1493 = vmatprep.mubr.f32.mxu0 0.0
        %1494 = vmatmul.mubr.f32.gmra.mxu0 %v1278
        %v1495 = vpop.f32.mrf.mxu0
        %v1496 = vadd.f32 %v1175, %v1495
        %v1497 = vpop.f32.mrf.mxu0
        %1498 = vmatprep.mubr.f32.mxu0 0.0
        %1499 = vmatmul.mubr.f32.gmra.mxu0 %v1281
        %v1500 = vpop.f32.mrf.mxu0
        %v1501 = vadd.f32 %v1180, %v1500
        %v1502 = vpop.f32.mrf.mxu0
        %1503 = vmatprep.mubr.f32.mxu0 0.0
        %1504 = vmatmul.mubr.f32.gmra.mxu0 %v1284
        %v1505 = vpop.f32.mrf.mxu0
        %v1506 = vadd.f32 %v1185, %v1505
        %v1507 = vpop.f32.mrf.mxu0
        %1508 = vmatprep.mubr.f32.mxu0 0.0
        %1509 = vmatmul.mubr.f32.gmra.mxu0 %v1287
        %v1510 = vpop.f32.mrf.mxu0
        %v1511 = vadd.f32 %v1190, %v1510
        %v1512 = vpop.f32.mrf.mxu0
        %1513 = vdwg.mxu0
        %v1514 = vld [vmem:[#allocation2 + $0x2] sm:$0xff]
        %v1515 = vld [vmem:[#allocation2 + $0xa] sm:$0xff]
        %v1516 = vld [vmem:[#allocation2 + $0x1a] sm:$0xff]
        %v1517 = vld [vmem:[#allocation2 + $0x22] sm:$0xff]
        %v1518 = vld [vmem:[#allocation2 + $0x32] sm:$0xff]
        %v1519 = vld [vmem:[#allocation2 + $0x3a] sm:$0xff]
        %v1520 = vld [vmem:[#allocation2 + $0x4a] sm:$0xff]
        %v1521 = vld [vmem:[#allocation2 + $0x52] sm:$0xff]
        %v1522 = vld [vmem:[#allocation2 + $0x62] sm:$0xff]
        %v1523 = vld [vmem:[#allocation2 + $0x6a] sm:$0xff]
        %v1524 = vld [vmem:[#allocation2 + $0x7a] sm:$0xff]
        %v1525 = vld [vmem:[#allocation2 + $0x82] sm:$0xff]
        %v1526 = vld [vmem:[#allocation2 + $0x92] sm:$0xff]
        %v1527 = vld [vmem:[#allocation2 + $0x9a] sm:$0xff]
        %v1528 = vld [vmem:[#allocation2 + $0xaa] sm:$0xff]
        %v1529 = vld [vmem:[#allocation2 + $0xb2] sm:$0xff]
        %v1530 = vld [vmem:[#allocation2 + $0xc2] sm:$0xff]
        %v1531 = vld [vmem:[#allocation2 + $0xca] sm:$0xff]
        %v1532 = vld [vmem:[#allocation2 + $0xda] sm:$0xff]
        %v1533 = vld [vmem:[#allocation2 + $0xe2] sm:$0xff]
        %v1534 = vld [vmem:[#allocation2 + $0xf2] sm:$0xff]
        %v1535 = vld [vmem:[#allocation2 + $0xfa] sm:$0xff]
        %v1536 = vld [vmem:[#allocation2 + $0x10a] sm:$0xff]
        %v1537 = vld [vmem:[#allocation2 + $0x112] sm:$0xff]
        %v1538 = vld [vmem:[#allocation2 + $0x122] sm:$0xff]
        %v1539 = vld [vmem:[#allocation2 + $0x12a] sm:$0xff]
        %v1540 = vld [vmem:[#allocation2 + $0x13a] sm:$0xff]
        %v1541 = vld [vmem:[#allocation2 + $0x142] sm:$0xff]
        %v1542 = vld [vmem:[#allocation2 + $0x152] sm:$0xff]
        %v1543 = vld [vmem:[#allocation2 + $0x15a] sm:$0xff]
        %v1544 = vld [vmem:[#allocation2 + $0x16a] sm:$0xff]
        %v1545 = vld [vmem:[#allocation2 + $0x172] sm:$0xff]
        %s1546 = scalar_lea.vmem %s3, 32
        %v1547 = vld [vmem:[%s1546] sm:$0xff]
        %v1548 = vld [vmem:[%s1546 + $0x8] sm:$0xff]
        %v1550 = vsel %vm724, %v1514, 0
        %v1553 = vsel %vm724, %v1515, 0
        %v1556 = vsel %vm724, %v1516, 0
        %v1559 = vsel %vm724, %v1517, 0
        %v1562 = vsel %vm724, %v1518, 0
        %v1565 = vsel %vm724, %v1519, 0
        %v1568 = vsel %vm724, %v1520, 0
        %v1571 = vsel %vm724, %v1521, 0
        %v1574 = vsel %vm724, %v1522, 0
        %v1577 = vsel %vm724, %v1523, 0
        %v1580 = vsel %vm724, %v1524, 0
        %v1583 = vsel %vm724, %v1525, 0
        %v1586 = vsel %vm724, %v1526, 0
        %v1589 = vsel %vm724, %v1527, 0
        %v1592 = vsel %vm724, %v1528, 0
        %v1595 = vsel %vm724, %v1529, 0
        %v1598 = vsel %vm724, %v1530, 0
        %v1601 = vsel %vm724, %v1531, 0
        %v1604 = vsel %vm724, %v1532, 0
        %v1607 = vsel %vm724, %v1533, 0
        %v1610 = vsel %vm724, %v1534, 0
        %v1613 = vsel %vm724, %v1535, 0
        %v1616 = vsel %vm724, %v1536, 0
        %v1619 = vsel %vm724, %v1537, 0
        %v1622 = vsel %vm724, %v1538, 0
        %v1625 = vsel %vm724, %v1539, 0
        %v1628 = vsel %vm724, %v1540, 0
        %v1631 = vsel %vm724, %v1541, 0
        %v1634 = vsel %vm724, %v1542, 0
        %v1637 = vsel %vm724, %v1543, 0
        %v1640 = vsel %vm724, %v1544, 0
        %v1643 = vsel %vm724, %v1545, 0
        %1645 = vmatprep.subr.mxu0 0.0
        %1646 = vmatpush1.msra.mxu0 0.0
        %1647 = vmatprep.subr.mxu0 0.0
        %1648 = vmatpush1.msra.mxu0 0.0
        %1649 = vmatprep.subr.mxu0 0.0
        %1650 = vmatpush1.msra.mxu0 0.0
        %1651 = vmatprep.subr.mxu0 0.0
        %1652 = vmatpush1.msra.mxu0 0.0
        %1653 = vmatprep.subr.mxu0 0.0
        %1654 = vmatpush1.msra.mxu0 0.0
        %1655 = vmatprep.subr.mxu0 0.0
        %1656 = vmatpush1.msra.mxu0 0.0
        %1657 = vmatprep.subr.mxu0 0.0
        %1658 = vmatpush1.msra.mxu0 0.0
        %1659 = vmatprep.subr.mxu0 0.0
        %1660 = vmatpush1.msra.mxu0 0.0
        %1661 = vmatprep.subr.mxu0 0.0
        %1662 = vmatpush1.msra.mxu0 0.0
        %1663 = vmatprep.subr.mxu0 0.0
        %1664 = vmatpush1.msra.mxu0 0.0
        %1665 = vmatprep.subr.mxu0 0.0
        %1666 = vmatpush1.msra.mxu0 0.0
        %1667 = vmatprep.subr.mxu0 0.0
        %1668 = vmatpush1.msra.mxu0 0.0
        %1669 = vmatprep.subr.mxu0 0.0
        %1670 = vmatpush1.msra.mxu0 0.0
        %1671 = vmatprep.subr.mxu0 0.0
        %1672 = vmatpush1.msra.mxu0 0.0
        %1673 = vmatprep.subr.mxu0 0.0
        %1674 = vmatpush1.msra.mxu0 %v1548
        %1675 = vmatprep.subr.mxu0 0.0
        %1676 = vmatpush1.msra.mxu0 %v1547
        %1677 = vmatprep.subr.mxu0 0.0
        %1678 = vmatpush2.msra.mxu0 0.0
        %1679 = vmatprep.subr.mxu0 0.0
        %1680 = vmatpush2.msra.mxu0 0.0
        %1681 = vmatprep.subr.mxu0 0.0
        %1682 = vmatpush2.msra.mxu0 0.0
        %1683 = vmatprep.subr.mxu0 0.0
        %1684 = vmatpush2.msra.mxu0 0.0
        %1685 = vmatprep.subr.mxu0 0.0
        %1686 = vmatpush2.msra.mxu0 0.0
        %1687 = vmatprep.subr.mxu0 0.0
        %1688 = vmatpush2.msra.mxu0 0.0
        %1689 = vmatprep.subr.mxu0 0.0
        %1690 = vmatpush2.msra.mxu0 0.0
        %1691 = vmatprep.subr.mxu0 0.0
        %1692 = vmatpush2.msra.mxu0 0.0
        %1693 = vmatprep.subr.mxu0 0.0
        %1694 = vmatpush2.msra.mxu0 0.0
        %1695 = vmatprep.subr.mxu0 0.0
        %1696 = vmatpush2.msra.mxu0 0.0
        %1697 = vmatprep.subr.mxu0 0.0
        %1698 = vmatpush2.msra.mxu0 0.0
        %1699 = vmatprep.subr.mxu0 0.0
        %1700 = vmatpush2.msra.mxu0 0.0
        %1701 = vmatprep.subr.mxu0 0.0
        %1702 = vmatpush2.msra.mxu0 0.0
        %1703 = vmatprep.subr.mxu0 0.0
        %1704 = vmatpush2.msra.mxu0 0.0
        %1705 = vmatprep.subr.mxu0 0.0
        %1706 = vmatpush2.msra.mxu0 0.0
        %1707 = vmatprep.subr.mxu0 0.0
        %1708 = vmatpush2.msra.mxu0 0.0
        %1709 = vmatprep.mubr.f32.mxu0 0.0
        %1710 = vmatmul.mubr.f32.gmra.mxu0 %v1550
        %v1711 = vpop.f32.mrf.mxu0
        %v1712 = vadd.f32 0.0, %v1711
        %v1713 = vpop.f32.mrf.mxu0
        %1714 = vmatprep.mubr.f32.mxu0 0.0
        %1715 = vmatmul.mubr.f32.gmra.mxu0 %v1553
        %v1716 = vpop.f32.mrf.mxu0
        %v1717 = vadd.f32 0.0, %v1716
        %v1718 = vpop.f32.mrf.mxu0
        %1719 = vmatprep.mubr.f32.mxu0 0.0
        %1720 = vmatmul.mubr.f32.gmra.mxu0 %v1556
        %v1721 = vpop.f32.mrf.mxu0
        %v1722 = vadd.f32 0.0, %v1721
        %v1723 = vpop.f32.mrf.mxu0
        %1724 = vmatprep.mubr.f32.mxu0 0.0
        %1725 = vmatmul.mubr.f32.gmra.mxu0 %v1559
        %v1726 = vpop.f32.mrf.mxu0
        %v1727 = vadd.f32 0.0, %v1726
        %v1728 = vpop.f32.mrf.mxu0
        %1729 = vmatprep.mubr.f32.mxu0 0.0
        %1730 = vmatmul.mubr.f32.gmra.mxu0 %v1562
        %v1731 = vpop.f32.mrf.mxu0
        %v1732 = vadd.f32 0.0, %v1731
        %v1733 = vpop.f32.mrf.mxu0
        %1734 = vmatprep.mubr.f32.mxu0 0.0
        %1735 = vmatmul.mubr.f32.gmra.mxu0 %v1565
        %v1736 = vpop.f32.mrf.mxu0
        %v1737 = vadd.f32 0.0, %v1736
        %v1738 = vpop.f32.mrf.mxu0
        %1739 = vmatprep.mubr.f32.mxu0 0.0
        %1740 = vmatmul.mubr.f32.gmra.mxu0 %v1568
        %v1741 = vpop.f32.mrf.mxu0
        %v1742 = vadd.f32 0.0, %v1741
        %v1743 = vpop.f32.mrf.mxu0
        %1744 = vmatprep.mubr.f32.mxu0 0.0
        %1745 = vmatmul.mubr.f32.gmra.mxu0 %v1571
        %v1746 = vpop.f32.mrf.mxu0
        %v1747 = vadd.f32 0.0, %v1746
        %v1748 = vpop.f32.mrf.mxu0
        %1749 = vmatprep.mubr.f32.mxu0 0.0
        %1750 = vmatmul.mubr.f32.gmra.mxu0 %v1574
        %v1751 = vpop.f32.mrf.mxu0
        %v1752 = vadd.f32 0.0, %v1751
        %v1753 = vpop.f32.mrf.mxu0
        %1754 = vmatprep.mubr.f32.mxu0 0.0
        %1755 = vmatmul.mubr.f32.gmra.mxu0 %v1577
        %v1756 = vpop.f32.mrf.mxu0
        %v1757 = vadd.f32 0.0, %v1756
        %v1758 = vpop.f32.mrf.mxu0
        %1759 = vmatprep.mubr.f32.mxu0 0.0
        %1760 = vmatmul.mubr.f32.gmra.mxu0 %v1580
        %v1761 = vpop.f32.mrf.mxu0
        %v1762 = vadd.f32 0.0, %v1761
        %v1763 = vpop.f32.mrf.mxu0
        %1764 = vmatprep.mubr.f32.mxu0 0.0
        %1765 = vmatmul.mubr.f32.gmra.mxu0 %v1583
        %v1766 = vpop.f32.mrf.mxu0
        %v1767 = vadd.f32 0.0, %v1766
        %v1768 = vpop.f32.mrf.mxu0
        %1769 = vmatprep.mubr.f32.mxu0 0.0
        %1770 = vmatmul.mubr.f32.gmra.mxu0 %v1586
        %v1771 = vpop.f32.mrf.mxu0
        %v1772 = vadd.f32 0.0, %v1771
        %v1773 = vpop.f32.mrf.mxu0
        %1774 = vmatprep.mubr.f32.mxu0 0.0
        %1775 = vmatmul.mubr.f32.gmra.mxu0 %v1589
        %v1776 = vpop.f32.mrf.mxu0
        %v1777 = vadd.f32 0.0, %v1776
        %v1778 = vpop.f32.mrf.mxu0
        %1779 = vmatprep.mubr.f32.mxu0 0.0
        %1780 = vmatmul.mubr.f32.gmra.mxu0 %v1592
        %v1781 = vpop.f32.mrf.mxu0
        %v1782 = vadd.f32 0.0, %v1781
        %v1783 = vpop.f32.mrf.mxu0
        %1784 = vmatprep.mubr.f32.mxu0 0.0
        %1785 = vmatmul.mubr.f32.gmra.mxu0 %v1595
        %v1786 = vpop.f32.mrf.mxu0
        %v1787 = vadd.f32 0.0, %v1786
        %v1788 = vpop.f32.mrf.mxu0
        %1789 = vmatprep.mubr.f32.mxu0 0.0
        %1790 = vmatmul.mubr.f32.gmra.mxu0 %v1598
        %v1791 = vpop.f32.mrf.mxu0
        %v1792 = vadd.f32 0.0, %v1791
        %v1793 = vpop.f32.mrf.mxu0
        %1794 = vmatprep.mubr.f32.mxu0 0.0
        %1795 = vmatmul.mubr.f32.gmra.mxu0 %v1601
        %v1796 = vpop.f32.mrf.mxu0
        %v1797 = vadd.f32 0.0, %v1796
        %v1798 = vpop.f32.mrf.mxu0
        %1799 = vmatprep.mubr.f32.mxu0 0.0
        %1800 = vmatmul.mubr.f32.gmra.mxu0 %v1604
        %v1801 = vpop.f32.mrf.mxu0
        %v1802 = vadd.f32 0.0, %v1801
        %v1803 = vpop.f32.mrf.mxu0
        %1804 = vmatprep.mubr.f32.mxu0 0.0
        %1805 = vmatmul.mubr.f32.gmra.mxu0 %v1607
        %v1806 = vpop.f32.mrf.mxu0
        %v1807 = vadd.f32 0.0, %v1806
        %v1808 = vpop.f32.mrf.mxu0
        %1809 = vmatprep.mubr.f32.mxu0 0.0
        %1810 = vmatmul.mubr.f32.gmra.mxu0 %v1610
        %v1811 = vpop.f32.mrf.mxu0
        %v1812 = vadd.f32 0.0, %v1811
        %v1813 = vpop.f32.mrf.mxu0
        %1814 = vmatprep.mubr.f32.mxu0 0.0
        %1815 = vmatmul.mubr.f32.gmra.mxu0 %v1613
        %v1816 = vpop.f32.mrf.mxu0
        %v1817 = vadd.f32 0.0, %v1816
        %v1818 = vpop.f32.mrf.mxu0
        %1819 = vmatprep.mubr.f32.mxu0 0.0
        %1820 = vmatmul.mubr.f32.gmra.mxu0 %v1616
        %v1821 = vpop.f32.mrf.mxu0
        %v1822 = vadd.f32 0.0, %v1821
        %v1823 = vpop.f32.mrf.mxu0
        %1824 = vmatprep.mubr.f32.mxu0 0.0
        %1825 = vmatmul.mubr.f32.gmra.mxu0 %v1619
        %v1826 = vpop.f32.mrf.mxu0
        %v1827 = vadd.f32 0.0, %v1826
        %v1828 = vpop.f32.mrf.mxu0
        %1829 = vmatprep.mubr.f32.mxu0 0.0
        %1830 = vmatmul.mubr.f32.gmra.mxu0 %v1622
        %v1831 = vpop.f32.mrf.mxu0
        %v1832 = vadd.f32 0.0, %v1831
        %v1833 = vpop.f32.mrf.mxu0
        %1834 = vmatprep.mubr.f32.mxu0 0.0
        %1835 = vmatmul.mubr.f32.gmra.mxu0 %v1625
        %v1836 = vpop.f32.mrf.mxu0
        %v1837 = vadd.f32 0.0, %v1836
        %v1838 = vpop.f32.mrf.mxu0
        %1839 = vmatprep.mubr.f32.mxu0 0.0
        %1840 = vmatmul.mubr.f32.gmra.mxu0 %v1628
        %v1841 = vpop.f32.mrf.mxu0
        %v1842 = vadd.f32 0.0, %v1841
        %v1843 = vpop.f32.mrf.mxu0
        %1844 = vmatprep.mubr.f32.mxu0 0.0
        %1845 = vmatmul.mubr.f32.gmra.mxu0 %v1631
        %v1846 = vpop.f32.mrf.mxu0
        %v1847 = vadd.f32 0.0, %v1846
        %v1848 = vpop.f32.mrf.mxu0
        %1849 = vmatprep.mubr.f32.mxu0 0.0
        %1850 = vmatmul.mubr.f32.gmra.mxu0 %v1634
        %v1851 = vpop.f32.mrf.mxu0
        %v1852 = vadd.f32 0.0, %v1851
        %v1853 = vpop.f32.mrf.mxu0
        %1854 = vmatprep.mubr.f32.mxu0 0.0
        %1855 = vmatmul.mubr.f32.gmra.mxu0 %v1637
        %v1856 = vpop.f32.mrf.mxu0
        %v1857 = vadd.f32 0.0, %v1856
        %v1858 = vpop.f32.mrf.mxu0
        %1859 = vmatprep.mubr.f32.mxu0 0.0
        %1860 = vmatmul.mubr.f32.gmra.mxu0 %v1640
        %v1861 = vpop.f32.mrf.mxu0
        %v1862 = vadd.f32 0.0, %v1861
        %v1863 = vpop.f32.mrf.mxu0
        %1864 = vmatprep.mubr.f32.mxu0 0.0
        %1865 = vmatmul.mubr.f32.gmra.mxu0 %v1643
        %v1866 = vpop.f32.mrf.mxu0
        %v1867 = vadd.f32 0.0, %v1866
        %v1868 = vpop.f32.mrf.mxu0
        %1869 = vdwg.mxu0
        %v1870 = vadd.f32 %v1356, %v1712
        %v1871 = vadd.f32 %v1361, %v1717
        %v1872 = vadd.f32 %v1366, %v1722
        %v1873 = vadd.f32 %v1371, %v1727
        %v1874 = vadd.f32 %v1376, %v1732
        %v1875 = vadd.f32 %v1381, %v1737
        %v1876 = vadd.f32 %v1386, %v1742
        %v1877 = vadd.f32 %v1391, %v1747
        %v1878 = vadd.f32 %v1396, %v1752
        %v1879 = vadd.f32 %v1401, %v1757
        %v1880 = vadd.f32 %v1406, %v1762
        %v1881 = vadd.f32 %v1411, %v1767
        %v1882 = vadd.f32 %v1416, %v1772
        %v1883 = vadd.f32 %v1421, %v1777
        %v1884 = vadd.f32 %v1426, %v1782
        %v1885 = vadd.f32 %v1431, %v1787
        %v1886 = vadd.f32 %v1436, %v1792
        %v1887 = vadd.f32 %v1441, %v1797
        %v1888 = vadd.f32 %v1446, %v1802
        %v1889 = vadd.f32 %v1451, %v1807
        %v1890 = vadd.f32 %v1456, %v1812
        %v1891 = vadd.f32 %v1461, %v1817
        %v1892 = vadd.f32 %v1466, %v1822
        %v1893 = vadd.f32 %v1471, %v1827
        %v1894 = vadd.f32 %v1476, %v1832
        %v1895 = vadd.f32 %v1481, %v1837
        %v1896 = vadd.f32 %v1486, %v1842
        %v1897 = vadd.f32 %v1491, %v1847
        %v1898 = vadd.f32 %v1496, %v1852
        %v1899 = vadd.f32 %v1501, %v1857
        %v1900 = vadd.f32 %v1506, %v1862
        %v1901 = vadd.f32 %v1511, %v1867
        %v1902 = vld [vmem:[%s770] sm:$0xff]
        %v1903 = vld [vmem:[%s770 + $0x8] sm:$0xff]
        %v1904 = vld [vmem:[%s770 + $0x18] sm:$0xff]
        %v1905 = vld [vmem:[%s770 + $0x20] sm:$0xff]
        %v1906 = vld [vmem:[%s770 + $0x30] sm:$0xff]
        %v1907 = vld [vmem:[%s770 + $0x38] sm:$0xff]
        %v1908 = vld [vmem:[%s770 + $0x48] sm:$0xff]
        %v1909 = vld [vmem:[%s770 + $0x50] sm:$0xff]
        %v1910 = vld [vmem:[%s770 + $0x60] sm:$0xff]
        %v1911 = vld [vmem:[%s770 + $0x68] sm:$0xff]
        %v1912 = vld [vmem:[%s770 + $0x78] sm:$0xff]
        %v1913 = vld [vmem:[%s770 + $0x80] sm:$0xff]
        %v1914 = vld [vmem:[%s770 + $0x90] sm:$0xff]
        %v1915 = vld [vmem:[%s770 + $0x98] sm:$0xff]
        %v1916 = vld [vmem:[%s770 + $0xa8] sm:$0xff]
        %v1917 = vld [vmem:[%s770 + $0xb0] sm:$0xff]
        %v1918 = vld [vmem:[%s770 + $0xc0] sm:$0xff]
        %v1919 = vld [vmem:[%s770 + $0xc8] sm:$0xff]
        %v1920 = vld [vmem:[%s770 + $0xd8] sm:$0xff]
        %v1921 = vld [vmem:[%s770 + $0xe0] sm:$0xff]
        %v1922 = vld [vmem:[%s770 + $0xf0] sm:$0xff]
        %v1923 = vld [vmem:[%s770 + $0xf8] sm:$0xff]
        %v1924 = vld [vmem:[%s770 + $0x108] sm:$0xff]
        %v1925 = vld [vmem:[%s770 + $0x110] sm:$0xff]
        %v1926 = vld [vmem:[%s770 + $0x120] sm:$0xff]
        %v1927 = vld [vmem:[%s770 + $0x128] sm:$0xff]
        %v1928 = vld [vmem:[%s770 + $0x138] sm:$0xff]
        %v1929 = vld [vmem:[%s770 + $0x140] sm:$0xff]
        %v1930 = vld [vmem:[%s770 + $0x150] sm:$0xff]
        %v1931 = vld [vmem:[%s770 + $0x158] sm:$0xff]
        %v1932 = vld [vmem:[%s770 + $0x168] sm:$0xff]
        %v1933 = vld [vmem:[%s770 + $0x170] sm:$0xff]
        %s1934 = scalar_lea.vmem %s3, 48
        %v1935 = vld [vmem:[%s1934] sm:$0xff]
        %v1936 = vld [vmem:[%s1934 + $0x8] sm:$0xff]
        %v1938 = vsel %vm724, %v1902, 0
        %v1941 = vsel %vm724, %v1903, 0
        %v1944 = vsel %vm724, %v1904, 0
        %v1947 = vsel %vm724, %v1905, 0
        %v1950 = vsel %vm724, %v1906, 0
        %v1953 = vsel %vm724, %v1907, 0
        %v1956 = vsel %vm724, %v1908, 0
        %v1959 = vsel %vm724, %v1909, 0
        %v1962 = vsel %vm724, %v1910, 0
        %v1965 = vsel %vm724, %v1911, 0
        %v1968 = vsel %vm724, %v1912, 0
        %v1971 = vsel %vm724, %v1913, 0
        %v1974 = vsel %vm724, %v1914, 0
        %v1977 = vsel %vm724, %v1915, 0
        %v1980 = vsel %vm724, %v1916, 0
        %v1983 = vsel %vm724, %v1917, 0
        %v1986 = vsel %vm724, %v1918, 0
        %v1989 = vsel %vm724, %v1919, 0
        %v1992 = vsel %vm724, %v1920, 0
        %v1995 = vsel %vm724, %v1921, 0
        %v1998 = vsel %vm724, %v1922, 0
        %v2001 = vsel %vm724, %v1923, 0
        %v2004 = vsel %vm724, %v1924, 0
        %v2007 = vsel %vm724, %v1925, 0
        %v2010 = vsel %vm724, %v1926, 0
        %v2013 = vsel %vm724, %v1927, 0
        %v2016 = vsel %vm724, %v1928, 0
        %v2019 = vsel %vm724, %v1929, 0
        %v2022 = vsel %vm724, %v1930, 0
        %v2025 = vsel %vm724, %v1931, 0
        %v2028 = vsel %vm724, %v1932, 0
        %v2031 = vsel %vm724, %v1933, 0
        %2033 = vmatprep.subr.mxu0 0.0
        %2034 = vmatpush1.msra.mxu0 0.0
        %2035 = vmatprep.subr.mxu0 0.0
        %2036 = vmatpush1.msra.mxu0 0.0
        %2037 = vmatprep.subr.mxu0 0.0
        %2038 = vmatpush1.msra.mxu0 0.0
        %2039 = vmatprep.subr.mxu0 0.0
        %2040 = vmatpush1.msra.mxu0 0.0
        %2041 = vmatprep.subr.mxu0 0.0
        %2042 = vmatpush1.msra.mxu0 0.0
        %2043 = vmatprep.subr.mxu0 0.0
        %2044 = vmatpush1.msra.mxu0 0.0
        %2045 = vmatprep.subr.mxu0 0.0
        %2046 = vmatpush1.msra.mxu0 0.0
        %2047 = vmatprep.subr.mxu0 0.0
        %2048 = vmatpush1.msra.mxu0 0.0
        %2049 = vmatprep.subr.mxu0 0.0
        %2050 = vmatpush1.msra.mxu0 0.0
        %2051 = vmatprep.subr.mxu0 0.0
        %2052 = vmatpush1.msra.mxu0 0.0
        %2053 = vmatprep.subr.mxu0 0.0
        %2054 = vmatpush1.msra.mxu0 0.0
        %2055 = vmatprep.subr.mxu0 0.0
        %2056 = vmatpush1.msra.mxu0 0.0
        %2057 = vmatprep.subr.mxu0 0.0
        %2058 = vmatpush1.msra.mxu0 0.0
        %2059 = vmatprep.subr.mxu0 0.0
        %2060 = vmatpush1.msra.mxu0 0.0
        %2061 = vmatprep.subr.mxu0 0.0
        %2062 = vmatpush1.msra.mxu0 %v1936
        %2063 = vmatprep.subr.mxu0 0.0
        %2064 = vmatpush1.msra.mxu0 %v1935
        %2065 = vmatprep.subr.mxu0 0.0
        %2066 = vmatpush2.msra.mxu0 0.0
        %2067 = vmatprep.subr.mxu0 0.0
        %2068 = vmatpush2.msra.mxu0 0.0
        %2069 = vmatprep.subr.mxu0 0.0
        %2070 = vmatpush2.msra.mxu0 0.0
        %2071 = vmatprep.subr.mxu0 0.0
        %2072 = vmatpush2.msra.mxu0 0.0
        %2073 = vmatprep.subr.mxu0 0.0
        %2074 = vmatpush2.msra.mxu0 0.0
        %2075 = vmatprep.subr.mxu0 0.0
        %2076 = vmatpush2.msra.mxu0 0.0
        %2077 = vmatprep.subr.mxu0 0.0
        %2078 = vmatpush2.msra.mxu0 0.0
        %2079 = vmatprep.subr.mxu0 0.0
        %2080 = vmatpush2.msra.mxu0 0.0
        %2081 = vmatprep.subr.mxu0 0.0
        %2082 = vmatpush2.msra.mxu0 0.0
        %2083 = vmatprep.subr.mxu0 0.0
        %2084 = vmatpush2.msra.mxu0 0.0
        %2085 = vmatprep.subr.mxu0 0.0
        %2086 = vmatpush2.msra.mxu0 0.0
        %2087 = vmatprep.subr.mxu0 0.0
        %2088 = vmatpush2.msra.mxu0 0.0
        %2089 = vmatprep.subr.mxu0 0.0
        %2090 = vmatpush2.msra.mxu0 0.0
        %2091 = vmatprep.subr.mxu0 0.0
        %2092 = vmatpush2.msra.mxu0 0.0
        %2093 = vmatprep.subr.mxu0 0.0
        %2094 = vmatpush2.msra.mxu0 0.0
        %2095 = vmatprep.subr.mxu0 0.0
        %2096 = vmatpush2.msra.mxu0 0.0
        %2097 = vmatprep.mubr.f32.mxu0 0.0
        %2098 = vmatmul.mubr.f32.gmra.mxu0 %v1938
        %v2099 = vpop.f32.mrf.mxu0
        %v2100 = vadd.f32 0.0, %v2099
        %v2101 = vpop.f32.mrf.mxu0
        %2102 = vmatprep.mubr.f32.mxu0 0.0
        %2103 = vmatmul.mubr.f32.gmra.mxu0 %v1941
        %v2104 = vpop.f32.mrf.mxu0
        %v2105 = vadd.f32 0.0, %v2104
        %v2106 = vpop.f32.mrf.mxu0
        %2107 = vmatprep.mubr.f32.mxu0 0.0
        %2108 = vmatmul.mubr.f32.gmra.mxu0 %v1944
        %v2109 = vpop.f32.mrf.mxu0
        %v2110 = vadd.f32 0.0, %v2109
        %v2111 = vpop.f32.mrf.mxu0
        %2112 = vmatprep.mubr.f32.mxu0 0.0
        %2113 = vmatmul.mubr.f32.gmra.mxu0 %v1947
        %v2114 = vpop.f32.mrf.mxu0
        %v2115 = vadd.f32 0.0, %v2114
        %v2116 = vpop.f32.mrf.mxu0
        %2117 = vmatprep.mubr.f32.mxu0 0.0
        %2118 = vmatmul.mubr.f32.gmra.mxu0 %v1950
        %v2119 = vpop.f32.mrf.mxu0
        %v2120 = vadd.f32 0.0, %v2119
        %v2121 = vpop.f32.mrf.mxu0
        %2122 = vmatprep.mubr.f32.mxu0 0.0
        %2123 = vmatmul.mubr.f32.gmra.mxu0 %v1953
        %v2124 = vpop.f32.mrf.mxu0
        %v2125 = vadd.f32 0.0, %v2124
        %v2126 = vpop.f32.mrf.mxu0
        %2127 = vmatprep.mubr.f32.mxu0 0.0
        %2128 = vmatmul.mubr.f32.gmra.mxu0 %v1956
        %v2129 = vpop.f32.mrf.mxu0
        %v2130 = vadd.f32 0.0, %v2129
        %v2131 = vpop.f32.mrf.mxu0
        %2132 = vmatprep.mubr.f32.mxu0 0.0
        %2133 = vmatmul.mubr.f32.gmra.mxu0 %v1959
        %v2134 = vpop.f32.mrf.mxu0
        %v2135 = vadd.f32 0.0, %v2134
        %v2136 = vpop.f32.mrf.mxu0
        %2137 = vmatprep.mubr.f32.mxu0 0.0
        %2138 = vmatmul.mubr.f32.gmra.mxu0 %v1962
        %v2139 = vpop.f32.mrf.mxu0
        %v2140 = vadd.f32 0.0, %v2139
        %v2141 = vpop.f32.mrf.mxu0
        %2142 = vmatprep.mubr.f32.mxu0 0.0
        %2143 = vmatmul.mubr.f32.gmra.mxu0 %v1965
        %v2144 = vpop.f32.mrf.mxu0
        %v2145 = vadd.f32 0.0, %v2144
        %v2146 = vpop.f32.mrf.mxu0
        %2147 = vmatprep.mubr.f32.mxu0 0.0
        %2148 = vmatmul.mubr.f32.gmra.mxu0 %v1968
        %v2149 = vpop.f32.mrf.mxu0
        %v2150 = vadd.f32 0.0, %v2149
        %v2151 = vpop.f32.mrf.mxu0
        %2152 = vmatprep.mubr.f32.mxu0 0.0
        %2153 = vmatmul.mubr.f32.gmra.mxu0 %v1971
        %v2154 = vpop.f32.mrf.mxu0
        %v2155 = vadd.f32 0.0, %v2154
        %v2156 = vpop.f32.mrf.mxu0
        %2157 = vmatprep.mubr.f32.mxu0 0.0
        %2158 = vmatmul.mubr.f32.gmra.mxu0 %v1974
        %v2159 = vpop.f32.mrf.mxu0
        %v2160 = vadd.f32 0.0, %v2159
        %v2161 = vpop.f32.mrf.mxu0
        %2162 = vmatprep.mubr.f32.mxu0 0.0
        %2163 = vmatmul.mubr.f32.gmra.mxu0 %v1977
        %v2164 = vpop.f32.mrf.mxu0
        %v2165 = vadd.f32 0.0, %v2164
        %v2166 = vpop.f32.mrf.mxu0
        %2167 = vmatprep.mubr.f32.mxu0 0.0
        %2168 = vmatmul.mubr.f32.gmra.mxu0 %v1980
        %v2169 = vpop.f32.mrf.mxu0
        %v2170 = vadd.f32 0.0, %v2169
        %v2171 = vpop.f32.mrf.mxu0
        %2172 = vmatprep.mubr.f32.mxu0 0.0
        %2173 = vmatmul.mubr.f32.gmra.mxu0 %v1983
        %v2174 = vpop.f32.mrf.mxu0
        %v2175 = vadd.f32 0.0, %v2174
        %v2176 = vpop.f32.mrf.mxu0
        %2177 = vmatprep.mubr.f32.mxu0 0.0
        %2178 = vmatmul.mubr.f32.gmra.mxu0 %v1986
        %v2179 = vpop.f32.mrf.mxu0
        %v2180 = vadd.f32 0.0, %v2179
        %v2181 = vpop.f32.mrf.mxu0
        %2182 = vmatprep.mubr.f32.mxu0 0.0
        %2183 = vmatmul.mubr.f32.gmra.mxu0 %v1989
        %v2184 = vpop.f32.mrf.mxu0
        %v2185 = vadd.f32 0.0, %v2184
        %v2186 = vpop.f32.mrf.mxu0
        %2187 = vmatprep.mubr.f32.mxu0 0.0
        %2188 = vmatmul.mubr.f32.gmra.mxu0 %v1992
        %v2189 = vpop.f32.mrf.mxu0
        %v2190 = vadd.f32 0.0, %v2189
        %v2191 = vpop.f32.mrf.mxu0
        %2192 = vmatprep.mubr.f32.mxu0 0.0
        %2193 = vmatmul.mubr.f32.gmra.mxu0 %v1995
        %v2194 = vpop.f32.mrf.mxu0
        %v2195 = vadd.f32 0.0, %v2194
        %v2196 = vpop.f32.mrf.mxu0
        %2197 = vmatprep.mubr.f32.mxu0 0.0
        %2198 = vmatmul.mubr.f32.gmra.mxu0 %v1998
        %v2199 = vpop.f32.mrf.mxu0
        %v2200 = vadd.f32 0.0, %v2199
        %v2201 = vpop.f32.mrf.mxu0
        %2202 = vmatprep.mubr.f32.mxu0 0.0
        %2203 = vmatmul.mubr.f32.gmra.mxu0 %v2001
        %v2204 = vpop.f32.mrf.mxu0
        %v2205 = vadd.f32 0.0, %v2204
        %v2206 = vpop.f32.mrf.mxu0
        %2207 = vmatprep.mubr.f32.mxu0 0.0
        %2208 = vmatmul.mubr.f32.gmra.mxu0 %v2004
        %v2209 = vpop.f32.mrf.mxu0
        %v2210 = vadd.f32 0.0, %v2209
        %v2211 = vpop.f32.mrf.mxu0
        %2212 = vmatprep.mubr.f32.mxu0 0.0
        %2213 = vmatmul.mubr.f32.gmra.mxu0 %v2007
        %v2214 = vpop.f32.mrf.mxu0
        %v2215 = vadd.f32 0.0, %v2214
        %v2216 = vpop.f32.mrf.mxu0
        %2217 = vmatprep.mubr.f32.mxu0 0.0
        %2218 = vmatmul.mubr.f32.gmra.mxu0 %v2010
        %v2219 = vpop.f32.mrf.mxu0
        %v2220 = vadd.f32 0.0, %v2219
        %v2221 = vpop.f32.mrf.mxu0
        %2222 = vmatprep.mubr.f32.mxu0 0.0
        %2223 = vmatmul.mubr.f32.gmra.mxu0 %v2013
        %v2224 = vpop.f32.mrf.mxu0
        %v2225 = vadd.f32 0.0, %v2224
        %v2226 = vpop.f32.mrf.mxu0
        %2227 = vmatprep.mubr.f32.mxu0 0.0
        %2228 = vmatmul.mubr.f32.gmra.mxu0 %v2016
        %v2229 = vpop.f32.mrf.mxu0
        %v2230 = vadd.f32 0.0, %v2229
        %v2231 = vpop.f32.mrf.mxu0
        %2232 = vmatprep.mubr.f32.mxu0 0.0
        %2233 = vmatmul.mubr.f32.gmra.mxu0 %v2019
        %v2234 = vpop.f32.mrf.mxu0
        %v2235 = vadd.f32 0.0, %v2234
        %v2236 = vpop.f32.mrf.mxu0
        %2237 = vmatprep.mubr.f32.mxu0 0.0
        %2238 = vmatmul.mubr.f32.gmra.mxu0 %v2022
        %v2239 = vpop.f32.mrf.mxu0
        %v2240 = vadd.f32 0.0, %v2239
        %v2241 = vpop.f32.mrf.mxu0
        %2242 = vmatprep.mubr.f32.mxu0 0.0
        %2243 = vmatmul.mubr.f32.gmra.mxu0 %v2025
        %v2244 = vpop.f32.mrf.mxu0
        %v2245 = vadd.f32 0.0, %v2244
        %v2246 = vpop.f32.mrf.mxu0
        %2247 = vmatprep.mubr.f32.mxu0 0.0
        %2248 = vmatmul.mubr.f32.gmra.mxu0 %v2028
        %v2249 = vpop.f32.mrf.mxu0
        %v2250 = vadd.f32 0.0, %v2249
        %v2251 = vpop.f32.mrf.mxu0
        %2252 = vmatprep.mubr.f32.mxu0 0.0
        %2253 = vmatmul.mubr.f32.gmra.mxu0 %v2031
        %v2254 = vpop.f32.mrf.mxu0
        %v2255 = vadd.f32 0.0, %v2254
        %v2256 = vpop.f32.mrf.mxu0
        %2257 = vdwg.mxu0
        %v2258 = vadd.f32 %v1870, %v2100
        %v2259 = vadd.f32 %v1871, %v2105
        %v2260 = vadd.f32 %v1872, %v2110
        %v2261 = vadd.f32 %v1873, %v2115
        %v2262 = vadd.f32 %v1874, %v2120
        %v2263 = vadd.f32 %v1875, %v2125
        %v2264 = vadd.f32 %v1876, %v2130
        %v2265 = vadd.f32 %v1877, %v2135
        %v2266 = vadd.f32 %v1878, %v2140
        %v2267 = vadd.f32 %v1879, %v2145
        %v2268 = vadd.f32 %v1880, %v2150
        %v2269 = vadd.f32 %v1881, %v2155
        %v2270 = vadd.f32 %v1882, %v2160
        %v2271 = vadd.f32 %v1883, %v2165
        %v2272 = vadd.f32 %v1884, %v2170
        %v2273 = vadd.f32 %v1885, %v2175
        %v2274 = vadd.f32 %v1886, %v2180
        %v2275 = vadd.f32 %v1887, %v2185
        %v2276 = vadd.f32 %v1888, %v2190
        %v2277 = vadd.f32 %v1889, %v2195
        %v2278 = vadd.f32 %v1890, %v2200
        %v2279 = vadd.f32 %v1891, %v2205
        %v2280 = vadd.f32 %v1892, %v2210
        %v2281 = vadd.f32 %v1893, %v2215
        %v2282 = vadd.f32 %v1894, %v2220
        %v2283 = vadd.f32 %v1895, %v2225
        %v2284 = vadd.f32 %v1896, %v2230
        %v2285 = vadd.f32 %v1897, %v2235
        %v2286 = vadd.f32 %v1898, %v2240
        %v2287 = vadd.f32 %v1899, %v2245
        %v2288 = vadd.f32 %v1900, %v2250
        %v2289 = vadd.f32 %v1901, %v2255
        %v2290 = vld [vmem:[%s770 + $0x1] sm:$0xff]
        %v2291 = vld [vmem:[%s770 + $0x9] sm:$0xff]
        %v2292 = vld [vmem:[%s770 + $0x19] sm:$0xff]
        %v2293 = vld [vmem:[%s770 + $0x21] sm:$0xff]
        %v2294 = vld [vmem:[%s770 + $0x31] sm:$0xff]
        %v2295 = vld [vmem:[%s770 + $0x39] sm:$0xff]
        %v2296 = vld [vmem:[%s770 + $0x49] sm:$0xff]
        %v2297 = vld [vmem:[%s770 + $0x51] sm:$0xff]
        %v2298 = vld [vmem:[%s770 + $0x61] sm:$0xff]
        %v2299 = vld [vmem:[%s770 + $0x69] sm:$0xff]
        %v2300 = vld [vmem:[%s770 + $0x79] sm:$0xff]
        %v2301 = vld [vmem:[%s770 + $0x81] sm:$0xff]
        %v2302 = vld [vmem:[%s770 + $0x91] sm:$0xff]
        %v2303 = vld [vmem:[%s770 + $0x99] sm:$0xff]
        %v2304 = vld [vmem:[%s770 + $0xa9] sm:$0xff]
        %v2305 = vld [vmem:[%s770 + $0xb1] sm:$0xff]
        %v2306 = vld [vmem:[%s770 + $0xc1] sm:$0xff]
        %v2307 = vld [vmem:[%s770 + $0xc9] sm:$0xff]
        %v2308 = vld [vmem:[%s770 + $0xd9] sm:$0xff]
        %v2309 = vld [vmem:[%s770 + $0xe1] sm:$0xff]
        %v2310 = vld [vmem:[%s770 + $0xf1] sm:$0xff]
        %v2311 = vld [vmem:[%s770 + $0xf9] sm:$0xff]
        %v2312 = vld [vmem:[%s770 + $0x109] sm:$0xff]
        %v2313 = vld [vmem:[%s770 + $0x111] sm:$0xff]
        %v2314 = vld [vmem:[%s770 + $0x121] sm:$0xff]
        %v2315 = vld [vmem:[%s770 + $0x129] sm:$0xff]
        %v2316 = vld [vmem:[%s770 + $0x139] sm:$0xff]
        %v2317 = vld [vmem:[%s770 + $0x141] sm:$0xff]
        %v2318 = vld [vmem:[%s770 + $0x151] sm:$0xff]
        %v2319 = vld [vmem:[%s770 + $0x159] sm:$0xff]
        %v2320 = vld [vmem:[%s770 + $0x169] sm:$0xff]
        %v2321 = vld [vmem:[%s770 + $0x171] sm:$0xff]
        %s2322 = scalar_lea.vmem %s3, 64
        %v2323 = vld [vmem:[%s2322] sm:$0xff]
        %v2324 = vld [vmem:[%s2322 + $0x8] sm:$0xff]
        %v2326 = vsel %vm724, %v2290, 0
        %v2329 = vsel %vm724, %v2291, 0
        %v2332 = vsel %vm724, %v2292, 0
        %v2335 = vsel %vm724, %v2293, 0
        %v2338 = vsel %vm724, %v2294, 0
        %v2341 = vsel %vm724, %v2295, 0
        %v2344 = vsel %vm724, %v2296, 0
        %v2347 = vsel %vm724, %v2297, 0
        %v2350 = vsel %vm724, %v2298, 0
        %v2353 = vsel %vm724, %v2299, 0
        %v2356 = vsel %vm724, %v2300, 0
        %v2359 = vsel %vm724, %v2301, 0
        %v2362 = vsel %vm724, %v2302, 0
        %v2365 = vsel %vm724, %v2303, 0
        %v2368 = vsel %vm724, %v2304, 0
        %v2371 = vsel %vm724, %v2305, 0
        %v2374 = vsel %vm724, %v2306, 0
        %v2377 = vsel %vm724, %v2307, 0
        %v2380 = vsel %vm724, %v2308, 0
        %v2383 = vsel %vm724, %v2309, 0
        %v2386 = vsel %vm724, %v2310, 0
        %v2389 = vsel %vm724, %v2311, 0
        %v2392 = vsel %vm724, %v2312, 0
        %v2395 = vsel %vm724, %v2313, 0
        %v2398 = vsel %vm724, %v2314, 0
        %v2401 = vsel %vm724, %v2315, 0
        %v2404 = vsel %vm724, %v2316, 0
        %v2407 = vsel %vm724, %v2317, 0
        %v2410 = vsel %vm724, %v2318, 0
        %v2413 = vsel %vm724, %v2319, 0
        %v2416 = vsel %vm724, %v2320, 0
        %v2419 = vsel %vm724, %v2321, 0
        %2421 = vmatprep.subr.mxu0 0.0
        %2422 = vmatpush1.msra.mxu0 0.0
        %2423 = vmatprep.subr.mxu0 0.0
        %2424 = vmatpush1.msra.mxu0 0.0
        %2425 = vmatprep.subr.mxu0 0.0
        %2426 = vmatpush1.msra.mxu0 0.0
        %2427 = vmatprep.subr.mxu0 0.0
        %2428 = vmatpush1.msra.mxu0 0.0
        %2429 = vmatprep.subr.mxu0 0.0
        %2430 = vmatpush1.msra.mxu0 0.0
        %2431 = vmatprep.subr.mxu0 0.0
        %2432 = vmatpush1.msra.mxu0 0.0
        %2433 = vmatprep.subr.mxu0 0.0
        %2434 = vmatpush1.msra.mxu0 0.0
        %2435 = vmatprep.subr.mxu0 0.0
        %2436 = vmatpush1.msra.mxu0 0.0
        %2437 = vmatprep.subr.mxu0 0.0
        %2438 = vmatpush1.msra.mxu0 0.0
        %2439 = vmatprep.subr.mxu0 0.0
        %2440 = vmatpush1.msra.mxu0 0.0
        %2441 = vmatprep.subr.mxu0 0.0
        %2442 = vmatpush1.msra.mxu0 0.0
        %2443 = vmatprep.subr.mxu0 0.0
        %2444 = vmatpush1.msra.mxu0 0.0
        %2445 = vmatprep.subr.mxu0 0.0
        %2446 = vmatpush1.msra.mxu0 0.0
        %2447 = vmatprep.subr.mxu0 0.0
        %2448 = vmatpush1.msra.mxu0 0.0
        %2449 = vmatprep.subr.mxu0 0.0
        %2450 = vmatpush1.msra.mxu0 %v2324
        %2451 = vmatprep.subr.mxu0 0.0
        %2452 = vmatpush1.msra.mxu0 %v2323
        %2453 = vmatprep.subr.mxu0 0.0
        %2454 = vmatpush2.msra.mxu0 0.0
        %2455 = vmatprep.subr.mxu0 0.0
        %2456 = vmatpush2.msra.mxu0 0.0
        %2457 = vmatprep.subr.mxu0 0.0
        %2458 = vmatpush2.msra.mxu0 0.0
        %2459 = vmatprep.subr.mxu0 0.0
        %2460 = vmatpush2.msra.mxu0 0.0
        %2461 = vmatprep.subr.mxu0 0.0
        %2462 = vmatpush2.msra.mxu0 0.0
        %2463 = vmatprep.subr.mxu0 0.0
        %2464 = vmatpush2.msra.mxu0 0.0
        %2465 = vmatprep.subr.mxu0 0.0
        %2466 = vmatpush2.msra.mxu0 0.0
        %2467 = vmatprep.subr.mxu0 0.0
        %2468 = vmatpush2.msra.mxu0 0.0
        %2469 = vmatprep.subr.mxu0 0.0
        %2470 = vmatpush2.msra.mxu0 0.0
        %2471 = vmatprep.subr.mxu0 0.0
        %2472 = vmatpush2.msra.mxu0 0.0
        %2473 = vmatprep.subr.mxu0 0.0
        %2474 = vmatpush2.msra.mxu0 0.0
        %2475 = vmatprep.subr.mxu0 0.0
        %2476 = vmatpush2.msra.mxu0 0.0
        %2477 = vmatprep.subr.mxu0 0.0
        %2478 = vmatpush2.msra.mxu0 0.0
        %2479 = vmatprep.subr.mxu0 0.0
        %2480 = vmatpush2.msra.mxu0 0.0
        %2481 = vmatprep.subr.mxu0 0.0
        %2482 = vmatpush2.msra.mxu0 0.0
        %2483 = vmatprep.subr.mxu0 0.0
        %2484 = vmatpush2.msra.mxu0 0.0
        %2485 = vmatprep.mubr.f32.mxu0 0.0
        %2486 = vmatmul.mubr.f32.gmra.mxu0 %v2326
        %v2487 = vpop.f32.mrf.mxu0
        %v2488 = vadd.f32 0.0, %v2487
        %v2489 = vpop.f32.mrf.mxu0
        %2490 = vmatprep.mubr.f32.mxu0 0.0
        %2491 = vmatmul.mubr.f32.gmra.mxu0 %v2329
        %v2492 = vpop.f32.mrf.mxu0
        %v2493 = vadd.f32 0.0, %v2492
        %v2494 = vpop.f32.mrf.mxu0
        %2495 = vmatprep.mubr.f32.mxu0 0.0
        %2496 = vmatmul.mubr.f32.gmra.mxu0 %v2332
        %v2497 = vpop.f32.mrf.mxu0
        %v2498 = vadd.f32 0.0, %v2497
        %v2499 = vpop.f32.mrf.mxu0
        %2500 = vmatprep.mubr.f32.mxu0 0.0
        %2501 = vmatmul.mubr.f32.gmra.mxu0 %v2335
        %v2502 = vpop.f32.mrf.mxu0
        %v2503 = vadd.f32 0.0, %v2502
        %v2504 = vpop.f32.mrf.mxu0
        %2505 = vmatprep.mubr.f32.mxu0 0.0
        %2506 = vmatmul.mubr.f32.gmra.mxu0 %v2338
        %v2507 = vpop.f32.mrf.mxu0
        %v2508 = vadd.f32 0.0, %v2507
        %v2509 = vpop.f32.mrf.mxu0
        %2510 = vmatprep.mubr.f32.mxu0 0.0
        %2511 = vmatmul.mubr.f32.gmra.mxu0 %v2341
        %v2512 = vpop.f32.mrf.mxu0
        %v2513 = vadd.f32 0.0, %v2512
        %v2514 = vpop.f32.mrf.mxu0
        %2515 = vmatprep.mubr.f32.mxu0 0.0
        %2516 = vmatmul.mubr.f32.gmra.mxu0 %v2344
        %v2517 = vpop.f32.mrf.mxu0
        %v2518 = vadd.f32 0.0, %v2517
        %v2519 = vpop.f32.mrf.mxu0
        %2520 = vmatprep.mubr.f32.mxu0 0.0
        %2521 = vmatmul.mubr.f32.gmra.mxu0 %v2347
        %v2522 = vpop.f32.mrf.mxu0
        %v2523 = vadd.f32 0.0, %v2522
        %v2524 = vpop.f32.mrf.mxu0
        %2525 = vmatprep.mubr.f32.mxu0 0.0
        %2526 = vmatmul.mubr.f32.gmra.mxu0 %v2350
        %v2527 = vpop.f32.mrf.mxu0
        %v2528 = vadd.f32 0.0, %v2527
        %v2529 = vpop.f32.mrf.mxu0
        %2530 = vmatprep.mubr.f32.mxu0 0.0
        %2531 = vmatmul.mubr.f32.gmra.mxu0 %v2353
        %v2532 = vpop.f32.mrf.mxu0
        %v2533 = vadd.f32 0.0, %v2532
        %v2534 = vpop.f32.mrf.mxu0
        %2535 = vmatprep.mubr.f32.mxu0 0.0
        %2536 = vmatmul.mubr.f32.gmra.mxu0 %v2356
        %v2537 = vpop.f32.mrf.mxu0
        %v2538 = vadd.f32 0.0, %v2537
        %v2539 = vpop.f32.mrf.mxu0
        %2540 = vmatprep.mubr.f32.mxu0 0.0
        %2541 = vmatmul.mubr.f32.gmra.mxu0 %v2359
        %v2542 = vpop.f32.mrf.mxu0
        %v2543 = vadd.f32 0.0, %v2542
        %v2544 = vpop.f32.mrf.mxu0
        %2545 = vmatprep.mubr.f32.mxu0 0.0
        %2546 = vmatmul.mubr.f32.gmra.mxu0 %v2362
        %v2547 = vpop.f32.mrf.mxu0
        %v2548 = vadd.f32 0.0, %v2547
        %v2549 = vpop.f32.mrf.mxu0
        %2550 = vmatprep.mubr.f32.mxu0 0.0
        %2551 = vmatmul.mubr.f32.gmra.mxu0 %v2365
        %v2552 = vpop.f32.mrf.mxu0
        %v2553 = vadd.f32 0.0, %v2552
        %v2554 = vpop.f32.mrf.mxu0
        %2555 = vmatprep.mubr.f32.mxu0 0.0
        %2556 = vmatmul.mubr.f32.gmra.mxu0 %v2368
        %v2557 = vpop.f32.mrf.mxu0
        %v2558 = vadd.f32 0.0, %v2557
        %v2559 = vpop.f32.mrf.mxu0
        %2560 = vmatprep.mubr.f32.mxu0 0.0
        %2561 = vmatmul.mubr.f32.gmra.mxu0 %v2371
        %v2562 = vpop.f32.mrf.mxu0
        %v2563 = vadd.f32 0.0, %v2562
        %v2564 = vpop.f32.mrf.mxu0
        %2565 = vmatprep.mubr.f32.mxu0 0.0
        %2566 = vmatmul.mubr.f32.gmra.mxu0 %v2374
        %v2567 = vpop.f32.mrf.mxu0
        %v2568 = vadd.f32 0.0, %v2567
        %v2569 = vpop.f32.mrf.mxu0
        %2570 = vmatprep.mubr.f32.mxu0 0.0
        %2571 = vmatmul.mubr.f32.gmra.mxu0 %v2377
        %v2572 = vpop.f32.mrf.mxu0
        %v2573 = vadd.f32 0.0, %v2572
        %v2574 = vpop.f32.mrf.mxu0
        %2575 = vmatprep.mubr.f32.mxu0 0.0
        %2576 = vmatmul.mubr.f32.gmra.mxu0 %v2380
        %v2577 = vpop.f32.mrf.mxu0
        %v2578 = vadd.f32 0.0, %v2577
        %v2579 = vpop.f32.mrf.mxu0
        %2580 = vmatprep.mubr.f32.mxu0 0.0
        %2581 = vmatmul.mubr.f32.gmra.mxu0 %v2383
        %v2582 = vpop.f32.mrf.mxu0
        %v2583 = vadd.f32 0.0, %v2582
        %v2584 = vpop.f32.mrf.mxu0
        %2585 = vmatprep.mubr.f32.mxu0 0.0
        %2586 = vmatmul.mubr.f32.gmra.mxu0 %v2386
        %v2587 = vpop.f32.mrf.mxu0
        %v2588 = vadd.f32 0.0, %v2587
        %v2589 = vpop.f32.mrf.mxu0
        %2590 = vmatprep.mubr.f32.mxu0 0.0
        %2591 = vmatmul.mubr.f32.gmra.mxu0 %v2389
        %v2592 = vpop.f32.mrf.mxu0
        %v2593 = vadd.f32 0.0, %v2592
        %v2594 = vpop.f32.mrf.mxu0
        %2595 = vmatprep.mubr.f32.mxu0 0.0
        %2596 = vmatmul.mubr.f32.gmra.mxu0 %v2392
        %v2597 = vpop.f32.mrf.mxu0
        %v2598 = vadd.f32 0.0, %v2597
        %v2599 = vpop.f32.mrf.mxu0
        %2600 = vmatprep.mubr.f32.mxu0 0.0
        %2601 = vmatmul.mubr.f32.gmra.mxu0 %v2395
        %v2602 = vpop.f32.mrf.mxu0
        %v2603 = vadd.f32 0.0, %v2602
        %v2604 = vpop.f32.mrf.mxu0
        %2605 = vmatprep.mubr.f32.mxu0 0.0
        %2606 = vmatmul.mubr.f32.gmra.mxu0 %v2398
        %v2607 = vpop.f32.mrf.mxu0
        %v2608 = vadd.f32 0.0, %v2607
        %v2609 = vpop.f32.mrf.mxu0
        %2610 = vmatprep.mubr.f32.mxu0 0.0
        %2611 = vmatmul.mubr.f32.gmra.mxu0 %v2401
        %v2612 = vpop.f32.mrf.mxu0
        %v2613 = vadd.f32 0.0, %v2612
        %v2614 = vpop.f32.mrf.mxu0
        %2615 = vmatprep.mubr.f32.mxu0 0.0
        %2616 = vmatmul.mubr.f32.gmra.mxu0 %v2404
        %v2617 = vpop.f32.mrf.mxu0
        %v2618 = vadd.f32 0.0, %v2617
        %v2619 = vpop.f32.mrf.mxu0
        %2620 = vmatprep.mubr.f32.mxu0 0.0
        %2621 = vmatmul.mubr.f32.gmra.mxu0 %v2407
        %v2622 = vpop.f32.mrf.mxu0
        %v2623 = vadd.f32 0.0, %v2622
        %v2624 = vpop.f32.mrf.mxu0
        %2625 = vmatprep.mubr.f32.mxu0 0.0
        %2626 = vmatmul.mubr.f32.gmra.mxu0 %v2410
        %v2627 = vpop.f32.mrf.mxu0
        %v2628 = vadd.f32 0.0, %v2627
        %v2629 = vpop.f32.mrf.mxu0
        %2630 = vmatprep.mubr.f32.mxu0 0.0
        %2631 = vmatmul.mubr.f32.gmra.mxu0 %v2413
        %v2632 = vpop.f32.mrf.mxu0
        %v2633 = vadd.f32 0.0, %v2632
        %v2634 = vpop.f32.mrf.mxu0
        %2635 = vmatprep.mubr.f32.mxu0 0.0
        %2636 = vmatmul.mubr.f32.gmra.mxu0 %v2416
        %v2637 = vpop.f32.mrf.mxu0
        %v2638 = vadd.f32 0.0, %v2637
        %v2639 = vpop.f32.mrf.mxu0
        %2640 = vmatprep.mubr.f32.mxu0 0.0
        %2641 = vmatmul.mubr.f32.gmra.mxu0 %v2419
        %v2642 = vpop.f32.mrf.mxu0
        %v2643 = vadd.f32 0.0, %v2642
        %v2644 = vpop.f32.mrf.mxu0
        %2645 = vdwg.mxu0
        %v2646 = vadd.f32 %v2258, %v2488
        %v2647 = vadd.f32 %v2259, %v2493
        %v2648 = vadd.f32 %v2260, %v2498
        %v2649 = vadd.f32 %v2261, %v2503
        %v2650 = vadd.f32 %v2262, %v2508
        %v2651 = vadd.f32 %v2263, %v2513
        %v2652 = vadd.f32 %v2264, %v2518
        %v2653 = vadd.f32 %v2265, %v2523
        %v2654 = vadd.f32 %v2266, %v2528
        %v2655 = vadd.f32 %v2267, %v2533
        %v2656 = vadd.f32 %v2268, %v2538
        %v2657 = vadd.f32 %v2269, %v2543
        %v2658 = vadd.f32 %v2270, %v2548
        %v2659 = vadd.f32 %v2271, %v2553
        %v2660 = vadd.f32 %v2272, %v2558
        %v2661 = vadd.f32 %v2273, %v2563
        %v2662 = vadd.f32 %v2274, %v2568
        %v2663 = vadd.f32 %v2275, %v2573
        %v2664 = vadd.f32 %v2276, %v2578
        %v2665 = vadd.f32 %v2277, %v2583
        %v2666 = vadd.f32 %v2278, %v2588
        %v2667 = vadd.f32 %v2279, %v2593
        %v2668 = vadd.f32 %v2280, %v2598
        %v2669 = vadd.f32 %v2281, %v2603
        %v2670 = vadd.f32 %v2282, %v2608
        %v2671 = vadd.f32 %v2283, %v2613
        %v2672 = vadd.f32 %v2284, %v2618
        %v2673 = vadd.f32 %v2285, %v2623
        %v2674 = vadd.f32 %v2286, %v2628
        %v2675 = vadd.f32 %v2287, %v2633
        %v2676 = vadd.f32 %v2288, %v2638
        %v2677 = vadd.f32 %v2289, %v2643
        %v2678 = vld [vmem:[%s770 + $0x2] sm:$0xff]
        %v2679 = vld [vmem:[%s770 + $0xa] sm:$0xff]
        %v2680 = vld [vmem:[%s770 + $0x1a] sm:$0xff]
        %v2681 = vld [vmem:[%s770 + $0x22] sm:$0xff]
        %v2682 = vld [vmem:[%s770 + $0x32] sm:$0xff]
        %v2683 = vld [vmem:[%s770 + $0x3a] sm:$0xff]
        %v2684 = vld [vmem:[%s770 + $0x4a] sm:$0xff]
        %v2685 = vld [vmem:[%s770 + $0x52] sm:$0xff]
        %v2686 = vld [vmem:[%s770 + $0x62] sm:$0xff]
        %v2687 = vld [vmem:[%s770 + $0x6a] sm:$0xff]
        %v2688 = vld [vmem:[%s770 + $0x7a] sm:$0xff]
        %v2689 = vld [vmem:[%s770 + $0x82] sm:$0xff]
        %v2690 = vld [vmem:[%s770 + $0x92] sm:$0xff]
        %v2691 = vld [vmem:[%s770 + $0x9a] sm:$0xff]
        %v2692 = vld [vmem:[%s770 + $0xaa] sm:$0xff]
        %v2693 = vld [vmem:[%s770 + $0xb2] sm:$0xff]
        %v2694 = vld [vmem:[%s770 + $0xc2] sm:$0xff]
        %v2695 = vld [vmem:[%s770 + $0xca] sm:$0xff]
        %v2696 = vld [vmem:[%s770 + $0xda] sm:$0xff]
        %v2697 = vld [vmem:[%s770 + $0xe2] sm:$0xff]
        %v2698 = vld [vmem:[%s770 + $0xf2] sm:$0xff]
        %v2699 = vld [vmem:[%s770 + $0xfa] sm:$0xff]
        %v2700 = vld [vmem:[%s770 + $0x10a] sm:$0xff]
        %v2701 = vld [vmem:[%s770 + $0x112] sm:$0xff]
        %v2702 = vld [vmem:[%s770 + $0x122] sm:$0xff]
        %v2703 = vld [vmem:[%s770 + $0x12a] sm:$0xff]
        %v2704 = vld [vmem:[%s770 + $0x13a] sm:$0xff]
        %v2705 = vld [vmem:[%s770 + $0x142] sm:$0xff]
        %v2706 = vld [vmem:[%s770 + $0x152] sm:$0xff]
        %v2707 = vld [vmem:[%s770 + $0x15a] sm:$0xff]
        %v2708 = vld [vmem:[%s770 + $0x16a] sm:$0xff]
        %v2709 = vld [vmem:[%s770 + $0x172] sm:$0xff]
        %s2710 = scalar_lea.vmem %s3, 80
        %v2711 = vld [vmem:[%s2710] sm:$0xff]
        %v2712 = vld [vmem:[%s2710 + $0x8] sm:$0xff]
        %v2714 = vsel %vm724, %v2678, 0
        %v2717 = vsel %vm724, %v2679, 0
        %v2720 = vsel %vm724, %v2680, 0
        %v2723 = vsel %vm724, %v2681, 0
        %v2726 = vsel %vm724, %v2682, 0
        %v2729 = vsel %vm724, %v2683, 0
        %v2732 = vsel %vm724, %v2684, 0
        %v2735 = vsel %vm724, %v2685, 0
        %v2738 = vsel %vm724, %v2686, 0
        %v2741 = vsel %vm724, %v2687, 0
        %v2744 = vsel %vm724, %v2688, 0
        %v2747 = vsel %vm724, %v2689, 0
        %v2750 = vsel %vm724, %v2690, 0
        %v2753 = vsel %vm724, %v2691, 0
        %v2756 = vsel %vm724, %v2692, 0
        %v2759 = vsel %vm724, %v2693, 0
        %v2762 = vsel %vm724, %v2694, 0
        %v2765 = vsel %vm724, %v2695, 0
        %v2768 = vsel %vm724, %v2696, 0
        %v2771 = vsel %vm724, %v2697, 0
        %v2774 = vsel %vm724, %v2698, 0
        %v2777 = vsel %vm724, %v2699, 0
        %v2780 = vsel %vm724, %v2700, 0
        %v2783 = vsel %vm724, %v2701, 0
        %v2786 = vsel %vm724, %v2702, 0
        %v2789 = vsel %vm724, %v2703, 0
        %v2792 = vsel %vm724, %v2704, 0
        %v2795 = vsel %vm724, %v2705, 0
        %v2798 = vsel %vm724, %v2706, 0
        %v2801 = vsel %vm724, %v2707, 0
        %v2804 = vsel %vm724, %v2708, 0
        %v2807 = vsel %vm724, %v2709, 0
        %2809 = vmatprep.subr.mxu0 0.0
        %2810 = vmatpush1.msra.mxu0 0.0
        %2811 = vmatprep.subr.mxu0 0.0
        %2812 = vmatpush1.msra.mxu0 0.0
        %2813 = vmatprep.subr.mxu0 0.0
        %2814 = vmatpush1.msra.mxu0 0.0
        %2815 = vmatprep.subr.mxu0 0.0
        %2816 = vmatpush1.msra.mxu0 0.0
        %2817 = vmatprep.subr.mxu0 0.0
        %2818 = vmatpush1.msra.mxu0 0.0
        %2819 = vmatprep.subr.mxu0 0.0
        %2820 = vmatpush1.msra.mxu0 0.0
        %2821 = vmatprep.subr.mxu0 0.0
        %2822 = vmatpush1.msra.mxu0 0.0
        %2823 = vmatprep.subr.mxu0 0.0
        %2824 = vmatpush1.msra.mxu0 0.0
        %2825 = vmatprep.subr.mxu0 0.0
        %2826 = vmatpush1.msra.mxu0 0.0
        %2827 = vmatprep.subr.mxu0 0.0
        %2828 = vmatpush1.msra.mxu0 0.0
        %2829 = vmatprep.subr.mxu0 0.0
        %2830 = vmatpush1.msra.mxu0 0.0
        %2831 = vmatprep.subr.mxu0 0.0
        %2832 = vmatpush1.msra.mxu0 0.0
        %2833 = vmatprep.subr.mxu0 0.0
        %2834 = vmatpush1.msra.mxu0 0.0
        %2835 = vmatprep.subr.mxu0 0.0
        %2836 = vmatpush1.msra.mxu0 0.0
        %2837 = vmatprep.subr.mxu0 0.0
        %2838 = vmatpush1.msra.mxu0 %v2712
        %2839 = vmatprep.subr.mxu0 0.0
        %2840 = vmatpush1.msra.mxu0 %v2711
        %2841 = vmatprep.subr.mxu0 0.0
        %2842 = vmatpush2.msra.mxu0 0.0
        %2843 = vmatprep.subr.mxu0 0.0
        %2844 = vmatpush2.msra.mxu0 0.0
        %2845 = vmatprep.subr.mxu0 0.0
        %2846 = vmatpush2.msra.mxu0 0.0
        %2847 = vmatprep.subr.mxu0 0.0
        %2848 = vmatpush2.msra.mxu0 0.0
        %2849 = vmatprep.subr.mxu0 0.0
        %2850 = vmatpush2.msra.mxu0 0.0
        %2851 = vmatprep.subr.mxu0 0.0
        %2852 = vmatpush2.msra.mxu0 0.0
        %2853 = vmatprep.subr.mxu0 0.0
        %2854 = vmatpush2.msra.mxu0 0.0
        %2855 = vmatprep.subr.mxu0 0.0
        %2856 = vmatpush2.msra.mxu0 0.0
        %2857 = vmatprep.subr.mxu0 0.0
        %2858 = vmatpush2.msra.mxu0 0.0
        %2859 = vmatprep.subr.mxu0 0.0
        %2860 = vmatpush2.msra.mxu0 0.0
        %2861 = vmatprep.subr.mxu0 0.0
        %2862 = vmatpush2.msra.mxu0 0.0
        %2863 = vmatprep.subr.mxu0 0.0
        %2864 = vmatpush2.msra.mxu0 0.0
        %2865 = vmatprep.subr.mxu0 0.0
        %2866 = vmatpush2.msra.mxu0 0.0
        %2867 = vmatprep.subr.mxu0 0.0
        %2868 = vmatpush2.msra.mxu0 0.0
        %2869 = vmatprep.subr.mxu0 0.0
        %2870 = vmatpush2.msra.mxu0 0.0
        %2871 = vmatprep.subr.mxu0 0.0
        %2872 = vmatpush2.msra.mxu0 0.0
        %2873 = vmatprep.mubr.f32.mxu0 0.0
        %2874 = vmatmul.mubr.f32.gmra.mxu0 %v2714
        %v2875 = vpop.f32.mrf.mxu0
        %v2876 = vadd.f32 0.0, %v2875
        %v2877 = vpop.f32.mrf.mxu0
        %2878 = vmatprep.mubr.f32.mxu0 0.0
        %2879 = vmatmul.mubr.f32.gmra.mxu0 %v2717
        %v2880 = vpop.f32.mrf.mxu0
        %v2881 = vadd.f32 0.0, %v2880
        %v2882 = vpop.f32.mrf.mxu0
        %2883 = vmatprep.mubr.f32.mxu0 0.0
        %2884 = vmatmul.mubr.f32.gmra.mxu0 %v2720
        %v2885 = vpop.f32.mrf.mxu0
        %v2886 = vadd.f32 0.0, %v2885
        %v2887 = vpop.f32.mrf.mxu0
        %2888 = vmatprep.mubr.f32.mxu0 0.0
        %2889 = vmatmul.mubr.f32.gmra.mxu0 %v2723
        %v2890 = vpop.f32.mrf.mxu0
        %v2891 = vadd.f32 0.0, %v2890
        %v2892 = vpop.f32.mrf.mxu0
        %2893 = vmatprep.mubr.f32.mxu0 0.0
        %2894 = vmatmul.mubr.f32.gmra.mxu0 %v2726
        %v2895 = vpop.f32.mrf.mxu0
        %v2896 = vadd.f32 0.0, %v2895
        %v2897 = vpop.f32.mrf.mxu0
        %2898 = vmatprep.mubr.f32.mxu0 0.0
        %2899 = vmatmul.mubr.f32.gmra.mxu0 %v2729
        %v2900 = vpop.f32.mrf.mxu0
        %v2901 = vadd.f32 0.0, %v2900
        %v2902 = vpop.f32.mrf.mxu0
        %2903 = vmatprep.mubr.f32.mxu0 0.0
        %2904 = vmatmul.mubr.f32.gmra.mxu0 %v2732
        %v2905 = vpop.f32.mrf.mxu0
        %v2906 = vadd.f32 0.0, %v2905
        %v2907 = vpop.f32.mrf.mxu0
        %2908 = vmatprep.mubr.f32.mxu0 0.0
        %2909 = vmatmul.mubr.f32.gmra.mxu0 %v2735
        %v2910 = vpop.f32.mrf.mxu0
        %v2911 = vadd.f32 0.0, %v2910
        %v2912 = vpop.f32.mrf.mxu0
        %2913 = vmatprep.mubr.f32.mxu0 0.0
        %2914 = vmatmul.mubr.f32.gmra.mxu0 %v2738
        %v2915 = vpop.f32.mrf.mxu0
        %v2916 = vadd.f32 0.0, %v2915
        %v2917 = vpop.f32.mrf.mxu0
        %2918 = vmatprep.mubr.f32.mxu0 0.0
        %2919 = vmatmul.mubr.f32.gmra.mxu0 %v2741
        %v2920 = vpop.f32.mrf.mxu0
        %v2921 = vadd.f32 0.0, %v2920
        %v2922 = vpop.f32.mrf.mxu0
        %2923 = vmatprep.mubr.f32.mxu0 0.0
        %2924 = vmatmul.mubr.f32.gmra.mxu0 %v2744
        %v2925 = vpop.f32.mrf.mxu0
        %v2926 = vadd.f32 0.0, %v2925
        %v2927 = vpop.f32.mrf.mxu0
        %2928 = vmatprep.mubr.f32.mxu0 0.0
        %2929 = vmatmul.mubr.f32.gmra.mxu0 %v2747
        %v2930 = vpop.f32.mrf.mxu0
        %v2931 = vadd.f32 0.0, %v2930
        %v2932 = vpop.f32.mrf.mxu0
        %2933 = vmatprep.mubr.f32.mxu0 0.0
        %2934 = vmatmul.mubr.f32.gmra.mxu0 %v2750
        %v2935 = vpop.f32.mrf.mxu0
        %v2936 = vadd.f32 0.0, %v2935
        %v2937 = vpop.f32.mrf.mxu0
        %2938 = vmatprep.mubr.f32.mxu0 0.0
        %2939 = vmatmul.mubr.f32.gmra.mxu0 %v2753
        %v2940 = vpop.f32.mrf.mxu0
        %v2941 = vadd.f32 0.0, %v2940
        %v2942 = vpop.f32.mrf.mxu0
        %2943 = vmatprep.mubr.f32.mxu0 0.0
        %2944 = vmatmul.mubr.f32.gmra.mxu0 %v2756
        %v2945 = vpop.f32.mrf.mxu0
        %v2946 = vadd.f32 0.0, %v2945
        %v2947 = vpop.f32.mrf.mxu0
        %2948 = vmatprep.mubr.f32.mxu0 0.0
        %2949 = vmatmul.mubr.f32.gmra.mxu0 %v2759
        %v2950 = vpop.f32.mrf.mxu0
        %v2951 = vadd.f32 0.0, %v2950
        %v2952 = vpop.f32.mrf.mxu0
        %2953 = vmatprep.mubr.f32.mxu0 0.0
        %2954 = vmatmul.mubr.f32.gmra.mxu0 %v2762
        %v2955 = vpop.f32.mrf.mxu0
        %v2956 = vadd.f32 0.0, %v2955
        %v2957 = vpop.f32.mrf.mxu0
        %2958 = vmatprep.mubr.f32.mxu0 0.0
        %2959 = vmatmul.mubr.f32.gmra.mxu0 %v2765
        %v2960 = vpop.f32.mrf.mxu0
        %v2961 = vadd.f32 0.0, %v2960
        %v2962 = vpop.f32.mrf.mxu0
        %2963 = vmatprep.mubr.f32.mxu0 0.0
        %2964 = vmatmul.mubr.f32.gmra.mxu0 %v2768
        %v2965 = vpop.f32.mrf.mxu0
        %v2966 = vadd.f32 0.0, %v2965
        %v2967 = vpop.f32.mrf.mxu0
        %2968 = vmatprep.mubr.f32.mxu0 0.0
        %2969 = vmatmul.mubr.f32.gmra.mxu0 %v2771
        %v2970 = vpop.f32.mrf.mxu0
        %v2971 = vadd.f32 0.0, %v2970
        %v2972 = vpop.f32.mrf.mxu0
        %2973 = vmatprep.mubr.f32.mxu0 0.0
        %2974 = vmatmul.mubr.f32.gmra.mxu0 %v2774
        %v2975 = vpop.f32.mrf.mxu0
        %v2976 = vadd.f32 0.0, %v2975
        %v2977 = vpop.f32.mrf.mxu0
        %2978 = vmatprep.mubr.f32.mxu0 0.0
        %2979 = vmatmul.mubr.f32.gmra.mxu0 %v2777
        %v2980 = vpop.f32.mrf.mxu0
        %v2981 = vadd.f32 0.0, %v2980
        %v2982 = vpop.f32.mrf.mxu0
        %2983 = vmatprep.mubr.f32.mxu0 0.0
        %2984 = vmatmul.mubr.f32.gmra.mxu0 %v2780
        %v2985 = vpop.f32.mrf.mxu0
        %v2986 = vadd.f32 0.0, %v2985
        %v2987 = vpop.f32.mrf.mxu0
        %2988 = vmatprep.mubr.f32.mxu0 0.0
        %2989 = vmatmul.mubr.f32.gmra.mxu0 %v2783
        %v2990 = vpop.f32.mrf.mxu0
        %v2991 = vadd.f32 0.0, %v2990
        %v2992 = vpop.f32.mrf.mxu0
        %2993 = vmatprep.mubr.f32.mxu0 0.0
        %2994 = vmatmul.mubr.f32.gmra.mxu0 %v2786
        %v2995 = vpop.f32.mrf.mxu0
        %v2996 = vadd.f32 0.0, %v2995
        %v2997 = vpop.f32.mrf.mxu0
        %2998 = vmatprep.mubr.f32.mxu0 0.0
        %2999 = vmatmul.mubr.f32.gmra.mxu0 %v2789
        %v3000 = vpop.f32.mrf.mxu0
        %v3001 = vadd.f32 0.0, %v3000
        %v3002 = vpop.f32.mrf.mxu0
        %3003 = vmatprep.mubr.f32.mxu0 0.0
        %3004 = vmatmul.mubr.f32.gmra.mxu0 %v2792
        %v3005 = vpop.f32.mrf.mxu0
        %v3006 = vadd.f32 0.0, %v3005
        %v3007 = vpop.f32.mrf.mxu0
        %3008 = vmatprep.mubr.f32.mxu0 0.0
        %3009 = vmatmul.mubr.f32.gmra.mxu0 %v2795
        %v3010 = vpop.f32.mrf.mxu0
        %v3011 = vadd.f32 0.0, %v3010
        %v3012 = vpop.f32.mrf.mxu0
        %3013 = vmatprep.mubr.f32.mxu0 0.0
        %3014 = vmatmul.mubr.f32.gmra.mxu0 %v2798
        %v3015 = vpop.f32.mrf.mxu0
        %v3016 = vadd.f32 0.0, %v3015
        %v3017 = vpop.f32.mrf.mxu0
        %3018 = vmatprep.mubr.f32.mxu0 0.0
        %3019 = vmatmul.mubr.f32.gmra.mxu0 %v2801
        %v3020 = vpop.f32.mrf.mxu0
        %v3021 = vadd.f32 0.0, %v3020
        %v3022 = vpop.f32.mrf.mxu0
        %3023 = vmatprep.mubr.f32.mxu0 0.0
        %3024 = vmatmul.mubr.f32.gmra.mxu0 %v2804
        %v3025 = vpop.f32.mrf.mxu0
        %v3026 = vadd.f32 0.0, %v3025
        %v3027 = vpop.f32.mrf.mxu0
        %3028 = vmatprep.mubr.f32.mxu0 0.0
        %3029 = vmatmul.mubr.f32.gmra.mxu0 %v2807
        %v3030 = vpop.f32.mrf.mxu0
        %v3031 = vadd.f32 0.0, %v3030
        %v3032 = vpop.f32.mrf.mxu0
        %3033 = vdwg.mxu0
        %v3034 = vadd.f32 %v2646, %v2876
        %v3035 = vadd.f32 %v2647, %v2881
        %v3036 = vadd.f32 %v2648, %v2886
        %v3037 = vadd.f32 %v2649, %v2891
        %v3038 = vadd.f32 %v2650, %v2896
        %v3039 = vadd.f32 %v2651, %v2901
        %v3040 = vadd.f32 %v2652, %v2906
        %v3041 = vadd.f32 %v2653, %v2911
        %v3042 = vadd.f32 %v2654, %v2916
        %v3043 = vadd.f32 %v2655, %v2921
        %v3044 = vadd.f32 %v2656, %v2926
        %v3045 = vadd.f32 %v2657, %v2931
        %v3046 = vadd.f32 %v2658, %v2936
        %v3047 = vadd.f32 %v2659, %v2941
        %v3048 = vadd.f32 %v2660, %v2946
        %v3049 = vadd.f32 %v2661, %v2951
        %v3050 = vadd.f32 %v2662, %v2956
        %v3051 = vadd.f32 %v2663, %v2961
        %v3052 = vadd.f32 %v2664, %v2966
        %v3053 = vadd.f32 %v2665, %v2971
        %v3054 = vadd.f32 %v2666, %v2976
        %v3055 = vadd.f32 %v2667, %v2981
        %v3056 = vadd.f32 %v2668, %v2986
        %v3057 = vadd.f32 %v2669, %v2991
        %v3058 = vadd.f32 %v2670, %v2996
        %v3059 = vadd.f32 %v2671, %v3001
        %v3060 = vadd.f32 %v2672, %v3006
        %v3061 = vadd.f32 %v2673, %v3011
        %v3062 = vadd.f32 %v2674, %v3016
        %v3063 = vadd.f32 %v2675, %v3021
        %v3064 = vadd.f32 %v2676, %v3026
        %v3065 = vadd.f32 %v2677, %v3031
        %s3066 = scalar_lea.vmem [#allocation2], 48
        %v3067 = vld [vmem:[%s3066] sm:$0xff]
        %v3068 = vld [vmem:[%s3066 + $0x8] sm:$0xff]
        %v3069 = vld [vmem:[%s3066 + $0x18] sm:$0xff]
        %v3070 = vld [vmem:[%s3066 + $0x20] sm:$0xff]
        %v3071 = vld [vmem:[%s3066 + $0x30] sm:$0xff]
        %v3072 = vld [vmem:[%s3066 + $0x38] sm:$0xff]
        %v3073 = vld [vmem:[%s3066 + $0x48] sm:$0xff]
        %v3074 = vld [vmem:[%s3066 + $0x50] sm:$0xff]
        %v3075 = vld [vmem:[%s3066 + $0x60] sm:$0xff]
        %v3076 = vld [vmem:[%s3066 + $0x68] sm:$0xff]
        %v3077 = vld [vmem:[%s3066 + $0x78] sm:$0xff]
        %v3078 = vld [vmem:[%s3066 + $0x80] sm:$0xff]
        %v3079 = vld [vmem:[%s3066 + $0x90] sm:$0xff]
        %v3080 = vld [vmem:[%s3066 + $0x98] sm:$0xff]
        %v3081 = vld [vmem:[%s3066 + $0xa8] sm:$0xff]
        %v3082 = vld [vmem:[%s3066 + $0xb0] sm:$0xff]
        %v3083 = vld [vmem:[%s3066 + $0xc0] sm:$0xff]
        %v3084 = vld [vmem:[%s3066 + $0xc8] sm:$0xff]
        %v3085 = vld [vmem:[%s3066 + $0xd8] sm:$0xff]
        %v3086 = vld [vmem:[%s3066 + $0xe0] sm:$0xff]
        %v3087 = vld [vmem:[%s3066 + $0xf0] sm:$0xff]
        %v3088 = vld [vmem:[%s3066 + $0xf8] sm:$0xff]
        %v3089 = vld [vmem:[%s3066 + $0x108] sm:$0xff]
        %v3090 = vld [vmem:[%s3066 + $0x110] sm:$0xff]
        %v3091 = vld [vmem:[%s3066 + $0x120] sm:$0xff]
        %v3092 = vld [vmem:[%s3066 + $0x128] sm:$0xff]
        %v3093 = vld [vmem:[%s3066 + $0x138] sm:$0xff]
        %v3094 = vld [vmem:[%s3066 + $0x140] sm:$0xff]
        %v3095 = vld [vmem:[%s3066 + $0x150] sm:$0xff]
        %v3096 = vld [vmem:[%s3066 + $0x158] sm:$0xff]
        %v3097 = vld [vmem:[%s3066 + $0x168] sm:$0xff]
        %v3098 = vld [vmem:[%s3066 + $0x170] sm:$0xff]
        %s3099 = scalar_lea.vmem %s3, 96
        %v3100 = vld [vmem:[%s3099] sm:$0xff]
        %v3101 = vld [vmem:[%s3099 + $0x8] sm:$0xff]
        %v3103 = vsel %vm724, %v3067, 0
        %v3106 = vsel %vm724, %v3068, 0
        %v3109 = vsel %vm724, %v3069, 0
        %v3112 = vsel %vm724, %v3070, 0
        %v3115 = vsel %vm724, %v3071, 0
        %v3118 = vsel %vm724, %v3072, 0
        %v3121 = vsel %vm724, %v3073, 0
        %v3124 = vsel %vm724, %v3074, 0
        %v3127 = vsel %vm724, %v3075, 0
        %v3130 = vsel %vm724, %v3076, 0
        %v3133 = vsel %vm724, %v3077, 0
        %v3136 = vsel %vm724, %v3078, 0
        %v3139 = vsel %vm724, %v3079, 0
        %v3142 = vsel %vm724, %v3080, 0
        %v3145 = vsel %vm724, %v3081, 0
        %v3148 = vsel %vm724, %v3082, 0
        %v3151 = vsel %vm724, %v3083, 0
        %v3154 = vsel %vm724, %v3084, 0
        %v3157 = vsel %vm724, %v3085, 0
        %v3160 = vsel %vm724, %v3086, 0
        %v3163 = vsel %vm724, %v3087, 0
        %v3166 = vsel %vm724, %v3088, 0
        %v3169 = vsel %vm724, %v3089, 0
        %v3172 = vsel %vm724, %v3090, 0
        %v3175 = vsel %vm724, %v3091, 0
        %v3178 = vsel %vm724, %v3092, 0
        %v3181 = vsel %vm724, %v3093, 0
        %v3184 = vsel %vm724, %v3094, 0
        %v3187 = vsel %vm724, %v3095, 0
        %v3190 = vsel %vm724, %v3096, 0
        %v3193 = vsel %vm724, %v3097, 0
        %v3196 = vsel %vm724, %v3098, 0
        %3198 = vmatprep.subr.mxu0 0.0
        %3199 = vmatpush1.msra.mxu0 0.0
        %3200 = vmatprep.subr.mxu0 0.0
        %3201 = vmatpush1.msra.mxu0 0.0
        %3202 = vmatprep.subr.mxu0 0.0
        %3203 = vmatpush1.msra.mxu0 0.0
        %3204 = vmatprep.subr.mxu0 0.0
        %3205 = vmatpush1.msra.mxu0 0.0
        %3206 = vmatprep.subr.mxu0 0.0
        %3207 = vmatpush1.msra.mxu0 0.0
        %3208 = vmatprep.subr.mxu0 0.0
        %3209 = vmatpush1.msra.mxu0 0.0
        %3210 = vmatprep.subr.mxu0 0.0
        %3211 = vmatpush1.msra.mxu0 0.0
        %3212 = vmatprep.subr.mxu0 0.0
        %3213 = vmatpush1.msra.mxu0 0.0
        %3214 = vmatprep.subr.mxu0 0.0
        %3215 = vmatpush1.msra.mxu0 0.0
        %3216 = vmatprep.subr.mxu0 0.0
        %3217 = vmatpush1.msra.mxu0 0.0
        %3218 = vmatprep.subr.mxu0 0.0
        %3219 = vmatpush1.msra.mxu0 0.0
        %3220 = vmatprep.subr.mxu0 0.0
        %3221 = vmatpush1.msra.mxu0 0.0
        %3222 = vmatprep.subr.mxu0 0.0
        %3223 = vmatpush1.msra.mxu0 0.0
        %3224 = vmatprep.subr.mxu0 0.0
        %3225 = vmatpush1.msra.mxu0 0.0
        %3226 = vmatprep.subr.mxu0 0.0
        %3227 = vmatpush1.msra.mxu0 %v3101
        %3228 = vmatprep.subr.mxu0 0.0
        %3229 = vmatpush1.msra.mxu0 %v3100
        %3230 = vmatprep.subr.mxu0 0.0
        %3231 = vmatpush2.msra.mxu0 0.0
        %3232 = vmatprep.subr.mxu0 0.0
        %3233 = vmatpush2.msra.mxu0 0.0
        %3234 = vmatprep.subr.mxu0 0.0
        %3235 = vmatpush2.msra.mxu0 0.0
        %3236 = vmatprep.subr.mxu0 0.0
        %3237 = vmatpush2.msra.mxu0 0.0
        %3238 = vmatprep.subr.mxu0 0.0
        %3239 = vmatpush2.msra.mxu0 0.0
        %3240 = vmatprep.subr.mxu0 0.0
        %3241 = vmatpush2.msra.mxu0 0.0
        %3242 = vmatprep.subr.mxu0 0.0
        %3243 = vmatpush2.msra.mxu0 0.0
        %3244 = vmatprep.subr.mxu0 0.0
        %3245 = vmatpush2.msra.mxu0 0.0
        %3246 = vmatprep.subr.mxu0 0.0
        %3247 = vmatpush2.msra.mxu0 0.0
        %3248 = vmatprep.subr.mxu0 0.0
        %3249 = vmatpush2.msra.mxu0 0.0
        %3250 = vmatprep.subr.mxu0 0.0
        %3251 = vmatpush2.msra.mxu0 0.0
        %3252 = vmatprep.subr.mxu0 0.0
        %3253 = vmatpush2.msra.mxu0 0.0
        %3254 = vmatprep.subr.mxu0 0.0
        %3255 = vmatpush2.msra.mxu0 0.0
        %3256 = vmatprep.subr.mxu0 0.0
        %3257 = vmatpush2.msra.mxu0 0.0
        %3258 = vmatprep.subr.mxu0 0.0
        %3259 = vmatpush2.msra.mxu0 0.0
        %3260 = vmatprep.subr.mxu0 0.0
        %3261 = vmatpush2.msra.mxu0 0.0
        %3262 = vmatprep.mubr.f32.mxu0 0.0
        %3263 = vmatmul.mubr.f32.gmra.mxu0 %v3103
        %v3264 = vpop.f32.mrf.mxu0
        %v3265 = vadd.f32 0.0, %v3264
        %v3266 = vpop.f32.mrf.mxu0
        %3267 = vmatprep.mubr.f32.mxu0 0.0
        %3268 = vmatmul.mubr.f32.gmra.mxu0 %v3106
        %v3269 = vpop.f32.mrf.mxu0
        %v3270 = vadd.f32 0.0, %v3269
        %v3271 = vpop.f32.mrf.mxu0
        %3272 = vmatprep.mubr.f32.mxu0 0.0
        %3273 = vmatmul.mubr.f32.gmra.mxu0 %v3109
        %v3274 = vpop.f32.mrf.mxu0
        %v3275 = vadd.f32 0.0, %v3274
        %v3276 = vpop.f32.mrf.mxu0
        %3277 = vmatprep.mubr.f32.mxu0 0.0
        %3278 = vmatmul.mubr.f32.gmra.mxu0 %v3112
        %v3279 = vpop.f32.mrf.mxu0
        %v3280 = vadd.f32 0.0, %v3279
        %v3281 = vpop.f32.mrf.mxu0
        %3282 = vmatprep.mubr.f32.mxu0 0.0
        %3283 = vmatmul.mubr.f32.gmra.mxu0 %v3115
        %v3284 = vpop.f32.mrf.mxu0
        %v3285 = vadd.f32 0.0, %v3284
        %v3286 = vpop.f32.mrf.mxu0
        %3287 = vmatprep.mubr.f32.mxu0 0.0
        %3288 = vmatmul.mubr.f32.gmra.mxu0 %v3118
        %v3289 = vpop.f32.mrf.mxu0
        %v3290 = vadd.f32 0.0, %v3289
        %v3291 = vpop.f32.mrf.mxu0
        %3292 = vmatprep.mubr.f32.mxu0 0.0
        %3293 = vmatmul.mubr.f32.gmra.mxu0 %v3121
        %v3294 = vpop.f32.mrf.mxu0
        %v3295 = vadd.f32 0.0, %v3294
        %v3296 = vpop.f32.mrf.mxu0
        %3297 = vmatprep.mubr.f32.mxu0 0.0
        %3298 = vmatmul.mubr.f32.gmra.mxu0 %v3124
        %v3299 = vpop.f32.mrf.mxu0
        %v3300 = vadd.f32 0.0, %v3299
        %v3301 = vpop.f32.mrf.mxu0
        %3302 = vmatprep.mubr.f32.mxu0 0.0
        %3303 = vmatmul.mubr.f32.gmra.mxu0 %v3127
        %v3304 = vpop.f32.mrf.mxu0
        %v3305 = vadd.f32 0.0, %v3304
        %v3306 = vpop.f32.mrf.mxu0
        %3307 = vmatprep.mubr.f32.mxu0 0.0
        %3308 = vmatmul.mubr.f32.gmra.mxu0 %v3130
        %v3309 = vpop.f32.mrf.mxu0
        %v3310 = vadd.f32 0.0, %v3309
        %v3311 = vpop.f32.mrf.mxu0
        %3312 = vmatprep.mubr.f32.mxu0 0.0
        %3313 = vmatmul.mubr.f32.gmra.mxu0 %v3133
        %v3314 = vpop.f32.mrf.mxu0
        %v3315 = vadd.f32 0.0, %v3314
        %v3316 = vpop.f32.mrf.mxu0
        %3317 = vmatprep.mubr.f32.mxu0 0.0
        %3318 = vmatmul.mubr.f32.gmra.mxu0 %v3136
        %v3319 = vpop.f32.mrf.mxu0
        %v3320 = vadd.f32 0.0, %v3319
        %v3321 = vpop.f32.mrf.mxu0
        %3322 = vmatprep.mubr.f32.mxu0 0.0
        %3323 = vmatmul.mubr.f32.gmra.mxu0 %v3139
        %v3324 = vpop.f32.mrf.mxu0
        %v3325 = vadd.f32 0.0, %v3324
        %v3326 = vpop.f32.mrf.mxu0
        %3327 = vmatprep.mubr.f32.mxu0 0.0
        %3328 = vmatmul.mubr.f32.gmra.mxu0 %v3142
        %v3329 = vpop.f32.mrf.mxu0
        %v3330 = vadd.f32 0.0, %v3329
        %v3331 = vpop.f32.mrf.mxu0
        %3332 = vmatprep.mubr.f32.mxu0 0.0
        %3333 = vmatmul.mubr.f32.gmra.mxu0 %v3145
        %v3334 = vpop.f32.mrf.mxu0
        %v3335 = vadd.f32 0.0, %v3334
        %v3336 = vpop.f32.mrf.mxu0
        %3337 = vmatprep.mubr.f32.mxu0 0.0
        %3338 = vmatmul.mubr.f32.gmra.mxu0 %v3148
        %v3339 = vpop.f32.mrf.mxu0
        %v3340 = vadd.f32 0.0, %v3339
        %v3341 = vpop.f32.mrf.mxu0
        %3342 = vmatprep.mubr.f32.mxu0 0.0
        %3343 = vmatmul.mubr.f32.gmra.mxu0 %v3151
        %v3344 = vpop.f32.mrf.mxu0
        %v3345 = vadd.f32 0.0, %v3344
        %v3346 = vpop.f32.mrf.mxu0
        %3347 = vmatprep.mubr.f32.mxu0 0.0
        %3348 = vmatmul.mubr.f32.gmra.mxu0 %v3154
        %v3349 = vpop.f32.mrf.mxu0
        %v3350 = vadd.f32 0.0, %v3349
        %v3351 = vpop.f32.mrf.mxu0
        %3352 = vmatprep.mubr.f32.mxu0 0.0
        %3353 = vmatmul.mubr.f32.gmra.mxu0 %v3157
        %v3354 = vpop.f32.mrf.mxu0
        %v3355 = vadd.f32 0.0, %v3354
        %v3356 = vpop.f32.mrf.mxu0
        %3357 = vmatprep.mubr.f32.mxu0 0.0
        %3358 = vmatmul.mubr.f32.gmra.mxu0 %v3160
        %v3359 = vpop.f32.mrf.mxu0
        %v3360 = vadd.f32 0.0, %v3359
        %v3361 = vpop.f32.mrf.mxu0
        %3362 = vmatprep.mubr.f32.mxu0 0.0
        %3363 = vmatmul.mubr.f32.gmra.mxu0 %v3163
        %v3364 = vpop.f32.mrf.mxu0
        %v3365 = vadd.f32 0.0, %v3364
        %v3366 = vpop.f32.mrf.mxu0
        %3367 = vmatprep.mubr.f32.mxu0 0.0
        %3368 = vmatmul.mubr.f32.gmra.mxu0 %v3166
        %v3369 = vpop.f32.mrf.mxu0
        %v3370 = vadd.f32 0.0, %v3369
        %v3371 = vpop.f32.mrf.mxu0
        %3372 = vmatprep.mubr.f32.mxu0 0.0
        %3373 = vmatmul.mubr.f32.gmra.mxu0 %v3169
        %v3374 = vpop.f32.mrf.mxu0
        %v3375 = vadd.f32 0.0, %v3374
        %v3376 = vpop.f32.mrf.mxu0
        %3377 = vmatprep.mubr.f32.mxu0 0.0
        %3378 = vmatmul.mubr.f32.gmra.mxu0 %v3172
        %v3379 = vpop.f32.mrf.mxu0
        %v3380 = vadd.f32 0.0, %v3379
        %v3381 = vpop.f32.mrf.mxu0
        %3382 = vmatprep.mubr.f32.mxu0 0.0
        %3383 = vmatmul.mubr.f32.gmra.mxu0 %v3175
        %v3384 = vpop.f32.mrf.mxu0
        %v3385 = vadd.f32 0.0, %v3384
        %v3386 = vpop.f32.mrf.mxu0
        %3387 = vmatprep.mubr.f32.mxu0 0.0
        %3388 = vmatmul.mubr.f32.gmra.mxu0 %v3178
        %v3389 = vpop.f32.mrf.mxu0
        %v3390 = vadd.f32 0.0, %v3389
        %v3391 = vpop.f32.mrf.mxu0
        %3392 = vmatprep.mubr.f32.mxu0 0.0
        %3393 = vmatmul.mubr.f32.gmra.mxu0 %v3181
        %v3394 = vpop.f32.mrf.mxu0
        %v3395 = vadd.f32 0.0, %v3394
        %v3396 = vpop.f32.mrf.mxu0
        %3397 = vmatprep.mubr.f32.mxu0 0.0
        %3398 = vmatmul.mubr.f32.gmra.mxu0 %v3184
        %v3399 = vpop.f32.mrf.mxu0
        %v3400 = vadd.f32 0.0, %v3399
        %v3401 = vpop.f32.mrf.mxu0
        %3402 = vmatprep.mubr.f32.mxu0 0.0
        %3403 = vmatmul.mubr.f32.gmra.mxu0 %v3187
        %v3404 = vpop.f32.mrf.mxu0
        %v3405 = vadd.f32 0.0, %v3404
        %v3406 = vpop.f32.mrf.mxu0
        %3407 = vmatprep.mubr.f32.mxu0 0.0
        %3408 = vmatmul.mubr.f32.gmra.mxu0 %v3190
        %v3409 = vpop.f32.mrf.mxu0
        %v3410 = vadd.f32 0.0, %v3409
        %v3411 = vpop.f32.mrf.mxu0
        %3412 = vmatprep.mubr.f32.mxu0 0.0
        %3413 = vmatmul.mubr.f32.gmra.mxu0 %v3193
        %v3414 = vpop.f32.mrf.mxu0
        %v3415 = vadd.f32 0.0, %v3414
        %v3416 = vpop.f32.mrf.mxu0
        %3417 = vmatprep.mubr.f32.mxu0 0.0
        %3418 = vmatmul.mubr.f32.gmra.mxu0 %v3196
        %v3419 = vpop.f32.mrf.mxu0
        %v3420 = vadd.f32 0.0, %v3419
        %v3421 = vpop.f32.mrf.mxu0
        %3422 = vdwg.mxu0
        %v3423 = vadd.f32 %v3034, %v3265
        %v3424 = vadd.f32 %v3035, %v3270
        %v3425 = vadd.f32 %v3036, %v3275
        %v3426 = vadd.f32 %v3037, %v3280
        %v3427 = vadd.f32 %v3038, %v3285
        %v3428 = vadd.f32 %v3039, %v3290
        %v3429 = vadd.f32 %v3040, %v3295
        %v3430 = vadd.f32 %v3041, %v3300
        %v3431 = vadd.f32 %v3042, %v3305
        %v3432 = vadd.f32 %v3043, %v3310
        %v3433 = vadd.f32 %v3044, %v3315
        %v3434 = vadd.f32 %v3045, %v3320
        %v3435 = vadd.f32 %v3046, %v3325
        %v3436 = vadd.f32 %v3047, %v3330
        %v3437 = vadd.f32 %v3048, %v3335
        %v3438 = vadd.f32 %v3049, %v3340
        %v3439 = vadd.f32 %v3050, %v3345
        %v3440 = vadd.f32 %v3051, %v3350
        %v3441 = vadd.f32 %v3052, %v3355
        %v3442 = vadd.f32 %v3053, %v3360
        %v3443 = vadd.f32 %v3054, %v3365
        %v3444 = vadd.f32 %v3055, %v3370
        %v3445 = vadd.f32 %v3056, %v3375
        %v3446 = vadd.f32 %v3057, %v3380
        %v3447 = vadd.f32 %v3058, %v3385
        %v3448 = vadd.f32 %v3059, %v3390
        %v3449 = vadd.f32 %v3060, %v3395
        %v3450 = vadd.f32 %v3061, %v3400
        %v3451 = vadd.f32 %v3062, %v3405
        %v3452 = vadd.f32 %v3063, %v3410
        %v3453 = vadd.f32 %v3064, %v3415
        %v3454 = vadd.f32 %v3065, %v3420
        %v3455 = vld [vmem:[%s3066 + $0x1] sm:$0xff]
        %v3456 = vld [vmem:[%s3066 + $0x9] sm:$0xff]
        %v3457 = vld [vmem:[%s3066 + $0x19] sm:$0xff]
        %v3458 = vld [vmem:[%s3066 + $0x21] sm:$0xff]
        %v3459 = vld [vmem:[%s3066 + $0x31] sm:$0xff]
        %v3460 = vld [vmem:[%s3066 + $0x39] sm:$0xff]
        %v3461 = vld [vmem:[%s3066 + $0x49] sm:$0xff]
        %v3462 = vld [vmem:[%s3066 + $0x51] sm:$0xff]
        %v3463 = vld [vmem:[%s3066 + $0x61] sm:$0xff]
        %v3464 = vld [vmem:[%s3066 + $0x69] sm:$0xff]
        %v3465 = vld [vmem:[%s3066 + $0x79] sm:$0xff]
        %v3466 = vld [vmem:[%s3066 + $0x81] sm:$0xff]
        %v3467 = vld [vmem:[%s3066 + $0x91] sm:$0xff]
        %v3468 = vld [vmem:[%s3066 + $0x99] sm:$0xff]
        %v3469 = vld [vmem:[%s3066 + $0xa9] sm:$0xff]
        %v3470 = vld [vmem:[%s3066 + $0xb1] sm:$0xff]
        %v3471 = vld [vmem:[%s3066 + $0xc1] sm:$0xff]
        %v3472 = vld [vmem:[%s3066 + $0xc9] sm:$0xff]
        %v3473 = vld [vmem:[%s3066 + $0xd9] sm:$0xff]
        %v3474 = vld [vmem:[%s3066 + $0xe1] sm:$0xff]
        %v3475 = vld [vmem:[%s3066 + $0xf1] sm:$0xff]
        %v3476 = vld [vmem:[%s3066 + $0xf9] sm:$0xff]
        %v3477 = vld [vmem:[%s3066 + $0x109] sm:$0xff]
        %v3478 = vld [vmem:[%s3066 + $0x111] sm:$0xff]
        %v3479 = vld [vmem:[%s3066 + $0x121] sm:$0xff]
        %v3480 = vld [vmem:[%s3066 + $0x129] sm:$0xff]
        %v3481 = vld [vmem:[%s3066 + $0x139] sm:$0xff]
        %v3482 = vld [vmem:[%s3066 + $0x141] sm:$0xff]
        %v3483 = vld [vmem:[%s3066 + $0x151] sm:$0xff]
        %v3484 = vld [vmem:[%s3066 + $0x159] sm:$0xff]
        %v3485 = vld [vmem:[%s3066 + $0x169] sm:$0xff]
        %v3486 = vld [vmem:[%s3066 + $0x171] sm:$0xff]
        %s3487 = scalar_lea.vmem %s3, 112
        %v3488 = vld [vmem:[%s3487] sm:$0xff]
        %v3489 = vld [vmem:[%s3487 + $0x8] sm:$0xff]
        %v3491 = vsel %vm724, %v3455, 0
        %v3494 = vsel %vm724, %v3456, 0
        %v3497 = vsel %vm724, %v3457, 0
        %v3500 = vsel %vm724, %v3458, 0
        %v3503 = vsel %vm724, %v3459, 0
        %v3506 = vsel %vm724, %v3460, 0
        %v3509 = vsel %vm724, %v3461, 0
        %v3512 = vsel %vm724, %v3462, 0
        %v3515 = vsel %vm724, %v3463, 0
        %v3518 = vsel %vm724, %v3464, 0
        %v3521 = vsel %vm724, %v3465, 0
        %v3524 = vsel %vm724, %v3466, 0
        %v3527 = vsel %vm724, %v3467, 0
        %v3530 = vsel %vm724, %v3468, 0
        %v3533 = vsel %vm724, %v3469, 0
        %v3536 = vsel %vm724, %v3470, 0
        %v3539 = vsel %vm724, %v3471, 0
        %v3542 = vsel %vm724, %v3472, 0
        %v3545 = vsel %vm724, %v3473, 0
        %v3548 = vsel %vm724, %v3474, 0
        %v3551 = vsel %vm724, %v3475, 0
        %v3554 = vsel %vm724, %v3476, 0
        %v3557 = vsel %vm724, %v3477, 0
        %v3560 = vsel %vm724, %v3478, 0
        %v3563 = vsel %vm724, %v3479, 0
        %v3566 = vsel %vm724, %v3480, 0
        %v3569 = vsel %vm724, %v3481, 0
        %v3572 = vsel %vm724, %v3482, 0
        %v3575 = vsel %vm724, %v3483, 0
        %v3578 = vsel %vm724, %v3484, 0
        %v3581 = vsel %vm724, %v3485, 0
        %v3584 = vsel %vm724, %v3486, 0
        %3586 = vmatprep.subr.mxu0 0.0
        %3587 = vmatpush1.msra.mxu0 0.0
        %3588 = vmatprep.subr.mxu0 0.0
        %3589 = vmatpush1.msra.mxu0 0.0
        %3590 = vmatprep.subr.mxu0 0.0
        %3591 = vmatpush1.msra.mxu0 0.0
        %3592 = vmatprep.subr.mxu0 0.0
        %3593 = vmatpush1.msra.mxu0 0.0
        %3594 = vmatprep.subr.mxu0 0.0
        %3595 = vmatpush1.msra.mxu0 0.0
        %3596 = vmatprep.subr.mxu0 0.0
        %3597 = vmatpush1.msra.mxu0 0.0
        %3598 = vmatprep.subr.mxu0 0.0
        %3599 = vmatpush1.msra.mxu0 0.0
        %3600 = vmatprep.subr.mxu0 0.0
        %3601 = vmatpush1.msra.mxu0 0.0
        %3602 = vmatprep.subr.mxu0 0.0
        %3603 = vmatpush1.msra.mxu0 0.0
        %3604 = vmatprep.subr.mxu0 0.0
        %3605 = vmatpush1.msra.mxu0 0.0
        %3606 = vmatprep.subr.mxu0 0.0
        %3607 = vmatpush1.msra.mxu0 0.0
        %3608 = vmatprep.subr.mxu0 0.0
        %3609 = vmatpush1.msra.mxu0 0.0
        %3610 = vmatprep.subr.mxu0 0.0
        %3611 = vmatpush1.msra.mxu0 0.0
        %3612 = vmatprep.subr.mxu0 0.0
        %3613 = vmatpush1.msra.mxu0 0.0
        %3614 = vmatprep.subr.mxu0 0.0
        %3615 = vmatpush1.msra.mxu0 %v3489
        %3616 = vmatprep.subr.mxu0 0.0
        %3617 = vmatpush1.msra.mxu0 %v3488
        %3618 = vmatprep.subr.mxu0 0.0
        %3619 = vmatpush2.msra.mxu0 0.0
        %3620 = vmatprep.subr.mxu0 0.0
        %3621 = vmatpush2.msra.mxu0 0.0
        %3622 = vmatprep.subr.mxu0 0.0
        %3623 = vmatpush2.msra.mxu0 0.0
        %3624 = vmatprep.subr.mxu0 0.0
        %3625 = vmatpush2.msra.mxu0 0.0
        %3626 = vmatprep.subr.mxu0 0.0
        %3627 = vmatpush2.msra.mxu0 0.0
        %3628 = vmatprep.subr.mxu0 0.0
        %3629 = vmatpush2.msra.mxu0 0.0
        %3630 = vmatprep.subr.mxu0 0.0
        %3631 = vmatpush2.msra.mxu0 0.0
        %3632 = vmatprep.subr.mxu0 0.0
        %3633 = vmatpush2.msra.mxu0 0.0
        %3634 = vmatprep.subr.mxu0 0.0
        %3635 = vmatpush2.msra.mxu0 0.0
        %3636 = vmatprep.subr.mxu0 0.0
        %3637 = vmatpush2.msra.mxu0 0.0
        %3638 = vmatprep.subr.mxu0 0.0
        %3639 = vmatpush2.msra.mxu0 0.0
        %3640 = vmatprep.subr.mxu0 0.0
        %3641 = vmatpush2.msra.mxu0 0.0
        %3642 = vmatprep.subr.mxu0 0.0
        %3643 = vmatpush2.msra.mxu0 0.0
        %3644 = vmatprep.subr.mxu0 0.0
        %3645 = vmatpush2.msra.mxu0 0.0
        %3646 = vmatprep.subr.mxu0 0.0
        %3647 = vmatpush2.msra.mxu0 0.0
        %3648 = vmatprep.subr.mxu0 0.0
        %3649 = vmatpush2.msra.mxu0 0.0
        %3650 = vmatprep.mubr.f32.mxu0 0.0
        %3651 = vmatmul.mubr.f32.gmra.mxu0 %v3491
        %v3652 = vpop.f32.mrf.mxu0
        %v3653 = vadd.f32 0.0, %v3652
        %v3654 = vpop.f32.mrf.mxu0
        %3655 = vmatprep.mubr.f32.mxu0 0.0
        %3656 = vmatmul.mubr.f32.gmra.mxu0 %v3494
        %v3657 = vpop.f32.mrf.mxu0
        %v3658 = vadd.f32 0.0, %v3657
        %v3659 = vpop.f32.mrf.mxu0
        %3660 = vmatprep.mubr.f32.mxu0 0.0
        %3661 = vmatmul.mubr.f32.gmra.mxu0 %v3497
        %v3662 = vpop.f32.mrf.mxu0
        %v3663 = vadd.f32 0.0, %v3662
        %v3664 = vpop.f32.mrf.mxu0
        %3665 = vmatprep.mubr.f32.mxu0 0.0
        %3666 = vmatmul.mubr.f32.gmra.mxu0 %v3500
        %v3667 = vpop.f32.mrf.mxu0
        %v3668 = vadd.f32 0.0, %v3667
        %v3669 = vpop.f32.mrf.mxu0
        %3670 = vmatprep.mubr.f32.mxu0 0.0
        %3671 = vmatmul.mubr.f32.gmra.mxu0 %v3503
        %v3672 = vpop.f32.mrf.mxu0
        %v3673 = vadd.f32 0.0, %v3672
        %v3674 = vpop.f32.mrf.mxu0
        %3675 = vmatprep.mubr.f32.mxu0 0.0
        %3676 = vmatmul.mubr.f32.gmra.mxu0 %v3506
        %v3677 = vpop.f32.mrf.mxu0
        %v3678 = vadd.f32 0.0, %v3677
        %v3679 = vpop.f32.mrf.mxu0
        %3680 = vmatprep.mubr.f32.mxu0 0.0
        %3681 = vmatmul.mubr.f32.gmra.mxu0 %v3509
        %v3682 = vpop.f32.mrf.mxu0
        %v3683 = vadd.f32 0.0, %v3682
        %v3684 = vpop.f32.mrf.mxu0
        %3685 = vmatprep.mubr.f32.mxu0 0.0
        %3686 = vmatmul.mubr.f32.gmra.mxu0 %v3512
        %v3687 = vpop.f32.mrf.mxu0
        %v3688 = vadd.f32 0.0, %v3687
        %v3689 = vpop.f32.mrf.mxu0
        %3690 = vmatprep.mubr.f32.mxu0 0.0
        %3691 = vmatmul.mubr.f32.gmra.mxu0 %v3515
        %v3692 = vpop.f32.mrf.mxu0
        %v3693 = vadd.f32 0.0, %v3692
        %v3694 = vpop.f32.mrf.mxu0
        %3695 = vmatprep.mubr.f32.mxu0 0.0
        %3696 = vmatmul.mubr.f32.gmra.mxu0 %v3518
        %v3697 = vpop.f32.mrf.mxu0
        %v3698 = vadd.f32 0.0, %v3697
        %v3699 = vpop.f32.mrf.mxu0
        %3700 = vmatprep.mubr.f32.mxu0 0.0
        %3701 = vmatmul.mubr.f32.gmra.mxu0 %v3521
        %v3702 = vpop.f32.mrf.mxu0
        %v3703 = vadd.f32 0.0, %v3702
        %v3704 = vpop.f32.mrf.mxu0
        %3705 = vmatprep.mubr.f32.mxu0 0.0
        %3706 = vmatmul.mubr.f32.gmra.mxu0 %v3524
        %v3707 = vpop.f32.mrf.mxu0
        %v3708 = vadd.f32 0.0, %v3707
        %v3709 = vpop.f32.mrf.mxu0
        %3710 = vmatprep.mubr.f32.mxu0 0.0
        %3711 = vmatmul.mubr.f32.gmra.mxu0 %v3527
        %v3712 = vpop.f32.mrf.mxu0
        %v3713 = vadd.f32 0.0, %v3712
        %v3714 = vpop.f32.mrf.mxu0
        %3715 = vmatprep.mubr.f32.mxu0 0.0
        %3716 = vmatmul.mubr.f32.gmra.mxu0 %v3530
        %v3717 = vpop.f32.mrf.mxu0
        %v3718 = vadd.f32 0.0, %v3717
        %v3719 = vpop.f32.mrf.mxu0
        %3720 = vmatprep.mubr.f32.mxu0 0.0
        %3721 = vmatmul.mubr.f32.gmra.mxu0 %v3533
        %v3722 = vpop.f32.mrf.mxu0
        %v3723 = vadd.f32 0.0, %v3722
        %v3724 = vpop.f32.mrf.mxu0
        %3725 = vmatprep.mubr.f32.mxu0 0.0
        %3726 = vmatmul.mubr.f32.gmra.mxu0 %v3536
        %v3727 = vpop.f32.mrf.mxu0
        %v3728 = vadd.f32 0.0, %v3727
        %v3729 = vpop.f32.mrf.mxu0
        %3730 = vmatprep.mubr.f32.mxu0 0.0
        %3731 = vmatmul.mubr.f32.gmra.mxu0 %v3539
        %v3732 = vpop.f32.mrf.mxu0
        %v3733 = vadd.f32 0.0, %v3732
        %v3734 = vpop.f32.mrf.mxu0
        %3735 = vmatprep.mubr.f32.mxu0 0.0
        %3736 = vmatmul.mubr.f32.gmra.mxu0 %v3542
        %v3737 = vpop.f32.mrf.mxu0
        %v3738 = vadd.f32 0.0, %v3737
        %v3739 = vpop.f32.mrf.mxu0
        %3740 = vmatprep.mubr.f32.mxu0 0.0
        %3741 = vmatmul.mubr.f32.gmra.mxu0 %v3545
        %v3742 = vpop.f32.mrf.mxu0
        %v3743 = vadd.f32 0.0, %v3742
        %v3744 = vpop.f32.mrf.mxu0
        %3745 = vmatprep.mubr.f32.mxu0 0.0
        %3746 = vmatmul.mubr.f32.gmra.mxu0 %v3548
        %v3747 = vpop.f32.mrf.mxu0
        %v3748 = vadd.f32 0.0, %v3747
        %v3749 = vpop.f32.mrf.mxu0
        %3750 = vmatprep.mubr.f32.mxu0 0.0
        %3751 = vmatmul.mubr.f32.gmra.mxu0 %v3551
        %v3752 = vpop.f32.mrf.mxu0
        %v3753 = vadd.f32 0.0, %v3752
        %v3754 = vpop.f32.mrf.mxu0
        %3755 = vmatprep.mubr.f32.mxu0 0.0
        %3756 = vmatmul.mubr.f32.gmra.mxu0 %v3554
        %v3757 = vpop.f32.mrf.mxu0
        %v3758 = vadd.f32 0.0, %v3757
        %v3759 = vpop.f32.mrf.mxu0
        %3760 = vmatprep.mubr.f32.mxu0 0.0
        %3761 = vmatmul.mubr.f32.gmra.mxu0 %v3557
        %v3762 = vpop.f32.mrf.mxu0
        %v3763 = vadd.f32 0.0, %v3762
        %v3764 = vpop.f32.mrf.mxu0
        %3765 = vmatprep.mubr.f32.mxu0 0.0
        %3766 = vmatmul.mubr.f32.gmra.mxu0 %v3560
        %v3767 = vpop.f32.mrf.mxu0
        %v3768 = vadd.f32 0.0, %v3767
        %v3769 = vpop.f32.mrf.mxu0
        %3770 = vmatprep.mubr.f32.mxu0 0.0
        %3771 = vmatmul.mubr.f32.gmra.mxu0 %v3563
        %v3772 = vpop.f32.mrf.mxu0
        %v3773 = vadd.f32 0.0, %v3772
        %v3774 = vpop.f32.mrf.mxu0
        %3775 = vmatprep.mubr.f32.mxu0 0.0
        %3776 = vmatmul.mubr.f32.gmra.mxu0 %v3566
        %v3777 = vpop.f32.mrf.mxu0
        %v3778 = vadd.f32 0.0, %v3777
        %v3779 = vpop.f32.mrf.mxu0
        %3780 = vmatprep.mubr.f32.mxu0 0.0
        %3781 = vmatmul.mubr.f32.gmra.mxu0 %v3569
        %v3782 = vpop.f32.mrf.mxu0
        %v3783 = vadd.f32 0.0, %v3782
        %v3784 = vpop.f32.mrf.mxu0
        %3785 = vmatprep.mubr.f32.mxu0 0.0
        %3786 = vmatmul.mubr.f32.gmra.mxu0 %v3572
        %v3787 = vpop.f32.mrf.mxu0
        %v3788 = vadd.f32 0.0, %v3787
        %v3789 = vpop.f32.mrf.mxu0
        %3790 = vmatprep.mubr.f32.mxu0 0.0
        %3791 = vmatmul.mubr.f32.gmra.mxu0 %v3575
        %v3792 = vpop.f32.mrf.mxu0
        %v3793 = vadd.f32 0.0, %v3792
        %v3794 = vpop.f32.mrf.mxu0
        %3795 = vmatprep.mubr.f32.mxu0 0.0
        %3796 = vmatmul.mubr.f32.gmra.mxu0 %v3578
        %v3797 = vpop.f32.mrf.mxu0
        %v3798 = vadd.f32 0.0, %v3797
        %v3799 = vpop.f32.mrf.mxu0
        %3800 = vmatprep.mubr.f32.mxu0 0.0
        %3801 = vmatmul.mubr.f32.gmra.mxu0 %v3581
        %v3802 = vpop.f32.mrf.mxu0
        %v3803 = vadd.f32 0.0, %v3802
        %v3804 = vpop.f32.mrf.mxu0
        %3805 = vmatprep.mubr.f32.mxu0 0.0
        %3806 = vmatmul.mubr.f32.gmra.mxu0 %v3584
        %v3807 = vpop.f32.mrf.mxu0
        %v3808 = vadd.f32 0.0, %v3807
        %v3809 = vpop.f32.mrf.mxu0
        %3810 = vdwg.mxu0
        %v3811 = vadd.f32 %v3423, %v3653
        %v3812 = vadd.f32 %v3424, %v3658
        %v3813 = vadd.f32 %v3425, %v3663
        %v3814 = vadd.f32 %v3426, %v3668
        %v3815 = vadd.f32 %v3427, %v3673
        %v3816 = vadd.f32 %v3428, %v3678
        %v3817 = vadd.f32 %v3429, %v3683
        %v3818 = vadd.f32 %v3430, %v3688
        %v3819 = vadd.f32 %v3431, %v3693
        %v3820 = vadd.f32 %v3432, %v3698
        %v3821 = vadd.f32 %v3433, %v3703
        %v3822 = vadd.f32 %v3434, %v3708
        %v3823 = vadd.f32 %v3435, %v3713
        %v3824 = vadd.f32 %v3436, %v3718
        %v3825 = vadd.f32 %v3437, %v3723
        %v3826 = vadd.f32 %v3438, %v3728
        %v3827 = vadd.f32 %v3439, %v3733
        %v3828 = vadd.f32 %v3440, %v3738
        %v3829 = vadd.f32 %v3441, %v3743
        %v3830 = vadd.f32 %v3442, %v3748
        %v3831 = vadd.f32 %v3443, %v3753
        %v3832 = vadd.f32 %v3444, %v3758
        %v3833 = vadd.f32 %v3445, %v3763
        %v3834 = vadd.f32 %v3446, %v3768
        %v3835 = vadd.f32 %v3447, %v3773
        %v3836 = vadd.f32 %v3448, %v3778
        %v3837 = vadd.f32 %v3449, %v3783
        %v3838 = vadd.f32 %v3450, %v3788
        %v3839 = vadd.f32 %v3451, %v3793
        %v3840 = vadd.f32 %v3452, %v3798
        %v3841 = vadd.f32 %v3453, %v3803
        %v3842 = vadd.f32 %v3454, %v3808
        %v3843 = vld [vmem:[%s3066 + $0x2] sm:$0xff]
        %v3844 = vld [vmem:[%s3066 + $0xa] sm:$0xff]
        %v3845 = vld [vmem:[%s3066 + $0x1a] sm:$0xff]
        %v3846 = vld [vmem:[%s3066 + $0x22] sm:$0xff]
        %v3847 = vld [vmem:[%s3066 + $0x32] sm:$0xff]
        %v3848 = vld [vmem:[%s3066 + $0x3a] sm:$0xff]
        %v3849 = vld [vmem:[%s3066 + $0x4a] sm:$0xff]
        %v3850 = vld [vmem:[%s3066 + $0x52] sm:$0xff]
        %v3851 = vld [vmem:[%s3066 + $0x62] sm:$0xff]
        %v3852 = vld [vmem:[%s3066 + $0x6a] sm:$0xff]
        %v3853 = vld [vmem:[%s3066 + $0x7a] sm:$0xff]
        %v3854 = vld [vmem:[%s3066 + $0x82] sm:$0xff]
        %v3855 = vld [vmem:[%s3066 + $0x92] sm:$0xff]
        %v3856 = vld [vmem:[%s3066 + $0x9a] sm:$0xff]
        %v3857 = vld [vmem:[%s3066 + $0xaa] sm:$0xff]
        %v3858 = vld [vmem:[%s3066 + $0xb2] sm:$0xff]
        %v3859 = vld [vmem:[%s3066 + $0xc2] sm:$0xff]
        %v3860 = vld [vmem:[%s3066 + $0xca] sm:$0xff]
        %v3861 = vld [vmem:[%s3066 + $0xda] sm:$0xff]
        %v3862 = vld [vmem:[%s3066 + $0xe2] sm:$0xff]
        %v3863 = vld [vmem:[%s3066 + $0xf2] sm:$0xff]
        %v3864 = vld [vmem:[%s3066 + $0xfa] sm:$0xff]
        %v3865 = vld [vmem:[%s3066 + $0x10a] sm:$0xff]
        %v3866 = vld [vmem:[%s3066 + $0x112] sm:$0xff]
        %v3867 = vld [vmem:[%s3066 + $0x122] sm:$0xff]
        %v3868 = vld [vmem:[%s3066 + $0x12a] sm:$0xff]
        %v3869 = vld [vmem:[%s3066 + $0x13a] sm:$0xff]
        %v3870 = vld [vmem:[%s3066 + $0x142] sm:$0xff]
        %v3871 = vld [vmem:[%s3066 + $0x152] sm:$0xff]
        %v3872 = vld [vmem:[%s3066 + $0x15a] sm:$0xff]
        %v3873 = vld [vmem:[%s3066 + $0x16a] sm:$0xff]
        %v3874 = vld [vmem:[%s3066 + $0x172] sm:$0xff]
        %s3875 = scalar_lea.vmem %s3, 128
        %v3876 = vld [vmem:[%s3875] sm:$0xff]
        %v3877 = vld [vmem:[%s3875 + $0x8] sm:$0xff]
        %v3879 = vsel %vm724, %v3843, 0
        %v3882 = vsel %vm724, %v3844, 0
        %v3885 = vsel %vm724, %v3845, 0
        %v3888 = vsel %vm724, %v3846, 0
        %v3891 = vsel %vm724, %v3847, 0
        %v3894 = vsel %vm724, %v3848, 0
        %v3897 = vsel %vm724, %v3849, 0
        %v3900 = vsel %vm724, %v3850, 0
        %v3903 = vsel %vm724, %v3851, 0
        %v3906 = vsel %vm724, %v3852, 0
        %v3909 = vsel %vm724, %v3853, 0
        %v3912 = vsel %vm724, %v3854, 0
        %v3915 = vsel %vm724, %v3855, 0
        %v3918 = vsel %vm724, %v3856, 0
        %v3921 = vsel %vm724, %v3857, 0
        %v3924 = vsel %vm724, %v3858, 0
        %v3927 = vsel %vm724, %v3859, 0
        %v3930 = vsel %vm724, %v3860, 0
        %v3933 = vsel %vm724, %v3861, 0
        %v3936 = vsel %vm724, %v3862, 0
        %v3939 = vsel %vm724, %v3863, 0
        %v3942 = vsel %vm724, %v3864, 0
        %v3945 = vsel %vm724, %v3865, 0
        %v3948 = vsel %vm724, %v3866, 0
        %v3951 = vsel %vm724, %v3867, 0
        %v3954 = vsel %vm724, %v3868, 0
        %v3957 = vsel %vm724, %v3869, 0
        %v3960 = vsel %vm724, %v3870, 0
        %v3963 = vsel %vm724, %v3871, 0
        %v3966 = vsel %vm724, %v3872, 0
        %v3969 = vsel %vm724, %v3873, 0
        %v3972 = vsel %vm724, %v3874, 0
        %3974 = vmatprep.subr.mxu0 0.0
        %3975 = vmatpush1.msra.mxu0 0.0
        %3976 = vmatprep.subr.mxu0 0.0
        %3977 = vmatpush1.msra.mxu0 0.0
        %3978 = vmatprep.subr.mxu0 0.0
        %3979 = vmatpush1.msra.mxu0 0.0
        %3980 = vmatprep.subr.mxu0 0.0
        %3981 = vmatpush1.msra.mxu0 0.0
        %3982 = vmatprep.subr.mxu0 0.0
        %3983 = vmatpush1.msra.mxu0 0.0
        %3984 = vmatprep.subr.mxu0 0.0
        %3985 = vmatpush1.msra.mxu0 0.0
        %3986 = vmatprep.subr.mxu0 0.0
        %3987 = vmatpush1.msra.mxu0 0.0
        %3988 = vmatprep.subr.mxu0 0.0
        %3989 = vmatpush1.msra.mxu0 0.0
        %3990 = vmatprep.subr.mxu0 0.0
        %3991 = vmatpush1.msra.mxu0 0.0
        %3992 = vmatprep.subr.mxu0 0.0
        %3993 = vmatpush1.msra.mxu0 0.0
        %3994 = vmatprep.subr.mxu0 0.0
        %3995 = vmatpush1.msra.mxu0 0.0
        %3996 = vmatprep.subr.mxu0 0.0
        %3997 = vmatpush1.msra.mxu0 0.0
        %3998 = vmatprep.subr.mxu0 0.0
        %3999 = vmatpush1.msra.mxu0 0.0
        %4000 = vmatprep.subr.mxu0 0.0
        %4001 = vmatpush1.msra.mxu0 0.0
        %4002 = vmatprep.subr.mxu0 0.0
        %4003 = vmatpush1.msra.mxu0 %v3877
        %4004 = vmatprep.subr.mxu0 0.0
        %4005 = vmatpush1.msra.mxu0 %v3876
        %4006 = vmatprep.subr.mxu0 0.0
        %4007 = vmatpush2.msra.mxu0 0.0
        %4008 = vmatprep.subr.mxu0 0.0
        %4009 = vmatpush2.msra.mxu0 0.0
        %4010 = vmatprep.subr.mxu0 0.0
        %4011 = vmatpush2.msra.mxu0 0.0
        %4012 = vmatprep.subr.mxu0 0.0
        %4013 = vmatpush2.msra.mxu0 0.0
        %4014 = vmatprep.subr.mxu0 0.0
        %4015 = vmatpush2.msra.mxu0 0.0
        %4016 = vmatprep.subr.mxu0 0.0
        %4017 = vmatpush2.msra.mxu0 0.0
        %4018 = vmatprep.subr.mxu0 0.0
        %4019 = vmatpush2.msra.mxu0 0.0
        %4020 = vmatprep.subr.mxu0 0.0
        %4021 = vmatpush2.msra.mxu0 0.0
        %4022 = vmatprep.subr.mxu0 0.0
        %4023 = vmatpush2.msra.mxu0 0.0
        %4024 = vmatprep.subr.mxu0 0.0
        %4025 = vmatpush2.msra.mxu0 0.0
        %4026 = vmatprep.subr.mxu0 0.0
        %4027 = vmatpush2.msra.mxu0 0.0
        %4028 = vmatprep.subr.mxu0 0.0
        %4029 = vmatpush2.msra.mxu0 0.0
        %4030 = vmatprep.subr.mxu0 0.0
        %4031 = vmatpush2.msra.mxu0 0.0
        %4032 = vmatprep.subr.mxu0 0.0
        %4033 = vmatpush2.msra.mxu0 0.0
        %4034 = vmatprep.subr.mxu0 0.0
        %4035 = vmatpush2.msra.mxu0 0.0
        %4036 = vmatprep.subr.mxu0 0.0
        %4037 = vmatpush2.msra.mxu0 0.0
        %4038 = vmatprep.mubr.f32.mxu0 0.0
        %4039 = vmatmul.mubr.f32.gmra.mxu0 %v3879
        %v4040 = vpop.f32.mrf.mxu0
        %v4041 = vadd.f32 0.0, %v4040
        %v4042 = vpop.f32.mrf.mxu0
        %4043 = vmatprep.mubr.f32.mxu0 0.0
        %4044 = vmatmul.mubr.f32.gmra.mxu0 %v3882
        %v4045 = vpop.f32.mrf.mxu0
        %v4046 = vadd.f32 0.0, %v4045
        %v4047 = vpop.f32.mrf.mxu0
        %4048 = vmatprep.mubr.f32.mxu0 0.0
        %4049 = vmatmul.mubr.f32.gmra.mxu0 %v3885
        %v4050 = vpop.f32.mrf.mxu0
        %v4051 = vadd.f32 0.0, %v4050
        %v4052 = vpop.f32.mrf.mxu0
        %4053 = vmatprep.mubr.f32.mxu0 0.0
        %4054 = vmatmul.mubr.f32.gmra.mxu0 %v3888
        %v4055 = vpop.f32.mrf.mxu0
        %v4056 = vadd.f32 0.0, %v4055
        %v4057 = vpop.f32.mrf.mxu0
        %4058 = vmatprep.mubr.f32.mxu0 0.0
        %4059 = vmatmul.mubr.f32.gmra.mxu0 %v3891
        %v4060 = vpop.f32.mrf.mxu0
        %v4061 = vadd.f32 0.0, %v4060
        %v4062 = vpop.f32.mrf.mxu0
        %4063 = vmatprep.mubr.f32.mxu0 0.0
        %4064 = vmatmul.mubr.f32.gmra.mxu0 %v3894
        %v4065 = vpop.f32.mrf.mxu0
        %v4066 = vadd.f32 0.0, %v4065
        %v4067 = vpop.f32.mrf.mxu0
        %4068 = vmatprep.mubr.f32.mxu0 0.0
        %4069 = vmatmul.mubr.f32.gmra.mxu0 %v3897
        %v4070 = vpop.f32.mrf.mxu0
        %v4071 = vadd.f32 0.0, %v4070
        %v4072 = vpop.f32.mrf.mxu0
        %4073 = vmatprep.mubr.f32.mxu0 0.0
        %4074 = vmatmul.mubr.f32.gmra.mxu0 %v3900
        %v4075 = vpop.f32.mrf.mxu0
        %v4076 = vadd.f32 0.0, %v4075
        %v4077 = vpop.f32.mrf.mxu0
        %4078 = vmatprep.mubr.f32.mxu0 0.0
        %4079 = vmatmul.mubr.f32.gmra.mxu0 %v3903
        %v4080 = vpop.f32.mrf.mxu0
        %v4081 = vadd.f32 0.0, %v4080
        %v4082 = vpop.f32.mrf.mxu0
        %4083 = vmatprep.mubr.f32.mxu0 0.0
        %4084 = vmatmul.mubr.f32.gmra.mxu0 %v3906
        %v4085 = vpop.f32.mrf.mxu0
        %v4086 = vadd.f32 0.0, %v4085
        %v4087 = vpop.f32.mrf.mxu0
        %4088 = vmatprep.mubr.f32.mxu0 0.0
        %4089 = vmatmul.mubr.f32.gmra.mxu0 %v3909
        %v4090 = vpop.f32.mrf.mxu0
        %v4091 = vadd.f32 0.0, %v4090
        %v4092 = vpop.f32.mrf.mxu0
        %4093 = vmatprep.mubr.f32.mxu0 0.0
        %4094 = vmatmul.mubr.f32.gmra.mxu0 %v3912
        %v4095 = vpop.f32.mrf.mxu0
        %v4096 = vadd.f32 0.0, %v4095
        %v4097 = vpop.f32.mrf.mxu0
        %4098 = vmatprep.mubr.f32.mxu0 0.0
        %4099 = vmatmul.mubr.f32.gmra.mxu0 %v3915
        %v4100 = vpop.f32.mrf.mxu0
        %v4101 = vadd.f32 0.0, %v4100
        %v4102 = vpop.f32.mrf.mxu0
        %4103 = vmatprep.mubr.f32.mxu0 0.0
        %4104 = vmatmul.mubr.f32.gmra.mxu0 %v3918
        %v4105 = vpop.f32.mrf.mxu0
        %v4106 = vadd.f32 0.0, %v4105
        %v4107 = vpop.f32.mrf.mxu0
        %4108 = vmatprep.mubr.f32.mxu0 0.0
        %4109 = vmatmul.mubr.f32.gmra.mxu0 %v3921
        %v4110 = vpop.f32.mrf.mxu0
        %v4111 = vadd.f32 0.0, %v4110
        %v4112 = vpop.f32.mrf.mxu0
        %4113 = vmatprep.mubr.f32.mxu0 0.0
        %4114 = vmatmul.mubr.f32.gmra.mxu0 %v3924
        %v4115 = vpop.f32.mrf.mxu0
        %v4116 = vadd.f32 0.0, %v4115
        %v4117 = vpop.f32.mrf.mxu0
        %4118 = vmatprep.mubr.f32.mxu0 0.0
        %4119 = vmatmul.mubr.f32.gmra.mxu0 %v3927
        %v4120 = vpop.f32.mrf.mxu0
        %v4121 = vadd.f32 0.0, %v4120
        %v4122 = vpop.f32.mrf.mxu0
        %4123 = vmatprep.mubr.f32.mxu0 0.0
        %4124 = vmatmul.mubr.f32.gmra.mxu0 %v3930
        %v4125 = vpop.f32.mrf.mxu0
        %v4126 = vadd.f32 0.0, %v4125
        %v4127 = vpop.f32.mrf.mxu0
        %4128 = vmatprep.mubr.f32.mxu0 0.0
        %4129 = vmatmul.mubr.f32.gmra.mxu0 %v3933
        %v4130 = vpop.f32.mrf.mxu0
        %v4131 = vadd.f32 0.0, %v4130
        %v4132 = vpop.f32.mrf.mxu0
        %4133 = vmatprep.mubr.f32.mxu0 0.0
        %4134 = vmatmul.mubr.f32.gmra.mxu0 %v3936
        %v4135 = vpop.f32.mrf.mxu0
        %v4136 = vadd.f32 0.0, %v4135
        %v4137 = vpop.f32.mrf.mxu0
        %4138 = vmatprep.mubr.f32.mxu0 0.0
        %4139 = vmatmul.mubr.f32.gmra.mxu0 %v3939
        %v4140 = vpop.f32.mrf.mxu0
        %v4141 = vadd.f32 0.0, %v4140
        %v4142 = vpop.f32.mrf.mxu0
        %4143 = vmatprep.mubr.f32.mxu0 0.0
        %4144 = vmatmul.mubr.f32.gmra.mxu0 %v3942
        %v4145 = vpop.f32.mrf.mxu0
        %v4146 = vadd.f32 0.0, %v4145
        %v4147 = vpop.f32.mrf.mxu0
        %4148 = vmatprep.mubr.f32.mxu0 0.0
        %4149 = vmatmul.mubr.f32.gmra.mxu0 %v3945
        %v4150 = vpop.f32.mrf.mxu0
        %v4151 = vadd.f32 0.0, %v4150
        %v4152 = vpop.f32.mrf.mxu0
        %4153 = vmatprep.mubr.f32.mxu0 0.0
        %4154 = vmatmul.mubr.f32.gmra.mxu0 %v3948
        %v4155 = vpop.f32.mrf.mxu0
        %v4156 = vadd.f32 0.0, %v4155
        %v4157 = vpop.f32.mrf.mxu0
        %4158 = vmatprep.mubr.f32.mxu0 0.0
        %4159 = vmatmul.mubr.f32.gmra.mxu0 %v3951
        %v4160 = vpop.f32.mrf.mxu0
        %v4161 = vadd.f32 0.0, %v4160
        %v4162 = vpop.f32.mrf.mxu0
        %4163 = vmatprep.mubr.f32.mxu0 0.0
        %4164 = vmatmul.mubr.f32.gmra.mxu0 %v3954
        %v4165 = vpop.f32.mrf.mxu0
        %v4166 = vadd.f32 0.0, %v4165
        %v4167 = vpop.f32.mrf.mxu0
        %4168 = vmatprep.mubr.f32.mxu0 0.0
        %4169 = vmatmul.mubr.f32.gmra.mxu0 %v3957
        %v4170 = vpop.f32.mrf.mxu0
        %v4171 = vadd.f32 0.0, %v4170
        %v4172 = vpop.f32.mrf.mxu0
        %4173 = vmatprep.mubr.f32.mxu0 0.0
        %4174 = vmatmul.mubr.f32.gmra.mxu0 %v3960
        %v4175 = vpop.f32.mrf.mxu0
        %v4176 = vadd.f32 0.0, %v4175
        %v4177 = vpop.f32.mrf.mxu0
        %4178 = vmatprep.mubr.f32.mxu0 0.0
        %4179 = vmatmul.mubr.f32.gmra.mxu0 %v3963
        %v4180 = vpop.f32.mrf.mxu0
        %v4181 = vadd.f32 0.0, %v4180
        %v4182 = vpop.f32.mrf.mxu0
        %4183 = vmatprep.mubr.f32.mxu0 0.0
        %4184 = vmatmul.mubr.f32.gmra.mxu0 %v3966
        %v4185 = vpop.f32.mrf.mxu0
        %v4186 = vadd.f32 0.0, %v4185
        %v4187 = vpop.f32.mrf.mxu0
        %4188 = vmatprep.mubr.f32.mxu0 0.0
        %4189 = vmatmul.mubr.f32.gmra.mxu0 %v3969
        %v4190 = vpop.f32.mrf.mxu0
        %v4191 = vadd.f32 0.0, %v4190
        %v4192 = vpop.f32.mrf.mxu0
        %4193 = vmatprep.mubr.f32.mxu0 0.0
        %4194 = vmatmul.mubr.f32.gmra.mxu0 %v3972
        %v4195 = vpop.f32.mrf.mxu0
        %v4196 = vadd.f32 0.0, %v4195
        %v4197 = vpop.f32.mrf.mxu0
        %4198 = vdwg.mxu0
        %v4199 = vadd.f32 %v3811, %v4041
        %v4200 = vadd.f32 %v3812, %v4046
        %v4201 = vadd.f32 %v3813, %v4051
        %v4202 = vadd.f32 %v3814, %v4056
        %v4203 = vadd.f32 %v3815, %v4061
        %v4204 = vadd.f32 %v3816, %v4066
        %v4205 = vadd.f32 %v3817, %v4071
        %v4206 = vadd.f32 %v3818, %v4076
        %v4207 = vadd.f32 %v3819, %v4081
        %v4208 = vadd.f32 %v3820, %v4086
        %v4209 = vadd.f32 %v3821, %v4091
        %v4210 = vadd.f32 %v3822, %v4096
        %v4211 = vadd.f32 %v3823, %v4101
        %v4212 = vadd.f32 %v3824, %v4106
        %v4213 = vadd.f32 %v3825, %v4111
        %v4214 = vadd.f32 %v3826, %v4116
        %v4215 = vadd.f32 %v3827, %v4121
        %v4216 = vadd.f32 %v3828, %v4126
        %v4217 = vadd.f32 %v3829, %v4131
        %v4218 = vadd.f32 %v3830, %v4136
        %v4219 = vadd.f32 %v3831, %v4141
        %v4220 = vadd.f32 %v3832, %v4146
        %v4221 = vadd.f32 %v3833, %v4151
        %v4222 = vadd.f32 %v3834, %v4156
        %v4223 = vadd.f32 %v3835, %v4161
        %v4224 = vadd.f32 %v3836, %v4166
        %v4225 = vadd.f32 %v3837, %v4171
        %v4226 = vadd.f32 %v3838, %v4176
        %v4227 = vadd.f32 %v3839, %v4181
        %v4228 = vadd.f32 %v3840, %v4186
        %v4229 = vadd.f32 %v3841, %v4191
        %v4230 = vadd.f32 %v3842, %v4196
        %v4231 = vld [vmem:[%s4] sm:$0x1]
        %v4233 = vlaneseq
        %v4234 = vshrl.u32 %v4233, 7
        %v4235 = vsub.s32 0, %v4234
        %v4236 = vrot.slane %v4231, %v4235
        %v4238 = vadd.f32 %v4199, %v4236
        %v4239 = vadd.f32 %v4200, %v4236
        %v4240 = vadd.f32 %v4201, %v4236
        %v4241 = vadd.f32 %v4202, %v4236
        %v4242 = vadd.f32 %v4203, %v4236
        %v4243 = vadd.f32 %v4204, %v4236
        %v4244 = vadd.f32 %v4205, %v4236
        %v4245 = vadd.f32 %v4206, %v4236
        %v4246 = vadd.f32 %v4207, %v4236
        %v4247 = vadd.f32 %v4208, %v4236
        %v4248 = vadd.f32 %v4209, %v4236
        %v4249 = vadd.f32 %v4210, %v4236
        %v4250 = vadd.f32 %v4211, %v4236
        %v4251 = vadd.f32 %v4212, %v4236
        %v4252 = vadd.f32 %v4213, %v4236
        %v4253 = vadd.f32 %v4214, %v4236
        %v4254 = vadd.f32 %v4215, %v4236
        %v4255 = vadd.f32 %v4216, %v4236
        %v4256 = vadd.f32 %v4217, %v4236
        %v4257 = vadd.f32 %v4218, %v4236
        %v4258 = vadd.f32 %v4219, %v4236
        %v4259 = vadd.f32 %v4220, %v4236
        %v4260 = vadd.f32 %v4221, %v4236
        %v4261 = vadd.f32 %v4222, %v4236
        %v4262 = vadd.f32 %v4223, %v4236
        %v4263 = vadd.f32 %v4224, %v4236
        %v4264 = vadd.f32 %v4225, %v4236
        %v4265 = vadd.f32 %v4226, %v4236
        %v4266 = vadd.f32 %v4227, %v4236
        %v4267 = vadd.f32 %v4228, %v4236
        %v4268 = vadd.f32 %v4229, %v4236
        %v4269 = vadd.f32 %v4230, %v4236
        %v4270 = vsel %vm724, %v4238, 0.0
        %v4271 = vsel %vm724, %v4239, 0.0
        %v4272 = vadd.f32 %v4270, %v4271
        %v4273 = vsel %vm724, %v4240, 0.0
        %v4274 = vadd.f32 %v4272, %v4273
        %v4275 = vsel %vm724, %v4241, 0.0
        %v4276 = vadd.f32 %v4274, %v4275
        %v4277 = vsel %vm724, %v4242, 0.0
        %v4278 = vadd.f32 %v4276, %v4277
        %v4279 = vsel %vm724, %v4243, 0.0
        %v4280 = vadd.f32 %v4278, %v4279
        %v4281 = vsel %vm724, %v4244, 0.0
        %v4282 = vadd.f32 %v4280, %v4281
        %v4283 = vsel %vm724, %v4245, 0.0
        %v4284 = vadd.f32 %v4282, %v4283
        %v4285 = vsel %vm724, %v4246, 0.0
        %v4286 = vadd.f32 %v4284, %v4285
        %v4287 = vsel %vm724, %v4247, 0.0
        %v4288 = vadd.f32 %v4286, %v4287
        %v4289 = vsel %vm724, %v4248, 0.0
        %v4290 = vadd.f32 %v4288, %v4289
        %v4291 = vsel %vm724, %v4249, 0.0
        %v4292 = vadd.f32 %v4290, %v4291
        %v4293 = vsel %vm724, %v4250, 0.0
        %v4294 = vadd.f32 %v4292, %v4293
        %v4295 = vsel %vm724, %v4251, 0.0
        %v4296 = vadd.f32 %v4294, %v4295
        %v4297 = vsel %vm724, %v4252, 0.0
        %v4298 = vadd.f32 %v4296, %v4297
        %v4299 = vsel %vm724, %v4253, 0.0
        %v4300 = vadd.f32 %v4298, %v4299
        %v4301 = vsel %vm724, %v4254, 0.0
        %v4302 = vadd.f32 %v4300, %v4301
        %v4303 = vsel %vm724, %v4255, 0.0
        %v4304 = vadd.f32 %v4302, %v4303
        %v4305 = vsel %vm724, %v4256, 0.0
        %v4306 = vadd.f32 %v4304, %v4305
        %v4307 = vsel %vm724, %v4257, 0.0
        %v4308 = vadd.f32 %v4306, %v4307
        %v4309 = vsel %vm724, %v4258, 0.0
        %v4310 = vadd.f32 %v4308, %v4309
        %v4311 = vsel %vm724, %v4259, 0.0
        %v4312 = vadd.f32 %v4310, %v4311
        %v4313 = vsel %vm724, %v4260, 0.0
        %v4314 = vadd.f32 %v4312, %v4313
        %v4315 = vsel %vm724, %v4261, 0.0
        %v4316 = vadd.f32 %v4314, %v4315
        %v4317 = vsel %vm724, %v4262, 0.0
        %v4318 = vadd.f32 %v4316, %v4317
        %v4319 = vsel %vm724, %v4263, 0.0
        %v4320 = vadd.f32 %v4318, %v4319
        %v4321 = vsel %vm724, %v4264, 0.0
        %v4322 = vadd.f32 %v4320, %v4321
        %v4323 = vsel %vm724, %v4265, 0.0
        %v4324 = vadd.f32 %v4322, %v4323
        %v4325 = vsel %vm724, %v4266, 0.0
        %v4326 = vadd.f32 %v4324, %v4325
        %v4327 = vsel %vm724, %v4267, 0.0
        %v4328 = vadd.f32 %v4326, %v4327
        %v4329 = vsel %vm724, %v4268, 0.0
        %v4330 = vadd.f32 %v4328, %v4329
        %v4331 = vsel %vm724, %v4269, 0.0
        %v4332 = vadd.f32 %v4330, %v4331
        %v4333 = vrot.slane %v4332, 4
        %v4334 = vadd.f32 %v4332, %v4333
        %v4335 = vrot.slane %v4334, 2
        %v4336 = vadd.f32 %v4334, %v4335
        %v4337 = vrot.slane %v4336, 1
        %v4338 = vadd.f32 %v4336, %v4337
        %v4339 = vrcp.pop 256.0
        %v4340 = vmul.f32 %v4338, %v4339
        %v4341 = vsel %vm724, %v4238, -inf
        %v4342 = vsel %vm724, %v4239, -inf
        %v4343 = vsel %vm724, %v4240, -inf
        %v4344 = vsel %vm724, %v4241, -inf
        %v4345 = vsel %vm724, %v4242, -inf
        %v4346 = vmax.f32 %v4341, %v4345
        %v4347 = vsel %vm724, %v4243, -inf
        %v4348 = vmax.f32 %v4342, %v4347
        %v4349 = vsel %vm724, %v4244, -inf
        %v4350 = vmax.f32 %v4343, %v4349
        %v4351 = vsel %vm724, %v4245, -inf
        %v4352 = vmax.f32 %v4344, %v4351
        %v4353 = vsel %vm724, %v4246, -inf
        %v4354 = vmax.f32 %v4346, %v4353
        %v4355 = vsel %vm724, %v4247, -inf
        %v4356 = vmax.f32 %v4348, %v4355
        %v4357 = vsel %vm724, %v4248, -inf
        %v4358 = vmax.f32 %v4350, %v4357
        %v4359 = vsel %vm724, %v4249, -inf
        %v4360 = vmax.f32 %v4352, %v4359
        %v4361 = vsel %vm724, %v4250, -inf
        %v4362 = vmax.f32 %v4354, %v4361
        %v4363 = vsel %vm724, %v4251, -inf
        %v4364 = vmax.f32 %v4356, %v4363
        %v4365 = vsel %vm724, %v4252, -inf
        %v4366 = vmax.f32 %v4358, %v4365
        %v4367 = vsel %vm724, %v4253, -inf
        %v4368 = vmax.f32 %v4360, %v4367
        %v4369 = vsel %vm724, %v4254, -inf
        %v4370 = vmax.f32 %v4362, %v4369
        %v4371 = vsel %vm724, %v4255, -inf
        %v4372 = vmax.f32 %v4364, %v4371
        %v4373 = vsel %vm724, %v4256, -inf
        %v4374 = vmax.f32 %v4366, %v4373
        %v4375 = vsel %vm724, %v4257, -inf
        %v4376 = vmax.f32 %v4368, %v4375
        %v4377 = vsel %vm724, %v4258, -inf
        %v4378 = vmax.f32 %v4370, %v4377
        %v4379 = vsel %vm724, %v4259, -inf
        %v4380 = vmax.f32 %v4372, %v4379
        %v4381 = vsel %vm724, %v4260, -inf
        %v4382 = vmax.f32 %v4374, %v4381
        %v4383 = vsel %vm724, %v4261, -inf
        %v4384 = vmax.f32 %v4376, %v4383
        %v4385 = vsel %vm724, %v4262, -inf
        %v4386 = vmax.f32 %v4378, %v4385
        %v4387 = vsel %vm724, %v4263, -inf
        %v4388 = vmax.f32 %v4380, %v4387
        %v4389 = vsel %vm724, %v4264, -inf
        %v4390 = vmax.f32 %v4382, %v4389
        %v4391 = vsel %vm724, %v4265, -inf
        %v4392 = vmax.f32 %v4384, %v4391
        %v4393 = vsel %vm724, %v4266, -inf
        %v4394 = vmax.f32 %v4386, %v4393
        %v4395 = vsel %vm724, %v4267, -inf
        %v4396 = vmax.f32 %v4388, %v4395
        %v4397 = vsel %vm724, %v4268, -inf
        %v4398 = vmax.f32 %v4390, %v4397
        %v4399 = vsel %vm724, %v4269, -inf
        %v4400 = vmax.f32 %v4392, %v4399
        %v4401 = vmax.f32 %v4394, %v4396
        %v4402 = vmax.f32 %v4398, %v4400
        %v4403 = vmax.f32 %v4401, %v4402
        %v4404 = vrot.slane %v4403, 4
        %v4405 = vmax.f32 %v4403, %v4404
        %v4406 = vrot.slane %v4405, 2
        %v4407 = vmax.f32 %v4405, %v4406
        %v4408 = vrot.slane %v4407, 1
        %v4409 = vmax.f32 %v4407, %v4408
        %v4410 = vld [vmem:[%s5] sm:$0xff]
        %v4411 = vld [vmem:[%s5 + $0x8] sm:$0xff]
        %v4413 = vsel %vm724, %v4340, 0
        %4415 = vmatprep.subr.mxu0 0.0
        %4416 = vmatpush1.msra.mxu0 0.0
        %4417 = vmatprep.subr.mxu0 0.0
        %4418 = vmatpush1.msra.mxu0 0.0
        %4419 = vmatprep.subr.mxu0 0.0
        %4420 = vmatpush1.msra.mxu0 0.0
        %4421 = vmatprep.subr.mxu0 0.0
        %4422 = vmatpush1.msra.mxu0 0.0
        %4423 = vmatprep.subr.mxu0 0.0
        %4424 = vmatpush1.msra.mxu0 0.0
        %4425 = vmatprep.subr.mxu0 0.0
        %4426 = vmatpush1.msra.mxu0 0.0
        %4427 = vmatprep.subr.mxu0 0.0
        %4428 = vmatpush1.msra.mxu0 0.0
        %4429 = vmatprep.subr.mxu0 0.0
        %4430 = vmatpush1.msra.mxu0 0.0
        %4431 = vmatprep.subr.mxu0 0.0
        %4432 = vmatpush1.msra.mxu0 0.0
        %4433 = vmatprep.subr.mxu0 0.0
        %4434 = vmatpush1.msra.mxu0 0.0
        %4435 = vmatprep.subr.mxu0 0.0
        %4436 = vmatpush1.msra.mxu0 0.0
        %4437 = vmatprep.subr.mxu0 0.0
        %4438 = vmatpush1.msra.mxu0 0.0
        %4439 = vmatprep.subr.mxu0 0.0
        %4440 = vmatpush1.msra.mxu0 0.0
        %4441 = vmatprep.subr.mxu0 0.0
        %4442 = vmatpush1.msra.mxu0 0.0
        %4443 = vmatprep.subr.mxu0 0.0
        %4444 = vmatpush1.msra.mxu0 %v4411
        %4445 = vmatprep.subr.mxu0 0.0
        %4446 = vmatpush1.msra.mxu0 %v4410
        %4447 = vmatprep.subr.mxu0 0.0
        %4448 = vmatpush2.msra.mxu0 0.0
        %4449 = vmatprep.subr.mxu0 0.0
        %4450 = vmatpush2.msra.mxu0 0.0
        %4451 = vmatprep.subr.mxu0 0.0
        %4452 = vmatpush2.msra.mxu0 0.0
        %4453 = vmatprep.subr.mxu0 0.0
        %4454 = vmatpush2.msra.mxu0 0.0
        %4455 = vmatprep.subr.mxu0 0.0
        %4456 = vmatpush2.msra.mxu0 0.0
        %4457 = vmatprep.subr.mxu0 0.0
        %4458 = vmatpush2.msra.mxu0 0.0
        %4459 = vmatprep.subr.mxu0 0.0
        %4460 = vmatpush2.msra.mxu0 0.0
        %4461 = vmatprep.subr.mxu0 0.0
        %4462 = vmatpush2.msra.mxu0 0.0
        %4463 = vmatprep.subr.mxu0 0.0
        %4464 = vmatpush2.msra.mxu0 0.0
        %4465 = vmatprep.subr.mxu0 0.0
        %4466 = vmatpush2.msra.mxu0 0.0
        %4467 = vmatprep.subr.mxu0 0.0
        %4468 = vmatpush2.msra.mxu0 0.0
        %4469 = vmatprep.subr.mxu0 0.0
        %4470 = vmatpush2.msra.mxu0 0.0
        %4471 = vmatprep.subr.mxu0 0.0
        %4472 = vmatpush2.msra.mxu0 0.0
        %4473 = vmatprep.subr.mxu0 0.0
        %4474 = vmatpush2.msra.mxu0 0.0
        %4475 = vmatprep.subr.mxu0 0.0
        %4476 = vmatpush2.msra.mxu0 0.0
        %4477 = vmatprep.subr.mxu0 0.0
        %4478 = vmatpush2.msra.mxu0 0.0
        %4479 = vmatprep.mubr.f32.mxu0 0.0
        %4480 = vmatmul.mubr.f32.gmra.mxu0 %v4413
        %v4481 = vpop.f32.mrf.mxu0
        %v4482 = vadd.f32 0.0, %v4481
        %v4483 = vpop.f32.mrf.mxu0
        %4484 = vdwg.mxu0
        %v4485 = vmax.f32 %v4482, 0.0
        %v4486 = vld [vmem:[%s6] sm:$0xf]
        %v4488 = vsel %vm724, %v4409, 0
        %4490 = vmatprep.subr.mxu0 0.0
        %4491 = vmatpush1.msra.mxu0 0.0
        %4492 = vmatprep.subr.mxu0 0.0
        %4493 = vmatpush1.msra.mxu0 0.0
        %4494 = vmatprep.subr.mxu0 0.0
        %4495 = vmatpush1.msra.mxu0 0.0
        %4496 = vmatprep.subr.mxu0 0.0
        %4497 = vmatpush1.msra.mxu0 0.0
        %4498 = vmatprep.subr.mxu0 0.0
        %4499 = vmatpush1.msra.mxu0 0.0
        %4500 = vmatprep.subr.mxu0 0.0
        %4501 = vmatpush1.msra.mxu0 0.0
        %4502 = vmatprep.subr.mxu0 0.0
        %4503 = vmatpush1.msra.mxu0 0.0
        %4504 = vmatprep.subr.mxu0 0.0
        %4505 = vmatpush1.msra.mxu0 0.0
        %4506 = vmatprep.subr.mxu0 0.0
        %4507 = vmatpush1.msra.mxu0 0.0
        %4508 = vmatprep.subr.mxu0 0.0
        %4509 = vmatpush1.msra.mxu0 0.0
        %4510 = vmatprep.subr.mxu0 0.0
        %4511 = vmatpush1.msra.mxu0 0.0
        %4512 = vmatprep.subr.mxu0 0.0
        %4513 = vmatpush1.msra.mxu0 0.0
        %4514 = vmatprep.subr.mxu0 0.0
        %4515 = vmatpush1.msra.mxu0 0.0
        %4516 = vmatprep.subr.mxu0 0.0
        %4517 = vmatpush1.msra.mxu0 0.0
        %4518 = vmatprep.subr.mxu0 0.0
        %4519 = vmatpush1.msra.mxu0 %v4411
        %4520 = vmatprep.subr.mxu0 0.0
        %4521 = vmatpush1.msra.mxu0 %v4410
        %4522 = vmatprep.subr.mxu0 0.0
        %4523 = vmatpush2.msra.mxu0 0.0
        %4524 = vmatprep.subr.mxu0 0.0
        %4525 = vmatpush2.msra.mxu0 0.0
        %4526 = vmatprep.subr.mxu0 0.0
        %4527 = vmatpush2.msra.mxu0 0.0
        %4528 = vmatprep.subr.mxu0 0.0
        %4529 = vmatpush2.msra.mxu0 0.0
        %4530 = vmatprep.subr.mxu0 0.0
        %4531 = vmatpush2.msra.mxu0 0.0
        %4532 = vmatprep.subr.mxu0 0.0
        %4533 = vmatpush2.msra.mxu0 0.0
        %4534 = vmatprep.subr.mxu0 0.0
        %4535 = vmatpush2.msra.mxu0 0.0
        %4536 = vmatprep.subr.mxu0 0.0
        %4537 = vmatpush2.msra.mxu0 0.0
        %4538 = vmatprep.subr.mxu0 0.0
        %4539 = vmatpush2.msra.mxu0 0.0
        %4540 = vmatprep.subr.mxu0 0.0
        %4541 = vmatpush2.msra.mxu0 0.0
        %4542 = vmatprep.subr.mxu0 0.0
        %4543 = vmatpush2.msra.mxu0 0.0
        %4544 = vmatprep.subr.mxu0 0.0
        %4545 = vmatpush2.msra.mxu0 0.0
        %4546 = vmatprep.subr.mxu0 0.0
        %4547 = vmatpush2.msra.mxu0 0.0
        %4548 = vmatprep.subr.mxu0 0.0
        %4549 = vmatpush2.msra.mxu0 0.0
        %4550 = vmatprep.subr.mxu0 0.0
        %4551 = vmatpush2.msra.mxu0 0.0
        %4552 = vmatprep.subr.mxu0 0.0
        %4553 = vmatpush2.msra.mxu0 0.0
        %4554 = vmatprep.mubr.f32.mxu0 0.0
        %4555 = vmatmul.mubr.f32.gmra.mxu0 %v4488
        %v4556 = vpop.f32.mrf.mxu0
        %v4557 = vadd.f32 0.0, %v4556
        %v4558 = vpop.f32.mrf.mxu0
        %4559 = vdwg.mxu0
        %v4560 = vmax.f32 %v4557, 0.0
        %v4562 = vsel %vm398, %v4560, 0
        %v4565 = vsel %vm495, %v4486, 0
        %4567 = vmatprep.subr.mxu0 0.0
        %4568 = vmatpush1.msra.mxu0 0.0
        %4569 = vmatprep.subr.mxu0 0.0
        %4570 = vmatpush1.msra.mxu0 0.0
        %4571 = vmatprep.subr.mxu0 0.0
        %4572 = vmatpush1.msra.mxu0 0.0
        %4573 = vmatprep.subr.mxu0 0.0
        %4574 = vmatpush1.msra.mxu0 0.0
        %4575 = vmatprep.subr.mxu0 0.0
        %4576 = vmatpush1.msra.mxu0 0.0
        %4577 = vmatprep.subr.mxu0 0.0
        %4578 = vmatpush1.msra.mxu0 0.0
        %4579 = vmatprep.subr.mxu0 0.0
        %4580 = vmatpush1.msra.mxu0 0.0
        %4581 = vmatprep.subr.mxu0 0.0
        %4582 = vmatpush1.msra.mxu0 0.0
        %4583 = vmatprep.subr.mxu0 0.0
        %4584 = vmatpush1.msra.mxu0 0.0
        %4585 = vmatprep.subr.mxu0 0.0
        %4586 = vmatpush1.msra.mxu0 0.0
        %4587 = vmatprep.subr.mxu0 0.0
        %4588 = vmatpush1.msra.mxu0 0.0
        %4589 = vmatprep.subr.mxu0 0.0
        %4590 = vmatpush1.msra.mxu0 0.0
        %4591 = vmatprep.subr.mxu0 0.0
        %4592 = vmatpush1.msra.mxu0 0.0
        %4593 = vmatprep.subr.mxu0 0.0
        %4594 = vmatpush1.msra.mxu0 0.0
        %4595 = vmatprep.subr.mxu0 0.0
        %4596 = vmatpush1.msra.mxu0 0.0
        %4597 = vmatprep.subr.mxu0 0.0
        %4598 = vmatpush1.msra.mxu0 %v4565
        %4599 = vmatprep.subr.mxu0 0.0
        %4600 = vmatpush2.msra.mxu0 0.0
        %4601 = vmatprep.subr.mxu0 0.0
        %4602 = vmatpush2.msra.mxu0 0.0
        %4603 = vmatprep.subr.mxu0 0.0
        %4604 = vmatpush2.msra.mxu0 0.0
        %4605 = vmatprep.subr.mxu0 0.0
        %4606 = vmatpush2.msra.mxu0 0.0
        %4607 = vmatprep.subr.mxu0 0.0
        %4608 = vmatpush2.msra.mxu0 0.0
        %4609 = vmatprep.subr.mxu0 0.0
        %4610 = vmatpush2.msra.mxu0 0.0
        %4611 = vmatprep.subr.mxu0 0.0
        %4612 = vmatpush2.msra.mxu0 0.0
        %4613 = vmatprep.subr.mxu0 0.0
        %4614 = vmatpush2.msra.mxu0 0.0
        %4615 = vmatprep.subr.mxu0 0.0
        %4616 = vmatpush2.msra.mxu0 0.0
        %4617 = vmatprep.subr.mxu0 0.0
        %4618 = vmatpush2.msra.mxu0 0.0
        %4619 = vmatprep.subr.mxu0 0.0
        %4620 = vmatpush2.msra.mxu0 0.0
        %4621 = vmatprep.subr.mxu0 0.0
        %4622 = vmatpush2.msra.mxu0 0.0
        %4623 = vmatprep.subr.mxu0 0.0
        %4624 = vmatpush2.msra.mxu0 0.0
        %4625 = vmatprep.subr.mxu0 0.0
        %4626 = vmatpush2.msra.mxu0 0.0
        %4627 = vmatprep.subr.mxu0 0.0
        %4628 = vmatpush2.msra.mxu0 0.0
        %4629 = vmatprep.subr.mxu0 0.0
        %4630 = vmatpush2.msra.mxu0 0.0
        %4631 = vmatprep.mubr.f32.mxu0 0.0
        %4632 = vmatmul.mubr.f32.gmra.mxu0 %v4562
        %v4633 = vpop.f32.mrf.mxu0
        %v4634 = vadd.f32 0.0, %v4633
        %v4635 = vpop.f32.mrf.mxu0
        %4636 = vdwg.mxu0
        %v4638 = vsel %vm398, %v4485, 0
        %4640 = vmatprep.subr.mxu0 0.0
        %4641 = vmatpush1.msra.mxu0 0.0
        %4642 = vmatprep.subr.mxu0 0.0
        %4643 = vmatpush1.msra.mxu0 0.0
        %4644 = vmatprep.subr.mxu0 0.0
        %4645 = vmatpush1.msra.mxu0 0.0
        %4646 = vmatprep.subr.mxu0 0.0
        %4647 = vmatpush1.msra.mxu0 0.0
        %4648 = vmatprep.subr.mxu0 0.0
        %4649 = vmatpush1.msra.mxu0 0.0
        %4650 = vmatprep.subr.mxu0 0.0
        %4651 = vmatpush1.msra.mxu0 0.0
        %4652 = vmatprep.subr.mxu0 0.0
        %4653 = vmatpush1.msra.mxu0 0.0
        %4654 = vmatprep.subr.mxu0 0.0
        %4655 = vmatpush1.msra.mxu0 0.0
        %4656 = vmatprep.subr.mxu0 0.0
        %4657 = vmatpush1.msra.mxu0 0.0
        %4658 = vmatprep.subr.mxu0 0.0
        %4659 = vmatpush1.msra.mxu0 0.0
        %4660 = vmatprep.subr.mxu0 0.0
        %4661 = vmatpush1.msra.mxu0 0.0
        %4662 = vmatprep.subr.mxu0 0.0
        %4663 = vmatpush1.msra.mxu0 0.0
        %4664 = vmatprep.subr.mxu0 0.0
        %4665 = vmatpush1.msra.mxu0 0.0
        %4666 = vmatprep.subr.mxu0 0.0
        %4667 = vmatpush1.msra.mxu0 0.0
        %4668 = vmatprep.subr.mxu0 0.0
        %4669 = vmatpush1.msra.mxu0 0.0
        %4670 = vmatprep.subr.mxu0 0.0
        %4671 = vmatpush1.msra.mxu0 %v4565
        %4672 = vmatprep.subr.mxu0 0.0
        %4673 = vmatpush2.msra.mxu0 0.0
        %4674 = vmatprep.subr.mxu0 0.0
        %4675 = vmatpush2.msra.mxu0 0.0
        %4676 = vmatprep.subr.mxu0 0.0
        %4677 = vmatpush2.msra.mxu0 0.0
        %4678 = vmatprep.subr.mxu0 0.0
        %4679 = vmatpush2.msra.mxu0 0.0
        %4680 = vmatprep.subr.mxu0 0.0
        %4681 = vmatpush2.msra.mxu0 0.0
        %4682 = vmatprep.subr.mxu0 0.0
        %4683 = vmatpush2.msra.mxu0 0.0
        %4684 = vmatprep.subr.mxu0 0.0
        %4685 = vmatpush2.msra.mxu0 0.0
        %4686 = vmatprep.subr.mxu0 0.0
        %4687 = vmatpush2.msra.mxu0 0.0
        %4688 = vmatprep.subr.mxu0 0.0
        %4689 = vmatpush2.msra.mxu0 0.0
        %4690 = vmatprep.subr.mxu0 0.0
        %4691 = vmatpush2.msra.mxu0 0.0
        %4692 = vmatprep.subr.mxu0 0.0
        %4693 = vmatpush2.msra.mxu0 0.0
        %4694 = vmatprep.subr.mxu0 0.0
        %4695 = vmatpush2.msra.mxu0 0.0
        %4696 = vmatprep.subr.mxu0 0.0
        %4697 = vmatpush2.msra.mxu0 0.0
        %4698 = vmatprep.subr.mxu0 0.0
        %4699 = vmatpush2.msra.mxu0 0.0
        %4700 = vmatprep.subr.mxu0 0.0
        %4701 = vmatpush2.msra.mxu0 0.0
        %4702 = vmatprep.subr.mxu0 0.0
        %4703 = vmatpush2.msra.mxu0 0.0
        %4704 = vmatprep.mubr.f32.mxu0 0.0
        %4705 = vmatmul.mubr.f32.gmra.mxu0 %v4638
        %v4706 = vpop.f32.mrf.mxu0
        %v4707 = vadd.f32 %v4634, %v4706
        %v4708 = vpop.f32.mrf.mxu0
        %4709 = vdwg.mxu0
        %v4710 = vxor.u32 %v4707, 2147483648
        %v4711 = vmul.f32 %v4710, 1.442695
        %v4712 = vpow.pop %v4711
        %v4713 = vadd.f32 %v4712, 1.0
        %v4714 = vrcp.pop %v4713
        %v4715 = vmul.f32 1.0, %v4714
        %v4716 = vlaneseq
        %v4717 = vshrl.u32 %v4716, 7
        %v4718 = vsub.s32 0, %v4717
        %v4719 = vrot.slane %v4715, %v4718
        %v4720 = vmul.f32 %v4238, %v4719
        %v4721 = vmul.f32 %v4239, %v4719
        %v4722 = vmul.f32 %v4240, %v4719
        %v4723 = vmul.f32 %v4241, %v4719
        %v4724 = vmul.f32 %v4242, %v4719
        %v4725 = vmul.f32 %v4243, %v4719
        %v4726 = vmul.f32 %v4244, %v4719
        %v4727 = vmul.f32 %v4245, %v4719
        %v4728 = vmul.f32 %v4246, %v4719
        %v4729 = vmul.f32 %v4247, %v4719
        %v4730 = vmul.f32 %v4248, %v4719
        %v4731 = vmul.f32 %v4249, %v4719
        %v4732 = vmul.f32 %v4250, %v4719
        %v4733 = vmul.f32 %v4251, %v4719
        %v4734 = vmul.f32 %v4252, %v4719
        %v4735 = vmul.f32 %v4253, %v4719
        %v4736 = vmul.f32 %v4254, %v4719
        %v4737 = vmul.f32 %v4255, %v4719
        %v4738 = vmul.f32 %v4256, %v4719
        %v4739 = vmul.f32 %v4257, %v4719
        %v4740 = vmul.f32 %v4258, %v4719
        %v4741 = vmul.f32 %v4259, %v4719
        %v4742 = vmul.f32 %v4260, %v4719
        %v4743 = vmul.f32 %v4261, %v4719
        %v4744 = vmul.f32 %v4262, %v4719
        %v4745 = vmul.f32 %v4263, %v4719
        %v4746 = vmul.f32 %v4264, %v4719
        %v4747 = vmul.f32 %v4265, %v4719
        %v4748 = vmul.f32 %v4266, %v4719
        %v4749 = vmul.f32 %v4267, %v4719
        %v4750 = vmul.f32 %v4268, %v4719
        %v4751 = vmul.f32 %v4269, %v4719
        %v4752 = vsel %vm724, %v4720, 0.0
        %4753 = vadd.xlane.f32.xlu0 %v4752
        %v4754 = vpop.xlane.xlu0 %4753
        %v4755 = vsel %vm724, %v4721, 0.0
        %4756 = vadd.xlane.f32.xlu0 %v4755
        %v4757 = vpop.xlane.xlu0 %4756
        %v4758 = vsel %vm724, %v4722, 0.0
        %4759 = vadd.xlane.f32.xlu0 %v4758
        %v4760 = vpop.xlane.xlu0 %4759
        %v4761 = vsel %vm724, %v4723, 0.0
        %4762 = vadd.xlane.f32.xlu0 %v4761
        %v4763 = vpop.xlane.xlu0 %4762
        %v4764 = vsel %vm724, %v4724, 0.0
        %4765 = vadd.xlane.f32.xlu0 %v4764
        %v4766 = vpop.xlane.xlu0 %4765
        %v4767 = vsel %vm724, %v4725, 0.0
        %4768 = vadd.xlane.f32.xlu0 %v4767
        %v4769 = vpop.xlane.xlu0 %4768
        %v4770 = vsel %vm724, %v4726, 0.0
        %4771 = vadd.xlane.f32.xlu0 %v4770
        %v4772 = vpop.xlane.xlu0 %4771
        %v4773 = vsel %vm724, %v4727, 0.0
        %4774 = vadd.xlane.f32.xlu0 %v4773
        %v4775 = vpop.xlane.xlu0 %4774
        %v4776 = vsel %vm724, %v4728, 0.0
        %4777 = vadd.xlane.f32.xlu0 %v4776
        %v4778 = vpop.xlane.xlu0 %4777
        %v4779 = vsel %vm724, %v4729, 0.0
        %4780 = vadd.xlane.f32.xlu0 %v4779
        %v4781 = vpop.xlane.xlu0 %4780
        %v4782 = vsel %vm724, %v4730, 0.0
        %4783 = vadd.xlane.f32.xlu0 %v4782
        %v4784 = vpop.xlane.xlu0 %4783
        %v4785 = vsel %vm724, %v4731, 0.0
        %4786 = vadd.xlane.f32.xlu0 %v4785
        %v4787 = vpop.xlane.xlu0 %4786
        %v4788 = vsel %vm724, %v4732, 0.0
        %4789 = vadd.xlane.f32.xlu0 %v4788
        %v4790 = vpop.xlane.xlu0 %4789
        %v4791 = vsel %vm724, %v4733, 0.0
        %4792 = vadd.xlane.f32.xlu0 %v4791
        %v4793 = vpop.xlane.xlu0 %4792
        %v4794 = vsel %vm724, %v4734, 0.0
        %4795 = vadd.xlane.f32.xlu0 %v4794
        %v4796 = vpop.xlane.xlu0 %4795
        %v4797 = vsel %vm724, %v4735, 0.0
        %4798 = vadd.xlane.f32.xlu0 %v4797
        %v4799 = vpop.xlane.xlu0 %4798
        %v4800 = vsel %vm724, %v4736, 0.0
        %4801 = vadd.xlane.f32.xlu0 %v4800
        %v4802 = vpop.xlane.xlu0 %4801
        %v4803 = vsel %vm724, %v4737, 0.0
        %4804 = vadd.xlane.f32.xlu0 %v4803
        %v4805 = vpop.xlane.xlu0 %4804
        %v4806 = vsel %vm724, %v4738, 0.0
        %4807 = vadd.xlane.f32.xlu0 %v4806
        %v4808 = vpop.xlane.xlu0 %4807
        %v4809 = vsel %vm724, %v4739, 0.0
        %4810 = vadd.xlane.f32.xlu0 %v4809
        %v4811 = vpop.xlane.xlu0 %4810
        %v4812 = vsel %vm724, %v4740, 0.0
        %4813 = vadd.xlane.f32.xlu0 %v4812
        %v4814 = vpop.xlane.xlu0 %4813
        %v4815 = vsel %vm724, %v4741, 0.0
        %4816 = vadd.xlane.f32.xlu0 %v4815
        %v4817 = vpop.xlane.xlu0 %4816
        %v4818 = vsel %vm724, %v4742, 0.0
        %4819 = vadd.xlane.f32.xlu0 %v4818
        %v4820 = vpop.xlane.xlu0 %4819
        %v4821 = vsel %vm724, %v4743, 0.0
        %4822 = vadd.xlane.f32.xlu0 %v4821
        %v4823 = vpop.xlane.xlu0 %4822
        %v4824 = vsel %vm724, %v4744, 0.0
        %4825 = vadd.xlane.f32.xlu0 %v4824
        %v4826 = vpop.xlane.xlu0 %4825
        %v4827 = vsel %vm724, %v4745, 0.0
        %4828 = vadd.xlane.f32.xlu0 %v4827
        %v4829 = vpop.xlane.xlu0 %4828
        %v4830 = vsel %vm724, %v4746, 0.0
        %4831 = vadd.xlane.f32.xlu0 %v4830
        %v4832 = vpop.xlane.xlu0 %4831
        %v4833 = vsel %vm724, %v4747, 0.0
        %4834 = vadd.xlane.f32.xlu0 %v4833
        %v4835 = vpop.xlane.xlu0 %4834
        %v4836 = vsel %vm724, %v4748, 0.0
        %4837 = vadd.xlane.f32.xlu0 %v4836
        %v4838 = vpop.xlane.xlu0 %4837
        %v4839 = vsel %vm724, %v4749, 0.0
        %4840 = vadd.xlane.f32.xlu0 %v4839
        %v4841 = vpop.xlane.xlu0 %4840
        %v4842 = vsel %vm724, %v4750, 0.0
        %4843 = vadd.xlane.f32.xlu0 %v4842
        %v4844 = vpop.xlane.xlu0 %4843
        %v4845 = vsel %vm724, %v4751, 0.0
        %4846 = vadd.xlane.f32.xlu0 %v4845
        %v4847 = vpop.xlane.xlu0 %4846
        %v4848 = vrcp.pop 16.0
        %v4849 = vmul.f32 %v4754, %v4848
        %v4850 = vmul.f32 %v4757, %v4848
        %v4851 = vmul.f32 %v4760, %v4848
        %v4852 = vmul.f32 %v4763, %v4848
        %v4853 = vmul.f32 %v4766, %v4848
        %v4854 = vmul.f32 %v4769, %v4848
        %v4855 = vmul.f32 %v4772, %v4848
        %v4856 = vmul.f32 %v4775, %v4848
        %v4857 = vmul.f32 %v4778, %v4848
        %v4858 = vmul.f32 %v4781, %v4848
        %v4859 = vmul.f32 %v4784, %v4848
        %v4860 = vmul.f32 %v4787, %v4848
        %v4861 = vmul.f32 %v4790, %v4848
        %v4862 = vmul.f32 %v4793, %v4848
        %v4863 = vmul.f32 %v4796, %v4848
        %v4864 = vmul.f32 %v4799, %v4848
        %v4865 = vmul.f32 %v4802, %v4848
        %v4866 = vmul.f32 %v4805, %v4848
        %v4867 = vmul.f32 %v4808, %v4848
        %v4868 = vmul.f32 %v4811, %v4848
        %v4869 = vmul.f32 %v4814, %v4848
        %v4870 = vmul.f32 %v4817, %v4848
        %v4871 = vmul.f32 %v4820, %v4848
        %v4872 = vmul.f32 %v4823, %v4848
        %v4873 = vmul.f32 %v4826, %v4848
        %v4874 = vmul.f32 %v4829, %v4848
        %v4875 = vmul.f32 %v4832, %v4848
        %v4876 = vmul.f32 %v4835, %v4848
        %v4877 = vmul.f32 %v4838, %v4848
        %v4878 = vmul.f32 %v4841, %v4848
        %v4879 = vmul.f32 %v4844, %v4848
        %v4880 = vmul.f32 %v4847, %v4848
        %v4881 = vsel %vm724, %v4720, -inf
        %4882 = vmax.xlane.f32.xlu0 %v4881
        %v4883 = vpop.xlane.xlu0 %4882
        %v4884 = vsel %vm724, %v4721, -inf
        %4885 = vmax.xlane.f32.xlu0 %v4884
        %v4886 = vpop.xlane.xlu0 %4885
        %v4887 = vsel %vm724, %v4722, -inf
        %4888 = vmax.xlane.f32.xlu0 %v4887
        %v4889 = vpop.xlane.xlu0 %4888
        %v4890 = vsel %vm724, %v4723, -inf
        %4891 = vmax.xlane.f32.xlu0 %v4890
        %v4892 = vpop.xlane.xlu0 %4891
        %v4893 = vsel %vm724, %v4724, -inf
        %4894 = vmax.xlane.f32.xlu0 %v4893
        %v4895 = vpop.xlane.xlu0 %4894
        %v4896 = vsel %vm724, %v4725, -inf
        %4897 = vmax.xlane.f32.xlu0 %v4896
        %v4898 = vpop.xlane.xlu0 %4897
        %v4899 = vsel %vm724, %v4726, -inf
        %4900 = vmax.xlane.f32.xlu0 %v4899
        %v4901 = vpop.xlane.xlu0 %4900
        %v4902 = vsel %vm724, %v4727, -inf
        %4903 = vmax.xlane.f32.xlu0 %v4902
        %v4904 = vpop.xlane.xlu0 %4903
        %v4905 = vsel %vm724, %v4728, -inf
        %4906 = vmax.xlane.f32.xlu0 %v4905
        %v4907 = vpop.xlane.xlu0 %4906
        %v4908 = vsel %vm724, %v4729, -inf
        %4909 = vmax.xlane.f32.xlu0 %v4908
        %v4910 = vpop.xlane.xlu0 %4909
        %v4911 = vsel %vm724, %v4730, -inf
        %4912 = vmax.xlane.f32.xlu0 %v4911
        %v4913 = vpop.xlane.xlu0 %4912
        %v4914 = vsel %vm724, %v4731, -inf
        %4915 = vmax.xlane.f32.xlu0 %v4914
        %v4916 = vpop.xlane.xlu0 %4915
        %v4917 = vsel %vm724, %v4732, -inf
        %4918 = vmax.xlane.f32.xlu0 %v4917
        %v4919 = vpop.xlane.xlu0 %4918
        %v4920 = vsel %vm724, %v4733, -inf
        %4921 = vmax.xlane.f32.xlu0 %v4920
        %v4922 = vpop.xlane.xlu0 %4921
        %v4923 = vsel %vm724, %v4734, -inf
        %4924 = vmax.xlane.f32.xlu0 %v4923
        %v4925 = vpop.xlane.xlu0 %4924
        %v4926 = vsel %vm724, %v4735, -inf
        %4927 = vmax.xlane.f32.xlu0 %v4926
        %v4928 = vpop.xlane.xlu0 %4927
        %v4929 = vsel %vm724, %v4736, -inf
        %4930 = vmax.xlane.f32.xlu0 %v4929
        %v4931 = vpop.xlane.xlu0 %4930
        %v4932 = vsel %vm724, %v4737, -inf
        %4933 = vmax.xlane.f32.xlu0 %v4932
        %v4934 = vpop.xlane.xlu0 %4933
        %v4935 = vsel %vm724, %v4738, -inf
        %4936 = vmax.xlane.f32.xlu0 %v4935
        %v4937 = vpop.xlane.xlu0 %4936
        %v4938 = vsel %vm724, %v4739, -inf
        %4939 = vmax.xlane.f32.xlu0 %v4938
        %v4940 = vpop.xlane.xlu0 %4939
        %v4941 = vsel %vm724, %v4740, -inf
        %4942 = vmax.xlane.f32.xlu0 %v4941
        %v4943 = vpop.xlane.xlu0 %4942
        %v4944 = vsel %vm724, %v4741, -inf
        %4945 = vmax.xlane.f32.xlu0 %v4944
        %v4946 = vpop.xlane.xlu0 %4945
        %v4947 = vsel %vm724, %v4742, -inf
        %4948 = vmax.xlane.f32.xlu0 %v4947
        %v4949 = vpop.xlane.xlu0 %4948
        %v4950 = vsel %vm724, %v4743, -inf
        %4951 = vmax.xlane.f32.xlu0 %v4950
        %v4952 = vpop.xlane.xlu0 %4951
        %v4953 = vsel %vm724, %v4744, -inf
        %4954 = vmax.xlane.f32.xlu0 %v4953
        %v4955 = vpop.xlane.xlu0 %4954
        %v4956 = vsel %vm724, %v4745, -inf
        %4957 = vmax.xlane.f32.xlu0 %v4956
        %v4958 = vpop.xlane.xlu0 %4957
        %v4959 = vsel %vm724, %v4746, -inf
        %4960 = vmax.xlane.f32.xlu0 %v4959
        %v4961 = vpop.xlane.xlu0 %4960
        %v4962 = vsel %vm724, %v4747, -inf
        %4963 = vmax.xlane.f32.xlu0 %v4962
        %v4964 = vpop.xlane.xlu0 %4963
        %v4965 = vsel %vm724, %v4748, -inf
        %4966 = vmax.xlane.f32.xlu0 %v4965
        %v4967 = vpop.xlane.xlu0 %4966
        %v4968 = vsel %vm724, %v4749, -inf
        %4969 = vmax.xlane.f32.xlu0 %v4968
        %v4970 = vpop.xlane.xlu0 %4969
        %v4971 = vsel %vm724, %v4750, -inf
        %4972 = vmax.xlane.f32.xlu0 %v4971
        %v4973 = vpop.xlane.xlu0 %4972
        %v4974 = vsel %vm724, %v4751, -inf
        %4975 = vmax.xlane.f32.xlu0 %v4974
        %v4976 = vpop.xlane.xlu0 %4975
        %vm4977 = vcmask 174080
        %4978 = vst.msk [vmem:[#allocation3] sm:$0x7] %vm4977, 0.0
        %4979 = vst.msk [vmem:[#allocation3 + $0x13] sm:$0x7] %vm4977, 0.0
        %vm4980 = vcmask 23552
        %4981 = vst.msk [vmem:[#allocation3] sm:$0xff] %vm4980, 0.0
        %4982 = vst.msk [vmem:[#allocation3 + $0x8] sm:$0xff] %vm4980, 0.0
        %vm4983 = vcmask 21504
        %4984 = vst.msk [vmem:[#allocation3 + $0x10] sm:$0x3f] %vm4983, 0.0
        %vm4985 = vcmask 179352
        %4986 = vst.msk [vmem:[#allocation3] sm:$0xff] %vm4985, 0.0
        %4987 = vst.msk [vmem:[#allocation3 + $0x8] sm:$0xff] %vm4985, 0.0
        %vm4988 = vcmask 177304
        %4989 = vst.msk [vmem:[#allocation3 + $0x10] sm:$0x3f] %vm4988, 0.0
        %v5022 = vlaneseq
        %v5023 = vand.u32 %v5022, 127
        %v5024 = vadd.s32 %v5023, 4294967293
        %v5025 = vlaneseq
        %v5026 = vshrl.u32 %v5025, 7
        %v5027 = vsub.s32 %v5024, %v5026
        %v5028 = vrot.slane %v4849, %v5027
        %v5029 = vadd.s32 %v5023, 4294967285
        %v5030 = vlaneseq
        %v5031 = vshrl.u32 %v5030, 7
        %v5032 = vsub.s32 %v5029, %v5031
        %v5033 = vrot.slane %v4850, %v5032
        %vm5034 = vcmask 154712
        %v5035 = vsel %vm5034, %v5033, %v5028
        %v5036 = vlaneseq
        %v5037 = vshrl.u32 %v5036, 7
        %v5038 = vsub.s32 %v5024, %v5037
        %v5039 = vrot.slane %v4851, %v5038
        %v5040 = vlaneseq
        %v5041 = vshrl.u32 %v5040, 7
        %v5042 = vsub.s32 %v5029, %v5041
        %v5043 = vrot.slane %v4852, %v5042
        %v5044 = vsel %vm5034, %v5043, %v5039
        %v5045 = vlaneseq
        %v5046 = vshrl.u32 %v5045, 7
        %v5047 = vsub.s32 %v5024, %v5046
        %v5048 = vrot.slane %v4853, %v5047
        %v5049 = vlaneseq
        %v5050 = vshrl.u32 %v5049, 7
        %v5051 = vsub.s32 %v5029, %v5050
        %v5052 = vrot.slane %v4854, %v5051
        %v5053 = vsel %vm5034, %v5052, %v5048
        %v5054 = vlaneseq
        %v5055 = vshrl.u32 %v5054, 7
        %v5056 = vsub.s32 %v5024, %v5055
        %v5057 = vrot.slane %v4855, %v5056
        %v5058 = vlaneseq
        %v5059 = vshrl.u32 %v5058, 7
        %v5060 = vsub.s32 %v5029, %v5059
        %v5061 = vrot.slane %v4856, %v5060
        %v5062 = vsel %vm5034, %v5061, %v5057
        %v5063 = vlaneseq
        %v5064 = vshrl.u32 %v5063, 7
        %v5065 = vsub.s32 %v5024, %v5064
        %v5066 = vrot.slane %v4857, %v5065
        %v5067 = vlaneseq
        %v5068 = vshrl.u32 %v5067, 7
        %v5069 = vsub.s32 %v5029, %v5068
        %v5070 = vrot.slane %v4858, %v5069
        %v5071 = vsel %vm5034, %v5070, %v5066
        %v5072 = vlaneseq
        %v5073 = vshrl.u32 %v5072, 7
        %v5074 = vsub.s32 %v5024, %v5073
        %v5075 = vrot.slane %v4859, %v5074
        %v5076 = vlaneseq
        %v5077 = vshrl.u32 %v5076, 7
        %v5078 = vsub.s32 %v5029, %v5077
        %v5079 = vrot.slane %v4860, %v5078
        %v5080 = vsel %vm5034, %v5079, %v5075
        %v5081 = vlaneseq
        %v5082 = vshrl.u32 %v5081, 7
        %v5083 = vsub.s32 %v5024, %v5082
        %v5084 = vrot.slane %v4861, %v5083
        %v5085 = vlaneseq
        %v5086 = vshrl.u32 %v5085, 7
        %v5087 = vsub.s32 %v5029, %v5086
        %v5088 = vrot.slane %v4862, %v5087
        %v5089 = vsel %vm5034, %v5088, %v5084
        %v5090 = vlaneseq
        %v5091 = vshrl.u32 %v5090, 7
        %v5092 = vsub.s32 %v5024, %v5091
        %v5093 = vrot.slane %v4863, %v5092
        %v5094 = vlaneseq
        %v5095 = vshrl.u32 %v5094, 7
        %v5096 = vsub.s32 %v5029, %v5095
        %v5097 = vrot.slane %v4864, %v5096
        %v5098 = vsel %vm5034, %v5097, %v5093
        %v5099 = vlaneseq
        %v5100 = vshrl.u32 %v5099, 7
        %v5101 = vsub.s32 %v5024, %v5100
        %v5102 = vrot.slane %v4865, %v5101
        %v5103 = vlaneseq
        %v5104 = vshrl.u32 %v5103, 7
        %v5105 = vsub.s32 %v5029, %v5104
        %v5106 = vrot.slane %v4866, %v5105
        %v5107 = vsel %vm5034, %v5106, %v5102
        %v5108 = vlaneseq
        %v5109 = vshrl.u32 %v5108, 7
        %v5110 = vsub.s32 %v5024, %v5109
        %v5111 = vrot.slane %v4867, %v5110
        %v5112 = vlaneseq
        %v5113 = vshrl.u32 %v5112, 7
        %v5114 = vsub.s32 %v5029, %v5113
        %v5115 = vrot.slane %v4868, %v5114
        %v5116 = vsel %vm5034, %v5115, %v5111
        %v5117 = vlaneseq
        %v5118 = vshrl.u32 %v5117, 7
        %v5119 = vsub.s32 %v5024, %v5118
        %v5120 = vrot.slane %v4869, %v5119
        %v5121 = vlaneseq
        %v5122 = vshrl.u32 %v5121, 7
        %v5123 = vsub.s32 %v5029, %v5122
        %v5124 = vrot.slane %v4870, %v5123
        %v5125 = vsel %vm5034, %v5124, %v5120
        %v5126 = vlaneseq
        %v5127 = vshrl.u32 %v5126, 7
        %v5128 = vsub.s32 %v5024, %v5127
        %v5129 = vrot.slane %v4871, %v5128
        %v5130 = vlaneseq
        %v5131 = vshrl.u32 %v5130, 7
        %v5132 = vsub.s32 %v5029, %v5131
        %v5133 = vrot.slane %v4872, %v5132
        %v5134 = vsel %vm5034, %v5133, %v5129
        %v5135 = vlaneseq
        %v5136 = vshrl.u32 %v5135, 7
        %v5137 = vsub.s32 %v5024, %v5136
        %v5138 = vrot.slane %v4873, %v5137
        %v5139 = vlaneseq
        %v5140 = vshrl.u32 %v5139, 7
        %v5141 = vsub.s32 %v5029, %v5140
        %v5142 = vrot.slane %v4874, %v5141
        %v5143 = vsel %vm5034, %v5142, %v5138
        %v5144 = vlaneseq
        %v5145 = vshrl.u32 %v5144, 7
        %v5146 = vsub.s32 %v5024, %v5145
        %v5147 = vrot.slane %v4875, %v5146
        %v5148 = vlaneseq
        %v5149 = vshrl.u32 %v5148, 7
        %v5150 = vsub.s32 %v5029, %v5149
        %v5151 = vrot.slane %v4876, %v5150
        %v5152 = vsel %vm5034, %v5151, %v5147
        %v5153 = vlaneseq
        %v5154 = vshrl.u32 %v5153, 7
        %v5155 = vsub.s32 %v5024, %v5154
        %v5156 = vrot.slane %v4877, %v5155
        %v5157 = vlaneseq
        %v5158 = vshrl.u32 %v5157, 7
        %v5159 = vsub.s32 %v5029, %v5158
        %v5160 = vrot.slane %v4878, %v5159
        %v5161 = vsel %vm5034, %v5160, %v5156
        %v5162 = vlaneseq
        %v5163 = vshrl.u32 %v5162, 7
        %v5164 = vsub.s32 %v5024, %v5163
        %v5165 = vrot.slane %v4879, %v5164
        %v5166 = vlaneseq
        %v5167 = vshrl.u32 %v5166, 7
        %v5168 = vsub.s32 %v5029, %v5167
        %v5169 = vrot.slane %v4880, %v5168
        %v5170 = vsel %vm5034, %v5169, %v5165
        %vm5171 = vcmask 1041409
        %v5172 = vsel %vm5171, %v5044, %v5035
        %vm5173 = vcmask 1042434
        %v5174 = vsel %vm5173, %v5053, %v5172
        %vm5175 = vcmask 1043459
        %v5176 = vsel %vm5175, %v5062, %v5174
        %vm5177 = vcmask 1044484
        %v5178 = vsel %vm5177, %v5071, %v5176
        %vm5179 = vcmask 1045509
        %v5180 = vsel %vm5179, %v5080, %v5178
        %vm5181 = vcmask 1046534
        %v5182 = vsel %vm5181, %v5089, %v5180
        %vm5183 = vcmask 1047559
        %v5184 = vsel %vm5183, %v5098, %v5182
        %v5185 = vsel %vm5171, %v5116, %v5107
        %v5186 = vsel %vm5173, %v5125, %v5185
        %v5187 = vsel %vm5175, %v5134, %v5186
        %v5188 = vsel %vm5177, %v5143, %v5187
        %v5189 = vsel %vm5179, %v5152, %v5188
        %v5190 = vsel %vm5181, %v5161, %v5189
        %v5191 = vsel %vm5183, %v5170, %v5190
        %vm5194 = vcmask 154648
        %5195 = vst.msk [vmem:[#allocation3 + $0x3] sm:$0xff] %vm5194, %v5184
        %5196 = vst.msk [vmem:[#allocation3 + $0xb] sm:$0xff] %vm5194, %v5191
        %5197 = vst.msk [vmem:[#allocation4] sm:$0x7] %vm4977, 0.0
        %5198 = vst.msk [vmem:[#allocation4 + $0x13] sm:$0x7] %vm4977, 0.0
        %5199 = vst.msk [vmem:[#allocation4] sm:$0xff] %vm4980, 0.0
        %5200 = vst.msk [vmem:[#allocation4 + $0x8] sm:$0xff] %vm4980, 0.0
        %5201 = vst.msk [vmem:[#allocation4 + $0x10] sm:$0x3f] %vm4983, 0.0
        %5202 = vst.msk [vmem:[#allocation4] sm:$0xff] %vm4985, 0.0
        %5203 = vst.msk [vmem:[#allocation4 + $0x8] sm:$0xff] %vm4985, 0.0
        %5204 = vst.msk [vmem:[#allocation4 + $0x10] sm:$0x3f] %vm4988, 0.0
        %v5237 = vlaneseq
        %v5238 = vshrl.u32 %v5237, 7
        %v5239 = vsub.s32 %v5024, %v5238
        %v5240 = vrot.slane %v4883, %v5239
        %v5241 = vlaneseq
        %v5242 = vshrl.u32 %v5241, 7
        %v5243 = vsub.s32 %v5029, %v5242
        %v5244 = vrot.slane %v4886, %v5243
        %v5245 = vsel %vm5034, %v5244, %v5240
        %v5246 = vlaneseq
        %v5247 = vshrl.u32 %v5246, 7
        %v5248 = vsub.s32 %v5024, %v5247
        %v5249 = vrot.slane %v4889, %v5248
        %v5250 = vlaneseq
        %v5251 = vshrl.u32 %v5250, 7
        %v5252 = vsub.s32 %v5029, %v5251
        %v5253 = vrot.slane %v4892, %v5252
        %v5254 = vsel %vm5034, %v5253, %v5249
        %v5255 = vlaneseq
        %v5256 = vshrl.u32 %v5255, 7
        %v5257 = vsub.s32 %v5024, %v5256
        %v5258 = vrot.slane %v4895, %v5257
        %v5259 = vlaneseq
        %v5260 = vshrl.u32 %v5259, 7
        %v5261 = vsub.s32 %v5029, %v5260
        %v5262 = vrot.slane %v4898, %v5261
        %v5263 = vsel %vm5034, %v5262, %v5258
        %v5264 = vlaneseq
        %v5265 = vshrl.u32 %v5264, 7
        %v5266 = vsub.s32 %v5024, %v5265
        %v5267 = vrot.slane %v4901, %v5266
        %v5268 = vlaneseq
        %v5269 = vshrl.u32 %v5268, 7
        %v5270 = vsub.s32 %v5029, %v5269
        %v5271 = vrot.slane %v4904, %v5270
        %v5272 = vsel %vm5034, %v5271, %v5267
        %v5273 = vlaneseq
        %v5274 = vshrl.u32 %v5273, 7
        %v5275 = vsub.s32 %v5024, %v5274
        %v5276 = vrot.slane %v4907, %v5275
        %v5277 = vlaneseq
        %v5278 = vshrl.u32 %v5277, 7
        %v5279 = vsub.s32 %v5029, %v5278
        %v5280 = vrot.slane %v4910, %v5279
        %v5281 = vsel %vm5034, %v5280, %v5276
        %v5282 = vlaneseq
        %v5283 = vshrl.u32 %v5282, 7
        %v5284 = vsub.s32 %v5024, %v5283
        %v5285 = vrot.slane %v4913, %v5284
        %v5286 = vlaneseq
        %v5287 = vshrl.u32 %v5286, 7
        %v5288 = vsub.s32 %v5029, %v5287
        %v5289 = vrot.slane %v4916, %v5288
        %v5290 = vsel %vm5034, %v5289, %v5285
        %v5291 = vlaneseq
        %v5292 = vshrl.u32 %v5291, 7
        %v5293 = vsub.s32 %v5024, %v5292
        %v5294 = vrot.slane %v4919, %v5293
        %v5295 = vlaneseq
        %v5296 = vshrl.u32 %v5295, 7
        %v5297 = vsub.s32 %v5029, %v5296
        %v5298 = vrot.slane %v4922, %v5297
        %v5299 = vsel %vm5034, %v5298, %v5294
        %v5300 = vlaneseq
        %v5301 = vshrl.u32 %v5300, 7
        %v5302 = vsub.s32 %v5024, %v5301
        %v5303 = vrot.slane %v4925, %v5302
        %v5304 = vlaneseq
        %v5305 = vshrl.u32 %v5304, 7
        %v5306 = vsub.s32 %v5029, %v5305
        %v5307 = vrot.slane %v4928, %v5306
        %v5308 = vsel %vm5034, %v5307, %v5303
        %v5309 = vlaneseq
        %v5310 = vshrl.u32 %v5309, 7
        %v5311 = vsub.s32 %v5024, %v5310
        %v5312 = vrot.slane %v4931, %v5311
        %v5313 = vlaneseq
        %v5314 = vshrl.u32 %v5313, 7
        %v5315 = vsub.s32 %v5029, %v5314
        %v5316 = vrot.slane %v4934, %v5315
        %v5317 = vsel %vm5034, %v5316, %v5312
        %v5318 = vlaneseq
        %v5319 = vshrl.u32 %v5318, 7
        %v5320 = vsub.s32 %v5024, %v5319
        %v5321 = vrot.slane %v4937, %v5320
        %v5322 = vlaneseq
        %v5323 = vshrl.u32 %v5322, 7
        %v5324 = vsub.s32 %v5029, %v5323
        %v5325 = vrot.slane %v4940, %v5324
        %v5326 = vsel %vm5034, %v5325, %v5321
        %v5327 = vlaneseq
        %v5328 = vshrl.u32 %v5327, 7
        %v5329 = vsub.s32 %v5024, %v5328
        %v5330 = vrot.slane %v4943, %v5329
        %v5331 = vlaneseq
        %v5332 = vshrl.u32 %v5331, 7
        %v5333 = vsub.s32 %v5029, %v5332
        %v5334 = vrot.slane %v4946, %v5333
        %v5335 = vsel %vm5034, %v5334, %v5330
        %v5336 = vlaneseq
        %v5337 = vshrl.u32 %v5336, 7
        %v5338 = vsub.s32 %v5024, %v5337
        %v5339 = vrot.slane %v4949, %v5338
        %v5340 = vlaneseq
        %v5341 = vshrl.u32 %v5340, 7
        %v5342 = vsub.s32 %v5029, %v5341
        %v5343 = vrot.slane %v4952, %v5342
        %v5344 = vsel %vm5034, %v5343, %v5339
        %v5345 = vlaneseq
        %v5346 = vshrl.u32 %v5345, 7
        %v5347 = vsub.s32 %v5024, %v5346
        %v5348 = vrot.slane %v4955, %v5347
        %v5349 = vlaneseq
        %v5350 = vshrl.u32 %v5349, 7
        %v5351 = vsub.s32 %v5029, %v5350
        %v5352 = vrot.slane %v4958, %v5351
        %v5353 = vsel %vm5034, %v5352, %v5348
        %v5354 = vlaneseq
        %v5355 = vshrl.u32 %v5354, 7
        %v5356 = vsub.s32 %v5024, %v5355
        %v5357 = vrot.slane %v4961, %v5356
        %v5358 = vlaneseq
        %v5359 = vshrl.u32 %v5358, 7
        %v5360 = vsub.s32 %v5029, %v5359
        %v5361 = vrot.slane %v4964, %v5360
        %v5362 = vsel %vm5034, %v5361, %v5357
        %v5363 = vlaneseq
        %v5364 = vshrl.u32 %v5363, 7
        %v5365 = vsub.s32 %v5024, %v5364
        %v5366 = vrot.slane %v4967, %v5365
        %v5367 = vlaneseq
        %v5368 = vshrl.u32 %v5367, 7
        %v5369 = vsub.s32 %v5029, %v5368
        %v5370 = vrot.slane %v4970, %v5369
        %v5371 = vsel %vm5034, %v5370, %v5366
        %v5372 = vlaneseq
        %v5373 = vshrl.u32 %v5372, 7
        %v5374 = vsub.s32 %v5024, %v5373
        %v5375 = vrot.slane %v4973, %v5374
        %v5376 = vlaneseq
        %v5377 = vshrl.u32 %v5376, 7
        %v5378 = vsub.s32 %v5029, %v5377
        %v5379 = vrot.slane %v4976, %v5378
        %v5380 = vsel %vm5034, %v5379, %v5375
        %v5381 = vsel %vm5171, %v5254, %v5245
        %v5382 = vsel %vm5173, %v5263, %v5381
        %v5383 = vsel %vm5175, %v5272, %v5382
        %v5384 = vsel %vm5177, %v5281, %v5383
        %v5385 = vsel %vm5179, %v5290, %v5384
        %v5386 = vsel %vm5181, %v5299, %v5385
        %v5387 = vsel %vm5183, %v5308, %v5386
        %v5388 = vsel %vm5171, %v5326, %v5317
        %v5389 = vsel %vm5173, %v5335, %v5388
        %v5390 = vsel %vm5175, %v5344, %v5389
        %v5391 = vsel %vm5177, %v5353, %v5390
        %v5392 = vsel %vm5179, %v5362, %v5391
        %v5393 = vsel %vm5181, %v5371, %v5392
        %v5394 = vsel %vm5183, %v5380, %v5393
        %5397 = vst.msk [vmem:[#allocation4 + $0x3] sm:$0xff] %vm5194, %v5387
        %5398 = vst.msk [vmem:[#allocation4 + $0xb] sm:$0xff] %vm5194, %v5394
        %v5399 = vld [vmem:[#allocation3] sm:$0xff]
        %v5400 = vld [vmem:[#allocation3 + $0x8] sm:$0xff]
        %v5401 = vld [vmem:[%s7] sm:$0xff]
        %v5402 = vld [vmem:[%s7 + $0x8] sm:$0xff]
        %v5403 = vld [vmem:[%s7 + $0x10] sm:$0x3f]
        %v5404 = vld [vmem:[#allocation4] sm:$0xff]
        %v5405 = vld [vmem:[#allocation4 + $0x8] sm:$0xff]
        %s5406 = scalar_lea.vmem %s7, 24
        %v5407 = vld [vmem:[%s5406] sm:$0xff]
        %v5408 = vld [vmem:[%s5406 + $0x8] sm:$0xff]
        %v5409 = vld [vmem:[%s5406 + $0x10] sm:$0x3f]
        %vm5410 = vcmask 179200
        %v5412 = vsel %vm5410, %v5404, 0
        %v5415 = vsel %vm5410, %v5405, 0
        %vm5417 = vcmask 1045504
        %v5419 = vsel %vm5417, %v5409, 0
        %5421 = vmatprep.subr.mxu0 0.0
        %5422 = vmatpush1.msra.mxu0 0.0
        %5423 = vmatprep.subr.mxu0 0.0
        %5424 = vmatpush1.msra.mxu0 0.0
        %5425 = vmatprep.subr.mxu0 0.0
        %5426 = vmatpush1.msra.mxu0 0.0
        %5427 = vmatprep.subr.mxu0 0.0
        %5428 = vmatpush1.msra.mxu0 0.0
        %5429 = vmatprep.subr.mxu0 0.0
        %5430 = vmatpush1.msra.mxu0 0.0
        %5431 = vmatprep.subr.mxu0 0.0
        %5432 = vmatpush1.msra.mxu0 0.0
        %5433 = vmatprep.subr.mxu0 0.0
        %5434 = vmatpush1.msra.mxu0 0.0
        %5435 = vmatprep.subr.mxu0 0.0
        %5436 = vmatpush1.msra.mxu0 0.0
        %5437 = vmatprep.subr.mxu0 0.0
        %5438 = vmatpush1.msra.mxu0 0.0
        %5439 = vmatprep.subr.mxu0 0.0
        %5440 = vmatpush1.msra.mxu0 0.0
        %5441 = vmatprep.subr.mxu0 0.0
        %5442 = vmatpush1.msra.mxu0 0.0
        %5443 = vmatprep.subr.mxu0 0.0
        %5444 = vmatpush1.msra.mxu0 0.0
        %5445 = vmatprep.subr.mxu0 0.0
        %5446 = vmatpush1.msra.mxu0 0.0
        %5447 = vmatprep.subr.mxu0 0.0
        %5448 = vmatpush1.msra.mxu0 %v5419
        %5449 = vmatprep.subr.mxu0 0.0
        %5450 = vmatpush1.msra.mxu0 %v5408
        %5451 = vmatprep.subr.mxu0 0.0
        %5452 = vmatpush1.msra.mxu0 %v5407
        %5453 = vmatprep.subr.mxu0 0.0
        %5454 = vmatpush2.msra.mxu0 0.0
        %5455 = vmatprep.subr.mxu0 0.0
        %5456 = vmatpush2.msra.mxu0 0.0
        %5457 = vmatprep.subr.mxu0 0.0
        %5458 = vmatpush2.msra.mxu0 0.0
        %5459 = vmatprep.subr.mxu0 0.0
        %5460 = vmatpush2.msra.mxu0 0.0
        %5461 = vmatprep.subr.mxu0 0.0
        %5462 = vmatpush2.msra.mxu0 0.0
        %5463 = vmatprep.subr.mxu0 0.0
        %5464 = vmatpush2.msra.mxu0 0.0
        %5465 = vmatprep.subr.mxu0 0.0
        %5466 = vmatpush2.msra.mxu0 0.0
        %5467 = vmatprep.subr.mxu0 0.0
        %5468 = vmatpush2.msra.mxu0 0.0
        %5469 = vmatprep.subr.mxu0 0.0
        %5470 = vmatpush2.msra.mxu0 0.0
        %5471 = vmatprep.subr.mxu0 0.0
        %5472 = vmatpush2.msra.mxu0 0.0
        %5473 = vmatprep.subr.mxu0 0.0
        %5474 = vmatpush2.msra.mxu0 0.0
        %5475 = vmatprep.subr.mxu0 0.0
        %5476 = vmatpush2.msra.mxu0 0.0
        %5477 = vmatprep.subr.mxu0 0.0
        %5478 = vmatpush2.msra.mxu0 0.0
        %5479 = vmatprep.subr.mxu0 0.0
        %5480 = vmatpush2.msra.mxu0 0.0
        %5481 = vmatprep.subr.mxu0 0.0
        %5482 = vmatpush2.msra.mxu0 0.0
        %5483 = vmatprep.subr.mxu0 0.0
        %5484 = vmatpush2.msra.mxu0 0.0
        %5485 = vmatprep.mubr.f32.mxu0 0.0
        %5486 = vmatmul.mubr.f32.gmra.mxu0 %v5412
        %v5487 = vpop.f32.mrf.mxu0
        %v5488 = vadd.f32 0.0, %v5487
        %v5489 = vpop.f32.mrf.mxu0
        %5490 = vmatprep.mubr.f32.mxu0 0.0
        %5491 = vmatmul.mubr.f32.gmra.mxu0 %v5415
        %v5492 = vpop.f32.mrf.mxu0
        %v5493 = vadd.f32 0.0, %v5492
        %v5494 = vpop.f32.mrf.mxu0
        %5495 = vdwg.mxu0
        %v5497 = vsel %vm5410, %v5399, 0
        %v5500 = vsel %vm5410, %v5400, 0
        %v5503 = vsel %vm5417, %v5403, 0
        %5505 = vmatprep.subr.mxu0 0.0
        %5506 = vmatpush1.msra.mxu0 0.0
        %5507 = vmatprep.subr.mxu0 0.0
        %5508 = vmatpush1.msra.mxu0 0.0
        %5509 = vmatprep.subr.mxu0 0.0
        %5510 = vmatpush1.msra.mxu0 0.0
        %5511 = vmatprep.subr.mxu0 0.0
        %5512 = vmatpush1.msra.mxu0 0.0
        %5513 = vmatprep.subr.mxu0 0.0
        %5514 = vmatpush1.msra.mxu0 0.0
        %5515 = vmatprep.subr.mxu0 0.0
        %5516 = vmatpush1.msra.mxu0 0.0
        %5517 = vmatprep.subr.mxu0 0.0
        %5518 = vmatpush1.msra.mxu0 0.0
        %5519 = vmatprep.subr.mxu0 0.0
        %5520 = vmatpush1.msra.mxu0 0.0
        %5521 = vmatprep.subr.mxu0 0.0
        %5522 = vmatpush1.msra.mxu0 0.0
        %5523 = vmatprep.subr.mxu0 0.0
        %5524 = vmatpush1.msra.mxu0 0.0
        %5525 = vmatprep.subr.mxu0 0.0
        %5526 = vmatpush1.msra.mxu0 0.0
        %5527 = vmatprep.subr.mxu0 0.0
        %5528 = vmatpush1.msra.mxu0 0.0
        %5529 = vmatprep.subr.mxu0 0.0
        %5530 = vmatpush1.msra.mxu0 0.0
        %5531 = vmatprep.subr.mxu0 0.0
        %5532 = vmatpush1.msra.mxu0 %v5503
        %5533 = vmatprep.subr.mxu0 0.0
        %5534 = vmatpush1.msra.mxu0 %v5402
        %5535 = vmatprep.subr.mxu0 0.0
        %5536 = vmatpush1.msra.mxu0 %v5401
        %5537 = vmatprep.subr.mxu0 0.0
        %5538 = vmatpush2.msra.mxu0 0.0
        %5539 = vmatprep.subr.mxu0 0.0
        %5540 = vmatpush2.msra.mxu0 0.0
        %5541 = vmatprep.subr.mxu0 0.0
        %5542 = vmatpush2.msra.mxu0 0.0
        %5543 = vmatprep.subr.mxu0 0.0
        %5544 = vmatpush2.msra.mxu0 0.0
        %5545 = vmatprep.subr.mxu0 0.0
        %5546 = vmatpush2.msra.mxu0 0.0
        %5547 = vmatprep.subr.mxu0 0.0
        %5548 = vmatpush2.msra.mxu0 0.0
        %5549 = vmatprep.subr.mxu0 0.0
        %5550 = vmatpush2.msra.mxu0 0.0
        %5551 = vmatprep.subr.mxu0 0.0
        %5552 = vmatpush2.msra.mxu0 0.0
        %5553 = vmatprep.subr.mxu0 0.0
        %5554 = vmatpush2.msra.mxu0 0.0
        %5555 = vmatprep.subr.mxu0 0.0
        %5556 = vmatpush2.msra.mxu0 0.0
        %5557 = vmatprep.subr.mxu0 0.0
        %5558 = vmatpush2.msra.mxu0 0.0
        %5559 = vmatprep.subr.mxu0 0.0
        %5560 = vmatpush2.msra.mxu0 0.0
        %5561 = vmatprep.subr.mxu0 0.0
        %5562 = vmatpush2.msra.mxu0 0.0
        %5563 = vmatprep.subr.mxu0 0.0
        %5564 = vmatpush2.msra.mxu0 0.0
        %5565 = vmatprep.subr.mxu0 0.0
        %5566 = vmatpush2.msra.mxu0 0.0
        %5567 = vmatprep.subr.mxu0 0.0
        %5568 = vmatpush2.msra.mxu0 0.0
        %5569 = vmatprep.mubr.f32.mxu0 0.0
        %5570 = vmatmul.mubr.f32.gmra.mxu0 %v5497
        %v5571 = vpop.f32.mrf.mxu0
        %v5572 = vadd.f32 %v5488, %v5571
        %v5573 = vpop.f32.mrf.mxu0
        %5574 = vmatprep.mubr.f32.mxu0 0.0
        %5575 = vmatmul.mubr.f32.gmra.mxu0 %v5500
        %v5576 = vpop.f32.mrf.mxu0
        %v5577 = vadd.f32 %v5493, %v5576
        %v5578 = vpop.f32.mrf.mxu0
        %5579 = vdwg.mxu0
        %v5580 = vld [vmem:[#allocation3 + $0x1] sm:$0xff]
        %v5581 = vld [vmem:[#allocation3 + $0x9] sm:$0xff]
        %s5582 = scalar_lea.vmem %s7, 48
        %v5583 = vld [vmem:[%s5582] sm:$0xff]
        %v5584 = vld [vmem:[%s5582 + $0x8] sm:$0xff]
        %v5585 = vld [vmem:[%s5582 + $0x10] sm:$0x3f]
        %v5587 = vsel %vm5410, %v5580, 0
        %v5590 = vsel %vm5410, %v5581, 0
        %v5593 = vsel %vm5417, %v5585, 0
        %5595 = vmatprep.subr.mxu0 0.0
        %5596 = vmatpush1.msra.mxu0 0.0
        %5597 = vmatprep.subr.mxu0 0.0
        %5598 = vmatpush1.msra.mxu0 0.0
        %5599 = vmatprep.subr.mxu0 0.0
        %5600 = vmatpush1.msra.mxu0 0.0
        %5601 = vmatprep.subr.mxu0 0.0
        %5602 = vmatpush1.msra.mxu0 0.0
        %5603 = vmatprep.subr.mxu0 0.0
        %5604 = vmatpush1.msra.mxu0 0.0
        %5605 = vmatprep.subr.mxu0 0.0
        %5606 = vmatpush1.msra.mxu0 0.0
        %5607 = vmatprep.subr.mxu0 0.0
        %5608 = vmatpush1.msra.mxu0 0.0
        %5609 = vmatprep.subr.mxu0 0.0
        %5610 = vmatpush1.msra.mxu0 0.0
        %5611 = vmatprep.subr.mxu0 0.0
        %5612 = vmatpush1.msra.mxu0 0.0
        %5613 = vmatprep.subr.mxu0 0.0
        %5614 = vmatpush1.msra.mxu0 0.0
        %5615 = vmatprep.subr.mxu0 0.0
        %5616 = vmatpush1.msra.mxu0 0.0
        %5617 = vmatprep.subr.mxu0 0.0
        %5618 = vmatpush1.msra.mxu0 0.0
        %5619 = vmatprep.subr.mxu0 0.0
        %5620 = vmatpush1.msra.mxu0 0.0
        %5621 = vmatprep.subr.mxu0 0.0
        %5622 = vmatpush1.msra.mxu0 %v5593
        %5623 = vmatprep.subr.mxu0 0.0
        %5624 = vmatpush1.msra.mxu0 %v5584
        %5625 = vmatprep.subr.mxu0 0.0
        %5626 = vmatpush1.msra.mxu0 %v5583
        %5627 = vmatprep.subr.mxu0 0.0
        %5628 = vmatpush2.msra.mxu0 0.0
        %5629 = vmatprep.subr.mxu0 0.0
        %5630 = vmatpush2.msra.mxu0 0.0
        %5631 = vmatprep.subr.mxu0 0.0
        %5632 = vmatpush2.msra.mxu0 0.0
        %5633 = vmatprep.subr.mxu0 0.0
        %5634 = vmatpush2.msra.mxu0 0.0
        %5635 = vmatprep.subr.mxu0 0.0
        %5636 = vmatpush2.msra.mxu0 0.0
        %5637 = vmatprep.subr.mxu0 0.0
        %5638 = vmatpush2.msra.mxu0 0.0
        %5639 = vmatprep.subr.mxu0 0.0
        %5640 = vmatpush2.msra.mxu0 0.0
        %5641 = vmatprep.subr.mxu0 0.0
        %5642 = vmatpush2.msra.mxu0 0.0
        %5643 = vmatprep.subr.mxu0 0.0
        %5644 = vmatpush2.msra.mxu0 0.0
        %5645 = vmatprep.subr.mxu0 0.0
        %5646 = vmatpush2.msra.mxu0 0.0
        %5647 = vmatprep.subr.mxu0 0.0
        %5648 = vmatpush2.msra.mxu0 0.0
        %5649 = vmatprep.subr.mxu0 0.0
        %5650 = vmatpush2.msra.mxu0 0.0
        %5651 = vmatprep.subr.mxu0 0.0
        %5652 = vmatpush2.msra.mxu0 0.0
        %5653 = vmatprep.subr.mxu0 0.0
        %5654 = vmatpush2.msra.mxu0 0.0
        %5655 = vmatprep.subr.mxu0 0.0
        %5656 = vmatpush2.msra.mxu0 0.0
        %5657 = vmatprep.subr.mxu0 0.0
        %5658 = vmatpush2.msra.mxu0 0.0
        %5659 = vmatprep.mubr.f32.mxu0 0.0
        %5660 = vmatmul.mubr.f32.gmra.mxu0 %v5587
        %v5661 = vpop.f32.mrf.mxu0
        %v5662 = vadd.f32 0.0, %v5661
        %v5663 = vpop.f32.mrf.mxu0
        %5664 = vmatprep.mubr.f32.mxu0 0.0
        %5665 = vmatmul.mubr.f32.gmra.mxu0 %v5590
        %v5666 = vpop.f32.mrf.mxu0
        %v5667 = vadd.f32 0.0, %v5666
        %v5668 = vpop.f32.mrf.mxu0
        %5669 = vdwg.mxu0
        %v5670 = vadd.f32 %v5572, %v5662
        %v5671 = vadd.f32 %v5577, %v5667
        %v5672 = vld [vmem:[#allocation4 + $0x1] sm:$0xff]
        %v5673 = vld [vmem:[#allocation4 + $0x9] sm:$0xff]
        %s5674 = scalar_lea.vmem %s7, 72
        %v5675 = vld [vmem:[%s5674] sm:$0xff]
        %v5676 = vld [vmem:[%s5674 + $0x8] sm:$0xff]
        %v5677 = vld [vmem:[%s5674 + $0x10] sm:$0x3f]
        %v5679 = vsel %vm5410, %v5672, 0
        %v5682 = vsel %vm5410, %v5673, 0
        %v5685 = vsel %vm5417, %v5677, 0
        %5687 = vmatprep.subr.mxu0 0.0
        %5688 = vmatpush1.msra.mxu0 0.0
        %5689 = vmatprep.subr.mxu0 0.0
        %5690 = vmatpush1.msra.mxu0 0.0
        %5691 = vmatprep.subr.mxu0 0.0
        %5692 = vmatpush1.msra.mxu0 0.0
        %5693 = vmatprep.subr.mxu0 0.0
        %5694 = vmatpush1.msra.mxu0 0.0
        %5695 = vmatprep.subr.mxu0 0.0
        %5696 = vmatpush1.msra.mxu0 0.0
        %5697 = vmatprep.subr.mxu0 0.0
        %5698 = vmatpush1.msra.mxu0 0.0
        %5699 = vmatprep.subr.mxu0 0.0
        %5700 = vmatpush1.msra.mxu0 0.0
        %5701 = vmatprep.subr.mxu0 0.0
        %5702 = vmatpush1.msra.mxu0 0.0
        %5703 = vmatprep.subr.mxu0 0.0
        %5704 = vmatpush1.msra.mxu0 0.0
        %5705 = vmatprep.subr.mxu0 0.0
        %5706 = vmatpush1.msra.mxu0 0.0
        %5707 = vmatprep.subr.mxu0 0.0
        %5708 = vmatpush1.msra.mxu0 0.0
        %5709 = vmatprep.subr.mxu0 0.0
        %5710 = vmatpush1.msra.mxu0 0.0
        %5711 = vmatprep.subr.mxu0 0.0
        %5712 = vmatpush1.msra.mxu0 0.0
        %5713 = vmatprep.subr.mxu0 0.0
        %5714 = vmatpush1.msra.mxu0 %v5685
        %5715 = vmatprep.subr.mxu0 0.0
        %5716 = vmatpush1.msra.mxu0 %v5676
        %5717 = vmatprep.subr.mxu0 0.0
        %5718 = vmatpush1.msra.mxu0 %v5675
        %5719 = vmatprep.subr.mxu0 0.0
        %5720 = vmatpush2.msra.mxu0 0.0
        %5721 = vmatprep.subr.mxu0 0.0
        %5722 = vmatpush2.msra.mxu0 0.0
        %5723 = vmatprep.subr.mxu0 0.0
        %5724 = vmatpush2.msra.mxu0 0.0
        %5725 = vmatprep.subr.mxu0 0.0
        %5726 = vmatpush2.msra.mxu0 0.0
        %5727 = vmatprep.subr.mxu0 0.0
        %5728 = vmatpush2.msra.mxu0 0.0
        %5729 = vmatprep.subr.mxu0 0.0
        %5730 = vmatpush2.msra.mxu0 0.0
        %5731 = vmatprep.subr.mxu0 0.0
        %5732 = vmatpush2.msra.mxu0 0.0
        %5733 = vmatprep.subr.mxu0 0.0
        %5734 = vmatpush2.msra.mxu0 0.0
        %5735 = vmatprep.subr.mxu0 0.0
        %5736 = vmatpush2.msra.mxu0 0.0
        %5737 = vmatprep.subr.mxu0 0.0
        %5738 = vmatpush2.msra.mxu0 0.0
        %5739 = vmatprep.subr.mxu0 0.0
        %5740 = vmatpush2.msra.mxu0 0.0
        %5741 = vmatprep.subr.mxu0 0.0
        %5742 = vmatpush2.msra.mxu0 0.0
        %5743 = vmatprep.subr.mxu0 0.0
        %5744 = vmatpush2.msra.mxu0 0.0
        %5745 = vmatprep.subr.mxu0 0.0
        %5746 = vmatpush2.msra.mxu0 0.0
        %5747 = vmatprep.subr.mxu0 0.0
        %5748 = vmatpush2.msra.mxu0 0.0
        %5749 = vmatprep.subr.mxu0 0.0
        %5750 = vmatpush2.msra.mxu0 0.0
        %5751 = vmatprep.mubr.f32.mxu0 0.0
        %5752 = vmatmul.mubr.f32.gmra.mxu0 %v5679
        %v5753 = vpop.f32.mrf.mxu0
        %v5754 = vadd.f32 0.0, %v5753
        %v5755 = vpop.f32.mrf.mxu0
        %5756 = vmatprep.mubr.f32.mxu0 0.0
        %5757 = vmatmul.mubr.f32.gmra.mxu0 %v5682
        %v5758 = vpop.f32.mrf.mxu0
        %v5759 = vadd.f32 0.0, %v5758
        %v5760 = vpop.f32.mrf.mxu0
        %5761 = vdwg.mxu0
        %v5762 = vadd.f32 %v5670, %v5754
        %v5763 = vadd.f32 %v5671, %v5759
        %v5764 = vld [vmem:[#allocation3 + $0x2] sm:$0xff]
        %v5765 = vld [vmem:[#allocation3 + $0xa] sm:$0xff]
        %s5766 = scalar_lea.vmem %s7, 96
        %v5767 = vld [vmem:[%s5766] sm:$0xff]
        %v5768 = vld [vmem:[%s5766 + $0x8] sm:$0xff]
        %v5769 = vld [vmem:[%s5766 + $0x10] sm:$0x3f]
        %v5771 = vsel %vm5410, %v5764, 0
        %v5774 = vsel %vm5410, %v5765, 0
        %v5777 = vsel %vm5417, %v5769, 0
        %5779 = vmatprep.subr.mxu0 0.0
        %5780 = vmatpush1.msra.mxu0 0.0
        %5781 = vmatprep.subr.mxu0 0.0
        %5782 = vmatpush1.msra.mxu0 0.0
        %5783 = vmatprep.subr.mxu0 0.0
        %5784 = vmatpush1.msra.mxu0 0.0
        %5785 = vmatprep.subr.mxu0 0.0
        %5786 = vmatpush1.msra.mxu0 0.0
        %5787 = vmatprep.subr.mxu0 0.0
        %5788 = vmatpush1.msra.mxu0 0.0
        %5789 = vmatprep.subr.mxu0 0.0
        %5790 = vmatpush1.msra.mxu0 0.0
        %5791 = vmatprep.subr.mxu0 0.0
        %5792 = vmatpush1.msra.mxu0 0.0
        %5793 = vmatprep.subr.mxu0 0.0
        %5794 = vmatpush1.msra.mxu0 0.0
        %5795 = vmatprep.subr.mxu0 0.0
        %5796 = vmatpush1.msra.mxu0 0.0
        %5797 = vmatprep.subr.mxu0 0.0
        %5798 = vmatpush1.msra.mxu0 0.0
        %5799 = vmatprep.subr.mxu0 0.0
        %5800 = vmatpush1.msra.mxu0 0.0
        %5801 = vmatprep.subr.mxu0 0.0
        %5802 = vmatpush1.msra.mxu0 0.0
        %5803 = vmatprep.subr.mxu0 0.0
        %5804 = vmatpush1.msra.mxu0 0.0
        %5805 = vmatprep.subr.mxu0 0.0
        %5806 = vmatpush1.msra.mxu0 %v5777
        %5807 = vmatprep.subr.mxu0 0.0
        %5808 = vmatpush1.msra.mxu0 %v5768
        %5809 = vmatprep.subr.mxu0 0.0
        %5810 = vmatpush1.msra.mxu0 %v5767
        %5811 = vmatprep.subr.mxu0 0.0
        %5812 = vmatpush2.msra.mxu0 0.0
        %5813 = vmatprep.subr.mxu0 0.0
        %5814 = vmatpush2.msra.mxu0 0.0
        %5815 = vmatprep.subr.mxu0 0.0
        %5816 = vmatpush2.msra.mxu0 0.0
        %5817 = vmatprep.subr.mxu0 0.0
        %5818 = vmatpush2.msra.mxu0 0.0
        %5819 = vmatprep.subr.mxu0 0.0
        %5820 = vmatpush2.msra.mxu0 0.0
        %5821 = vmatprep.subr.mxu0 0.0
        %5822 = vmatpush2.msra.mxu0 0.0
        %5823 = vmatprep.subr.mxu0 0.0
        %5824 = vmatpush2.msra.mxu0 0.0
        %5825 = vmatprep.subr.mxu0 0.0
        %5826 = vmatpush2.msra.mxu0 0.0
        %5827 = vmatprep.subr.mxu0 0.0
        %5828 = vmatpush2.msra.mxu0 0.0
        %5829 = vmatprep.subr.mxu0 0.0
        %5830 = vmatpush2.msra.mxu0 0.0
        %5831 = vmatprep.subr.mxu0 0.0
        %5832 = vmatpush2.msra.mxu0 0.0
        %5833 = vmatprep.subr.mxu0 0.0
        %5834 = vmatpush2.msra.mxu0 0.0
        %5835 = vmatprep.subr.mxu0 0.0
        %5836 = vmatpush2.msra.mxu0 0.0
        %5837 = vmatprep.subr.mxu0 0.0
        %5838 = vmatpush2.msra.mxu0 0.0
        %5839 = vmatprep.subr.mxu0 0.0
        %5840 = vmatpush2.msra.mxu0 0.0
        %5841 = vmatprep.subr.mxu0 0.0
        %5842 = vmatpush2.msra.mxu0 0.0
        %5843 = vmatprep.mubr.f32.mxu0 0.0
        %5844 = vmatmul.mubr.f32.gmra.mxu0 %v5771
        %v5845 = vpop.f32.mrf.mxu0
        %v5846 = vadd.f32 0.0, %v5845
        %v5847 = vpop.f32.mrf.mxu0
        %5848 = vmatprep.mubr.f32.mxu0 0.0
        %5849 = vmatmul.mubr.f32.gmra.mxu0 %v5774
        %v5850 = vpop.f32.mrf.mxu0
        %v5851 = vadd.f32 0.0, %v5850
        %v5852 = vpop.f32.mrf.mxu0
        %5853 = vdwg.mxu0
        %v5854 = vadd.f32 %v5762, %v5846
        %v5855 = vadd.f32 %v5763, %v5851
        %v5856 = vld [vmem:[#allocation4 + $0x2] sm:$0xff]
        %v5857 = vld [vmem:[#allocation4 + $0xa] sm:$0xff]
        %s5858 = scalar_lea.vmem %s7, 120
        %v5859 = vld [vmem:[%s5858] sm:$0xff]
        %v5860 = vld [vmem:[%s5858 + $0x8] sm:$0xff]
        %v5861 = vld [vmem:[%s5858 + $0x10] sm:$0x3f]
        %v5863 = vsel %vm5410, %v5856, 0
        %v5866 = vsel %vm5410, %v5857, 0
        %v5869 = vsel %vm5417, %v5861, 0
        %5871 = vmatprep.subr.mxu0 0.0
        %5872 = vmatpush1.msra.mxu0 0.0
        %5873 = vmatprep.subr.mxu0 0.0
        %5874 = vmatpush1.msra.mxu0 0.0
        %5875 = vmatprep.subr.mxu0 0.0
        %5876 = vmatpush1.msra.mxu0 0.0
        %5877 = vmatprep.subr.mxu0 0.0
        %5878 = vmatpush1.msra.mxu0 0.0
        %5879 = vmatprep.subr.mxu0 0.0
        %5880 = vmatpush1.msra.mxu0 0.0
        %5881 = vmatprep.subr.mxu0 0.0
        %5882 = vmatpush1.msra.mxu0 0.0
        %5883 = vmatprep.subr.mxu0 0.0
        %5884 = vmatpush1.msra.mxu0 0.0
        %5885 = vmatprep.subr.mxu0 0.0
        %5886 = vmatpush1.msra.mxu0 0.0
        %5887 = vmatprep.subr.mxu0 0.0
        %5888 = vmatpush1.msra.mxu0 0.0
        %5889 = vmatprep.subr.mxu0 0.0
        %5890 = vmatpush1.msra.mxu0 0.0
        %5891 = vmatprep.subr.mxu0 0.0
        %5892 = vmatpush1.msra.mxu0 0.0
        %5893 = vmatprep.subr.mxu0 0.0
        %5894 = vmatpush1.msra.mxu0 0.0
        %5895 = vmatprep.subr.mxu0 0.0
        %5896 = vmatpush1.msra.mxu0 0.0
        %5897 = vmatprep.subr.mxu0 0.0
        %5898 = vmatpush1.msra.mxu0 %v5869
        %5899 = vmatprep.subr.mxu0 0.0
        %5900 = vmatpush1.msra.mxu0 %v5860
        %5901 = vmatprep.subr.mxu0 0.0
        %5902 = vmatpush1.msra.mxu0 %v5859
        %5903 = vmatprep.subr.mxu0 0.0
        %5904 = vmatpush2.msra.mxu0 0.0
        %5905 = vmatprep.subr.mxu0 0.0
        %5906 = vmatpush2.msra.mxu0 0.0
        %5907 = vmatprep.subr.mxu0 0.0
        %5908 = vmatpush2.msra.mxu0 0.0
        %5909 = vmatprep.subr.mxu0 0.0
        %5910 = vmatpush2.msra.mxu0 0.0
        %5911 = vmatprep.subr.mxu0 0.0
        %5912 = vmatpush2.msra.mxu0 0.0
        %5913 = vmatprep.subr.mxu0 0.0
        %5914 = vmatpush2.msra.mxu0 0.0
        %5915 = vmatprep.subr.mxu0 0.0
        %5916 = vmatpush2.msra.mxu0 0.0
        %5917 = vmatprep.subr.mxu0 0.0
        %5918 = vmatpush2.msra.mxu0 0.0
        %5919 = vmatprep.subr.mxu0 0.0
        %5920 = vmatpush2.msra.mxu0 0.0
        %5921 = vmatprep.subr.mxu0 0.0
        %5922 = vmatpush2.msra.mxu0 0.0
        %5923 = vmatprep.subr.mxu0 0.0
        %5924 = vmatpush2.msra.mxu0 0.0
        %5925 = vmatprep.subr.mxu0 0.0
        %5926 = vmatpush2.msra.mxu0 0.0
        %5927 = vmatprep.subr.mxu0 0.0
        %5928 = vmatpush2.msra.mxu0 0.0
        %5929 = vmatprep.subr.mxu0 0.0
        %5930 = vmatpush2.msra.mxu0 0.0
        %5931 = vmatprep.subr.mxu0 0.0
        %5932 = vmatpush2.msra.mxu0 0.0
        %5933 = vmatprep.subr.mxu0 0.0
        %5934 = vmatpush2.msra.mxu0 0.0
        %5935 = vmatprep.mubr.f32.mxu0 0.0
        %5936 = vmatmul.mubr.f32.gmra.mxu0 %v5863
        %v5937 = vpop.f32.mrf.mxu0
        %v5938 = vadd.f32 0.0, %v5937
        %v5939 = vpop.f32.mrf.mxu0
        %5940 = vmatprep.mubr.f32.mxu0 0.0
        %5941 = vmatmul.mubr.f32.gmra.mxu0 %v5866
        %v5942 = vpop.f32.mrf.mxu0
        %v5943 = vadd.f32 0.0, %v5942
        %v5944 = vpop.f32.mrf.mxu0
        %5945 = vdwg.mxu0
        %v5946 = vadd.f32 %v5854, %v5938
        %v5947 = vadd.f32 %v5855, %v5943
        %v5948 = vld [vmem:[#allocation3 + $0x3] sm:$0xff]
        %v5949 = vld [vmem:[#allocation3 + $0xb] sm:$0xff]
        %s5950 = scalar_lea.vmem %s7, 144
        %v5951 = vld [vmem:[%s5950] sm:$0xff]
        %v5952 = vld [vmem:[%s5950 + $0x8] sm:$0xff]
        %v5953 = vld [vmem:[%s5950 + $0x10] sm:$0x3f]
        %v5955 = vsel %vm5410, %v5948, 0
        %v5958 = vsel %vm5410, %v5949, 0
        %v5961 = vsel %vm5417, %v5953, 0
        %5963 = vmatprep.subr.mxu0 0.0
        %5964 = vmatpush1.msra.mxu0 0.0
        %5965 = vmatprep.subr.mxu0 0.0
        %5966 = vmatpush1.msra.mxu0 0.0
        %5967 = vmatprep.subr.mxu0 0.0
        %5968 = vmatpush1.msra.mxu0 0.0
        %5969 = vmatprep.subr.mxu0 0.0
        %5970 = vmatpush1.msra.mxu0 0.0
        %5971 = vmatprep.subr.mxu0 0.0
        %5972 = vmatpush1.msra.mxu0 0.0
        %5973 = vmatprep.subr.mxu0 0.0
        %5974 = vmatpush1.msra.mxu0 0.0
        %5975 = vmatprep.subr.mxu0 0.0
        %5976 = vmatpush1.msra.mxu0 0.0
        %5977 = vmatprep.subr.mxu0 0.0
        %5978 = vmatpush1.msra.mxu0 0.0
        %5979 = vmatprep.subr.mxu0 0.0
        %5980 = vmatpush1.msra.mxu0 0.0
        %5981 = vmatprep.subr.mxu0 0.0
        %5982 = vmatpush1.msra.mxu0 0.0
        %5983 = vmatprep.subr.mxu0 0.0
        %5984 = vmatpush1.msra.mxu0 0.0
        %5985 = vmatprep.subr.mxu0 0.0
        %5986 = vmatpush1.msra.mxu0 0.0
        %5987 = vmatprep.subr.mxu0 0.0
        %5988 = vmatpush1.msra.mxu0 0.0
        %5989 = vmatprep.subr.mxu0 0.0
        %5990 = vmatpush1.msra.mxu0 %v5961
        %5991 = vmatprep.subr.mxu0 0.0
        %5992 = vmatpush1.msra.mxu0 %v5952
        %5993 = vmatprep.subr.mxu0 0.0
        %5994 = vmatpush1.msra.mxu0 %v5951
        %5995 = vmatprep.subr.mxu0 0.0
        %5996 = vmatpush2.msra.mxu0 0.0
        %5997 = vmatprep.subr.mxu0 0.0
        %5998 = vmatpush2.msra.mxu0 0.0
        %5999 = vmatprep.subr.mxu0 0.0
        %6000 = vmatpush2.msra.mxu0 0.0
        %6001 = vmatprep.subr.mxu0 0.0
        %6002 = vmatpush2.msra.mxu0 0.0
        %6003 = vmatprep.subr.mxu0 0.0
        %6004 = vmatpush2.msra.mxu0 0.0
        %6005 = vmatprep.subr.mxu0 0.0
        %6006 = vmatpush2.msra.mxu0 0.0
        %6007 = vmatprep.subr.mxu0 0.0
        %6008 = vmatpush2.msra.mxu0 0.0
        %6009 = vmatprep.subr.mxu0 0.0
        %6010 = vmatpush2.msra.mxu0 0.0
        %6011 = vmatprep.subr.mxu0 0.0
        %6012 = vmatpush2.msra.mxu0 0.0
        %6013 = vmatprep.subr.mxu0 0.0
        %6014 = vmatpush2.msra.mxu0 0.0
        %6015 = vmatprep.subr.mxu0 0.0
        %6016 = vmatpush2.msra.mxu0 0.0
        %6017 = vmatprep.subr.mxu0 0.0
        %6018 = vmatpush2.msra.mxu0 0.0
        %6019 = vmatprep.subr.mxu0 0.0
        %6020 = vmatpush2.msra.mxu0 0.0
        %6021 = vmatprep.subr.mxu0 0.0
        %6022 = vmatpush2.msra.mxu0 0.0
        %6023 = vmatprep.subr.mxu0 0.0
        %6024 = vmatpush2.msra.mxu0 0.0
        %6025 = vmatprep.subr.mxu0 0.0
        %6026 = vmatpush2.msra.mxu0 0.0
        %6027 = vmatprep.mubr.f32.mxu0 0.0
        %6028 = vmatmul.mubr.f32.gmra.mxu0 %v5955
        %v6029 = vpop.f32.mrf.mxu0
        %v6030 = vadd.f32 0.0, %v6029
        %v6031 = vpop.f32.mrf.mxu0
        %6032 = vmatprep.mubr.f32.mxu0 0.0
        %6033 = vmatmul.mubr.f32.gmra.mxu0 %v5958
        %v6034 = vpop.f32.mrf.mxu0
        %v6035 = vadd.f32 0.0, %v6034
        %v6036 = vpop.f32.mrf.mxu0
        %6037 = vdwg.mxu0
        %v6038 = vadd.f32 %v5946, %v6030
        %v6039 = vadd.f32 %v5947, %v6035
        %v6040 = vld [vmem:[#allocation4 + $0x3] sm:$0xff]
        %v6041 = vld [vmem:[#allocation4 + $0xb] sm:$0xff]
        %s6042 = scalar_lea.vmem %s7, 168
        %v6043 = vld [vmem:[%s6042] sm:$0xff]
        %v6044 = vld [vmem:[%s6042 + $0x8] sm:$0xff]
        %v6045 = vld [vmem:[%s6042 + $0x10] sm:$0x3f]
        %v6047 = vsel %vm5410, %v6040, 0
        %v6050 = vsel %vm5410, %v6041, 0
        %v6053 = vsel %vm5417, %v6045, 0
        %6055 = vmatprep.subr.mxu0 0.0
        %6056 = vmatpush1.msra.mxu0 0.0
        %6057 = vmatprep.subr.mxu0 0.0
        %6058 = vmatpush1.msra.mxu0 0.0
        %6059 = vmatprep.subr.mxu0 0.0
        %6060 = vmatpush1.msra.mxu0 0.0
        %6061 = vmatprep.subr.mxu0 0.0
        %6062 = vmatpush1.msra.mxu0 0.0
        %6063 = vmatprep.subr.mxu0 0.0
        %6064 = vmatpush1.msra.mxu0 0.0
        %6065 = vmatprep.subr.mxu0 0.0
        %6066 = vmatpush1.msra.mxu0 0.0
        %6067 = vmatprep.subr.mxu0 0.0
        %6068 = vmatpush1.msra.mxu0 0.0
        %6069 = vmatprep.subr.mxu0 0.0
        %6070 = vmatpush1.msra.mxu0 0.0
        %6071 = vmatprep.subr.mxu0 0.0
        %6072 = vmatpush1.msra.mxu0 0.0
        %6073 = vmatprep.subr.mxu0 0.0
        %6074 = vmatpush1.msra.mxu0 0.0
        %6075 = vmatprep.subr.mxu0 0.0
        %6076 = vmatpush1.msra.mxu0 0.0
        %6077 = vmatprep.subr.mxu0 0.0
        %6078 = vmatpush1.msra.mxu0 0.0
        %6079 = vmatprep.subr.mxu0 0.0
        %6080 = vmatpush1.msra.mxu0 0.0
        %6081 = vmatprep.subr.mxu0 0.0
        %6082 = vmatpush1.msra.mxu0 %v6053
        %6083 = vmatprep.subr.mxu0 0.0
        %6084 = vmatpush1.msra.mxu0 %v6044
        %6085 = vmatprep.subr.mxu0 0.0
        %6086 = vmatpush1.msra.mxu0 %v6043
        %6087 = vmatprep.subr.mxu0 0.0
        %6088 = vmatpush2.msra.mxu0 0.0
        %6089 = vmatprep.subr.mxu0 0.0
        %6090 = vmatpush2.msra.mxu0 0.0
        %6091 = vmatprep.subr.mxu0 0.0
        %6092 = vmatpush2.msra.mxu0 0.0
        %6093 = vmatprep.subr.mxu0 0.0
        %6094 = vmatpush2.msra.mxu0 0.0
        %6095 = vmatprep.subr.mxu0 0.0
        %6096 = vmatpush2.msra.mxu0 0.0
        %6097 = vmatprep.subr.mxu0 0.0
        %6098 = vmatpush2.msra.mxu0 0.0
        %6099 = vmatprep.subr.mxu0 0.0
        %6100 = vmatpush2.msra.mxu0 0.0
        %6101 = vmatprep.subr.mxu0 0.0
        %6102 = vmatpush2.msra.mxu0 0.0
        %6103 = vmatprep.subr.mxu0 0.0
        %6104 = vmatpush2.msra.mxu0 0.0
        %6105 = vmatprep.subr.mxu0 0.0
        %6106 = vmatpush2.msra.mxu0 0.0
        %6107 = vmatprep.subr.mxu0 0.0
        %6108 = vmatpush2.msra.mxu0 0.0
        %6109 = vmatprep.subr.mxu0 0.0
        %6110 = vmatpush2.msra.mxu0 0.0
        %6111 = vmatprep.subr.mxu0 0.0
        %6112 = vmatpush2.msra.mxu0 0.0
        %6113 = vmatprep.subr.mxu0 0.0
        %6114 = vmatpush2.msra.mxu0 0.0
        %6115 = vmatprep.subr.mxu0 0.0
        %6116 = vmatpush2.msra.mxu0 0.0
        %6117 = vmatprep.subr.mxu0 0.0
        %6118 = vmatpush2.msra.mxu0 0.0
        %6119 = vmatprep.mubr.f32.mxu0 0.0
        %6120 = vmatmul.mubr.f32.gmra.mxu0 %v6047
        %v6121 = vpop.f32.mrf.mxu0
        %v6122 = vadd.f32 0.0, %v6121
        %v6123 = vpop.f32.mrf.mxu0
        %6124 = vmatprep.mubr.f32.mxu0 0.0
        %6125 = vmatmul.mubr.f32.gmra.mxu0 %v6050
        %v6126 = vpop.f32.mrf.mxu0
        %v6127 = vadd.f32 0.0, %v6126
        %v6128 = vpop.f32.mrf.mxu0
        %6129 = vdwg.mxu0
        %v6130 = vadd.f32 %v6038, %v6122
        %v6131 = vadd.f32 %v6039, %v6127
        %v6132 = vld [vmem:[#allocation3 + $0x4] sm:$0xff]
        %v6133 = vld [vmem:[#allocation3 + $0xc] sm:$0xff]
        %s6134 = scalar_lea.vmem %s7, 192
        %v6135 = vld [vmem:[%s6134] sm:$0xff]
        %v6136 = vld [vmem:[%s6134 + $0x8] sm:$0xff]
        %v6137 = vld [vmem:[%s6134 + $0x10] sm:$0x3f]
        %v6139 = vsel %vm5410, %v6132, 0
        %v6142 = vsel %vm5410, %v6133, 0
        %v6145 = vsel %vm5417, %v6137, 0
        %6147 = vmatprep.subr.mxu0 0.0
        %6148 = vmatpush1.msra.mxu0 0.0
        %6149 = vmatprep.subr.mxu0 0.0
        %6150 = vmatpush1.msra.mxu0 0.0
        %6151 = vmatprep.subr.mxu0 0.0
        %6152 = vmatpush1.msra.mxu0 0.0
        %6153 = vmatprep.subr.mxu0 0.0
        %6154 = vmatpush1.msra.mxu0 0.0
        %6155 = vmatprep.subr.mxu0 0.0
        %6156 = vmatpush1.msra.mxu0 0.0
        %6157 = vmatprep.subr.mxu0 0.0
        %6158 = vmatpush1.msra.mxu0 0.0
        %6159 = vmatprep.subr.mxu0 0.0
        %6160 = vmatpush1.msra.mxu0 0.0
        %6161 = vmatprep.subr.mxu0 0.0
        %6162 = vmatpush1.msra.mxu0 0.0
        %6163 = vmatprep.subr.mxu0 0.0
        %6164 = vmatpush1.msra.mxu0 0.0
        %6165 = vmatprep.subr.mxu0 0.0
        %6166 = vmatpush1.msra.mxu0 0.0
        %6167 = vmatprep.subr.mxu0 0.0
        %6168 = vmatpush1.msra.mxu0 0.0
        %6169 = vmatprep.subr.mxu0 0.0
        %6170 = vmatpush1.msra.mxu0 0.0
        %6171 = vmatprep.subr.mxu0 0.0
        %6172 = vmatpush1.msra.mxu0 0.0
        %6173 = vmatprep.subr.mxu0 0.0
        %6174 = vmatpush1.msra.mxu0 %v6145
        %6175 = vmatprep.subr.mxu0 0.0
        %6176 = vmatpush1.msra.mxu0 %v6136
        %6177 = vmatprep.subr.mxu0 0.0
        %6178 = vmatpush1.msra.mxu0 %v6135
        %6179 = vmatprep.subr.mxu0 0.0
        %6180 = vmatpush2.msra.mxu0 0.0
        %6181 = vmatprep.subr.mxu0 0.0
        %6182 = vmatpush2.msra.mxu0 0.0
        %6183 = vmatprep.subr.mxu0 0.0
        %6184 = vmatpush2.msra.mxu0 0.0
        %6185 = vmatprep.subr.mxu0 0.0
        %6186 = vmatpush2.msra.mxu0 0.0
        %6187 = vmatprep.subr.mxu0 0.0
        %6188 = vmatpush2.msra.mxu0 0.0
        %6189 = vmatprep.subr.mxu0 0.0
        %6190 = vmatpush2.msra.mxu0 0.0
        %6191 = vmatprep.subr.mxu0 0.0
        %6192 = vmatpush2.msra.mxu0 0.0
        %6193 = vmatprep.subr.mxu0 0.0
        %6194 = vmatpush2.msra.mxu0 0.0
        %6195 = vmatprep.subr.mxu0 0.0
        %6196 = vmatpush2.msra.mxu0 0.0
        %6197 = vmatprep.subr.mxu0 0.0
        %6198 = vmatpush2.msra.mxu0 0.0
        %6199 = vmatprep.subr.mxu0 0.0
        %6200 = vmatpush2.msra.mxu0 0.0
        %6201 = vmatprep.subr.mxu0 0.0
        %6202 = vmatpush2.msra.mxu0 0.0
        %6203 = vmatprep.subr.mxu0 0.0
        %6204 = vmatpush2.msra.mxu0 0.0
        %6205 = vmatprep.subr.mxu0 0.0
        %6206 = vmatpush2.msra.mxu0 0.0
        %6207 = vmatprep.subr.mxu0 0.0
        %6208 = vmatpush2.msra.mxu0 0.0
        %6209 = vmatprep.subr.mxu0 0.0
        %6210 = vmatpush2.msra.mxu0 0.0
        %6211 = vmatprep.mubr.f32.mxu0 0.0
        %6212 = vmatmul.mubr.f32.gmra.mxu0 %v6139
        %v6213 = vpop.f32.mrf.mxu0
        %v6214 = vadd.f32 0.0, %v6213
        %v6215 = vpop.f32.mrf.mxu0
        %6216 = vmatprep.mubr.f32.mxu0 0.0
        %6217 = vmatmul.mubr.f32.gmra.mxu0 %v6142
        %v6218 = vpop.f32.mrf.mxu0
        %v6219 = vadd.f32 0.0, %v6218
        %v6220 = vpop.f32.mrf.mxu0
        %6221 = vdwg.mxu0
        %v6222 = vadd.f32 %v6130, %v6214
        %v6223 = vadd.f32 %v6131, %v6219
        %v6224 = vld [vmem:[#allocation4 + $0x4] sm:$0xff]
        %v6225 = vld [vmem:[#allocation4 + $0xc] sm:$0xff]
        %s6226 = scalar_lea.vmem %s7, 216
        %v6227 = vld [vmem:[%s6226] sm:$0xff]
        %v6228 = vld [vmem:[%s6226 + $0x8] sm:$0xff]
        %v6229 = vld [vmem:[%s6226 + $0x10] sm:$0x3f]
        %v6231 = vsel %vm5410, %v6224, 0
        %v6234 = vsel %vm5410, %v6225, 0
        %v6237 = vsel %vm5417, %v6229, 0
        %6239 = vmatprep.subr.mxu0 0.0
        %6240 = vmatpush1.msra.mxu0 0.0
        %6241 = vmatprep.subr.mxu0 0.0
        %6242 = vmatpush1.msra.mxu0 0.0
        %6243 = vmatprep.subr.mxu0 0.0
        %6244 = vmatpush1.msra.mxu0 0.0
        %6245 = vmatprep.subr.mxu0 0.0
        %6246 = vmatpush1.msra.mxu0 0.0
        %6247 = vmatprep.subr.mxu0 0.0
        %6248 = vmatpush1.msra.mxu0 0.0
        %6249 = vmatprep.subr.mxu0 0.0
        %6250 = vmatpush1.msra.mxu0 0.0
        %6251 = vmatprep.subr.mxu0 0.0
        %6252 = vmatpush1.msra.mxu0 0.0
        %6253 = vmatprep.subr.mxu0 0.0
        %6254 = vmatpush1.msra.mxu0 0.0
        %6255 = vmatprep.subr.mxu0 0.0
        %6256 = vmatpush1.msra.mxu0 0.0
        %6257 = vmatprep.subr.mxu0 0.0
        %6258 = vmatpush1.msra.mxu0 0.0
        %6259 = vmatprep.subr.mxu0 0.0
        %6260 = vmatpush1.msra.mxu0 0.0
        %6261 = vmatprep.subr.mxu0 0.0
        %6262 = vmatpush1.msra.mxu0 0.0
        %6263 = vmatprep.subr.mxu0 0.0
        %6264 = vmatpush1.msra.mxu0 0.0
        %6265 = vmatprep.subr.mxu0 0.0
        %6266 = vmatpush1.msra.mxu0 %v6237
        %6267 = vmatprep.subr.mxu0 0.0
        %6268 = vmatpush1.msra.mxu0 %v6228
        %6269 = vmatprep.subr.mxu0 0.0
        %6270 = vmatpush1.msra.mxu0 %v6227
        %6271 = vmatprep.subr.mxu0 0.0
        %6272 = vmatpush2.msra.mxu0 0.0
        %6273 = vmatprep.subr.mxu0 0.0
        %6274 = vmatpush2.msra.mxu0 0.0
        %6275 = vmatprep.subr.mxu0 0.0
        %6276 = vmatpush2.msra.mxu0 0.0
        %6277 = vmatprep.subr.mxu0 0.0
        %6278 = vmatpush2.msra.mxu0 0.0
        %6279 = vmatprep.subr.mxu0 0.0
        %6280 = vmatpush2.msra.mxu0 0.0
        %6281 = vmatprep.subr.mxu0 0.0
        %6282 = vmatpush2.msra.mxu0 0.0
        %6283 = vmatprep.subr.mxu0 0.0
        %6284 = vmatpush2.msra.mxu0 0.0
        %6285 = vmatprep.subr.mxu0 0.0
        %6286 = vmatpush2.msra.mxu0 0.0
        %6287 = vmatprep.subr.mxu0 0.0
        %6288 = vmatpush2.msra.mxu0 0.0
        %6289 = vmatprep.subr.mxu0 0.0
        %6290 = vmatpush2.msra.mxu0 0.0
        %6291 = vmatprep.subr.mxu0 0.0
        %6292 = vmatpush2.msra.mxu0 0.0
        %6293 = vmatprep.subr.mxu0 0.0
        %6294 = vmatpush2.msra.mxu0 0.0
        %6295 = vmatprep.subr.mxu0 0.0
        %6296 = vmatpush2.msra.mxu0 0.0
        %6297 = vmatprep.subr.mxu0 0.0
        %6298 = vmatpush2.msra.mxu0 0.0
        %6299 = vmatprep.subr.mxu0 0.0
        %6300 = vmatpush2.msra.mxu0 0.0
        %6301 = vmatprep.subr.mxu0 0.0
        %6302 = vmatpush2.msra.mxu0 0.0
        %6303 = vmatprep.mubr.f32.mxu0 0.0
        %6304 = vmatmul.mubr.f32.gmra.mxu0 %v6231
        %v6305 = vpop.f32.mrf.mxu0
        %v6306 = vadd.f32 0.0, %v6305
        %v6307 = vpop.f32.mrf.mxu0
        %6308 = vmatprep.mubr.f32.mxu0 0.0
        %6309 = vmatmul.mubr.f32.gmra.mxu0 %v6234
        %v6310 = vpop.f32.mrf.mxu0
        %v6311 = vadd.f32 0.0, %v6310
        %v6312 = vpop.f32.mrf.mxu0
        %6313 = vdwg.mxu0
        %v6314 = vadd.f32 %v6222, %v6306
        %v6315 = vadd.f32 %v6223, %v6311
        %v6316 = vld [vmem:[#allocation3 + $0x5] sm:$0xff]
        %v6317 = vld [vmem:[#allocation3 + $0xd] sm:$0xff]
        %s6318 = scalar_lea.vmem %s7, 240
        %v6319 = vld [vmem:[%s6318] sm:$0xff]
        %v6320 = vld [vmem:[%s6318 + $0x8] sm:$0xff]
        %v6321 = vld [vmem:[%s6318 + $0x10] sm:$0x3f]
        %v6323 = vsel %vm5410, %v6316, 0
        %v6326 = vsel %vm5410, %v6317, 0
        %v6329 = vsel %vm5417, %v6321, 0
        %6331 = vmatprep.subr.mxu0 0.0
        %6332 = vmatpush1.msra.mxu0 0.0
        %6333 = vmatprep.subr.mxu0 0.0
        %6334 = vmatpush1.msra.mxu0 0.0
        %6335 = vmatprep.subr.mxu0 0.0
        %6336 = vmatpush1.msra.mxu0 0.0
        %6337 = vmatprep.subr.mxu0 0.0
        %6338 = vmatpush1.msra.mxu0 0.0
        %6339 = vmatprep.subr.mxu0 0.0
        %6340 = vmatpush1.msra.mxu0 0.0
        %6341 = vmatprep.subr.mxu0 0.0
        %6342 = vmatpush1.msra.mxu0 0.0
        %6343 = vmatprep.subr.mxu0 0.0
        %6344 = vmatpush1.msra.mxu0 0.0
        %6345 = vmatprep.subr.mxu0 0.0
        %6346 = vmatpush1.msra.mxu0 0.0
        %6347 = vmatprep.subr.mxu0 0.0
        %6348 = vmatpush1.msra.mxu0 0.0
        %6349 = vmatprep.subr.mxu0 0.0
        %6350 = vmatpush1.msra.mxu0 0.0
        %6351 = vmatprep.subr.mxu0 0.0
        %6352 = vmatpush1.msra.mxu0 0.0
        %6353 = vmatprep.subr.mxu0 0.0
        %6354 = vmatpush1.msra.mxu0 0.0
        %6355 = vmatprep.subr.mxu0 0.0
        %6356 = vmatpush1.msra.mxu0 0.0
        %6357 = vmatprep.subr.mxu0 0.0
        %6358 = vmatpush1.msra.mxu0 %v6329
        %6359 = vmatprep.subr.mxu0 0.0
        %6360 = vmatpush1.msra.mxu0 %v6320
        %6361 = vmatprep.subr.mxu0 0.0
        %6362 = vmatpush1.msra.mxu0 %v6319
        %6363 = vmatprep.subr.mxu0 0.0
        %6364 = vmatpush2.msra.mxu0 0.0
        %6365 = vmatprep.subr.mxu0 0.0
        %6366 = vmatpush2.msra.mxu0 0.0
        %6367 = vmatprep.subr.mxu0 0.0
        %6368 = vmatpush2.msra.mxu0 0.0
        %6369 = vmatprep.subr.mxu0 0.0
        %6370 = vmatpush2.msra.mxu0 0.0
        %6371 = vmatprep.subr.mxu0 0.0
        %6372 = vmatpush2.msra.mxu0 0.0
        %6373 = vmatprep.subr.mxu0 0.0
        %6374 = vmatpush2.msra.mxu0 0.0
        %6375 = vmatprep.subr.mxu0 0.0
        %6376 = vmatpush2.msra.mxu0 0.0
        %6377 = vmatprep.subr.mxu0 0.0
        %6378 = vmatpush2.msra.mxu0 0.0
        %6379 = vmatprep.subr.mxu0 0.0
        %6380 = vmatpush2.msra.mxu0 0.0
        %6381 = vmatprep.subr.mxu0 0.0
        %6382 = vmatpush2.msra.mxu0 0.0
        %6383 = vmatprep.subr.mxu0 0.0
        %6384 = vmatpush2.msra.mxu0 0.0
        %6385 = vmatprep.subr.mxu0 0.0
        %6386 = vmatpush2.msra.mxu0 0.0
        %6387 = vmatprep.subr.mxu0 0.0
        %6388 = vmatpush2.msra.mxu0 0.0
        %6389 = vmatprep.subr.mxu0 0.0
        %6390 = vmatpush2.msra.mxu0 0.0
        %6391 = vmatprep.subr.mxu0 0.0
        %6392 = vmatpush2.msra.mxu0 0.0
        %6393 = vmatprep.subr.mxu0 0.0
        %6394 = vmatpush2.msra.mxu0 0.0
        %6395 = vmatprep.mubr.f32.mxu0 0.0
        %6396 = vmatmul.mubr.f32.gmra.mxu0 %v6323
        %v6397 = vpop.f32.mrf.mxu0
        %v6398 = vadd.f32 0.0, %v6397
        %v6399 = vpop.f32.mrf.mxu0
        %6400 = vmatprep.mubr.f32.mxu0 0.0
        %6401 = vmatmul.mubr.f32.gmra.mxu0 %v6326
        %v6402 = vpop.f32.mrf.mxu0
        %v6403 = vadd.f32 0.0, %v6402
        %v6404 = vpop.f32.mrf.mxu0
        %6405 = vdwg.mxu0
        %v6406 = vadd.f32 %v6314, %v6398
        %v6407 = vadd.f32 %v6315, %v6403
        %v6408 = vld [vmem:[#allocation4 + $0x5] sm:$0xff]
        %v6409 = vld [vmem:[#allocation4 + $0xd] sm:$0xff]
        %s6410 = scalar_lea.vmem %s7, 264
        %v6411 = vld [vmem:[%s6410] sm:$0xff]
        %v6412 = vld [vmem:[%s6410 + $0x8] sm:$0xff]
        %v6413 = vld [vmem:[%s6410 + $0x10] sm:$0x3f]
        %v6415 = vsel %vm5410, %v6408, 0
        %v6418 = vsel %vm5410, %v6409, 0
        %v6421 = vsel %vm5417, %v6413, 0
        %6423 = vmatprep.subr.mxu0 0.0
        %6424 = vmatpush1.msra.mxu0 0.0
        %6425 = vmatprep.subr.mxu0 0.0
        %6426 = vmatpush1.msra.mxu0 0.0
        %6427 = vmatprep.subr.mxu0 0.0
        %6428 = vmatpush1.msra.mxu0 0.0
        %6429 = vmatprep.subr.mxu0 0.0
        %6430 = vmatpush1.msra.mxu0 0.0
        %6431 = vmatprep.subr.mxu0 0.0
        %6432 = vmatpush1.msra.mxu0 0.0
        %6433 = vmatprep.subr.mxu0 0.0
        %6434 = vmatpush1.msra.mxu0 0.0
        %6435 = vmatprep.subr.mxu0 0.0
        %6436 = vmatpush1.msra.mxu0 0.0
        %6437 = vmatprep.subr.mxu0 0.0
        %6438 = vmatpush1.msra.mxu0 0.0
        %6439 = vmatprep.subr.mxu0 0.0
        %6440 = vmatpush1.msra.mxu0 0.0
        %6441 = vmatprep.subr.mxu0 0.0
        %6442 = vmatpush1.msra.mxu0 0.0
        %6443 = vmatprep.subr.mxu0 0.0
        %6444 = vmatpush1.msra.mxu0 0.0
        %6445 = vmatprep.subr.mxu0 0.0
        %6446 = vmatpush1.msra.mxu0 0.0
        %6447 = vmatprep.subr.mxu0 0.0
        %6448 = vmatpush1.msra.mxu0 0.0
        %6449 = vmatprep.subr.mxu0 0.0
        %6450 = vmatpush1.msra.mxu0 %v6421
        %6451 = vmatprep.subr.mxu0 0.0
        %6452 = vmatpush1.msra.mxu0 %v6412
        %6453 = vmatprep.subr.mxu0 0.0
        %6454 = vmatpush1.msra.mxu0 %v6411
        %6455 = vmatprep.subr.mxu0 0.0
        %6456 = vmatpush2.msra.mxu0 0.0
        %6457 = vmatprep.subr.mxu0 0.0
        %6458 = vmatpush2.msra.mxu0 0.0
        %6459 = vmatprep.subr.mxu0 0.0
        %6460 = vmatpush2.msra.mxu0 0.0
        %6461 = vmatprep.subr.mxu0 0.0
        %6462 = vmatpush2.msra.mxu0 0.0
        %6463 = vmatprep.subr.mxu0 0.0
        %6464 = vmatpush2.msra.mxu0 0.0
        %6465 = vmatprep.subr.mxu0 0.0
        %6466 = vmatpush2.msra.mxu0 0.0
        %6467 = vmatprep.subr.mxu0 0.0
        %6468 = vmatpush2.msra.mxu0 0.0
        %6469 = vmatprep.subr.mxu0 0.0
        %6470 = vmatpush2.msra.mxu0 0.0
        %6471 = vmatprep.subr.mxu0 0.0
        %6472 = vmatpush2.msra.mxu0 0.0
        %6473 = vmatprep.subr.mxu0 0.0
        %6474 = vmatpush2.msra.mxu0 0.0
        %6475 = vmatprep.subr.mxu0 0.0
        %6476 = vmatpush2.msra.mxu0 0.0
        %6477 = vmatprep.subr.mxu0 0.0
        %6478 = vmatpush2.msra.mxu0 0.0
        %6479 = vmatprep.subr.mxu0 0.0
        %6480 = vmatpush2.msra.mxu0 0.0
        %6481 = vmatprep.subr.mxu0 0.0
        %6482 = vmatpush2.msra.mxu0 0.0
        %6483 = vmatprep.subr.mxu0 0.0
        %6484 = vmatpush2.msra.mxu0 0.0
        %6485 = vmatprep.subr.mxu0 0.0
        %6486 = vmatpush2.msra.mxu0 0.0
        %6487 = vmatprep.mubr.f32.mxu0 0.0
        %6488 = vmatmul.mubr.f32.gmra.mxu0 %v6415
        %v6489 = vpop.f32.mrf.mxu0
        %v6490 = vadd.f32 0.0, %v6489
        %v6491 = vpop.f32.mrf.mxu0
        %6492 = vmatprep.mubr.f32.mxu0 0.0
        %6493 = vmatmul.mubr.f32.gmra.mxu0 %v6418
        %v6494 = vpop.f32.mrf.mxu0
        %v6495 = vadd.f32 0.0, %v6494
        %v6496 = vpop.f32.mrf.mxu0
        %6497 = vdwg.mxu0
        %v6498 = vadd.f32 %v6406, %v6490
        %v6499 = vadd.f32 %v6407, %v6495
        %v6500 = vld [vmem:[#allocation3 + $0x6] sm:$0xff]
        %v6501 = vld [vmem:[#allocation3 + $0xe] sm:$0xff]
        %s6502 = scalar_lea.vmem %s7, 288
        %v6503 = vld [vmem:[%s6502] sm:$0xff]
        %v6504 = vld [vmem:[%s6502 + $0x8] sm:$0xff]
        %v6505 = vld [vmem:[%s6502 + $0x10] sm:$0x3f]
        %v6507 = vsel %vm5410, %v6500, 0
        %v6510 = vsel %vm5410, %v6501, 0
        %v6513 = vsel %vm5417, %v6505, 0
        %6515 = vmatprep.subr.mxu0 0.0
        %6516 = vmatpush1.msra.mxu0 0.0
        %6517 = vmatprep.subr.mxu0 0.0
        %6518 = vmatpush1.msra.mxu0 0.0
        %6519 = vmatprep.subr.mxu0 0.0
        %6520 = vmatpush1.msra.mxu0 0.0
        %6521 = vmatprep.subr.mxu0 0.0
        %6522 = vmatpush1.msra.mxu0 0.0
        %6523 = vmatprep.subr.mxu0 0.0
        %6524 = vmatpush1.msra.mxu0 0.0
        %6525 = vmatprep.subr.mxu0 0.0
        %6526 = vmatpush1.msra.mxu0 0.0
        %6527 = vmatprep.subr.mxu0 0.0
        %6528 = vmatpush1.msra.mxu0 0.0
        %6529 = vmatprep.subr.mxu0 0.0
        %6530 = vmatpush1.msra.mxu0 0.0
        %6531 = vmatprep.subr.mxu0 0.0
        %6532 = vmatpush1.msra.mxu0 0.0
        %6533 = vmatprep.subr.mxu0 0.0
        %6534 = vmatpush1.msra.mxu0 0.0
        %6535 = vmatprep.subr.mxu0 0.0
        %6536 = vmatpush1.msra.mxu0 0.0
        %6537 = vmatprep.subr.mxu0 0.0
        %6538 = vmatpush1.msra.mxu0 0.0
        %6539 = vmatprep.subr.mxu0 0.0
        %6540 = vmatpush1.msra.mxu0 0.0
        %6541 = vmatprep.subr.mxu0 0.0
        %6542 = vmatpush1.msra.mxu0 %v6513
        %6543 = vmatprep.subr.mxu0 0.0
        %6544 = vmatpush1.msra.mxu0 %v6504
        %6545 = vmatprep.subr.mxu0 0.0
        %6546 = vmatpush1.msra.mxu0 %v6503
        %6547 = vmatprep.subr.mxu0 0.0
        %6548 = vmatpush2.msra.mxu0 0.0
        %6549 = vmatprep.subr.mxu0 0.0
        %6550 = vmatpush2.msra.mxu0 0.0
        %6551 = vmatprep.subr.mxu0 0.0
        %6552 = vmatpush2.msra.mxu0 0.0
        %6553 = vmatprep.subr.mxu0 0.0
        %6554 = vmatpush2.msra.mxu0 0.0
        %6555 = vmatprep.subr.mxu0 0.0
        %6556 = vmatpush2.msra.mxu0 0.0
        %6557 = vmatprep.subr.mxu0 0.0
        %6558 = vmatpush2.msra.mxu0 0.0
        %6559 = vmatprep.subr.mxu0 0.0
        %6560 = vmatpush2.msra.mxu0 0.0
        %6561 = vmatprep.subr.mxu0 0.0
        %6562 = vmatpush2.msra.mxu0 0.0
        %6563 = vmatprep.subr.mxu0 0.0
        %6564 = vmatpush2.msra.mxu0 0.0
        %6565 = vmatprep.subr.mxu0 0.0
        %6566 = vmatpush2.msra.mxu0 0.0
        %6567 = vmatprep.subr.mxu0 0.0
        %6568 = vmatpush2.msra.mxu0 0.0
        %6569 = vmatprep.subr.mxu0 0.0
        %6570 = vmatpush2.msra.mxu0 0.0
        %6571 = vmatprep.subr.mxu0 0.0
        %6572 = vmatpush2.msra.mxu0 0.0
        %6573 = vmatprep.subr.mxu0 0.0
        %6574 = vmatpush2.msra.mxu0 0.0
        %6575 = vmatprep.subr.mxu0 0.0
        %6576 = vmatpush2.msra.mxu0 0.0
        %6577 = vmatprep.subr.mxu0 0.0
        %6578 = vmatpush2.msra.mxu0 0.0
        %6579 = vmatprep.mubr.f32.mxu0 0.0
        %6580 = vmatmul.mubr.f32.gmra.mxu0 %v6507
        %v6581 = vpop.f32.mrf.mxu0
        %v6582 = vadd.f32 0.0, %v6581
        %v6583 = vpop.f32.mrf.mxu0
        %6584 = vmatprep.mubr.f32.mxu0 0.0
        %6585 = vmatmul.mubr.f32.gmra.mxu0 %v6510
        %v6586 = vpop.f32.mrf.mxu0
        %v6587 = vadd.f32 0.0, %v6586
        %v6588 = vpop.f32.mrf.mxu0
        %6589 = vdwg.mxu0
        %v6590 = vadd.f32 %v6498, %v6582
        %v6591 = vadd.f32 %v6499, %v6587
        %v6592 = vld [vmem:[#allocation4 + $0x6] sm:$0xff]
        %v6593 = vld [vmem:[#allocation4 + $0xe] sm:$0xff]
        %s6594 = scalar_lea.vmem %s7, 312
        %v6595 = vld [vmem:[%s6594] sm:$0xff]
        %v6596 = vld [vmem:[%s6594 + $0x8] sm:$0xff]
        %v6597 = vld [vmem:[%s6594 + $0x10] sm:$0x3f]
        %v6599 = vsel %vm5410, %v6592, 0
        %v6602 = vsel %vm5410, %v6593, 0
        %v6605 = vsel %vm5417, %v6597, 0
        %6607 = vmatprep.subr.mxu0 0.0
        %6608 = vmatpush1.msra.mxu0 0.0
        %6609 = vmatprep.subr.mxu0 0.0
        %6610 = vmatpush1.msra.mxu0 0.0
        %6611 = vmatprep.subr.mxu0 0.0
        %6612 = vmatpush1.msra.mxu0 0.0
        %6613 = vmatprep.subr.mxu0 0.0
        %6614 = vmatpush1.msra.mxu0 0.0
        %6615 = vmatprep.subr.mxu0 0.0
        %6616 = vmatpush1.msra.mxu0 0.0
        %6617 = vmatprep.subr.mxu0 0.0
        %6618 = vmatpush1.msra.mxu0 0.0
        %6619 = vmatprep.subr.mxu0 0.0
        %6620 = vmatpush1.msra.mxu0 0.0
        %6621 = vmatprep.subr.mxu0 0.0
        %6622 = vmatpush1.msra.mxu0 0.0
        %6623 = vmatprep.subr.mxu0 0.0
        %6624 = vmatpush1.msra.mxu0 0.0
        %6625 = vmatprep.subr.mxu0 0.0
        %6626 = vmatpush1.msra.mxu0 0.0
        %6627 = vmatprep.subr.mxu0 0.0
        %6628 = vmatpush1.msra.mxu0 0.0
        %6629 = vmatprep.subr.mxu0 0.0
        %6630 = vmatpush1.msra.mxu0 0.0
        %6631 = vmatprep.subr.mxu0 0.0
        %6632 = vmatpush1.msra.mxu0 0.0
        %6633 = vmatprep.subr.mxu0 0.0
        %6634 = vmatpush1.msra.mxu0 %v6605
        %6635 = vmatprep.subr.mxu0 0.0
        %6636 = vmatpush1.msra.mxu0 %v6596
        %6637 = vmatprep.subr.mxu0 0.0
        %6638 = vmatpush1.msra.mxu0 %v6595
        %6639 = vmatprep.subr.mxu0 0.0
        %6640 = vmatpush2.msra.mxu0 0.0
        %6641 = vmatprep.subr.mxu0 0.0
        %6642 = vmatpush2.msra.mxu0 0.0
        %6643 = vmatprep.subr.mxu0 0.0
        %6644 = vmatpush2.msra.mxu0 0.0
        %6645 = vmatprep.subr.mxu0 0.0
        %6646 = vmatpush2.msra.mxu0 0.0
        %6647 = vmatprep.subr.mxu0 0.0
        %6648 = vmatpush2.msra.mxu0 0.0
        %6649 = vmatprep.subr.mxu0 0.0
        %6650 = vmatpush2.msra.mxu0 0.0
        %6651 = vmatprep.subr.mxu0 0.0
        %6652 = vmatpush2.msra.mxu0 0.0
        %6653 = vmatprep.subr.mxu0 0.0
        %6654 = vmatpush2.msra.mxu0 0.0
        %6655 = vmatprep.subr.mxu0 0.0
        %6656 = vmatpush2.msra.mxu0 0.0
        %6657 = vmatprep.subr.mxu0 0.0
        %6658 = vmatpush2.msra.mxu0 0.0
        %6659 = vmatprep.subr.mxu0 0.0
        %6660 = vmatpush2.msra.mxu0 0.0
        %6661 = vmatprep.subr.mxu0 0.0
        %6662 = vmatpush2.msra.mxu0 0.0
        %6663 = vmatprep.subr.mxu0 0.0
        %6664 = vmatpush2.msra.mxu0 0.0
        %6665 = vmatprep.subr.mxu0 0.0
        %6666 = vmatpush2.msra.mxu0 0.0
        %6667 = vmatprep.subr.mxu0 0.0
        %6668 = vmatpush2.msra.mxu0 0.0
        %6669 = vmatprep.subr.mxu0 0.0
        %6670 = vmatpush2.msra.mxu0 0.0
        %6671 = vmatprep.mubr.f32.mxu0 0.0
        %6672 = vmatmul.mubr.f32.gmra.mxu0 %v6599
        %v6673 = vpop.f32.mrf.mxu0
        %v6674 = vadd.f32 0.0, %v6673
        %v6675 = vpop.f32.mrf.mxu0
        %6676 = vmatprep.mubr.f32.mxu0 0.0
        %6677 = vmatmul.mubr.f32.gmra.mxu0 %v6602
        %v6678 = vpop.f32.mrf.mxu0
        %v6679 = vadd.f32 0.0, %v6678
        %v6680 = vpop.f32.mrf.mxu0
        %6681 = vdwg.mxu0
        %v6682 = vadd.f32 %v6590, %v6674
        %v6683 = vadd.f32 %v6591, %v6679
        %v6684 = vxor.u32 %v6682, 2147483648
        %v6685 = vxor.u32 %v6683, 2147483648
        %v6686 = vmul.f32 %v6684, 1.442695
        %v6687 = vpow.pop %v6686
        %v6688 = vmul.f32 %v6685, 1.442695
        %v6689 = vpow.pop %v6688
        %v6690 = vadd.f32 %v6687, 1.0
        %v6691 = vadd.f32 %v6689, 1.0
        %v6692 = vrcp.pop %v6690
        %v6693 = vmul.f32 1.0, %v6692
        %v6694 = vrcp.pop %v6691
        %v6695 = vmul.f32 1.0, %v6694
        %v6696 = vlaneseq
        %v6697 = vshrl.u32 %v6696, 7
        %v6698 = vsub.s32 0, %v6697
        %v6699 = vrot.slane %v6693, %v6698
        %6701 = vbcast.lane.b32.xlu0 %v6699, 256
        %v6702 = vpop.permute.xlu0 %6701
        %s6704 = sor.u32 256, 8
        %6705 = vbcast.lane.b32.xlu0 %v6699, %s6704
        %v6706 = vpop.permute.xlu0 %6705
        %v6707 = vlaneseq
        %v6708 = vshrl.u32 %v6707, 7
        %v6709 = vsub.s32 1, %v6708
        %v6710 = vrot.slane %v6693, %v6709
        %6712 = vbcast.lane.b32.xlu0 %v6710, 256
        %v6713 = vpop.permute.xlu0 %6712
        %s6715 = sor.u32 256, 8
        %6716 = vbcast.lane.b32.xlu0 %v6710, %s6715
        %v6717 = vpop.permute.xlu0 %6716
        %v6718 = vlaneseq
        %v6719 = vshrl.u32 %v6718, 7
        %v6720 = vsub.s32 2, %v6719
        %v6721 = vrot.slane %v6693, %v6720
        %6723 = vbcast.lane.b32.xlu0 %v6721, 256
        %v6724 = vpop.permute.xlu0 %6723
        %s6726 = sor.u32 256, 8
        %6727 = vbcast.lane.b32.xlu0 %v6721, %s6726
        %v6728 = vpop.permute.xlu0 %6727
        %v6729 = vlaneseq
        %v6730 = vshrl.u32 %v6729, 7
        %v6731 = vsub.s32 3, %v6730
        %v6732 = vrot.slane %v6693, %v6731
        %6734 = vbcast.lane.b32.xlu0 %v6732, 256
        %v6735 = vpop.permute.xlu0 %6734
        %s6737 = sor.u32 256, 8
        %6738 = vbcast.lane.b32.xlu0 %v6732, %s6737
        %v6739 = vpop.permute.xlu0 %6738
        %v6740 = vlaneseq
        %v6741 = vshrl.u32 %v6740, 7
        %v6742 = vsub.s32 4, %v6741
        %v6743 = vrot.slane %v6693, %v6742
        %6745 = vbcast.lane.b32.xlu0 %v6743, 256
        %v6746 = vpop.permute.xlu0 %6745
        %s6748 = sor.u32 256, 8
        %6749 = vbcast.lane.b32.xlu0 %v6743, %s6748
        %v6750 = vpop.permute.xlu0 %6749
        %v6751 = vlaneseq
        %v6752 = vshrl.u32 %v6751, 7
        %v6753 = vsub.s32 5, %v6752
        %v6754 = vrot.slane %v6693, %v6753
        %6756 = vbcast.lane.b32.xlu0 %v6754, 256
        %v6757 = vpop.permute.xlu0 %6756
        %s6759 = sor.u32 256, 8
        %6760 = vbcast.lane.b32.xlu0 %v6754, %s6759
        %v6761 = vpop.permute.xlu0 %6760
        %v6762 = vlaneseq
        %v6763 = vshrl.u32 %v6762, 7
        %v6764 = vsub.s32 6, %v6763
        %v6765 = vrot.slane %v6693, %v6764
        %6767 = vbcast.lane.b32.xlu0 %v6765, 256
        %v6768 = vpop.permute.xlu0 %6767
        %s6770 = sor.u32 256, 8
        %6771 = vbcast.lane.b32.xlu0 %v6765, %s6770
        %v6772 = vpop.permute.xlu0 %6771
        %v6773 = vlaneseq
        %v6774 = vshrl.u32 %v6773, 7
        %v6775 = vsub.s32 7, %v6774
        %v6776 = vrot.slane %v6693, %v6775
        %6778 = vbcast.lane.b32.xlu0 %v6776, 256
        %v6779 = vpop.permute.xlu0 %6778
        %s6781 = sor.u32 256, 8
        %6782 = vbcast.lane.b32.xlu0 %v6776, %s6781
        %v6783 = vpop.permute.xlu0 %6782
        %v6784 = vlaneseq
        %v6785 = vshrl.u32 %v6784, 7
        %v6786 = vsub.s32 0, %v6785
        %v6787 = vrot.slane %v6695, %v6786
        %6789 = vbcast.lane.b32.xlu0 %v6787, 256
        %v6790 = vpop.permute.xlu0 %6789
        %s6792 = sor.u32 256, 8
        %6793 = vbcast.lane.b32.xlu0 %v6787, %s6792
        %v6794 = vpop.permute.xlu0 %6793
        %v6795 = vlaneseq
        %v6796 = vshrl.u32 %v6795, 7
        %v6797 = vsub.s32 1, %v6796
        %v6798 = vrot.slane %v6695, %v6797
        %6800 = vbcast.lane.b32.xlu0 %v6798, 256
        %v6801 = vpop.permute.xlu0 %6800
        %s6803 = sor.u32 256, 8
        %6804 = vbcast.lane.b32.xlu0 %v6798, %s6803
        %v6805 = vpop.permute.xlu0 %6804
        %v6806 = vlaneseq
        %v6807 = vshrl.u32 %v6806, 7
        %v6808 = vsub.s32 2, %v6807
        %v6809 = vrot.slane %v6695, %v6808
        %6811 = vbcast.lane.b32.xlu0 %v6809, 256
        %v6812 = vpop.permute.xlu0 %6811
        %s6814 = sor.u32 256, 8
        %6815 = vbcast.lane.b32.xlu0 %v6809, %s6814
        %v6816 = vpop.permute.xlu0 %6815
        %v6817 = vlaneseq
        %v6818 = vshrl.u32 %v6817, 7
        %v6819 = vsub.s32 3, %v6818
        %v6820 = vrot.slane %v6695, %v6819
        %6822 = vbcast.lane.b32.xlu0 %v6820, 256
        %v6823 = vpop.permute.xlu0 %6822
        %s6825 = sor.u32 256, 8
        %6826 = vbcast.lane.b32.xlu0 %v6820, %s6825
        %v6827 = vpop.permute.xlu0 %6826
        %v6828 = vlaneseq
        %v6829 = vshrl.u32 %v6828, 7
        %v6830 = vsub.s32 4, %v6829
        %v6831 = vrot.slane %v6695, %v6830
        %6833 = vbcast.lane.b32.xlu0 %v6831, 256
        %v6834 = vpop.permute.xlu0 %6833
        %s6836 = sor.u32 256, 8
        %6837 = vbcast.lane.b32.xlu0 %v6831, %s6836
        %v6838 = vpop.permute.xlu0 %6837
        %v6839 = vlaneseq
        %v6840 = vshrl.u32 %v6839, 7
        %v6841 = vsub.s32 5, %v6840
        %v6842 = vrot.slane %v6695, %v6841
        %6844 = vbcast.lane.b32.xlu0 %v6842, 256
        %v6845 = vpop.permute.xlu0 %6844
        %s6847 = sor.u32 256, 8
        %6848 = vbcast.lane.b32.xlu0 %v6842, %s6847
        %v6849 = vpop.permute.xlu0 %6848
        %v6850 = vlaneseq
        %v6851 = vshrl.u32 %v6850, 7
        %v6852 = vsub.s32 6, %v6851
        %v6853 = vrot.slane %v6695, %v6852
        %6855 = vbcast.lane.b32.xlu0 %v6853, 256
        %v6856 = vpop.permute.xlu0 %6855
        %s6858 = sor.u32 256, 8
        %6859 = vbcast.lane.b32.xlu0 %v6853, %s6858
        %v6860 = vpop.permute.xlu0 %6859
        %v6861 = vlaneseq
        %v6862 = vshrl.u32 %v6861, 7
        %v6863 = vsub.s32 7, %v6862
        %v6864 = vrot.slane %v6695, %v6863
        %6866 = vbcast.lane.b32.xlu0 %v6864, 256
        %v6867 = vpop.permute.xlu0 %6866
        %s6869 = sor.u32 256, 8
        %6870 = vbcast.lane.b32.xlu0 %v6864, %s6869
        %v6871 = vpop.permute.xlu0 %6870
        %v6872 = vmul.f32 %v4720, %v6702
        %v6873 = vmul.f32 %v4721, %v6706
        %v6874 = vmul.f32 %v4722, %v6713
        %v6875 = vmul.f32 %v4723, %v6717
        %v6876 = vmul.f32 %v4724, %v6724
        %v6877 = vmul.f32 %v4725, %v6728
        %v6878 = vmul.f32 %v4726, %v6735
        %v6879 = vmul.f32 %v4727, %v6739
        %v6880 = vmul.f32 %v4728, %v6746
        %v6881 = vmul.f32 %v4729, %v6750
        %v6882 = vmul.f32 %v4730, %v6757
        %v6883 = vmul.f32 %v4731, %v6761
        %v6884 = vmul.f32 %v4732, %v6768
        %v6885 = vmul.f32 %v4733, %v6772
        %v6886 = vmul.f32 %v4734, %v6779
        %v6887 = vmul.f32 %v4735, %v6783
        %v6888 = vmul.f32 %v4736, %v6790
        %v6889 = vmul.f32 %v4737, %v6794
        %v6890 = vmul.f32 %v4738, %v6801
        %v6891 = vmul.f32 %v4739, %v6805
        %v6892 = vmul.f32 %v4740, %v6812
        %v6893 = vmul.f32 %v4741, %v6816
        %v6894 = vmul.f32 %v4742, %v6823
        %v6895 = vmul.f32 %v4743, %v6827
        %v6896 = vmul.f32 %v4744, %v6834
        %v6897 = vmul.f32 %v4745, %v6838
        %v6898 = vmul.f32 %v4746, %v6845
        %v6899 = vmul.f32 %v4747, %v6849
        %v6900 = vmul.f32 %v4748, %v6856
        %v6901 = vmul.f32 %v4749, %v6860
        %v6902 = vmul.f32 %v4750, %v6867
        %v6903 = vmul.f32 %v4751, %v6871
        %v6904 = vld [vmem:[%s8] sm:$0xf]
        %v6905 = vld [vmem:[%s9] sm:$0x1]
        %v6907 = vlaneseq
        %v6908 = vshrl.u32 %v6907, 7
        %v6909 = vsub.s32 0, %v6908
        %v6910 = vrot.slane %v6905, %v6909
        %v6913 = vsel %vm495, %v6904, 0
        %6915 = vmatprep.subr.mxu0 0.0
        %6916 = vmatpush1.msra.mxu0 0.0
        %6917 = vmatprep.subr.mxu0 0.0
        %6918 = vmatpush1.msra.mxu0 0.0
        %6919 = vmatprep.subr.mxu0 0.0
        %6920 = vmatpush1.msra.mxu0 0.0
        %6921 = vmatprep.subr.mxu0 0.0
        %6922 = vmatpush1.msra.mxu0 0.0
        %6923 = vmatprep.subr.mxu0 0.0
        %6924 = vmatpush1.msra.mxu0 0.0
        %6925 = vmatprep.subr.mxu0 0.0
        %6926 = vmatpush1.msra.mxu0 0.0
        %6927 = vmatprep.subr.mxu0 0.0
        %6928 = vmatpush1.msra.mxu0 0.0
        %6929 = vmatprep.subr.mxu0 0.0
        %6930 = vmatpush1.msra.mxu0 0.0
        %6931 = vmatprep.subr.mxu0 0.0
        %6932 = vmatpush1.msra.mxu0 0.0
        %6933 = vmatprep.subr.mxu0 0.0
        %6934 = vmatpush1.msra.mxu0 0.0
        %6935 = vmatprep.subr.mxu0 0.0
        %6936 = vmatpush1.msra.mxu0 0.0
        %6937 = vmatprep.subr.mxu0 0.0
        %6938 = vmatpush1.msra.mxu0 0.0
        %6939 = vmatprep.subr.mxu0 0.0
        %6940 = vmatpush1.msra.mxu0 0.0
        %6941 = vmatprep.subr.mxu0 0.0
        %6942 = vmatpush1.msra.mxu0 0.0
        %6943 = vmatprep.subr.mxu0 0.0
        %6944 = vmatpush1.msra.mxu0 0.0
        %6945 = vmatprep.subr.mxu0 0.0
        %6946 = vmatpush1.msra.mxu0 %v6913
        %6947 = vmatprep.subr.mxu0 0.0
        %6948 = vmatpush2.msra.mxu0 0.0
        %6949 = vmatprep.subr.mxu0 0.0
        %6950 = vmatpush2.msra.mxu0 0.0
        %6951 = vmatprep.subr.mxu0 0.0
        %6952 = vmatpush2.msra.mxu0 0.0
        %6953 = vmatprep.subr.mxu0 0.0
        %6954 = vmatpush2.msra.mxu0 0.0
        %6955 = vmatprep.subr.mxu0 0.0
        %6956 = vmatpush2.msra.mxu0 0.0
        %6957 = vmatprep.subr.mxu0 0.0
        %6958 = vmatpush2.msra.mxu0 0.0
        %6959 = vmatprep.subr.mxu0 0.0
        %6960 = vmatpush2.msra.mxu0 0.0
        %6961 = vmatprep.subr.mxu0 0.0
        %6962 = vmatpush2.msra.mxu0 0.0
        %6963 = vmatprep.subr.mxu0 0.0
        %6964 = vmatpush2.msra.mxu0 0.0
        %6965 = vmatprep.subr.mxu0 0.0
        %6966 = vmatpush2.msra.mxu0 0.0
        %6967 = vmatprep.subr.mxu0 0.0
        %6968 = vmatpush2.msra.mxu0 0.0
        %6969 = vmatprep.subr.mxu0 0.0
        %6970 = vmatpush2.msra.mxu0 0.0
        %6971 = vmatprep.subr.mxu0 0.0
        %6972 = vmatpush2.msra.mxu0 0.0
        %6973 = vmatprep.subr.mxu0 0.0
        %6974 = vmatpush2.msra.mxu0 0.0
        %6975 = vmatprep.subr.mxu0 0.0
        %6976 = vmatpush2.msra.mxu0 0.0
        %6977 = vmatprep.subr.mxu0 0.0
        %6978 = vmatpush2.msra.mxu0 0.0
        %6979 = vmatprep.mubr.f32.mxu0 0.0
        %6980 = vmatmul.mubr.f32.gmra.mxu0 %v400
        %v6981 = vpop.f32.mrf.mxu0
        %v6982 = vadd.f32 %v6910, %v6981
        %v6983 = vpop.f32.mrf.mxu0
        %6984 = vmatprep.mubr.f32.mxu0 0.0
        %6985 = vmatmul.mubr.f32.gmra.mxu0 %v403
        %v6986 = vpop.f32.mrf.mxu0
        %v6987 = vadd.f32 %v6910, %v6986
        %v6988 = vpop.f32.mrf.mxu0
        %6989 = vmatprep.mubr.f32.mxu0 0.0
        %6990 = vmatmul.mubr.f32.gmra.mxu0 %v406
        %v6991 = vpop.f32.mrf.mxu0
        %v6992 = vadd.f32 %v6910, %v6991
        %v6993 = vpop.f32.mrf.mxu0
        %6994 = vmatprep.mubr.f32.mxu0 0.0
        %6995 = vmatmul.mubr.f32.gmra.mxu0 %v409
        %v6996 = vpop.f32.mrf.mxu0
        %v6997 = vadd.f32 %v6910, %v6996
        %v6998 = vpop.f32.mrf.mxu0
        %6999 = vmatprep.mubr.f32.mxu0 0.0
        %7000 = vmatmul.mubr.f32.gmra.mxu0 %v412
        %v7001 = vpop.f32.mrf.mxu0
        %v7002 = vadd.f32 %v6910, %v7001
        %v7003 = vpop.f32.mrf.mxu0
        %7004 = vmatprep.mubr.f32.mxu0 0.0
        %7005 = vmatmul.mubr.f32.gmra.mxu0 %v415
        %v7006 = vpop.f32.mrf.mxu0
        %v7007 = vadd.f32 %v6910, %v7006
        %v7008 = vpop.f32.mrf.mxu0
        %7009 = vmatprep.mubr.f32.mxu0 0.0
        %7010 = vmatmul.mubr.f32.gmra.mxu0 %v418
        %v7011 = vpop.f32.mrf.mxu0
        %v7012 = vadd.f32 %v6910, %v7011
        %v7013 = vpop.f32.mrf.mxu0
        %7014 = vmatprep.mubr.f32.mxu0 0.0
        %7015 = vmatmul.mubr.f32.gmra.mxu0 %v421
        %v7016 = vpop.f32.mrf.mxu0
        %v7017 = vadd.f32 %v6910, %v7016
        %v7018 = vpop.f32.mrf.mxu0
        %7019 = vmatprep.mubr.f32.mxu0 0.0
        %7020 = vmatmul.mubr.f32.gmra.mxu0 %v424
        %v7021 = vpop.f32.mrf.mxu0
        %v7022 = vadd.f32 %v6910, %v7021
        %v7023 = vpop.f32.mrf.mxu0
        %7024 = vmatprep.mubr.f32.mxu0 0.0
        %7025 = vmatmul.mubr.f32.gmra.mxu0 %v427
        %v7026 = vpop.f32.mrf.mxu0
        %v7027 = vadd.f32 %v6910, %v7026
        %v7028 = vpop.f32.mrf.mxu0
        %7029 = vmatprep.mubr.f32.mxu0 0.0
        %7030 = vmatmul.mubr.f32.gmra.mxu0 %v430
        %v7031 = vpop.f32.mrf.mxu0
        %v7032 = vadd.f32 %v6910, %v7031
        %v7033 = vpop.f32.mrf.mxu0
        %7034 = vmatprep.mubr.f32.mxu0 0.0
        %7035 = vmatmul.mubr.f32.gmra.mxu0 %v433
        %v7036 = vpop.f32.mrf.mxu0
        %v7037 = vadd.f32 %v6910, %v7036
        %v7038 = vpop.f32.mrf.mxu0
        %7039 = vmatprep.mubr.f32.mxu0 0.0
        %7040 = vmatmul.mubr.f32.gmra.mxu0 %v436
        %v7041 = vpop.f32.mrf.mxu0
        %v7042 = vadd.f32 %v6910, %v7041
        %v7043 = vpop.f32.mrf.mxu0
        %7044 = vmatprep.mubr.f32.mxu0 0.0
        %7045 = vmatmul.mubr.f32.gmra.mxu0 %v439
        %v7046 = vpop.f32.mrf.mxu0
        %v7047 = vadd.f32 %v6910, %v7046
        %v7048 = vpop.f32.mrf.mxu0
        %7049 = vmatprep.mubr.f32.mxu0 0.0
        %7050 = vmatmul.mubr.f32.gmra.mxu0 %v442
        %v7051 = vpop.f32.mrf.mxu0
        %v7052 = vadd.f32 %v6910, %v7051
        %v7053 = vpop.f32.mrf.mxu0
        %7054 = vmatprep.mubr.f32.mxu0 0.0
        %7055 = vmatmul.mubr.f32.gmra.mxu0 %v445
        %v7056 = vpop.f32.mrf.mxu0
        %v7057 = vadd.f32 %v6910, %v7056
        %v7058 = vpop.f32.mrf.mxu0
        %7059 = vmatprep.mubr.f32.mxu0 0.0
        %7060 = vmatmul.mubr.f32.gmra.mxu0 %v448
        %v7061 = vpop.f32.mrf.mxu0
        %v7062 = vadd.f32 %v6910, %v7061
        %v7063 = vpop.f32.mrf.mxu0
        %7064 = vmatprep.mubr.f32.mxu0 0.0
        %7065 = vmatmul.mubr.f32.gmra.mxu0 %v451
        %v7066 = vpop.f32.mrf.mxu0
        %v7067 = vadd.f32 %v6910, %v7066
        %v7068 = vpop.f32.mrf.mxu0
        %7069 = vmatprep.mubr.f32.mxu0 0.0
        %7070 = vmatmul.mubr.f32.gmra.mxu0 %v454
        %v7071 = vpop.f32.mrf.mxu0
        %v7072 = vadd.f32 %v6910, %v7071
        %v7073 = vpop.f32.mrf.mxu0
        %7074 = vmatprep.mubr.f32.mxu0 0.0
        %7075 = vmatmul.mubr.f32.gmra.mxu0 %v457
        %v7076 = vpop.f32.mrf.mxu0
        %v7077 = vadd.f32 %v6910, %v7076
        %v7078 = vpop.f32.mrf.mxu0
        %7079 = vmatprep.mubr.f32.mxu0 0.0
        %7080 = vmatmul.mubr.f32.gmra.mxu0 %v460
        %v7081 = vpop.f32.mrf.mxu0
        %v7082 = vadd.f32 %v6910, %v7081
        %v7083 = vpop.f32.mrf.mxu0
        %7084 = vmatprep.mubr.f32.mxu0 0.0
        %7085 = vmatmul.mubr.f32.gmra.mxu0 %v463
        %v7086 = vpop.f32.mrf.mxu0
        %v7087 = vadd.f32 %v6910, %v7086
        %v7088 = vpop.f32.mrf.mxu0
        %7089 = vmatprep.mubr.f32.mxu0 0.0
        %7090 = vmatmul.mubr.f32.gmra.mxu0 %v466
        %v7091 = vpop.f32.mrf.mxu0
        %v7092 = vadd.f32 %v6910, %v7091
        %v7093 = vpop.f32.mrf.mxu0
        %7094 = vmatprep.mubr.f32.mxu0 0.0
        %7095 = vmatmul.mubr.f32.gmra.mxu0 %v469
        %v7096 = vpop.f32.mrf.mxu0
        %v7097 = vadd.f32 %v6910, %v7096
        %v7098 = vpop.f32.mrf.mxu0
        %7099 = vmatprep.mubr.f32.mxu0 0.0
        %7100 = vmatmul.mubr.f32.gmra.mxu0 %v472
        %v7101 = vpop.f32.mrf.mxu0
        %v7102 = vadd.f32 %v6910, %v7101
        %v7103 = vpop.f32.mrf.mxu0
        %7104 = vmatprep.mubr.f32.mxu0 0.0
        %7105 = vmatmul.mubr.f32.gmra.mxu0 %v475
        %v7106 = vpop.f32.mrf.mxu0
        %v7107 = vadd.f32 %v6910, %v7106
        %v7108 = vpop.f32.mrf.mxu0
        %7109 = vmatprep.mubr.f32.mxu0 0.0
        %7110 = vmatmul.mubr.f32.gmra.mxu0 %v478
        %v7111 = vpop.f32.mrf.mxu0
        %v7112 = vadd.f32 %v6910, %v7111
        %v7113 = vpop.f32.mrf.mxu0
        %7114 = vmatprep.mubr.f32.mxu0 0.0
        %7115 = vmatmul.mubr.f32.gmra.mxu0 %v481
        %v7116 = vpop.f32.mrf.mxu0
        %v7117 = vadd.f32 %v6910, %v7116
        %v7118 = vpop.f32.mrf.mxu0
        %7119 = vmatprep.mubr.f32.mxu0 0.0
        %7120 = vmatmul.mubr.f32.gmra.mxu0 %v484
        %v7121 = vpop.f32.mrf.mxu0
        %v7122 = vadd.f32 %v6910, %v7121
        %v7123 = vpop.f32.mrf.mxu0
        %7124 = vmatprep.mubr.f32.mxu0 0.0
        %7125 = vmatmul.mubr.f32.gmra.mxu0 %v487
        %v7126 = vpop.f32.mrf.mxu0
        %v7127 = vadd.f32 %v6910, %v7126
        %v7128 = vpop.f32.mrf.mxu0
        %7129 = vmatprep.mubr.f32.mxu0 0.0
        %7130 = vmatmul.mubr.f32.gmra.mxu0 %v490
        %v7131 = vpop.f32.mrf.mxu0
        %v7132 = vadd.f32 %v6910, %v7131
        %v7133 = vpop.f32.mrf.mxu0
        %7134 = vmatprep.mubr.f32.mxu0 0.0
        %7135 = vmatmul.mubr.f32.gmra.mxu0 %v493
        %v7136 = vpop.f32.mrf.mxu0
        %v7137 = vadd.f32 %v6910, %v7136
        %v7138 = vpop.f32.mrf.mxu0
        %7139 = vdwg.mxu0
        %v7140 = vadd.f32 %v6872, %v6982
        %v7141 = vadd.f32 %v6873, %v6987
        %v7142 = vadd.f32 %v6874, %v6992
        %v7143 = vadd.f32 %v6875, %v6997
        %v7144 = vadd.f32 %v6876, %v7002
        %v7145 = vadd.f32 %v6877, %v7007
        %v7146 = vadd.f32 %v6878, %v7012
        %v7147 = vadd.f32 %v6879, %v7017
        %v7148 = vadd.f32 %v6880, %v7022
        %v7149 = vadd.f32 %v6881, %v7027
        %v7150 = vadd.f32 %v6882, %v7032
        %v7151 = vadd.f32 %v6883, %v7037
        %v7152 = vadd.f32 %v6884, %v7042
        %v7153 = vadd.f32 %v6885, %v7047
        %v7154 = vadd.f32 %v6886, %v7052
        %v7155 = vadd.f32 %v6887, %v7057
        %v7156 = vadd.f32 %v6888, %v7062
        %v7157 = vadd.f32 %v6889, %v7067
        %v7158 = vadd.f32 %v6890, %v7072
        %v7159 = vadd.f32 %v6891, %v7077
        %v7160 = vadd.f32 %v6892, %v7082
        %v7161 = vadd.f32 %v6893, %v7087
        %v7162 = vadd.f32 %v6894, %v7092
        %v7163 = vadd.f32 %v6895, %v7097
        %v7164 = vadd.f32 %v6896, %v7102
        %v7165 = vadd.f32 %v6897, %v7107
        %v7166 = vadd.f32 %v6898, %v7112
        %v7167 = vadd.f32 %v6899, %v7117
        %v7168 = vadd.f32 %v6900, %v7122
        %v7169 = vadd.f32 %v6901, %v7127
        %v7170 = vadd.f32 %v6902, %v7132
        %v7171 = vadd.f32 %v6903, %v7137
        %vm7172 = vcmp.ge.f32.partialorder %v7140, 0.0
        %vm7173 = vcmp.ge.f32.partialorder %v7141, 0.0
        %vm7174 = vcmp.ge.f32.partialorder %v7142, 0.0
        %vm7175 = vcmp.ge.f32.partialorder %v7143, 0.0
        %vm7176 = vcmp.ge.f32.partialorder %v7144, 0.0
        %vm7177 = vcmp.ge.f32.partialorder %v7145, 0.0
        %vm7178 = vcmp.ge.f32.partialorder %v7146, 0.0
        %vm7179 = vcmp.ge.f32.partialorder %v7147, 0.0
        %vm7180 = vcmp.ge.f32.partialorder %v7148, 0.0
        %vm7181 = vcmp.ge.f32.partialorder %v7149, 0.0
        %vm7182 = vcmp.ge.f32.partialorder %v7150, 0.0
        %vm7183 = vcmp.ge.f32.partialorder %v7151, 0.0
        %vm7184 = vcmp.ge.f32.partialorder %v7152, 0.0
        %vm7185 = vcmp.ge.f32.partialorder %v7153, 0.0
        %vm7186 = vcmp.ge.f32.partialorder %v7154, 0.0
        %vm7187 = vcmp.ge.f32.partialorder %v7155, 0.0
        %vm7188 = vcmp.ge.f32.partialorder %v7156, 0.0
        %vm7189 = vcmp.ge.f32.partialorder %v7157, 0.0
        %vm7190 = vcmp.ge.f32.partialorder %v7158, 0.0
        %vm7191 = vcmp.ge.f32.partialorder %v7159, 0.0
        %vm7192 = vcmp.ge.f32.partialorder %v7160, 0.0
        %vm7193 = vcmp.ge.f32.partialorder %v7161, 0.0
        %vm7194 = vcmp.ge.f32.partialorder %v7162, 0.0
        %vm7195 = vcmp.ge.f32.partialorder %v7163, 0.0
        %vm7196 = vcmp.ge.f32.partialorder %v7164, 0.0
        %vm7197 = vcmp.ge.f32.partialorder %v7165, 0.0
        %vm7198 = vcmp.ge.f32.partialorder %v7166, 0.0
        %vm7199 = vcmp.ge.f32.partialorder %v7167, 0.0
        %vm7200 = vcmp.ge.f32.partialorder %v7168, 0.0
        %vm7201 = vcmp.ge.f32.partialorder %v7169, 0.0
        %vm7202 = vcmp.ge.f32.partialorder %v7170, 0.0
        %vm7203 = vcmp.ge.f32.partialorder %v7171, 0.0
        %v7204 = vmul.f32 %v7140, 0.01
        %v7205 = vmul.f32 %v7141, 0.01
        %v7206 = vmul.f32 %v7142, 0.01
        %v7207 = vmul.f32 %v7143, 0.01
        %v7208 = vmul.f32 %v7144, 0.01
        %v7209 = vmul.f32 %v7145, 0.01
        %v7210 = vmul.f32 %v7146, 0.01
        %v7211 = vmul.f32 %v7147, 0.01
        %v7212 = vmul.f32 %v7148, 0.01
        %v7213 = vmul.f32 %v7149, 0.01
        %v7214 = vmul.f32 %v7150, 0.01
        %v7215 = vmul.f32 %v7151, 0.01
        %v7216 = vmul.f32 %v7152, 0.01
        %v7217 = vmul.f32 %v7153, 0.01
        %v7218 = vmul.f32 %v7154, 0.01
        %v7219 = vmul.f32 %v7155, 0.01
        %v7220 = vmul.f32 %v7156, 0.01
        %v7221 = vmul.f32 %v7157, 0.01
        %v7222 = vmul.f32 %v7158, 0.01
        %v7223 = vmul.f32 %v7159, 0.01
        %v7224 = vmul.f32 %v7160, 0.01
        %v7225 = vmul.f32 %v7161, 0.01
        %v7226 = vmul.f32 %v7162, 0.01
        %v7227 = vmul.f32 %v7163, 0.01
        %v7228 = vmul.f32 %v7164, 0.01
        %v7229 = vmul.f32 %v7165, 0.01
        %v7230 = vmul.f32 %v7166, 0.01
        %v7231 = vmul.f32 %v7167, 0.01
        %v7232 = vmul.f32 %v7168, 0.01
        %v7233 = vmul.f32 %v7169, 0.01
        %v7234 = vmul.f32 %v7170, 0.01
        %v7235 = vmul.f32 %v7171, 0.01
        %v7236 = vsel %vm7172, %v7140, %v7204
        %v7237 = vsel %vm7173, %v7141, %v7205
        %v7238 = vsel %vm7174, %v7142, %v7206
        %v7239 = vsel %vm7175, %v7143, %v7207
        %v7240 = vsel %vm7176, %v7144, %v7208
        %v7241 = vsel %vm7177, %v7145, %v7209
        %v7242 = vsel %vm7178, %v7146, %v7210
        %v7243 = vsel %vm7179, %v7147, %v7211
        %v7244 = vsel %vm7180, %v7148, %v7212
        %v7245 = vsel %vm7181, %v7149, %v7213
        %v7246 = vsel %vm7182, %v7150, %v7214
        %v7247 = vsel %vm7183, %v7151, %v7215
        %v7248 = vsel %vm7184, %v7152, %v7216
        %v7249 = vsel %vm7185, %v7153, %v7217
        %v7250 = vsel %vm7186, %v7154, %v7218
        %v7251 = vsel %vm7187, %v7155, %v7219
        %v7252 = vsel %vm7188, %v7156, %v7220
        %v7253 = vsel %vm7189, %v7157, %v7221
        %v7254 = vsel %vm7190, %v7158, %v7222
        %v7255 = vsel %vm7191, %v7159, %v7223
        %v7256 = vsel %vm7192, %v7160, %v7224
        %v7257 = vsel %vm7193, %v7161, %v7225
        %v7258 = vsel %vm7194, %v7162, %v7226
        %v7259 = vsel %vm7195, %v7163, %v7227
        %v7260 = vsel %vm7196, %v7164, %v7228
        %v7261 = vsel %vm7197, %v7165, %v7229
        %v7262 = vsel %vm7198, %v7166, %v7230
        %v7263 = vsel %vm7199, %v7167, %v7231
        %v7264 = vsel %vm7200, %v7168, %v7232
        %v7265 = vsel %vm7201, %v7169, %v7233
        %v7266 = vsel %vm7202, %v7170, %v7234
        %v7267 = vsel %vm7203, %v7171, %v7235
        %7268 = vxpose.xlu0.b32.start [1/16] %v7236, 128
        %7269 = vxpose.xlu0.b32.cont [2/16] %v7237, 128
        %7270 = vxpose.xlu0.b32.cont [3/16] %v7238, 128
        %7271 = vxpose.xlu0.b32.cont [4/16] %v7239, 128
        %7272 = vxpose.xlu0.b32.cont [5/16] %v7240, 128
        %7273 = vxpose.xlu0.b32.cont [6/16] %v7241, 128
        %7274 = vxpose.xlu0.b32.cont [7/16] %v7242, 128
        %7275 = vxpose.xlu0.b32.cont [8/16] %v7243, 128
        %7276 = vxpose.xlu0.b32.cont [9/16] %v7244, 128
        %7277 = vxpose.xlu0.b32.cont [10/16] %v7245, 128
        %7278 = vxpose.xlu0.b32.cont [11/16] %v7246, 128
        %7279 = vxpose.xlu0.b32.cont [12/16] %v7247, 128
        %7280 = vxpose.xlu0.b32.cont [13/16] %v7248, 128
        %7281 = vxpose.xlu0.b32.cont [14/16] %v7249, 128
        %7282 = vxpose.xlu0.b32.cont [15/16] %v7250, 128
        %7283 = vxpose.xlu0.b32.end [16/16] %v7251, 128
        %v7284 = vpop.trf.xlu0
        %v7285 = vpop.trf.xlu0
        %v7286 = vpop.trf.xlu0
        %v7287 = vpop.trf.xlu0
        %v7288 = vpop.trf.xlu0
        %v7289 = vpop.trf.xlu0
        %v7290 = vpop.trf.xlu0
        %v7291 = vpop.trf.xlu0
        %v7292 = vpop.trf.xlu0
        %v7293 = vpop.trf.xlu0
        %v7294 = vpop.trf.xlu0
        %v7295 = vpop.trf.xlu0
        %v7296 = vpop.trf.xlu0
        %v7297 = vpop.trf.xlu0
        %v7298 = vpop.trf.xlu0
        %v7299 = vpop.trf.xlu0
        %7300 = vxpose.xlu0.b32.start [1/16] %v7252, 128
        %7301 = vxpose.xlu0.b32.cont [2/16] %v7253, 128
        %7302 = vxpose.xlu0.b32.cont [3/16] %v7254, 128
        %7303 = vxpose.xlu0.b32.cont [4/16] %v7255, 128
        %7304 = vxpose.xlu0.b32.cont [5/16] %v7256, 128
        %7305 = vxpose.xlu0.b32.cont [6/16] %v7257, 128
        %7306 = vxpose.xlu0.b32.cont [7/16] %v7258, 128
        %7307 = vxpose.xlu0.b32.cont [8/16] %v7259, 128
        %7308 = vxpose.xlu0.b32.cont [9/16] %v7260, 128
        %7309 = vxpose.xlu0.b32.cont [10/16] %v7261, 128
        %7310 = vxpose.xlu0.b32.cont [11/16] %v7262, 128
        %7311 = vxpose.xlu0.b32.cont [12/16] %v7263, 128
        %7312 = vxpose.xlu0.b32.cont [13/16] %v7264, 128
        %7313 = vxpose.xlu0.b32.cont [14/16] %v7265, 128
        %7314 = vxpose.xlu0.b32.cont [15/16] %v7266, 128
        %7315 = vxpose.xlu0.b32.end [16/16] %v7267, 128
        %v7316 = vpop.trf.xlu0
        %v7317 = vpop.trf.xlu0
        %v7318 = vpop.trf.xlu0
        %v7319 = vpop.trf.xlu0
        %v7320 = vpop.trf.xlu0
        %v7321 = vpop.trf.xlu0
        %v7322 = vpop.trf.xlu0
        %v7323 = vpop.trf.xlu0
        %v7324 = vpop.trf.xlu0
        %v7325 = vpop.trf.xlu0
        %v7326 = vpop.trf.xlu0
        %v7327 = vpop.trf.xlu0
        %v7328 = vpop.trf.xlu0
        %v7329 = vpop.trf.xlu0
        %v7330 = vpop.trf.xlu0
        %v7331 = vpop.trf.xlu0
        %7332 = vst [vmem:[%s352] sm:$0xff] %v7284
        %7333 = vst [vmem:[%s352 + $0x8] sm:$0xff] %v7316
        %7334 = vst [vmem:[%s352 + $0x10] sm:$0xff] %v7285
        %7335 = vst [vmem:[%s352 + $0x18] sm:$0xff] %v7317
        %s7336 = sand.u32 %s247, 1
        %s7337 = scalar_lea.sflag [#allocation6], %s7336
        %s7338 = sand.u32 %s247, 1
        %s7339 = smul.addr %s7338, 32
        %s7340 = scalar_lea.vmem [#allocation5], %s7339
        // Predicated region
        $region61: #{tpu_custom_call.1} parent=59 // pred_check
          %p7341 = pneg %p257
        $region62: #{tpu_custom_call.1} parent=59 // pred_check_branch
          %7343 = sbr.rel (%p7341) target = $region64
        $region63: #{tpu_custom_call.1} parent=59 // pred_region
          %s7345 = ssub.s32 512, 512
          %7346 = vsyncadd %s7337, %s7345
          %s7347 = smul.addr %s24, 4
          %s7348 = smul.addr %s7347, 128
          %s7349 = scalar_lea.hbm %s10, %s7348
          %s7350 = sshll.u32 %s7340, 4
          %s7351 = int_to_ptr.vmem [resolvable:$true] %s7350
          %7356 = dma.vmem_to_hbm [thread:$0]  %s7351, 512, %s7349, %s7337, 256, 256, 16
        $region64: #{tpu_custom_call.1} parent=59 // pred_fallthru
          _
      $region60: #{tpu_custom_call.1} parent=5 // pred_fallthru
        _
      %p7357 = scmp.le.s32.totalorder 2, %s19
      // Predicated region
      $region65: #{tpu_custom_call.1} parent=5 // pred_check
        %p7358 = pneg %p7357
      $region66: #{tpu_custom_call.1} parent=5 // pred_check_branch
        %7360 = sbr.rel (%p7358) target = $region68
      $region67: #{tpu_custom_call.1} parent=5 // pred_region
        %s7361 = ssub.s32 %s19, 2
        // Predicated region
        $region69: #{tpu_custom_call.1} parent=67 // pred_check
          %p7362 = pneg %p263
        $region70: #{tpu_custom_call.1} parent=67 // pred_check_branch
          %7364 = sbr.rel (%p7362) target = $region72
        $region71: #{tpu_custom_call.1} parent=67 // pred_region
          %s7365 = sand.u32 %s248, 1
          %s7366 = scalar_lea.sflag [#allocation6], %s7365
          %s7367 = sand.u32 %s248, 1
          %s7368 = smul.addr %s7367, 32
          %s7369 = scalar_lea.vmem [#allocation5], %s7368
          %7370 = dma.done %s7366, 512
        $region72: #{tpu_custom_call.1} parent=67 // pred_fallthru
          _
      $region68: #{tpu_custom_call.1} parent=5 // pred_fallthru
        _
    $region6: #{tpu_custom_call.1} parent=1 // loop_footer
      %s23 = sadd.s32 1, %s19
    $region7: #{tpu_custom_call.1} parent=1 // loop_footer_branch
      %18 = sbr.rel target = $region3
    $region8: #{tpu_custom_call.1} parent=1 // loop_exit
      _
    %7371 = vsyncpa [#allocation6], 1
    %s7372 = scalar_lea.sflag [#allocation6], 1
    %7373 = vsyncpa %s7372, 1

</llo_original>
